<compile_context>
chip_gen: v5e
topology: v5e:2x2
jax: 0.10.0
libtpu: 0.0.40
codegen_flags: <defaults>
</compile_context>

<pallas_src>
import functools

import jax
import jax.numpy as jnp
from jax.experimental import pallas as pl
from jax.experimental.pallas import tpu as pltpu


# ---------------------------------------------------------------------------
# Scaled-down Llama-style config. Real model: hidden=4096, 32 heads x 128
# head_dim, intermediate=11008.  Here: hidden=256, 2 heads x 128 head_dim so
# every per-head tile is lane-dense (last dim == 128, same as the real model).
# ---------------------------------------------------------------------------
VOCAB = 256
HIDDEN = 256
NUM_HEADS = 2
HEAD_DIM = HIDDEN // NUM_HEADS           # 128
INTERMEDIATE = 512
NUM_LAYERS = 2
RMS_EPS = 1e-5
ROPE_BASE = 10000.0

# Tile caps sized for v7x's 64 MiB VMEM; on v5e/v6e (128 MiB) they can be
# raised (tm=512 / tn=1024) once M grows to real batch*seq.
TM_CAP = 256
TN_CAP = 512
K_SINGLE_BLOCK_MAX = 2048                # above this, tile the reduction axis


def _pick_tile(n, cap, align):
    """Largest tile <= cap that divides n (multiple of `align` when tiling)."""
    if n <= cap:
        return n
    best = None
    t = align
    while t <= cap:
        if n % t == 0:
            best = t
        t += align
    assert best is not None, (n, cap, align)
    return best


# ---------------------------------------------------------------------------
# Matmul kernels: optional fused RMSNorm on the input, optional fused residual
# add on the output.  K un-tiled fast path + K-tiled accumulator path.
# ---------------------------------------------------------------------------
def _make_mm_kernel(has_gamma, has_res, eps):
    def kernel(*refs):
        idx = 0
        x_ref = refs[idx]; idx += 1
        g_ref = None
        if has_gamma:
            g_ref = refs[idx]; idx += 1
        w_ref = refs[idx]; idx += 1
        r_ref = None
        if has_res:
            r_ref = refs[idx]; idx += 1
        o_ref = refs[idx]

        if has_gamma:
            x = x_ref[...].astype(jnp.float32)
            var = jnp.mean(x * x, axis=-1, keepdims=True)
            xin = (x * jax.lax.rsqrt(var + eps) * g_ref[...]).astype(w_ref.dtype)
        else:
            xin = x_ref[...].astype(w_ref.dtype)
        acc = jnp.dot(xin, w_ref[...], preferred_element_type=jnp.float32)
        if has_res:
            acc = acc + r_ref[...].astype(jnp.float32)
        o_ref[...] = acc.astype(o_ref.dtype)
    return kernel


def _make_mm_ktiled_kernel(has_res):
    def kernel(*refs):
        x_ref = refs[0]
        w_ref = refs[1]
        r_ref = refs[2] if has_res else None
        o_ref = refs[2 + int(has_res)]
        acc_ref = refs[3 + int(has_res)]

        @pl.when(pl.program_id(2) == 0)
        def _():
            acc_ref[...] = jnp.zeros_like(acc_ref)

        acc_ref[...] += jnp.dot(x_ref[...].astype(w_ref.dtype), w_ref[...],
                                preferred_element_type=jnp.float32)

        @pl.when(pl.program_id(2) == pl.num_programs(2) - 1)
        def _():
            acc = acc_ref[...]
            if has_res:
                acc = acc + r_ref[...].astype(jnp.float32)
            o_ref[...] = acc.astype(o_ref.dtype)
    return kernel


def pallas_matmul(x2d, w, *, gamma=None, residual=None,
                  out_dtype=jnp.float32, eps=RMS_EPS):
    """y = [rmsnorm(x)] @ w [+ residual].

    x2d: (M, K); w: (K, N) == PyTorch W^T; gamma: (K,) or None;
    residual: (M, N) or None.
    """
    M, K = x2d.shape
    K2, N = w.shape
    assert K == K2
    has_gamma = gamma is not None
    has_res = residual is not None
    tm_align = 16 if out_dtype == jnp.bfloat16 else 8
    tm = _pick_tile(M, TM_CAP, tm_align)
    tn = _pick_tile(N, TN_CAP, 128)

    if has_gamma:
        # fused norm needs the full row in one block
        assert K <= K_SINGLE_BLOCK_MAX, "fused-norm matmul requires un-tiled K"

    if K <= K_SINGLE_BLOCK_MAX:
        grid = (M // tm, N // tn)
        in_specs = [pl.BlockSpec((tm, K), lambda i, j: (i, 0))]
        args = [x2d]
        if has_gamma:
            in_specs.append(pl.BlockSpec((1, K), lambda i, j: (0, 0)))
            args.append(gamma.reshape(1, K).astype(jnp.float32))
        in_specs.append(pl.BlockSpec((K, tn), lambda i, j: (0, j)))
        args.append(w)
        if has_res:
            in_specs.append(pl.BlockSpec((tm, tn), lambda i, j: (i, j)))
            args.append(residual)
        return pl.pallas_call(
            _make_mm_kernel(has_gamma, has_res, eps),
            out_shape=jax.ShapeDtypeStruct((M, N), out_dtype),
            grid_spec=pltpu.PrefetchScalarGridSpec(
                num_scalar_prefetch=0, grid=grid,
                in_specs=in_specs,
                out_specs=pl.BlockSpec((tm, tn), lambda i, j: (i, j))),
            compiler_params=pltpu.CompilerParams(
                dimension_semantics=("parallel", "parallel")),
        )(*args)

    # K-tiled path for real hidden/intermediate sizes (not exercised here).
    tk = _pick_tile(K, 1024, 128)
    grid = (M // tm, N // tn, K // tk)
    in_specs = [pl.BlockSpec((tm, tk), lambda i, j, k: (i, k)),
                pl.BlockSpec((tk, tn), lambda i, j, k: (k, j))]
    args = [x2d, w]
    if has_res:
        in_specs.append(pl.BlockSpec((tm, tn), lambda i, j, k: (i, j)))
        args.append(residual)
    return pl.pallas_call(
        _make_mm_ktiled_kernel(has_res),
        out_shape=jax.ShapeDtypeStruct((M, N), out_dtype),
        grid_spec=pltpu.PrefetchScalarGridSpec(
            num_scalar_prefetch=0, grid=grid,
            in_specs=in_specs,
            out_specs=pl.BlockSpec((tm, tn), lambda i, j, k: (i, j)),
            scratch_shapes=[pltpu.VMEM((tm, tn), jnp.float32)]),
        compiler_params=pltpu.CompilerParams(
            dimension_semantics=("parallel", "parallel", "arbitrary")),
    )(*args)


# ---------------------------------------------------------------------------
# Fused RMSNorm + gate/up matmul + SwiGLU epilogue (activation written in bf16)
# ---------------------------------------------------------------------------
def _norm_swiglu_kernel(x_ref, g_ref, wg_ref, wu_ref, o_ref, *, eps):
    x = x_ref[...].astype(jnp.float32)
    var = jnp.mean(x * x, axis=-1, keepdims=True)
    xn = (x * jax.lax.rsqrt(var + eps) * g_ref[...]).astype(wg_ref.dtype)
    g = jnp.dot(xn, wg_ref[...], preferred_element_type=jnp.float32)
    u = jnp.dot(xn, wu_ref[...], preferred_element_type=jnp.float32)
    act = g * (1.0 / (1.0 + jnp.exp(-g))) * u          # SiLU(gate) * up
    o_ref[...] = act.astype(o_ref.dtype)


def pallas_swiglu(x2d, gamma, w_gate, w_up, *, eps=RMS_EPS,
                  out_dtype=jnp.bfloat16):
    M, K = x2d.shape
    K2, I = w_gate.shape
    assert K == K2 and w_up.shape == (K, I)
    assert K <= K_SINGLE_BLOCK_MAX
    tm = _pick_tile(M, TM_CAP, 16)
    tn = _pick_tile(I, TN_CAP, 128)
    grid = (M // tm, I // tn)
    return pl.pallas_call(
        functools.partial(_norm_swiglu_kernel, eps=eps),
        out_shape=jax.ShapeDtypeStruct((M, I), out_dtype),
        grid_spec=pltpu.PrefetchScalarGridSpec(
            num_scalar_prefetch=0, grid=grid,
            in_specs=[
                pl.BlockSpec((tm, K), lambda i, j: (i, 0)),
                pl.BlockSpec((1, K), lambda i, j: (0, 0)),
                pl.BlockSpec((K, tn), lambda i, j: (0, j)),
                pl.BlockSpec((K, tn), lambda i, j: (0, j)),
            ],
            out_specs=pl.BlockSpec((tm, tn), lambda i, j: (i, j))),
        compiler_params=pltpu.CompilerParams(
            dimension_semantics=("parallel", "parallel")),
    )(x2d, gamma.reshape(1, K).astype(jnp.float32), w_gate, w_up)


# ---------------------------------------------------------------------------
# Attention: one (batch, head) pair per grid step, fused RoPE, causal softmax,
# lane-dense (Sq, 128) output store.
# ---------------------------------------------------------------------------
def _attn_kernel(q_ref, k_ref, v_ref, csq_ref, csk_ref, o_ref, *,
                 scale, head_dim):
    half = head_dim // 2
    q = q_ref[...].astype(jnp.float32)
    k = k_ref[...].astype(jnp.float32)
    cos_q = csq_ref[:, :head_dim]
    sin_q = csq_ref[:, head_dim:]
    cos_k = csk_ref[:, :head_dim]
    sin_k = csk_ref[:, head_dim:]

    def rope(x, cos, sin):
        # rotate_half with jnp-only ops (robust under compile & interpret).
        rot = jnp.concatenate([-x[:, half:], x[:, :half]], axis=-1)
        return x * cos + rot * sin

    qh = rope(q, cos_q, sin_q).astype(jnp.bfloat16)
    kh = rope(k, cos_k, sin_k).astype(jnp.bfloat16)

    sq_len = q.shape[0]
    sk_len = k.shape[0]
    # (Sq, D) x (Sk, D) contracted on D -> (Sq, Sk); f32 MXU accumulation.
    s = jax.lax.dot_general(qh, kh, (((1,), (1,)), ((), ())),
                            preferred_element_type=jnp.float32) * scale
    # Bottom-right aligned causal mask (flash-attn causal=True convention).
    row = jax.lax.broadcasted_iota(jnp.int32, (sq_len, sk_len), 0)
    col = jax.lax.broadcasted_iota(jnp.int32, (sq_len, sk_len), 1)
    s = jnp.where(col <= row + (sk_len - sq_len), s, -1e30)

    m = jnp.max(s, axis=-1, keepdims=True)
    p = jnp.exp(s - m)
    l = jnp.sum(p, axis=-1, keepdims=True)
    acc = jnp.dot(p.astype(jnp.bfloat16), v_ref[...],
                  preferred_element_type=jnp.float32)
    o_ref[...] = (acc / l).astype(o_ref.dtype)


def pallas_causal_attention(q, k, v, cs_q, cs_k, out_dtype=jnp.bfloat16):
    """q: (B, Sq, H), k/v: (Bk, Sk, H) with Bk in {B, 1} -> (B, Sq, H)."""
    B, Sq, H = q.shape
    Bk, Sk, _ = k.shape
    scale = 1.0 / float(HEAD_DIM) ** 0.5
    q_idx = lambda b, h: (b, 0, h)
    kv_idx = (lambda b, h: (b, 0, h)) if Bk == B else (lambda b, h: (0, 0, h))
    kernel = functools.partial(_attn_kernel, scale=scale, head_dim=HEAD_DIM)
    return pl.pallas_call(
        kernel,
        out_shape=jax.ShapeDtypeStruct((B, Sq, H), out_dtype),
        grid_spec=pltpu.PrefetchScalarGridSpec(
            num_scalar_prefetch=0,
            grid=(B, NUM_HEADS),
            in_specs=[
                pl.BlockSpec((None, Sq, HEAD_DIM), q_idx),
                pl.BlockSpec((None, Sk, HEAD_DIM), kv_idx),
                pl.BlockSpec((None, Sk, HEAD_DIM), kv_idx),
                pl.BlockSpec((Sq, 2 * HEAD_DIM), lambda b, h: (0, 0)),
                pl.BlockSpec((Sk, 2 * HEAD_DIM), lambda b, h: (0, 0)),
            ],
            out_specs=pl.BlockSpec((None, Sq, HEAD_DIM), q_idx),
        ),
        compiler_params=pltpu.CompilerParams(
            dimension_semantics=("parallel", "parallel")),
    )(q, k, v, cs_q, cs_k)


# ---------------------------------------------------------------------------
# Glue: RoPE tables, attention block, MLP, layers, model
# ---------------------------------------------------------------------------
def rope_cos_sin_packed(seq_len, dim):
    """Returns (S, 2*dim) float32 table: [cos | sin], computed once/forward."""
    inv_freq = 1.0 / (ROPE_BASE ** (
        jnp.arange(0, dim, 2, dtype=jnp.float32) / dim))
    t = jnp.arange(seq_len, dtype=jnp.float32)
    freqs = jnp.einsum("i,j->ij", t, inv_freq)
    emb = jnp.concatenate([freqs, freqs], axis=-1)               # (S, dim)
    return jnp.concatenate([jnp.cos(emb), jnp.sin(emb)], axis=-1)


def self_attention_block(h, layer, cs_q, cs_k, memory, residual):
    """Fused norm + projections + RoPE + causal attention + (o_proj+residual).

    memory=None  -> self attention path (input_layernorm, q/k/v/o).
    memory given -> cross path (input_layernorm2 on h, q2/k2/v2/o2, raw memory
                    fed to K/V, same causal flash-attn as the reference).
    """
    B, Sq, H = h.shape
    h2d = h.reshape(B * Sq, H)
    attn = layer["attn"]

    if memory is None:
        qkv = pallas_matmul(h2d, attn["wqkv"], gamma=layer["input_ln"],
                            out_dtype=jnp.bfloat16)              # (B*Sq, 3H)
        q = qkv[:, :H].reshape(B, Sq, H)
        k = qkv[:, H:2 * H].reshape(B, Sq, H)
        v = qkv[:, 2 * H:].reshape(B, Sq, H)
        wo = attn["wo"]
    else:
        Bm, Sk, _ = memory.shape
        q = pallas_matmul(h2d, attn["wq2"], gamma=layer["input_ln2"],
                          out_dtype=jnp.bfloat16).reshape(B, Sq, H)
        kv = pallas_matmul(memory.reshape(Bm * Sk, H), attn["wkv2"],
                           out_dtype=jnp.bfloat16)               # (Bm*Sk, 2H)
        k = kv[:, :H].reshape(Bm, Sk, H)
        v = kv[:, H:].reshape(Bm, Sk, H)
        wo = attn["wo2"]

    ctx = pallas_causal_attention(q, k, v, cs_q, cs_k)           # (B,Sq,H) bf16
    # residual add fused into the output projection kernel (f32 out)
    out = pallas_matmul(ctx.reshape(B * Sq, H), wo,
                        residual=residual.reshape(B * Sq, H),
                        out_dtype=jnp.float32)
    return out.reshape(B, Sq, H)


def mlp_block(h, layer, residual):
    B, S, H = h.shape
    x2d = h.reshape(B * S, H)
    # fused: post-attention RMSNorm + gate/up matmul + SiLU(gate)*up, bf16 out
    act = pallas_swiglu(x2d, layer["post_ln"], layer["mlp"]["w_gate"],
                        layer["mlp"]["w_up"])                    # (B*S, I)
    # fused: down projection + residual add, f32 out
    out = pallas_matmul(act, layer["mlp"]["w_down"],
                        residual=residual.reshape(B * S, H),
                        out_dtype=jnp.float32)
    return out.reshape(B, S, H)


def decoder_layer(h, layer, memory_layer, cs_self, cs_mem):
    # self attention (norm fused into QKV proj, residual fused into o_proj)
    h = self_attention_block(h, layer, cs_self, cs_self, memory=None,
                             residual=h)
    # cross attention (norm2 fused into q2 proj, residual fused into o_proj2)
    if memory_layer is not None:
        h = self_attention_block(h, layer, cs_self, cs_mem,
                                 memory=memory_layer, residual=h)
    # mlp (post-attention norm + SwiGLU fused; residual fused into down proj)
    h = mlp_block(h, layer, residual=h)
    return h


def decoder_forward(params, input_ids, memory=None, labels=None):
    """Mirrors Decoder.forward -> model_forward -> model_model_forward."""
    B, S = input_ids.shape
    h = params["embed_tokens"][input_ids]                        # (B, S, H) f32
    # RoPE tables computed once per forward and shared by all layers.
    cs_self = rope_cos_sin_packed(S, HEAD_DIM)
    cs_mem = (rope_cos_sin_packed(memory.shape[1], HEAD_DIM)
              if memory is not None else None)
    for li, layer in enumerate(params["layers"]):
        mem_layer = memory[li][None, :, :] if memory is not None else None
        h = decoder_layer(h, layer, mem_layer, cs_self, cs_mem)
    # final RMSNorm fused into the lm_head matmul
    logits = pallas_matmul(h.reshape(B * S, HIDDEN), params["lm_head"],
                           gamma=params["final_norm"])
    logits = logits.reshape(B, S, VOCAB).astype(jnp.float32)
    loss = None
    # TODO(synk): compute_loss(...) (masked cross-entropy * valid_token_num) is
    # not defined in the provided source; labels path returns loss=None.
    return {"loss": loss, "logits": logits}


# ---------------------------------------------------------------------------
# Deterministic parameter construction (mirrors Decoder.__init__ cloning)
# ---------------------------------------------------------------------------
def make_params(key, wo_zero_init=True):
    def dense(k, fan_in, fan_out):
        # stored as (in, out) == PyTorch W^T; bf16 weights, f32 accumulation.
        return (jax.random.normal(k, (fan_in, fan_out), jnp.float32) * 0.02
                ).astype(jnp.bfloat16)

    keys = jax.random.split(key, 2 + NUM_LAYERS)
    params = {
        "embed_tokens": jax.random.normal(keys[0], (VOCAB, HIDDEN),
                                          jnp.float32) * 0.02,
        "final_norm": jnp.ones((HIDDEN,), jnp.float32),
        "lm_head": dense(keys[1], HIDDEN, VOCAB),
        "layers": [],
    }
    for li in range(NUM_LAYERS):
        lk = jax.random.split(keys[2 + li], 7)
        wq = dense(lk[0], HIDDEN, HIDDEN)
        wk = dense(lk[1], HIDDEN, HIDDEN)
        wv = dense(lk[2], HIDDEN, HIDDEN)
        wo = dense(lk[3], HIDDEN, HIDDEN)
        input_ln = jnp.ones((HIDDEN,), jnp.float32)
        # q_proj2 / k_proj2 / v_proj2 / o_proj2 / input_layernorm2 are clones
        # of the first-pass weights, as in Decoder.__init__ (o2 zeroed when
        # wo_zero_init).
        wo2 = jnp.zeros_like(wo) if wo_zero_init else wo
        layer = {
            "input_ln": input_ln,
            "input_ln2": input_ln,
            "post_ln": jnp.ones((HIDDEN,), jnp.float32),
            "attn": {
                "wqkv": jnp.concatenate([wq, wk, wv], axis=1),   # (H, 3H)
                "wo": wo,
                "wq2": wq,
                "wkv2": jnp.concatenate([wk, wv], axis=1),       # (H, 2H)
                "wo2": wo2,
            },
            "mlp": {
                "w_gate": dense(lk[4], HIDDEN, INTERMEDIATE),    # (H, I)
                "w_up": dense(lk[5], HIDDEN, INTERMEDIATE),      # (H, I)
                "w_down": dense(lk[6], INTERMEDIATE, HIDDEN),    # (I, H)
            },
        }
        params["layers"].append(layer)
    return params


# ---------------------------------------------------------------------------
if __name__ == "__main__":
    key = jax.random.PRNGKey(0)
    kp, kid, kmem = jax.random.split(key, 3)

    params = make_params(kp, wo_zero_init=True)

    batch, seq, mem_seq = 2, 16, 16
    input_ids = jax.random.randint(kid, (batch, seq), 0, VOCAB, dtype=jnp.int32)
    memory = jax.random.normal(kmem, (NUM_LAYERS, mem_seq, HIDDEN),
                               jnp.float32) * 0.1

    fwd = jax.jit(decoder_forward)
    out = fwd(params, input_ids, memory)
    logits = jax.block_until_ready(out["logits"])
    assert logits.shape == (batch, seq, VOCAB)
    assert logits.dtype == jnp.float32
    assert bool(jnp.all(jnp.isfinite(logits)))
    print("KERNEL_OK")
</pallas_src>

<mosaic_0001>
module attributes {stable_mosaic.version = 11 : i64} {
  func.func @kernel(%arg0: i32, %arg1: i32, %arg2: memref<32x256xf32, #tpu.memory_space<vmem>>, %arg3: memref<1x256xf32, #tpu.memory_space<vmem>>, %arg4: memref<256x384xbf16, #tpu.memory_space<vmem>>, %arg5: memref<32x384xbf16, #tpu.memory_space<vmem>>) attributes {dimension_semantics = [#tpu.dimension_semantics<parallel>, #tpu.dimension_semantics<parallel>], iteration_bounds = array<i64: 1, 2>, scalar_prefetch = 0 : i64, scratch_operands = 0 : i64, tpu.core_type = #tpu.core_type<tc>, window_params = [{transform_indices = @transform_0, window_bounds = array<i64: 32, 256>}, {pipeline_mode = #tpu.pipeline_mode<synchronous>, transform_indices = @transform_1, window_bounds = array<i64: 1, 256>}, {transform_indices = @transform_2, window_bounds = array<i64: 256, 384>}, {transform_indices = @transform_3, window_bounds = array<i64: 32, 384>}]} {
    %c0 = arith.constant 0 : index
    %c0_0 = arith.constant 0 : index
    %0 = vector.load %arg2[%c0, %c0_0] : memref<32x256xf32, #tpu.memory_space<vmem>>, vector<32x256xf32>
    %1 = arith.mulf %0, %0 : vector<32x256xf32>
    %cst = arith.constant dense<0.000000e+00> : vector<32xf32>
    %2 = vector.multi_reduction <add>, %1, %cst [1] : vector<32x256xf32> to vector<32xf32>
    %3 = vector.shape_cast %2 : vector<32xf32> to vector<32x1xf32>
    %cst_1 = arith.constant 2.560000e+02 : f32
    %4 = vector.broadcast %cst_1 : f32 to vector<32x1xf32>
    %5 = arith.divf %3, %4 : vector<32x1xf32>
    %cst_2 = arith.constant 9.99999974E-6 : f32
    %6 = vector.broadcast %cst_2 : f32 to vector<32x1xf32>
    %7 = arith.addf %5, %6 : vector<32x1xf32>
    %8 = math.rsqrt %7 : vector<32x1xf32>
    %9 = vector.broadcast %8 : vector<32x1xf32> to vector<32x256xf32>
    %10 = arith.mulf %0, %9 : vector<32x256xf32>
    %c0_3 = arith.constant 0 : index
    %c0_4 = arith.constant 0 : index
    %11 = vector.load %arg3[%c0_3, %c0_4] : memref<1x256xf32, #tpu.memory_space<vmem>>, vector<1x256xf32>
    %12 = vector.broadcast %11 : vector<1x256xf32> to vector<32x256xf32>
    %13 = arith.mulf %10, %12 : vector<32x256xf32>
    %14 = arith.truncf %13 : vector<32x256xf32> to vector<32x256xbf16>
    %c0_5 = arith.constant 0 : index
    %c0_6 = arith.constant 0 : index
    %15 = vector.load %arg4[%c0_5, %c0_6] : memref<256x384xbf16, #tpu.memory_space<vmem>>, vector<256x384xbf16>
    %cst_7 = arith.constant dense<0.000000e+00> : vector<32x384xf32>
    %16 = tpu.matmul %14, %15, %cst_7 {dimension_numbers = #tpu.dot_dimension_numbers<[1], [0], [0], [1], [0, 0, 1, 1], [], []>} : vector<32x256xbf16>, vector<256x384xbf16>, vector<32x384xf32> -> vector<32x384xf32>
    %17 = arith.truncf %16 : vector<32x384xf32> to vector<32x384xbf16>
    %c0_8 = arith.constant 0 : index
    %c0_9 = arith.constant 0 : index
    %18 = vector.load %arg5[%c0_8, %c0_9] : memref<32x384xbf16, #tpu.memory_space<vmem>>, vector<32x384xbf16>
    tpu.vector_store %arg5[%c0_8, %c0_9], %17 {strides = array<i32>} : memref<32x384xbf16, #tpu.memory_space<vmem>>, vector<32x384xbf16>,
    return
  }
  func.func @transform_0(%arg0: i32, %arg1: i32) -> (i32, i32) {
    %c0_i32 = arith.constant 0 : i32
    %c0_i32_0 = arith.constant 0 : i32
    return %arg0, %c0_i32 : i32, i32
  }
  func.func @transform_1(%arg0: i32, %arg1: i32) -> (i32, i32) {
    %c0_i32 = arith.constant 0 : i32
    %c0_i32_0 = arith.constant 0 : i32
    %c0_i32_1 = arith.constant 0 : i32
    return %c0_i32, %c0_i32_0 : i32, i32
  }
  func.func @transform_2(%arg0: i32, %arg1: i32) -> (i32, i32) {
    %c0_i32 = arith.constant 0 : i32
    %c0_i32_0 = arith.constant 0 : i32
    return %c0_i32, %arg1 : i32, i32
  }
  func.func @transform_3(%arg0: i32, %arg1: i32) -> (i32, i32) {
    %c0_i32 = arith.constant 0 : i32
    return %arg0, %arg1 : i32, i32
  }
}

module attributes {stable_mosaic.version = 11 : i64} {
  func.func @_attn_kernel(%arg0: i32, %arg1: i32, %arg2: memref<1x16x128xbf16, #tpu.memory_space<vmem>>, %arg3: memref<1x16x128xbf16, #tpu.memory_space<vmem>>, %arg4: memref<1x16x128xbf16, #tpu.memory_space<vmem>>, %arg5: memref<16x256xf32, #tpu.memory_space<vmem>>, %arg6: memref<16x256xf32, #tpu.memory_space<vmem>>, %arg7: memref<1x16x128xbf16, #tpu.memory_space<vmem>>) attributes {dimension_semantics = [#tpu.dimension_semantics<parallel>, #tpu.dimension_semantics<parallel>], iteration_bounds = array<i64: 2, 2>, scalar_prefetch = 0 : i64, scratch_operands = 0 : i64, tpu.core_type = #tpu.core_type<tc>, window_params = [{transform_indices = @transform_0, window_bounds = array<i64: 1, 16, 128>}, {transform_indices = @transform_1, window_bounds = array<i64: 1, 16, 128>}, {transform_indices = @transform_2, window_bounds = array<i64: 1, 16, 128>}, {pipeline_mode = #tpu.pipeline_mode<synchronous>, transform_indices = @transform_3, window_bounds = array<i64: 16, 256>}, {pipeline_mode = #tpu.pipeline_mode<synchronous>, transform_indices = @transform_4, window_bounds = array<i64: 16, 256>}, {transform_indices = @transform_5, window_bounds = array<i64: 1, 16, 128>}]} {
    %c0 = arith.constant 0 : index
    %c0_0 = arith.constant 0 : index
    %c0_1 = arith.constant 0 : index
    %0 = vector.load %arg2[%c0, %c0_0, %c0_1] : memref<1x16x128xbf16, #tpu.memory_space<vmem>>, vector<1x16x128xbf16>
    %1 = vector.shape_cast %0 : vector<1x16x128xbf16> to vector<16x128xbf16>
    %2 = arith.extf %1 : vector<16x128xbf16> to vector<16x128xf32>
    %c0_2 = arith.constant 0 : index
    %c0_3 = arith.constant 0 : index
    %c0_4 = arith.constant 0 : index
    %3 = vector.load %arg3[%c0_2, %c0_3, %c0_4] : memref<1x16x128xbf16, #tpu.memory_space<vmem>>, vector<1x16x128xbf16>
    %4 = vector.shape_cast %3 : vector<1x16x128xbf16> to vector<16x128xbf16>
    %5 = arith.extf %4 : vector<16x128xbf16> to vector<16x128xf32>
    %c0_5 = arith.constant 0 : index
    %c0_6 = arith.constant 0 : index
    %6 = vector.load %arg5[%c0_5, %c0_6] : memref<16x256xf32, #tpu.memory_space<vmem>>, vector<16x128xf32>
    %c0_7 = arith.constant 0 : index
    %c128 = arith.constant 128 : index
    %7 = vector.load %arg5[%c0_7, %c128] : memref<16x256xf32, #tpu.memory_space<vmem>>, vector<16x128xf32>
    %c0_8 = arith.constant 0 : index
    %c0_9 = arith.constant 0 : index
    %8 = vector.load %arg6[%c0_8, %c0_9] : memref<16x256xf32, #tpu.memory_space<vmem>>, vector<16x128xf32>
    %c0_10 = arith.constant 0 : index
    %c128_11 = arith.constant 128 : index
    %9 = vector.load %arg6[%c0_10, %c128_11] : memref<16x256xf32, #tpu.memory_space<vmem>>, vector<16x128xf32>
    %10 = vector.extract_strided_slice %2 {offsets = [0, 64], sizes = [16, 64], strides = [1, 1]} : vector<16x128xf32> to vector<16x64xf32>
    %cst = arith.constant 0.000000e+00 : f32
    %11 = vector.broadcast %cst : f32 to vector<16x64xf32>
    %12 = arith.subf %11, %10 : vector<16x64xf32>
    %13 = vector.extract_strided_slice %2 {offsets = [0, 0], sizes = [16, 64], strides = [1, 1]} : vector<16x128xf32> to vector<16x64xf32>
    %14 = tpu.concatenate %12, %13 in 1 : vector<16x64xf32>, vector<16x64xf32> -> vector<16x128xf32>
    %15 = arith.mulf %2, %6 : vector<16x128xf32>
    %16 = arith.mulf %14, %7 : vector<16x128xf32>
    %17 = arith.addf %15, %16 : vector<16x128xf32>
    %18 = arith.truncf %17 : vector<16x128xf32> to vector<16x128xbf16>
    %19 = vector.extract_strided_slice %5 {offsets = [0, 64], sizes = [16, 64], strides = [1, 1]} : vector<16x128xf32> to vector<16x64xf32>
    %cst_12 = arith.constant 0.000000e+00 : f32
    %20 = vector.broadcast %cst_12 : f32 to vector<16x64xf32>
    %21 = arith.subf %20, %19 : vector<16x64xf32>
    %22 = vector.extract_strided_slice %5 {offsets = [0, 0], sizes = [16, 64], strides = [1, 1]} : vector<16x128xf32> to vector<16x64xf32>
    %23 = tpu.concatenate %21, %22 in 1 : vector<16x64xf32>, vector<16x64xf32> -> vector<16x128xf32>
    %24 = arith.mulf %5, %8 : vector<16x128xf32>
    %25 = arith.mulf %23, %9 : vector<16x128xf32>
    %26 = arith.addf %24, %25 : vector<16x128xf32>
    %27 = arith.truncf %26 : vector<16x128xf32> to vector<16x128xbf16>
    %cst_13 = arith.constant dense<0.000000e+00> : vector<16x16xf32>
    %28 = tpu.matmul %18, %27, %cst_13 {dimension_numbers = #tpu.dot_dimension_numbers<[1], [1], [0], [0], [0, 0, 1, 0], [], []>} : vector<16x128xbf16>, vector<16x128xbf16>, vector<16x16xf32> -> vector<16x16xf32>
    %cst_14 = arith.constant 0.0883883461 : f32
    %29 = vector.broadcast %cst_14 : f32 to vector<16x16xf32>
    %30 = arith.mulf %28, %29 : vector<16x16xf32>
    %31 = tpu.iota {dimensions = array<i32: 0>} : vector<16x16xi32>
    %32 = tpu.iota {dimensions = array<i32: 1>} : vector<16x16xi32>
    %c0_i32 = arith.constant 0 : i32
    %33 = vector.broadcast %c0_i32 : i32 to vector<16x16xi32>
    %34 = arith.addi %31, %33 : vector<16x16xi32>
    %35 = arith.cmpi sle, %32, %34 : vector<16x16xi32>
    %cst_15 = arith.constant -1.000000e+30 : f32
    %36 = vector.broadcast %cst_15 : f32 to vector<16x16xf32>
    %37 = arith.select %35, %30, %36 : vector<16x16xi1>, vector<16x16xf32>
    %cst_16 = arith.constant dense<0xFF800000> : vector<16xf32>
    %38 = vector.multi_reduction <maximumf>, %37, %cst_16 [1] : vector<16x16xf32> to vector<16xf32>
    %39 = vector.shape_cast %38 : vector<16xf32> to vector<16x1xf32>
    %40 = vector.broadcast %39 : vector<16x1xf32> to vector<16x16xf32>
    %41 = arith.subf %37, %40 : vector<16x16xf32>
    %42 = math.exp %41 : vector<16x16xf32>
    %cst_17 = arith.constant dense<0.000000e+00> : vector<16xf32>
    %43 = vector.multi_reduction <add>, %42, %cst_17 [1] : vector<16x16xf32> to vector<16xf32>
    %44 = vector.shape_cast %43 : vector<16xf32> to vector<16x1xf32>
    %45 = arith.truncf %42 : vector<16x16xf32> to vector<16x16xbf16>
    %c0_18 = arith.constant 0 : index
    %c0_19 = arith.constant 0 : index
    %c0_20 = arith.constant 0 : index
    %46 = vector.load %arg4[%c0_18, %c0_19, %c0_20] : memref<1x16x128xbf16, #tpu.memory_space<vmem>>, vector<1x16x128xbf16>
    %47 = vector.shape_cast %46 : vector<1x16x128xbf16> to vector<16x128xbf16>
    %cst_21 = arith.constant dense<0.000000e+00> : vector<16x128xf32>
    %48 = tpu.matmul %45, %47, %cst_21 {dimension_numbers = #tpu.dot_dimension_numbers<[1], [0], [0], [1], [0, 0, 1, 1], [], []>} : vector<16x16xbf16>, vector<16x128xbf16>, vector<16x128xf32> -> vector<16x128xf32>
    %49 = vector.broadcast %44 : vector<16x1xf32> to vector<16x128xf32>
    %50 = arith.divf %48, %49 : vector<16x128xf32>
    %51 = arith.truncf %50 : vector<16x128xf32> to vector<16x128xbf16>
    %c0_22 = arith.constant 0 : index
    %c0_23 = arith.constant 0 : index
    %c0_24 = arith.constant 0 : index
    %52 = vector.load %arg7[%c0_22, %c0_23, %c0_24] : memref<1x16x128xbf16, #tpu.memory_space<vmem>>, vector<1x16x128xbf16>
    %53 = vector.shape_cast %52 : vector<1x16x128xbf16> to vector<16x128xbf16>
    %54 = vector.shape_cast %51 : vector<16x128xbf16> to vector<1x16x128xbf16>
    tpu.vector_store %arg7[%c0_22, %c0_23, %c0_24], %54 {strides = array<i32>} : memref<1x16x128xbf16, #tpu.memory_space<vmem>>, vector<1x16x128xbf16>,
    return
  }
  func.func @transform_0(%arg0: i32, %arg1: i32) -> (i32, i32, i32) {
    %c0_i32 = arith.constant 0 : i32
    %c0_i32_0 = arith.constant 0 : i32
    return %arg0, %c0_i32, %arg1 : i32, i32, i32
  }
  func.func @transform_1(%arg0: i32, %arg1: i32) -> (i32, i32, i32) {
    %c0_i32 = arith.constant 0 : i32
    %c0_i32_0 = arith.constant 0 : i32
    return %arg0, %c0_i32, %arg1 : i32, i32, i32
  }
  func.func @transform_2(%arg0: i32, %arg1: i32) -> (i32, i32, i32) {
    %c0_i32 = arith.constant 0 : i32
    %c0_i32_0 = arith.constant 0 : i32
    return %arg0, %c0_i32, %arg1 : i32, i32, i32
  }
  func.func @transform_3(%arg0: i32, %arg1: i32) -> (i32, i32) {
    %c0_i32 = arith.constant 0 : i32
    %c0_i32_0 = arith.constant 0 : i32
    %c0_i32_1 = arith.constant 0 : i32
    return %c0_i32, %c0_i32_0 : i32, i32
  }
  func.func @transform_4(%arg0: i32, %arg1: i32) -> (i32, i32) {
    %c0_i32 = arith.constant 0 : i32
    %c0_i32_0 = arith.constant 0 : i32
    %c0_i32_1 = arith.constant 0 : i32
    return %c0_i32, %c0_i32_0 : i32, i32
  }
  func.func @transform_5(%arg0: i32, %arg1: i32) -> (i32, i32, i32) {
    %c0_i32 = arith.constant 0 : i32
    %c0_i32_0 = arith.constant 0 : i32
    return %arg0, %c0_i32, %arg1 : i32, i32, i32
  }
}

module attributes {stable_mosaic.version = 11 : i64} {
  func.func @kernel(%arg0: i32, %arg1: i32, %arg2: memref<32x256xf32, #tpu.memory_space<vmem>>, %arg3: memref<1x256xf32, #tpu.memory_space<vmem>>, %arg4: memref<256x256xbf16, #tpu.memory_space<vmem>>, %arg5: memref<32x256xbf16, #tpu.memory_space<vmem>>) attributes {dimension_semantics = [#tpu.dimension_semantics<parallel>, #tpu.dimension_semantics<parallel>], iteration_bounds = array<i64: 1, 1>, scalar_prefetch = 0 : i64, scratch_operands = 0 : i64, tpu.core_type = #tpu.core_type<tc>, window_params = [{transform_indices = @transform_0, window_bounds = array<i64: 32, 256>}, {pipeline_mode = #tpu.pipeline_mode<synchronous>, transform_indices = @transform_1, window_bounds = array<i64: 1, 256>}, {transform_indices = @transform_2, window_bounds = array<i64: 256, 256>}, {transform_indices = @transform_3, window_bounds = array<i64: 32, 256>}]} {
    %c0 = arith.constant 0 : index
    %c0_0 = arith.constant 0 : index
    %0 = vector.load %arg2[%c0, %c0_0] : memref<32x256xf32, #tpu.memory_space<vmem>>, vector<32x256xf32>
    %1 = arith.mulf %0, %0 : vector<32x256xf32>
    %cst = arith.constant dense<0.000000e+00> : vector<32xf32>
    %2 = vector.multi_reduction <add>, %1, %cst [1] : vector<32x256xf32> to vector<32xf32>
    %3 = vector.shape_cast %2 : vector<32xf32> to vector<32x1xf32>
    %cst_1 = arith.constant 2.560000e+02 : f32
    %4 = vector.broadcast %cst_1 : f32 to vector<32x1xf32>
    %5 = arith.divf %3, %4 : vector<32x1xf32>
    %cst_2 = arith.constant 9.99999974E-6 : f32
    %6 = vector.broadcast %cst_2 : f32 to vector<32x1xf32>
    %7 = arith.addf %5, %6 : vector<32x1xf32>
    %8 = math.rsqrt %7 : vector<32x1xf32>
    %9 = vector.broadcast %8 : vector<32x1xf32> to vector<32x256xf32>
    %10 = arith.mulf %0, %9 : vector<32x256xf32>
    %c0_3 = arith.constant 0 : index
    %c0_4 = arith.constant 0 : index
    %11 = vector.load %arg3[%c0_3, %c0_4] : memref<1x256xf32, #tpu.memory_space<vmem>>, vector<1x256xf32>
    %12 = vector.broadcast %11 : vector<1x256xf32> to vector<32x256xf32>
    %13 = arith.mulf %10, %12 : vector<32x256xf32>
    %14 = arith.truncf %13 : vector<32x256xf32> to vector<32x256xbf16>
    %c0_5 = arith.constant 0 : index
    %c0_6 = arith.constant 0 : index
    %15 = vector.load %arg4[%c0_5, %c0_6] : memref<256x256xbf16, #tpu.memory_space<vmem>>, vector<256x256xbf16>
    %cst_7 = arith.constant dense<0.000000e+00> : vector<32x256xf32>
    %16 = tpu.matmul %14, %15, %cst_7 {dimension_numbers = #tpu.dot_dimension_numbers<[1], [0], [0], [1], [0, 0, 1, 1], [], []>} : vector<32x256xbf16>, vector<256x256xbf16>, vector<32x256xf32> -> vector<32x256xf32>
    %17 = arith.truncf %16 : vector<32x256xf32> to vector<32x256xbf16>
    %c0_8 = arith.constant 0 : index
    %c0_9 = arith.constant 0 : index
    %18 = vector.load %arg5[%c0_8, %c0_9] : memref<32x256xbf16, #tpu.memory_space<vmem>>, vector<32x256xbf16>
    tpu.vector_store %arg5[%c0_8, %c0_9], %17 {strides = array<i32>} : memref<32x256xbf16, #tpu.memory_space<vmem>>, vector<32x256xbf16>,
    return
  }
  func.func @transform_0(%arg0: i32, %arg1: i32) -> (i32, i32) {
    %c0_i32 = arith.constant 0 : i32
    %c0_i32_0 = arith.constant 0 : i32
    return %arg0, %c0_i32 : i32, i32
  }
  func.func @transform_1(%arg0: i32, %arg1: i32) -> (i32, i32) {
    %c0_i32 = arith.constant 0 : i32
    %c0_i32_0 = arith.constant 0 : i32
    %c0_i32_1 = arith.constant 0 : i32
    return %c0_i32, %c0_i32_0 : i32, i32
  }
  func.func @transform_2(%arg0: i32, %arg1: i32) -> (i32, i32) {
    %c0_i32 = arith.constant 0 : i32
    %c0_i32_0 = arith.constant 0 : i32
    return %c0_i32, %arg1 : i32, i32
  }
  func.func @transform_3(%arg0: i32, %arg1: i32) -> (i32, i32) {
    %c0_i32 = arith.constant 0 : i32
    return %arg0, %arg1 : i32, i32
  }
}

module attributes {stable_mosaic.version = 11 : i64} {
  func.func @kernel(%arg0: i32, %arg1: i32, %arg2: memref<32x256xbf16, #tpu.memory_space<vmem>>, %arg3: memref<256x256xbf16, #tpu.memory_space<vmem>>, %arg4: memref<32x256xf32, #tpu.memory_space<vmem>>, %arg5: memref<32x256xf32, #tpu.memory_space<vmem>>) attributes {dimension_semantics = [#tpu.dimension_semantics<parallel>, #tpu.dimension_semantics<parallel>], iteration_bounds = array<i64: 1, 1>, scalar_prefetch = 0 : i64, scratch_operands = 0 : i64, tpu.core_type = #tpu.core_type<tc>, window_params = [{transform_indices = @transform_0, window_bounds = array<i64: 32, 256>}, {transform_indices = @transform_1, window_bounds = array<i64: 256, 256>}, {transform_indices = @transform_2, window_bounds = array<i64: 32, 256>}, {transform_indices = @transform_3, window_bounds = array<i64: 32, 256>}]} {
    %c0 = arith.constant 0 : index
    %c0_0 = arith.constant 0 : index
    %0 = vector.load %arg2[%c0, %c0_0] : memref<32x256xbf16, #tpu.memory_space<vmem>>, vector<32x256xbf16>
    %c0_1 = arith.constant 0 : index
    %c0_2 = arith.constant 0 : index
    %1 = vector.load %arg3[%c0_1, %c0_2] : memref<256x256xbf16, #tpu.memory_space<vmem>>, vector<256x256xbf16>
    %cst = arith.constant dense<0.000000e+00> : vector<32x256xf32>
    %2 = tpu.matmul %0, %1, %cst {dimension_numbers = #tpu.dot_dimension_numbers<[1], [0], [0], [1], [0, 0, 1, 1], [], []>} : vector<32x256xbf16>, vector<256x256xbf16>, vector<32x256xf32> -> vector<32x256xf32>
    %c0_3 = arith.constant 0 : index
    %c0_4 = arith.constant 0 : index
    %3 = vector.load %arg4[%c0_3, %c0_4] : memref<32x256xf32, #tpu.memory_space<vmem>>, vector<32x256xf32>
    %4 = arith.addf %2, %3 : vector<32x256xf32>
    %c0_5 = arith.constant 0 : index
    %c0_6 = arith.constant 0 : index
    %5 = vector.load %arg5[%c0_5, %c0_6] : memref<32x256xf32, #tpu.memory_space<vmem>>, vector<32x256xf32>
    tpu.vector_store %arg5[%c0_5, %c0_6], %4 {strides = array<i32>} : memref<32x256xf32, #tpu.memory_space<vmem>>, vector<32x256xf32>,
    return
  }
  func.func @transform_0(%arg0: i32, %arg1: i32) -> (i32, i32) {
    %c0_i32 = arith.constant 0 : i32
    %c0_i32_0 = arith.constant 0 : i32
    return %arg0, %c0_i32 : i32, i32
  }
  func.func @transform_1(%arg0: i32, %arg1: i32) -> (i32, i32) {
    %c0_i32 = arith.constant 0 : i32
    %c0_i32_0 = arith.constant 0 : i32
    return %c0_i32, %arg1 : i32, i32
  }
  func.func @transform_2(%arg0: i32, %arg1: i32) -> (i32, i32) {
    %c0_i32 = arith.constant 0 : i32
    return %arg0, %arg1 : i32, i32
  }
  func.func @transform_3(%arg0: i32, %arg1: i32) -> (i32, i32) {
    %c0_i32 = arith.constant 0 : i32
    return %arg0, %arg1 : i32, i32
  }
}

module attributes {stable_mosaic.version = 11 : i64} {
  func.func @kernel(%arg0: i32, %arg1: i32, %arg2: memref<16x256xf32, #tpu.memory_space<vmem>>, %arg3: memref<256x512xbf16, #tpu.memory_space<vmem>>, %arg4: memref<16x512xbf16, #tpu.memory_space<vmem>>) attributes {dimension_semantics = [#tpu.dimension_semantics<parallel>, #tpu.dimension_semantics<parallel>], iteration_bounds = array<i64: 1, 1>, scalar_prefetch = 0 : i64, scratch_operands = 0 : i64, tpu.core_type = #tpu.core_type<tc>, window_params = [{transform_indices = @transform_0, window_bounds = array<i64: 16, 256>}, {transform_indices = @transform_1, window_bounds = array<i64: 256, 512>}, {transform_indices = @transform_2, window_bounds = array<i64: 16, 512>}]} {
    %c0 = arith.constant 0 : index
    %c0_0 = arith.constant 0 : index
    %0 = vector.load %arg2[%c0, %c0_0] : memref<16x256xf32, #tpu.memory_space<vmem>>, vector<16x256xf32>
    %1 = arith.truncf %0 : vector<16x256xf32> to vector<16x256xbf16>
    %c0_1 = arith.constant 0 : index
    %c0_2 = arith.constant 0 : index
    %2 = vector.load %arg3[%c0_1, %c0_2] : memref<256x512xbf16, #tpu.memory_space<vmem>>, vector<256x512xbf16>
    %cst = arith.constant dense<0.000000e+00> : vector<16x512xf32>
    %3 = tpu.matmul %1, %2, %cst {dimension_numbers = #tpu.dot_dimension_numbers<[1], [0], [0], [1], [0, 0, 1, 1], [], []>} : vector<16x256xbf16>, vector<256x512xbf16>, vector<16x512xf32> -> vector<16x512xf32>
    %4 = arith.truncf %3 : vector<16x512xf32> to vector<16x512xbf16>
    %c0_3 = arith.constant 0 : index
    %c0_4 = arith.constant 0 : index
    %5 = vector.load %arg4[%c0_3, %c0_4] : memref<16x512xbf16, #tpu.memory_space<vmem>>, vector<16x512xbf16>
    tpu.vector_store %arg4[%c0_3, %c0_4], %4 {strides = array<i32>} : memref<16x512xbf16, #tpu.memory_space<vmem>>, vector<16x512xbf16>,
    return
  }
  func.func @transform_0(%arg0: i32, %arg1: i32) -> (i32, i32) {
    %c0_i32 = arith.constant 0 : i32
    %c0_i32_0 = arith.constant 0 : i32
    return %arg0, %c0_i32 : i32, i32
  }
  func.func @transform_1(%arg0: i32, %arg1: i32) -> (i32, i32) {
    %c0_i32 = arith.constant 0 : i32
    %c0_i32_0 = arith.constant 0 : i32
    return %c0_i32, %arg1 : i32, i32
  }
  func.func @transform_2(%arg0: i32, %arg1: i32) -> (i32, i32) {
    %c0_i32 = arith.constant 0 : i32
    return %arg0, %arg1 : i32, i32
  }
}

module attributes {stable_mosaic.version = 11 : i64} {
  func.func @_attn_kernel(%arg0: i32, %arg1: i32, %arg2: memref<1x16x128xbf16, #tpu.memory_space<vmem>>, %arg3: memref<1x16x128xbf16, #tpu.memory_space<vmem>>, %arg4: memref<1x16x128xbf16, #tpu.memory_space<vmem>>, %arg5: memref<16x256xf32, #tpu.memory_space<vmem>>, %arg6: memref<16x256xf32, #tpu.memory_space<vmem>>, %arg7: memref<1x16x128xbf16, #tpu.memory_space<vmem>>) attributes {dimension_semantics = [#tpu.dimension_semantics<parallel>, #tpu.dimension_semantics<parallel>], iteration_bounds = array<i64: 2, 2>, scalar_prefetch = 0 : i64, scratch_operands = 0 : i64, tpu.core_type = #tpu.core_type<tc>, window_params = [{transform_indices = @transform_0, window_bounds = array<i64: 1, 16, 128>}, {transform_indices = @transform_1, window_bounds = array<i64: 1, 16, 128>}, {transform_indices = @transform_2, window_bounds = array<i64: 1, 16, 128>}, {pipeline_mode = #tpu.pipeline_mode<synchronous>, transform_indices = @transform_3, window_bounds = array<i64: 16, 256>}, {pipeline_mode = #tpu.pipeline_mode<synchronous>, transform_indices = @transform_4, window_bounds = array<i64: 16, 256>}, {transform_indices = @transform_5, window_bounds = array<i64: 1, 16, 128>}]} {
    %c0 = arith.constant 0 : index
    %c0_0 = arith.constant 0 : index
    %c0_1 = arith.constant 0 : index
    %0 = vector.load %arg2[%c0, %c0_0, %c0_1] : memref<1x16x128xbf16, #tpu.memory_space<vmem>>, vector<1x16x128xbf16>
    %1 = vector.shape_cast %0 : vector<1x16x128xbf16> to vector<16x128xbf16>
    %2 = arith.extf %1 : vector<16x128xbf16> to vector<16x128xf32>
    %c0_2 = arith.constant 0 : index
    %c0_3 = arith.constant 0 : index
    %c0_4 = arith.constant 0 : index
    %3 = vector.load %arg3[%c0_2, %c0_3, %c0_4] : memref<1x16x128xbf16, #tpu.memory_space<vmem>>, vector<1x16x128xbf16>
    %4 = vector.shape_cast %3 : vector<1x16x128xbf16> to vector<16x128xbf16>
    %5 = arith.extf %4 : vector<16x128xbf16> to vector<16x128xf32>
    %c0_5 = arith.constant 0 : index
    %c0_6 = arith.constant 0 : index
    %6 = vector.load %arg5[%c0_5, %c0_6] : memref<16x256xf32, #tpu.memory_space<vmem>>, vector<16x128xf32>
    %c0_7 = arith.constant 0 : index
    %c128 = arith.constant 128 : index
    %7 = vector.load %arg5[%c0_7, %c128] : memref<16x256xf32, #tpu.memory_space<vmem>>, vector<16x128xf32>
    %c0_8 = arith.constant 0 : index
    %c0_9 = arith.constant 0 : index
    %8 = vector.load %arg6[%c0_8, %c0_9] : memref<16x256xf32, #tpu.memory_space<vmem>>, vector<16x128xf32>
    %c0_10 = arith.constant 0 : index
    %c128_11 = arith.constant 128 : index
    %9 = vector.load %arg6[%c0_10, %c128_11] : memref<16x256xf32, #tpu.memory_space<vmem>>, vector<16x128xf32>
    %10 = vector.extract_strided_slice %2 {offsets = [0, 64], sizes = [16, 64], strides = [1, 1]} : vector<16x128xf32> to vector<16x64xf32>
    %cst = arith.constant 0.000000e+00 : f32
    %11 = vector.broadcast %cst : f32 to vector<16x64xf32>
    %12 = arith.subf %11, %10 : vector<16x64xf32>
    %13 = vector.extract_strided_slice %2 {offsets = [0, 0], sizes = [16, 64], strides = [1, 1]} : vector<16x128xf32> to vector<16x64xf32>
    %14 = tpu.concatenate %12, %13 in 1 : vector<16x64xf32>, vector<16x64xf32> -> vector<16x128xf32>
    %15 = arith.mulf %2, %6 : vector<16x128xf32>
    %16 = arith.mulf %14, %7 : vector<16x128xf32>
    %17 = arith.addf %15, %16 : vector<16x128xf32>
    %18 = arith.truncf %17 : vector<16x128xf32> to vector<16x128xbf16>
    %19 = vector.extract_strided_slice %5 {offsets = [0, 64], sizes = [16, 64], strides = [1, 1]} : vector<16x128xf32> to vector<16x64xf32>
    %cst_12 = arith.constant 0.000000e+00 : f32
    %20 = vector.broadcast %cst_12 : f32 to vector<16x64xf32>
    %21 = arith.subf %20, %19 : vector<16x64xf32>
    %22 = vector.extract_strided_slice %5 {offsets = [0, 0], sizes = [16, 64], strides = [1, 1]} : vector<16x128xf32> to vector<16x64xf32>
    %23 = tpu.concatenate %21, %22 in 1 : vector<16x64xf32>, vector<16x64xf32> -> vector<16x128xf32>
    %24 = arith.mulf %5, %8 : vector<16x128xf32>
    %25 = arith.mulf %23, %9 : vector<16x128xf32>
    %26 = arith.addf %24, %25 : vector<16x128xf32>
    %27 = arith.truncf %26 : vector<16x128xf32> to vector<16x128xbf16>
    %cst_13 = arith.constant dense<0.000000e+00> : vector<16x16xf32>
    %28 = tpu.matmul %18, %27, %cst_13 {dimension_numbers = #tpu.dot_dimension_numbers<[1], [1], [0], [0], [0, 0, 1, 0], [], []>} : vector<16x128xbf16>, vector<16x128xbf16>, vector<16x16xf32> -> vector<16x16xf32>
    %cst_14 = arith.constant 0.0883883461 : f32
    %29 = vector.broadcast %cst_14 : f32 to vector<16x16xf32>
    %30 = arith.mulf %28, %29 : vector<16x16xf32>
    %31 = tpu.iota {dimensions = array<i32: 0>} : vector<16x16xi32>
    %32 = tpu.iota {dimensions = array<i32: 1>} : vector<16x16xi32>
    %c0_i32 = arith.constant 0 : i32
    %33 = vector.broadcast %c0_i32 : i32 to vector<16x16xi32>
    %34 = arith.addi %31, %33 : vector<16x16xi32>
    %35 = arith.cmpi sle, %32, %34 : vector<16x16xi32>
    %cst_15 = arith.constant -1.000000e+30 : f32
    %36 = vector.broadcast %cst_15 : f32 to vector<16x16xf32>
    %37 = arith.select %35, %30, %36 : vector<16x16xi1>, vector<16x16xf32>
    %cst_16 = arith.constant dense<0xFF800000> : vector<16xf32>
    %38 = vector.multi_reduction <maximumf>, %37, %cst_16 [1] : vector<16x16xf32> to vector<16xf32>
    %39 = vector.shape_cast %38 : vector<16xf32> to vector<16x1xf32>
    %40 = vector.broadcast %39 : vector<16x1xf32> to vector<16x16xf32>
    %41 = arith.subf %37, %40 : vector<16x16xf32>
    %42 = math.exp %41 : vector<16x16xf32>
    %cst_17 = arith.constant dense<0.000000e+00> : vector<16xf32>
    %43 = vector.multi_reduction <add>, %42, %cst_17 [1] : vector<16x16xf32> to vector<16xf32>
    %44 = vector.shape_cast %43 : vector<16xf32> to vector<16x1xf32>
    %45 = arith.truncf %42 : vector<16x16xf32> to vector<16x16xbf16>
    %c0_18 = arith.constant 0 : index
    %c0_19 = arith.constant 0 : index
    %c0_20 = arith.constant 0 : index
    %46 = vector.load %arg4[%c0_18, %c0_19, %c0_20] : memref<1x16x128xbf16, #tpu.memory_space<vmem>>, vector<1x16x128xbf16>
    %47 = vector.shape_cast %46 : vector<1x16x128xbf16> to vector<16x128xbf16>
    %cst_21 = arith.constant dense<0.000000e+00> : vector<16x128xf32>
    %48 = tpu.matmul %45, %47, %cst_21 {dimension_numbers = #tpu.dot_dimension_numbers<[1], [0], [0], [1], [0, 0, 1, 1], [], []>} : vector<16x16xbf16>, vector<16x128xbf16>, vector<16x128xf32> -> vector<16x128xf32>
    %49 = vector.broadcast %44 : vector<16x1xf32> to vector<16x128xf32>
    %50 = arith.divf %48, %49 : vector<16x128xf32>
    %51 = arith.truncf %50 : vector<16x128xf32> to vector<16x128xbf16>
    %c0_22 = arith.constant 0 : index
    %c0_23 = arith.constant 0 : index
    %c0_24 = arith.constant 0 : index
    %52 = vector.load %arg7[%c0_22, %c0_23, %c0_24] : memref<1x16x128xbf16, #tpu.memory_space<vmem>>, vector<1x16x128xbf16>
    %53 = vector.shape_cast %52 : vector<1x16x128xbf16> to vector<16x128xbf16>
    %54 = vector.shape_cast %51 : vector<16x128xbf16> to vector<1x16x128xbf16>
    tpu.vector_store %arg7[%c0_22, %c0_23, %c0_24], %54 {strides = array<i32>} : memref<1x16x128xbf16, #tpu.memory_space<vmem>>, vector<1x16x128xbf16>,
    return
  }
  func.func @transform_0(%arg0: i32, %arg1: i32) -> (i32, i32, i32) {
    %c0_i32 = arith.constant 0 : i32
    %c0_i32_0 = arith.constant 0 : i32
    return %arg0, %c0_i32, %arg1 : i32, i32, i32
  }
  func.func @transform_1(%arg0: i32, %arg1: i32) -> (i32, i32, i32) {
    %c0_i32 = arith.constant 0 : i32
    %c0_i32_0 = arith.constant 0 : i32
    %c0_i32_1 = arith.constant 0 : i32
    return %c0_i32, %c0_i32_0, %arg1 : i32, i32, i32
  }
  func.func @transform_2(%arg0: i32, %arg1: i32) -> (i32, i32, i32) {
    %c0_i32 = arith.constant 0 : i32
    %c0_i32_0 = arith.constant 0 : i32
    %c0_i32_1 = arith.constant 0 : i32
    return %c0_i32, %c0_i32_0, %arg1 : i32, i32, i32
  }
  func.func @transform_3(%arg0: i32, %arg1: i32) -> (i32, i32) {
    %c0_i32 = arith.constant 0 : i32
    %c0_i32_0 = arith.constant 0 : i32
    %c0_i32_1 = arith.constant 0 : i32
    return %c0_i32, %c0_i32_0 : i32, i32
  }
  func.func @transform_4(%arg0: i32, %arg1: i32) -> (i32, i32) {
    %c0_i32 = arith.constant 0 : i32
    %c0_i32_0 = arith.constant 0 : i32
    %c0_i32_1 = arith.constant 0 : i32
    return %c0_i32, %c0_i32_0 : i32, i32
  }
  func.func @transform_5(%arg0: i32, %arg1: i32) -> (i32, i32, i32) {
    %c0_i32 = arith.constant 0 : i32
    %c0_i32_0 = arith.constant 0 : i32
    return %arg0, %c0_i32, %arg1 : i32, i32, i32
  }
}

module attributes {stable_mosaic.version = 11 : i64} {
  func.func @_norm_swiglu_kernel(%arg0: i32, %arg1: i32, %arg2: memref<32x256xf32, #tpu.memory_space<vmem>>, %arg3: memref<1x256xf32, #tpu.memory_space<vmem>>, %arg4: memref<256x512xbf16, #tpu.memory_space<vmem>>, %arg5: memref<256x512xbf16, #tpu.memory_space<vmem>>, %arg6: memref<32x512xbf16, #tpu.memory_space<vmem>>) attributes {dimension_semantics = [#tpu.dimension_semantics<parallel>, #tpu.dimension_semantics<parallel>], iteration_bounds = array<i64: 1, 1>, scalar_prefetch = 0 : i64, scratch_operands = 0 : i64, tpu.core_type = #tpu.core_type<tc>, window_params = [{transform_indices = @transform_0, window_bounds = array<i64: 32, 256>}, {pipeline_mode = #tpu.pipeline_mode<synchronous>, transform_indices = @transform_1, window_bounds = array<i64: 1, 256>}, {transform_indices = @transform_2, window_bounds = array<i64: 256, 512>}, {transform_indices = @transform_3, window_bounds = array<i64: 256, 512>}, {transform_indices = @transform_4, window_bounds = array<i64: 32, 512>}]} {
    %c0 = arith.constant 0 : index
    %c0_0 = arith.constant 0 : index
    %0 = vector.load %arg2[%c0, %c0_0] : memref<32x256xf32, #tpu.memory_space<vmem>>, vector<32x256xf32>
    %1 = arith.mulf %0, %0 : vector<32x256xf32>
    %cst = arith.constant dense<0.000000e+00> : vector<32xf32>
    %2 = vector.multi_reduction <add>, %1, %cst [1] : vector<32x256xf32> to vector<32xf32>
    %3 = vector.shape_cast %2 : vector<32xf32> to vector<32x1xf32>
    %cst_1 = arith.constant 2.560000e+02 : f32
    %4 = vector.broadcast %cst_1 : f32 to vector<32x1xf32>
    %5 = arith.divf %3, %4 : vector<32x1xf32>
    %cst_2 = arith.constant 9.99999974E-6 : f32
    %6 = vector.broadcast %cst_2 : f32 to vector<32x1xf32>
    %7 = arith.addf %5, %6 : vector<32x1xf32>
    %8 = math.rsqrt %7 : vector<32x1xf32>
    %9 = vector.broadcast %8 : vector<32x1xf32> to vector<32x256xf32>
    %10 = arith.mulf %0, %9 : vector<32x256xf32>
    %c0_3 = arith.constant 0 : index
    %c0_4 = arith.constant 0 : index
    %11 = vector.load %arg3[%c0_3, %c0_4] : memref<1x256xf32, #tpu.memory_space<vmem>>, vector<1x256xf32>
    %12 = vector.broadcast %11 : vector<1x256xf32> to vector<32x256xf32>
    %13 = arith.mulf %10, %12 : vector<32x256xf32>
    %14 = arith.truncf %13 : vector<32x256xf32> to vector<32x256xbf16>
    %c0_5 = arith.constant 0 : index
    %c0_6 = arith.constant 0 : index
    %15 = vector.load %arg4[%c0_5, %c0_6] : memref<256x512xbf16, #tpu.memory_space<vmem>>, vector<256x512xbf16>
    %cst_7 = arith.constant dense<0.000000e+00> : vector<32x512xf32>
    %16 = tpu.matmul %14, %15, %cst_7 {dimension_numbers = #tpu.dot_dimension_numbers<[1], [0], [0], [1], [0, 0, 1, 1], [], []>} : vector<32x256xbf16>, vector<256x512xbf16>, vector<32x512xf32> -> vector<32x512xf32>
    %c0_8 = arith.constant 0 : index
    %c0_9 = arith.constant 0 : index
    %17 = vector.load %arg5[%c0_8, %c0_9] : memref<256x512xbf16, #tpu.memory_space<vmem>>, vector<256x512xbf16>
    %cst_10 = arith.constant dense<0.000000e+00> : vector<32x512xf32>
    %18 = tpu.matmul %14, %17, %cst_10 {dimension_numbers = #tpu.dot_dimension_numbers<[1], [0], [0], [1], [0, 0, 1, 1], [], []>} : vector<32x256xbf16>, vector<256x512xbf16>, vector<32x512xf32> -> vector<32x512xf32>
    %cst_11 = arith.constant 0.000000e+00 : f32
    %19 = vector.broadcast %cst_11 : f32 to vector<32x512xf32>
    %20 = arith.subf %19, %16 : vector<32x512xf32>
    %21 = math.exp %20 : vector<32x512xf32>
    %cst_12 = arith.constant 1.000000e+00 : f32
    %22 = vector.broadcast %cst_12 : f32 to vector<32x512xf32>
    %23 = arith.addf %22, %21 : vector<32x512xf32>
    %cst_13 = arith.constant 1.000000e+00 : f32
    %24 = vector.broadcast %cst_13 : f32 to vector<32x512xf32>
    %25 = arith.divf %24, %23 : vector<32x512xf32>
    %26 = arith.mulf %16, %25 : vector<32x512xf32>
    %27 = arith.mulf %26, %18 : vector<32x512xf32>
    %28 = arith.truncf %27 : vector<32x512xf32> to vector<32x512xbf16>
    %c0_14 = arith.constant 0 : index
    %c0_15 = arith.constant 0 : index
    %29 = vector.load %arg6[%c0_14, %c0_15] : memref<32x512xbf16, #tpu.memory_space<vmem>>, vector<32x512xbf16>
    tpu.vector_store %arg6[%c0_14, %c0_15], %28 {strides = array<i32>} : memref<32x512xbf16, #tpu.memory_space<vmem>>, vector<32x512xbf16>,
    return
  }
  func.func @transform_0(%arg0: i32, %arg1: i32) -> (i32, i32) {
    %c0_i32 = arith.constant 0 : i32
    %c0_i32_0 = arith.constant 0 : i32
    return %arg0, %c0_i32 : i32, i32
  }
  func.func @transform_1(%arg0: i32, %arg1: i32) -> (i32, i32) {
    %c0_i32 = arith.constant 0 : i32
    %c0_i32_0 = arith.constant 0 : i32
    %c0_i32_1 = arith.constant 0 : i32
    return %c0_i32, %c0_i32_0 : i32, i32
  }
  func.func @transform_2(%arg0: i32, %arg1: i32) -> (i32, i32) {
    %c0_i32 = arith.constant 0 : i32
    %c0_i32_0 = arith.constant 0 : i32
    return %c0_i32, %arg1 : i32, i32
  }
  func.func @transform_3(%arg0: i32, %arg1: i32) -> (i32, i32) {
    %c0_i32 = arith.constant 0 : i32
    %c0_i32_0 = arith.constant 0 : i32
    return %c0_i32, %arg1 : i32, i32
  }
  func.func @transform_4(%arg0: i32, %arg1: i32) -> (i32, i32) {
    %c0_i32 = arith.constant 0 : i32
    return %arg0, %arg1 : i32, i32
  }
}

module attributes {stable_mosaic.version = 11 : i64} {
  func.func @kernel(%arg0: i32, %arg1: i32, %arg2: memref<32x512xbf16, #tpu.memory_space<vmem>>, %arg3: memref<512x256xbf16, #tpu.memory_space<vmem>>, %arg4: memref<32x256xf32, #tpu.memory_space<vmem>>, %arg5: memref<32x256xf32, #tpu.memory_space<vmem>>) attributes {dimension_semantics = [#tpu.dimension_semantics<parallel>, #tpu.dimension_semantics<parallel>], iteration_bounds = array<i64: 1, 1>, scalar_prefetch = 0 : i64, scratch_operands = 0 : i64, tpu.core_type = #tpu.core_type<tc>, window_params = [{transform_indices = @transform_0, window_bounds = array<i64: 32, 512>}, {transform_indices = @transform_1, window_bounds = array<i64: 512, 256>}, {transform_indices = @transform_2, window_bounds = array<i64: 32, 256>}, {transform_indices = @transform_3, window_bounds = array<i64: 32, 256>}]} {
    %c0 = arith.constant 0 : index
    %c0_0 = arith.constant 0 : index
    %0 = vector.load %arg2[%c0, %c0_0] : memref<32x512xbf16, #tpu.memory_space<vmem>>, vector<32x512xbf16>
    %c0_1 = arith.constant 0 : index
    %c0_2 = arith.constant 0 : index
    %1 = vector.load %arg3[%c0_1, %c0_2] : memref<512x256xbf16, #tpu.memory_space<vmem>>, vector<512x256xbf16>
    %cst = arith.constant dense<0.000000e+00> : vector<32x256xf32>
    %2 = tpu.matmul %0, %1, %cst {dimension_numbers = #tpu.dot_dimension_numbers<[1], [0], [0], [1], [0, 0, 1, 1], [], []>} : vector<32x512xbf16>, vector<512x256xbf16>, vector<32x256xf32> -> vector<32x256xf32>
    %c0_3 = arith.constant 0 : index
    %c0_4 = arith.constant 0 : index
    %3 = vector.load %arg4[%c0_3, %c0_4] : memref<32x256xf32, #tpu.memory_space<vmem>>, vector<32x256xf32>
    %4 = arith.addf %2, %3 : vector<32x256xf32>
    %c0_5 = arith.constant 0 : index
    %c0_6 = arith.constant 0 : index
    %5 = vector.load %arg5[%c0_5, %c0_6] : memref<32x256xf32, #tpu.memory_space<vmem>>, vector<32x256xf32>
    tpu.vector_store %arg5[%c0_5, %c0_6], %4 {strides = array<i32>} : memref<32x256xf32, #tpu.memory_space<vmem>>, vector<32x256xf32>,
    return
  }
  func.func @transform_0(%arg0: i32, %arg1: i32) -> (i32, i32) {
    %c0_i32 = arith.constant 0 : i32
    %c0_i32_0 = arith.constant 0 : i32
    return %arg0, %c0_i32 : i32, i32
  }
  func.func @transform_1(%arg0: i32, %arg1: i32) -> (i32, i32) {
    %c0_i32 = arith.constant 0 : i32
    %c0_i32_0 = arith.constant 0 : i32
    return %c0_i32, %arg1 : i32, i32
  }
  func.func @transform_2(%arg0: i32, %arg1: i32) -> (i32, i32) {
    %c0_i32 = arith.constant 0 : i32
    return %arg0, %arg1 : i32, i32
  }
  func.func @transform_3(%arg0: i32, %arg1: i32) -> (i32, i32) {
    %c0_i32 = arith.constant 0 : i32
    return %arg0, %arg1 : i32, i32
  }
}

module attributes {stable_mosaic.version = 11 : i64} {
  func.func @kernel(%arg0: i32, %arg1: i32, %arg2: memref<32x256xf32, #tpu.memory_space<vmem>>, %arg3: memref<1x256xf32, #tpu.memory_space<vmem>>, %arg4: memref<256x384xbf16, #tpu.memory_space<vmem>>, %arg5: memref<32x384xbf16, #tpu.memory_space<vmem>>) attributes {dimension_semantics = [#tpu.dimension_semantics<parallel>, #tpu.dimension_semantics<parallel>], iteration_bounds = array<i64: 1, 2>, scalar_prefetch = 0 : i64, scratch_operands = 0 : i64, tpu.core_type = #tpu.core_type<tc>, window_params = [{transform_indices = @transform_0, window_bounds = array<i64: 32, 256>}, {pipeline_mode = #tpu.pipeline_mode<synchronous>, transform_indices = @transform_1, window_bounds = array<i64: 1, 256>}, {transform_indices = @transform_2, window_bounds = array<i64: 256, 384>}, {transform_indices = @transform_3, window_bounds = array<i64: 32, 384>}]} {
    %c0 = arith.constant 0 : index
    %c0_0 = arith.constant 0 : index
    %0 = vector.load %arg2[%c0, %c0_0] : memref<32x256xf32, #tpu.memory_space<vmem>>, vector<32x256xf32>
    %1 = arith.mulf %0, %0 : vector<32x256xf32>
    %cst = arith.constant dense<0.000000e+00> : vector<32xf32>
    %2 = vector.multi_reduction <add>, %1, %cst [1] : vector<32x256xf32> to vector<32xf32>
    %3 = vector.shape_cast %2 : vector<32xf32> to vector<32x1xf32>
    %cst_1 = arith.constant 2.560000e+02 : f32
    %4 = vector.broadcast %cst_1 : f32 to vector<32x1xf32>
    %5 = arith.divf %3, %4 : vector<32x1xf32>
    %cst_2 = arith.constant 9.99999974E-6 : f32
    %6 = vector.broadcast %cst_2 : f32 to vector<32x1xf32>
    %7 = arith.addf %5, %6 : vector<32x1xf32>
    %8 = math.rsqrt %7 : vector<32x1xf32>
    %9 = vector.broadcast %8 : vector<32x1xf32> to vector<32x256xf32>
    %10 = arith.mulf %0, %9 : vector<32x256xf32>
    %c0_3 = arith.constant 0 : index
    %c0_4 = arith.constant 0 : index
    %11 = vector.load %arg3[%c0_3, %c0_4] : memref<1x256xf32, #tpu.memory_space<vmem>>, vector<1x256xf32>
    %12 = vector.broadcast %11 : vector<1x256xf32> to vector<32x256xf32>
    %13 = arith.mulf %10, %12 : vector<32x256xf32>
    %14 = arith.truncf %13 : vector<32x256xf32> to vector<32x256xbf16>
    %c0_5 = arith.constant 0 : index
    %c0_6 = arith.constant 0 : index
    %15 = vector.load %arg4[%c0_5, %c0_6] : memref<256x384xbf16, #tpu.memory_space<vmem>>, vector<256x384xbf16>
    %cst_7 = arith.constant dense<0.000000e+00> : vector<32x384xf32>
    %16 = tpu.matmul %14, %15, %cst_7 {dimension_numbers = #tpu.dot_dimension_numbers<[1], [0], [0], [1], [0, 0, 1, 1], [], []>} : vector<32x256xbf16>, vector<256x384xbf16>, vector<32x384xf32> -> vector<32x384xf32>
    %17 = arith.truncf %16 : vector<32x384xf32> to vector<32x384xbf16>
    %c0_8 = arith.constant 0 : index
    %c0_9 = arith.constant 0 : index
    %18 = vector.load %arg5[%c0_8, %c0_9] : memref<32x384xbf16, #tpu.memory_space<vmem>>, vector<32x384xbf16>
    tpu.vector_store %arg5[%c0_8, %c0_9], %17 {strides = array<i32>} : memref<32x384xbf16, #tpu.memory_space<vmem>>, vector<32x384xbf16>,
    return
  }
  func.func @transform_0(%arg0: i32, %arg1: i32) -> (i32, i32) {
    %c0_i32 = arith.constant 0 : i32
    %c0_i32_0 = arith.constant 0 : i32
    return %arg0, %c0_i32 : i32, i32
  }
  func.func @transform_1(%arg0: i32, %arg1: i32) -> (i32, i32) {
    %c0_i32 = arith.constant 0 : i32
    %c0_i32_0 = arith.constant 0 : i32
    %c0_i32_1 = arith.constant 0 : i32
    return %c0_i32, %c0_i32_0 : i32, i32
  }
  func.func @transform_2(%arg0: i32, %arg1: i32) -> (i32, i32) {
    %c0_i32 = arith.constant 0 : i32
    %c0_i32_0 = arith.constant 0 : i32
    return %c0_i32, %arg1 : i32, i32
  }
  func.func @transform_3(%arg0: i32, %arg1: i32) -> (i32, i32) {
    %c0_i32 = arith.constant 0 : i32
    return %arg0, %arg1 : i32, i32
  }
}

module attributes {stable_mosaic.version = 11 : i64} {
  func.func @kernel(%arg0: i32, %arg1: i32, %arg2: memref<32x256xbf16, #tpu.memory_space<vmem>>, %arg3: memref<256x256xbf16, #tpu.memory_space<vmem>>, %arg4: memref<32x256xf32, #tpu.memory_space<vmem>>, %arg5: memref<32x256xf32, #tpu.memory_space<vmem>>) attributes {dimension_semantics = [#tpu.dimension_semantics<parallel>, #tpu.dimension_semantics<parallel>], iteration_bounds = array<i64: 1, 1>, scalar_prefetch = 0 : i64, scratch_operands = 0 : i64, tpu.core_type = #tpu.core_type<tc>, window_params = [{transform_indices = @transform_0, window_bounds = array<i64: 32, 256>}, {transform_indices = @transform_1, window_bounds = array<i64: 256, 256>}, {transform_indices = @transform_2, window_bounds = array<i64: 32, 256>}, {transform_indices = @transform_3, window_bounds = array<i64: 32, 256>}]} {
    %c0 = arith.constant 0 : index
    %c0_0 = arith.constant 0 : index
    %0 = vector.load %arg2[%c0, %c0_0] : memref<32x256xbf16, #tpu.memory_space<vmem>>, vector<32x256xbf16>
    %c0_1 = arith.constant 0 : index
    %c0_2 = arith.constant 0 : index
    %1 = vector.load %arg3[%c0_1, %c0_2] : memref<256x256xbf16, #tpu.memory_space<vmem>>, vector<256x256xbf16>
    %cst = arith.constant dense<0.000000e+00> : vector<32x256xf32>
    %2 = tpu.matmul %0, %1, %cst {dimension_numbers = #tpu.dot_dimension_numbers<[1], [0], [0], [1], [0, 0, 1, 1], [], []>} : vector<32x256xbf16>, vector<256x256xbf16>, vector<32x256xf32> -> vector<32x256xf32>
    %c0_3 = arith.constant 0 : index
    %c0_4 = arith.constant 0 : index
    %3 = vector.load %arg4[%c0_3, %c0_4] : memref<32x256xf32, #tpu.memory_space<vmem>>, vector<32x256xf32>
    %4 = arith.addf %2, %3 : vector<32x256xf32>
    %c0_5 = arith.constant 0 : index
    %c0_6 = arith.constant 0 : index
    %5 = vector.load %arg5[%c0_5, %c0_6] : memref<32x256xf32, #tpu.memory_space<vmem>>, vector<32x256xf32>
    tpu.vector_store %arg5[%c0_5, %c0_6], %4 {strides = array<i32>} : memref<32x256xf32, #tpu.memory_space<vmem>>, vector<32x256xf32>,
    return
  }
  func.func @transform_0(%arg0: i32, %arg1: i32) -> (i32, i32) {
    %c0_i32 = arith.constant 0 : i32
    %c0_i32_0 = arith.constant 0 : i32
    return %arg0, %c0_i32 : i32, i32
  }
  func.func @transform_1(%arg0: i32, %arg1: i32) -> (i32, i32) {
    %c0_i32 = arith.constant 0 : i32
    %c0_i32_0 = arith.constant 0 : i32
    return %c0_i32, %arg1 : i32, i32
  }
  func.func @transform_2(%arg0: i32, %arg1: i32) -> (i32, i32) {
    %c0_i32 = arith.constant 0 : i32
    return %arg0, %arg1 : i32, i32
  }
  func.func @transform_3(%arg0: i32, %arg1: i32) -> (i32, i32) {
    %c0_i32 = arith.constant 0 : i32
    return %arg0, %arg1 : i32, i32
  }
}

module attributes {stable_mosaic.version = 11 : i64} {
  func.func @kernel(%arg0: i32, %arg1: i32, %arg2: memref<32x256xf32, #tpu.memory_space<vmem>>, %arg3: memref<1x256xf32, #tpu.memory_space<vmem>>, %arg4: memref<256x256xbf16, #tpu.memory_space<vmem>>, %arg5: memref<32x256xf32, #tpu.memory_space<vmem>>) attributes {dimension_semantics = [#tpu.dimension_semantics<parallel>, #tpu.dimension_semantics<parallel>], iteration_bounds = array<i64: 1, 1>, scalar_prefetch = 0 : i64, scratch_operands = 0 : i64, tpu.core_type = #tpu.core_type<tc>, window_params = [{transform_indices = @transform_0, window_bounds = array<i64: 32, 256>}, {pipeline_mode = #tpu.pipeline_mode<synchronous>, transform_indices = @transform_1, window_bounds = array<i64: 1, 256>}, {transform_indices = @transform_2, window_bounds = array<i64: 256, 256>}, {transform_indices = @transform_3, window_bounds = array<i64: 32, 256>}]} {
    %c0 = arith.constant 0 : index
    %c0_0 = arith.constant 0 : index
    %0 = vector.load %arg2[%c0, %c0_0] : memref<32x256xf32, #tpu.memory_space<vmem>>, vector<32x256xf32>
    %1 = arith.mulf %0, %0 : vector<32x256xf32>
    %cst = arith.constant dense<0.000000e+00> : vector<32xf32>
    %2 = vector.multi_reduction <add>, %1, %cst [1] : vector<32x256xf32> to vector<32xf32>
    %3 = vector.shape_cast %2 : vector<32xf32> to vector<32x1xf32>
    %cst_1 = arith.constant 2.560000e+02 : f32
    %4 = vector.broadcast %cst_1 : f32 to vector<32x1xf32>
    %5 = arith.divf %3, %4 : vector<32x1xf32>
    %cst_2 = arith.constant 9.99999974E-6 : f32
    %6 = vector.broadcast %cst_2 : f32 to vector<32x1xf32>
    %7 = arith.addf %5, %6 : vector<32x1xf32>
    %8 = math.rsqrt %7 : vector<32x1xf32>
    %9 = vector.broadcast %8 : vector<32x1xf32> to vector<32x256xf32>
    %10 = arith.mulf %0, %9 : vector<32x256xf32>
    %c0_3 = arith.constant 0 : index
    %c0_4 = arith.constant 0 : index
    %11 = vector.load %arg3[%c0_3, %c0_4] : memref<1x256xf32, #tpu.memory_space<vmem>>, vector<1x256xf32>
    %12 = vector.broadcast %11 : vector<1x256xf32> to vector<32x256xf32>
    %13 = arith.mulf %10, %12 : vector<32x256xf32>
    %14 = arith.truncf %13 : vector<32x256xf32> to vector<32x256xbf16>
    %c0_5 = arith.constant 0 : index
    %c0_6 = arith.constant 0 : index
    %15 = vector.load %arg4[%c0_5, %c0_6] : memref<256x256xbf16, #tpu.memory_space<vmem>>, vector<256x256xbf16>
    %cst_7 = arith.constant dense<0.000000e+00> : vector<32x256xf32>
    %16 = tpu.matmul %14, %15, %cst_7 {dimension_numbers = #tpu.dot_dimension_numbers<[1], [0], [0], [1], [0, 0, 1, 1], [], []>} : vector<32x256xbf16>, vector<256x256xbf16>, vector<32x256xf32> -> vector<32x256xf32>
    %c0_8 = arith.constant 0 : index
    %c0_9 = arith.constant 0 : index
    %17 = vector.load %arg5[%c0_8, %c0_9] : memref<32x256xf32, #tpu.memory_space<vmem>>, vector<32x256xf32>
    tpu.vector_store %arg5[%c0_8, %c0_9], %16 {strides = array<i32>} : memref<32x256xf32, #tpu.memory_space<vmem>>, vector<32x256xf32>,
    return
  }
  func.func @transform_0(%arg0: i32, %arg1: i32) -> (i32, i32) {
    %c0_i32 = arith.constant 0 : i32
    %c0_i32_0 = arith.constant 0 : i32
    return %arg0, %c0_i32 : i32, i32
  }
  func.func @transform_1(%arg0: i32, %arg1: i32) -> (i32, i32) {
    %c0_i32 = arith.constant 0 : i32
    %c0_i32_0 = arith.constant 0 : i32
    %c0_i32_1 = arith.constant 0 : i32
    return %c0_i32, %c0_i32_0 : i32, i32
  }
  func.func @transform_2(%arg0: i32, %arg1: i32) -> (i32, i32) {
    %c0_i32 = arith.constant 0 : i32
    %c0_i32_0 = arith.constant 0 : i32
    return %c0_i32, %arg1 : i32, i32
  }
  func.func @transform_3(%arg0: i32, %arg1: i32) -> (i32, i32) {
    %c0_i32 = arith.constant 0 : i32
    return %arg0, %arg1 : i32, i32
  }
}

</mosaic_0001>

<llo_original>
// kernel: decoder_forward.22
$region0: #{decoder_forward.22}
  #allocation0 [shape = 'u32[]', space=smem, size = 0x4, offset = 0x4, fixed_abs, tag = 'smem constant byte address 0x4 - core index']
  #allocation1 [shape = 'u32[72,128]{1,0:T(1,128)}', space=vmem, size = 0x9000, scoped, tag = 'internal scratch']
  %s0 = inlined_call_operand.vmem [shape: f32[32,256], index: 0, kind: input, shape index: {}]
  %s1 = inlined_call_operand.vmem [shape: f32[1,256], index: 1, kind: input, shape index: {}]
  %s2 = inlined_call_operand.hbm [shape: bf16[256,256], index: 2, kind: input, shape index: {}]
  %s3 = inlined_call_operand.vmem [shape: bf16[32,256], index: 3, kind: output, shape index: {}]
  %s4 = sld [smem:[#allocation0]]
  $region26: #{decoder_forward.22} parent=0
    _
  %s6 = ssub.s32 1, %s4
  %s7 = scalar_select 0, %s6, %s4
  $region1: #{decoder_forward.22} parent=0
    #allocation2 [shape = 'u8[131072]{0}', space=vmem, size = 0x20000, scoped, tag = 'input window, operand 2, single buffered']
    #allocation3 [shape = 's32[1]{0}', space=sflag, size = 0x4, scoped, tag = 'scoped memory for decoder_forward.22']
    %8 = vsyncpa [#allocation3], 0
    // Predicated region
    $region2: #{decoder_forward.22} parent=1 // pred_check
      _
    $region3: #{decoder_forward.22} parent=1 // pred_check_branch
      %10 = sbr.rel (0) target = $region5
    $region4: #{decoder_forward.22} parent=1 // pred_region
      _
    $region5: #{decoder_forward.22} parent=1 // pred_fallthru
      _
    // Predicated region
    $region6: #{decoder_forward.22} parent=1 // pred_check
      _
    $region7: #{decoder_forward.22} parent=1 // pred_check_branch
      %12 = sbr.rel (0) target = $region9
    $region8: #{decoder_forward.22} parent=1 // pred_region
      _
    $region9: #{decoder_forward.22} parent=1 // pred_fallthru
      _
    // Predicated region
    $region10: #{decoder_forward.22} parent=1 // pred_check
      _
    $region11: #{decoder_forward.22} parent=1 // pred_check_branch
      %14 = sbr.rel (0) target = $region13
    $region12: #{decoder_forward.22} parent=1 // pred_region
      %16 = vsyncadd [#allocation3], 0
      %s17 = sshll.u32 %s2, 4
      %s18 = int_to_ptr.hbm [resolvable:$true] %s17
      %s19 = sshll.u32 [#allocation2], 4
      %s20 = int_to_ptr.vmem [resolvable:$true] %s19
      %25 = dma.hbm_to_vmem [thread:$0]  %s18, 4096, %s20, [#allocation3], 128, 128, 8
    $region13: #{decoder_forward.22} parent=1 // pred_fallthru
      _
    // Predicated region
    $region14: #{decoder_forward.22} parent=1 // pred_check
      _
    $region15: #{decoder_forward.22} parent=1 // pred_check_branch
      %27 = sbr.rel (0) target = $region17
    $region16: #{decoder_forward.22} parent=1 // pred_region
      %29 = dma.done [#allocation3], 4096
    $region17: #{decoder_forward.22} parent=1 // pred_fallthru
      _
    %v30 = vld [vmem:[%s0] sm:$0xff]
    %v31 = vld [vmem:[%s0 + $0x8] sm:$0xff]
    %v32 = vld [vmem:[%s0 + $0x10] sm:$0xff]
    %v33 = vld [vmem:[%s0 + $0x18] sm:$0xff]
    %v34 = vld [vmem:[%s0 + $0x20] sm:$0xff]
    %v35 = vld [vmem:[%s0 + $0x28] sm:$0xff]
    %v36 = vld [vmem:[%s0 + $0x30] sm:$0xff]
    %v37 = vld [vmem:[%s0 + $0x38] sm:$0xff]
    %v38 = vmul.f32 %v30, %v30
    %v39 = vmul.f32 %v31, %v31
    %v40 = vmul.f32 %v32, %v32
    %v41 = vmul.f32 %v33, %v33
    %v42 = vmul.f32 %v34, %v34
    %v43 = vmul.f32 %v35, %v35
    %v44 = vmul.f32 %v36, %v36
    %v45 = vmul.f32 %v37, %v37
    %v46 = vadd.f32 %v38, %v39
    %47 = vadd.xlane.f32.xlu0 %v46
    %v48 = vpop.xlane.xlu0 %47
    %v49 = vadd.f32 %v40, %v41
    %50 = vadd.xlane.f32.xlu0 %v49
    %v51 = vpop.xlane.xlu0 %50
    %v52 = vadd.f32 %v42, %v43
    %53 = vadd.xlane.f32.xlu0 %v52
    %v54 = vpop.xlane.xlu0 %53
    %v55 = vadd.f32 %v44, %v45
    %56 = vadd.xlane.f32.xlu0 %v55
    %v57 = vpop.xlane.xlu0 %56
    %v58 = vrcp.pop 256.0
    %v59 = vmul.f32 256.0, %v58
    %v60 = vsub.f32 1.0, %v59
    %v61 = vmul.f32 %v58, %v60
    %v62 = vadd.f32 %v58, %v61
    %vm63 = vweird.f32 %v58
    %v64 = vsel %vm63, %v58, %v62
    %v65 = vmul.f32 %v48, %v64
    %v66 = vmul.f32 %v51, %v64
    %v67 = vmul.f32 %v54, %v64
    %v68 = vmul.f32 %v57, %v64
    %v69 = vadd.f32 %v65, 1e-05
    %v70 = vadd.f32 %v66, 1e-05
    %v71 = vadd.f32 %v67, 1e-05
    %v72 = vadd.f32 %v68, 1e-05
    %v73 = vrsqrt.pop %v69
    %v74 = vmul.f32 %v73, %v69
    %v75 = vmul.f32 %v74, %v73
    %v76 = vmul.f32 0.5, %v75
    %v77 = vsub.f32 1.5, %v76
    %v78 = vmul.f32 %v73, %v77
    %vm79 = vweird.f32 %v69
    %vm80 = vweird.f32 %v73
    %vm81 = vmor %vm79, %vm80
    %v82 = vsel %vm81, %v73, %v78
    %v83 = vrsqrt.pop %v70
    %v84 = vmul.f32 %v83, %v70
    %v85 = vmul.f32 %v84, %v83
    %v86 = vmul.f32 0.5, %v85
    %v87 = vsub.f32 1.5, %v86
    %v88 = vmul.f32 %v83, %v87
    %vm89 = vweird.f32 %v70
    %vm90 = vweird.f32 %v83
    %vm91 = vmor %vm89, %vm90
    %v92 = vsel %vm91, %v83, %v88
    %v93 = vrsqrt.pop %v71
    %v94 = vmul.f32 %v93, %v71
    %v95 = vmul.f32 %v94, %v93
    %v96 = vmul.f32 0.5, %v95
    %v97 = vsub.f32 1.5, %v96
    %v98 = vmul.f32 %v93, %v97
    %vm99 = vweird.f32 %v71
    %vm100 = vweird.f32 %v93
    %vm101 = vmor %vm99, %vm100
    %v102 = vsel %vm101, %v93, %v98
    %v103 = vrsqrt.pop %v72
    %v104 = vmul.f32 %v103, %v72
    %v105 = vmul.f32 %v104, %v103
    %v106 = vmul.f32 0.5, %v105
    %v107 = vsub.f32 1.5, %v106
    %v108 = vmul.f32 %v103, %v107
    %vm109 = vweird.f32 %v72
    %vm110 = vweird.f32 %v103
    %vm111 = vmor %vm109, %vm110
    %v112 = vsel %vm111, %v103, %v108
    %v113 = vmul.f32 %v30, %v82
    %v114 = vmul.f32 %v31, %v82
    %v115 = vmul.f32 %v32, %v92
    %v116 = vmul.f32 %v33, %v92
    %v117 = vmul.f32 %v34, %v102
    %v118 = vmul.f32 %v35, %v102
    %v119 = vmul.f32 %v36, %v112
    %v120 = vmul.f32 %v37, %v112
    %v121 = vld [vmem:[%s1] sm:$0x3]
    %v123 = vperm.slane %v121, 0
    %v124 = vperm.slane %v121, 1
    %v127 = vmul.f32 %v113, %v123
    %v128 = vmul.f32 %v114, %v124
    %v129 = vmul.f32 %v115, %v123
    %v130 = vmul.f32 %v116, %v124
    %v131 = vmul.f32 %v117, %v123
    %v132 = vmul.f32 %v118, %v124
    %v133 = vmul.f32 %v119, %v123
    %v134 = vmul.f32 %v120, %v124
    %v135 = vpack.c.bf16 %v129, %v127
    %v136 = vpack.c.bf16 %v130, %v128
    %v137 = vpack.c.bf16 %v133, %v131
    %v138 = vpack.c.bf16 %v134, %v132
    %v139 = vld [vmem:[#allocation2] sm:$0xff]
    %v140 = vld [vmem:[#allocation2 + $0x8] sm:$0xff]
    %v141 = vld [vmem:[#allocation2 + $0x10] sm:$0xff]
    %v142 = vld [vmem:[#allocation2 + $0x18] sm:$0xff]
    %v143 = vld [vmem:[#allocation2 + $0x20] sm:$0xff]
    %v144 = vld [vmem:[#allocation2 + $0x28] sm:$0xff]
    %v145 = vld [vmem:[#allocation2 + $0x30] sm:$0xff]
    %v146 = vld [vmem:[#allocation2 + $0x38] sm:$0xff]
    %v147 = vld [vmem:[#allocation2 + $0x40] sm:$0xff]
    %v148 = vld [vmem:[#allocation2 + $0x48] sm:$0xff]
    %v149 = vld [vmem:[#allocation2 + $0x50] sm:$0xff]
    %v150 = vld [vmem:[#allocation2 + $0x58] sm:$0xff]
    %v151 = vld [vmem:[#allocation2 + $0x60] sm:$0xff]
    %v152 = vld [vmem:[#allocation2 + $0x68] sm:$0xff]
    %v153 = vld [vmem:[#allocation2 + $0x70] sm:$0xff]
    %v154 = vld [vmem:[#allocation2 + $0x78] sm:$0xff]
    %v155 = vld [vmem:[#allocation2 + $0x80] sm:$0xff]
    %v156 = vld [vmem:[#allocation2 + $0x88] sm:$0xff]
    %v157 = vld [vmem:[#allocation2 + $0x90] sm:$0xff]
    %v158 = vld [vmem:[#allocation2 + $0x98] sm:$0xff]
    %v159 = vld [vmem:[#allocation2 + $0xa0] sm:$0xff]
    %v160 = vld [vmem:[#allocation2 + $0xa8] sm:$0xff]
    %v161 = vld [vmem:[#allocation2 + $0xb0] sm:$0xff]
    %v162 = vld [vmem:[#allocation2 + $0xb8] sm:$0xff]
    %v163 = vld [vmem:[#allocation2 + $0xc0] sm:$0xff]
    %v164 = vld [vmem:[#allocation2 + $0xc8] sm:$0xff]
    %v165 = vld [vmem:[#allocation2 + $0xd0] sm:$0xff]
    %v166 = vld [vmem:[#allocation2 + $0xd8] sm:$0xff]
    %v167 = vld [vmem:[#allocation2 + $0xe0] sm:$0xff]
    %v168 = vld [vmem:[#allocation2 + $0xe8] sm:$0xff]
    %v169 = vld [vmem:[#allocation2 + $0xf0] sm:$0xff]
    %v170 = vld [vmem:[#allocation2 + $0xf8] sm:$0xff]
    %v203 = vunpack.c.l.b16 %v139
    %v204 = vunpack.c.h.b16 %v139
    %v205 = vunpack.c.l.b16 %v140
    %v206 = vunpack.c.h.b16 %v140
    %v207 = vunpack.c.l.b16 %v141
    %v208 = vunpack.c.h.b16 %v141
    %v209 = vunpack.c.l.b16 %v142
    %v210 = vunpack.c.h.b16 %v142
    %v211 = vunpack.c.l.b16 %v143
    %v212 = vunpack.c.h.b16 %v143
    %v213 = vunpack.c.l.b16 %v144
    %v214 = vunpack.c.h.b16 %v144
    %v215 = vunpack.c.l.b16 %v145
    %v216 = vunpack.c.h.b16 %v145
    %v217 = vunpack.c.l.b16 %v146
    %v218 = vunpack.c.h.b16 %v146
    %v219 = vunpack.c.l.b16 %v147
    %v220 = vunpack.c.h.b16 %v147
    %v221 = vunpack.c.l.b16 %v148
    %v222 = vunpack.c.h.b16 %v148
    %v223 = vunpack.c.l.b16 %v149
    %v224 = vunpack.c.h.b16 %v149
    %v225 = vunpack.c.l.b16 %v150
    %v226 = vunpack.c.h.b16 %v150
    %v227 = vunpack.c.l.b16 %v151
    %v228 = vunpack.c.h.b16 %v151
    %v229 = vunpack.c.l.b16 %v152
    %v230 = vunpack.c.h.b16 %v152
    %v231 = vunpack.c.l.b16 %v153
    %v232 = vunpack.c.h.b16 %v153
    %v233 = vunpack.c.l.b16 %v154
    %v234 = vunpack.c.h.b16 %v154
    %v235 = vunpack.c.l.b16 %v155
    %v236 = vunpack.c.h.b16 %v155
    %v237 = vunpack.c.l.b16 %v156
    %v238 = vunpack.c.h.b16 %v156
    %v239 = vunpack.c.l.b16 %v157
    %v240 = vunpack.c.h.b16 %v157
    %v241 = vunpack.c.l.b16 %v158
    %v242 = vunpack.c.h.b16 %v158
    %v243 = vunpack.c.l.b16 %v159
    %v244 = vunpack.c.h.b16 %v159
    %v245 = vunpack.c.l.b16 %v160
    %v246 = vunpack.c.h.b16 %v160
    %v247 = vunpack.c.l.b16 %v161
    %v248 = vunpack.c.h.b16 %v161
    %v249 = vunpack.c.l.b16 %v162
    %v250 = vunpack.c.h.b16 %v162
    %v251 = vunpack.c.l.b16 %v163
    %v252 = vunpack.c.h.b16 %v163
    %v253 = vunpack.c.l.b16 %v164
    %v254 = vunpack.c.h.b16 %v164
    %v255 = vunpack.c.l.b16 %v165
    %v256 = vunpack.c.h.b16 %v165
    %v257 = vunpack.c.l.b16 %v166
    %v258 = vunpack.c.h.b16 %v166
    %v259 = vunpack.c.l.b16 %v167
    %v260 = vunpack.c.h.b16 %v167
    %v261 = vunpack.c.l.b16 %v168
    %v262 = vunpack.c.h.b16 %v168
    %v263 = vunpack.c.l.b16 %v169
    %v264 = vunpack.c.h.b16 %v169
    %v265 = vunpack.c.l.b16 %v170
    %v266 = vunpack.c.h.b16 %v170
    %v267 = vpack.c.b16 %v205, %v203
    %v268 = vpack.c.b16 %v206, %v204
    %v269 = vpack.c.b16 %v209, %v207
    %v270 = vpack.c.b16 %v210, %v208
    %v271 = vpack.c.b16 %v213, %v211
    %v272 = vpack.c.b16 %v214, %v212
    %v273 = vpack.c.b16 %v217, %v215
    %v274 = vpack.c.b16 %v218, %v216
    %v275 = vpack.c.b16 %v221, %v219
    %v276 = vpack.c.b16 %v222, %v220
    %v277 = vpack.c.b16 %v225, %v223
    %v278 = vpack.c.b16 %v226, %v224
    %v279 = vpack.c.b16 %v229, %v227
    %v280 = vpack.c.b16 %v230, %v228
    %v281 = vpack.c.b16 %v233, %v231
    %v282 = vpack.c.b16 %v234, %v232
    %v283 = vpack.c.b16 %v237, %v235
    %v284 = vpack.c.b16 %v238, %v236
    %v285 = vpack.c.b16 %v241, %v239
    %v286 = vpack.c.b16 %v242, %v240
    %v287 = vpack.c.b16 %v245, %v243
    %v288 = vpack.c.b16 %v246, %v244
    %v289 = vpack.c.b16 %v249, %v247
    %v290 = vpack.c.b16 %v250, %v248
    %v291 = vpack.c.b16 %v253, %v251
    %v292 = vpack.c.b16 %v254, %v252
    %v293 = vpack.c.b16 %v257, %v255
    %v294 = vpack.c.b16 %v258, %v256
    %v295 = vpack.c.b16 %v261, %v259
    %v296 = vpack.c.b16 %v262, %v260
    %v297 = vpack.c.b16 %v265, %v263
    %v298 = vpack.c.b16 %v266, %v264
    %331 = vmatpush.bf16.msra.mxu0 %v281
    %332 = vmatpush.bf16.msra.mxu0 %v279
    %333 = vmatpush.bf16.msra.mxu0 %v277
    %334 = vmatpush.bf16.msra.mxu0 %v275
    %335 = vmatpush.bf16.msra.mxu0 %v273
    %336 = vmatpush.bf16.msra.mxu0 %v271
    %337 = vmatpush.bf16.msra.mxu0 %v269
    %338 = vmatpush.bf16.msra.mxu0 %v267
    %339 = vmatmul.bf16.gmra.mxu0 %v135
    %v340 = vpop.f32.mrf.mxu0
    %v341 = vadd.f32 0.0, %v340
    %v342 = vpop.f32.mrf.mxu0
    %v343 = vadd.f32 0.0, %v342
    %344 = vmatmul.bf16.gmra.mxu0 %v137
    %v345 = vpop.f32.mrf.mxu0
    %v346 = vadd.f32 0.0, %v345
    %v347 = vpop.f32.mrf.mxu0
    %v348 = vadd.f32 0.0, %v347
    %349 = vdwg.mxu0
    %350 = vmatpush.bf16.msra.mxu0 %v297
    %351 = vmatpush.bf16.msra.mxu0 %v295
    %352 = vmatpush.bf16.msra.mxu0 %v293
    %353 = vmatpush.bf16.msra.mxu0 %v291
    %354 = vmatpush.bf16.msra.mxu0 %v289
    %355 = vmatpush.bf16.msra.mxu0 %v287
    %356 = vmatpush.bf16.msra.mxu0 %v285
    %357 = vmatpush.bf16.msra.mxu0 %v283
    %358 = vmatmul.bf16.gmra.mxu0 %v136
    %v359 = vpop.f32.mrf.mxu0
    %v360 = vadd.f32 %v341, %v359
    %v361 = vpop.f32.mrf.mxu0
    %v362 = vadd.f32 %v343, %v361
    %363 = vmatmul.bf16.gmra.mxu0 %v138
    %v364 = vpop.f32.mrf.mxu0
    %v365 = vadd.f32 %v346, %v364
    %v366 = vpop.f32.mrf.mxu0
    %v367 = vadd.f32 %v348, %v366
    %368 = vdwg.mxu0
    %369 = vmatpush.bf16.msra.mxu0 %v282
    %370 = vmatpush.bf16.msra.mxu0 %v280
    %371 = vmatpush.bf16.msra.mxu0 %v278
    %372 = vmatpush.bf16.msra.mxu0 %v276
    %373 = vmatpush.bf16.msra.mxu0 %v274
    %374 = vmatpush.bf16.msra.mxu0 %v272
    %375 = vmatpush.bf16.msra.mxu0 %v270
    %376 = vmatpush.bf16.msra.mxu0 %v268
    %377 = vmatmul.bf16.gmra.mxu0 %v135
    %v378 = vpop.f32.mrf.mxu0
    %v379 = vadd.f32 0.0, %v378
    %v380 = vpop.f32.mrf.mxu0
    %v381 = vadd.f32 0.0, %v380
    %382 = vmatmul.bf16.gmra.mxu0 %v137
    %v383 = vpop.f32.mrf.mxu0
    %v384 = vadd.f32 0.0, %v383
    %v385 = vpop.f32.mrf.mxu0
    %v386 = vadd.f32 0.0, %v385
    %387 = vdwg.mxu0
    %388 = vmatpush.bf16.msra.mxu0 %v298
    %389 = vmatpush.bf16.msra.mxu0 %v296
    %390 = vmatpush.bf16.msra.mxu0 %v294
    %391 = vmatpush.bf16.msra.mxu0 %v292
    %392 = vmatpush.bf16.msra.mxu0 %v290
    %393 = vmatpush.bf16.msra.mxu0 %v288
    %394 = vmatpush.bf16.msra.mxu0 %v286
    %395 = vmatpush.bf16.msra.mxu0 %v284
    %396 = vmatmul.bf16.gmra.mxu0 %v136
    %v397 = vpop.f32.mrf.mxu0
    %v398 = vadd.f32 %v379, %v397
    %v399 = vpop.f32.mrf.mxu0
    %v400 = vadd.f32 %v381, %v399
    %401 = vmatmul.bf16.gmra.mxu0 %v138
    %v402 = vpop.f32.mrf.mxu0
    %v403 = vadd.f32 %v384, %v402
    %v404 = vpop.f32.mrf.mxu0
    %v405 = vadd.f32 %v386, %v404
    %406 = vdwg.mxu0
    %v407 = vpack.c.bf16 %v398, %v360
    %v408 = vpack.c.bf16 %v400, %v362
    %v409 = vpack.c.bf16 %v403, %v365
    %v410 = vpack.c.bf16 %v405, %v367
    %411 = vst [vmem:[%s3] sm:$0xff] %v407
    %412 = vst [vmem:[%s3 + $0x8] sm:$0xff] %v408
    %413 = vst [vmem:[%s3 + $0x10] sm:$0xff] %v409
    %414 = vst [vmem:[%s3 + $0x18] sm:$0xff] %v410
    // Predicated region
    $region18: #{decoder_forward.22} parent=1 // pred_check
      _
    $region19: #{decoder_forward.22} parent=1 // pred_check_branch
      %416 = sbr.rel (0) target = $region21
    $region20: #{decoder_forward.22} parent=1 // pred_region
      _
    $region21: #{decoder_forward.22} parent=1 // pred_fallthru
      _
    // Predicated region
    $region22: #{decoder_forward.22} parent=1 // pred_check
      _
    $region23: #{decoder_forward.22} parent=1 // pred_check_branch
      %418 = sbr.rel (0) target = $region25
    $region24: #{decoder_forward.22} parent=1 // pred_region
      _
    $region25: #{decoder_forward.22} parent=1 // pred_fallthru
      _
    %419 = vsyncpa [#allocation3], 1

// kernel: decoder_forward.20
$region0: #{decoder_forward.20}
  #allocation0 [shape = 'u32[]', space=smem, size = 0x4, offset = 0x4, fixed_abs, tag = 'smem constant byte address 0x4 - core index']
  #allocation1 [shape = 'u32[72,128]{1,0:T(1,128)}', space=vmem, size = 0x9000, scoped, tag = 'internal scratch']
  %s0 = inlined_call_operand.vmem [shape: bf16[2,16,256], index: 0, kind: input, shape index: {}]
  %s1 = inlined_call_operand.vmem [shape: bf16[2,16,256], index: 1, kind: input, shape index: {}]
  %s2 = inlined_call_operand.vmem [shape: bf16[2,16,256], index: 2, kind: input, shape index: {}]
  %s3 = inlined_call_operand.vmem [shape: f32[16,256], index: 3, kind: input, shape index: {}, may-alias: {3,4}]
  %s4 = inlined_call_operand.vmem [shape: f32[16,256], index: 4, kind: input, shape index: {}, may-alias: {3,4}]
  %s5 = inlined_call_operand.vmem [shape: bf16[2,16,256], index: 5, kind: output, shape index: {}]
  %s6 = sld [smem:[#allocation0]]
  $region213: #{decoder_forward.20} parent=0
    _
  %s8 = ssub.s32 1, %s6
  %s9 = scalar_select 0, %s8, %s6
  $region1: #{decoder_forward.20} parent=0
    #allocation2 [shape = 'u8[8192]{0}', space=vmem, size = 0x2000, scoped, tag = 'input window, operand 0']
    #allocation3 [shape = 'u8[8192]{0}', space=vmem, size = 0x2000, scoped, tag = 'input window, operand 1']
    #allocation4 [shape = 'u8[8192]{0}', space=vmem, size = 0x2000, scoped, tag = 'input window, operand 2']
    #allocation5 [shape = 'u8[8192]{0}', space=vmem, size = 0x2000, scoped, tag = 'output window, operand 0']
    loop: start=0, step=1, limit=6
    $region2: #{decoder_forward.20} parent=1 // loop_pre_header
      _
    $region3: #{decoder_forward.20} parent=1 // loop_header
      %s11 = sphi 0, %s15
      %p12 = scmp.ge.s32.totalorder %s11, 6
      %s18 = sphi 0, %s30
      %s19 = sphi 0, %s26
      %s20 = sphi 0, %s18
      %s21 = sphi 0, %s19
      %s22 = sphi 0, %s20
      %s23 = sphi 0, %s21
      %s35 = sphi 0, %s37
      %s38 = sphi 0, %s35
      %s39 = sphi 0, %s38
      %s55 = sphi 0, %s39
      %s63 = sphi 0, %s65
      %s66 = sphi 0, %s63
      %s67 = sphi 0, %s66
      %s83 = sphi 0, %s67
      %s91 = sphi 0, %s93
      %s94 = sphi 0, %s91
      %s95 = sphi 0, %s94
      %s111 = sphi 0, %s95
      %s115 = sphi 0, %s115
      %s117 = sphi 0, %s115
      %s118 = sphi 0, %s117
      %s132 = sphi 0, %s118
      %s136 = sphi 0, %s136
      %s138 = sphi 0, %s136
      %s139 = sphi 0, %s138
      %s153 = sphi 0, %s139
      %s161 = sphi 0, %s163
      %s164 = sphi 0, %s161
      %s165 = sphi 0, %s164
      %s181 = sphi 0, %s165
    $region4: #{decoder_forward.20} parent=1 // loop_header_branch
      %14 = sbr.rel (%p12) target = $region8
    $region5: #{decoder_forward.20} parent=1 // loop_body
      %s16 = ssub.s32 %s11, 1
      %s17 = ssub.s32 %s11, 2
      %s24 = sadd.s32 1, %s19
      %p25 = scmp.ge.s32.totalorder %s24, 2
      %s26 = scalar_select %p25, 0, %s24
      %s27 = sadd.s32 1, %s18
      %s28 = scalar_select %p25, %s27, %s18
      %p29 = scmp.ge.s32.totalorder %s28, 2
      %s30 = scalar_select %p29, 0, %s28
      %s31 = ssub.s32 %s18, %s30
      %s32 = ssub.s32 %s19, %s26
      %s33 = sor.u32 %s31, %s32
      %p34 = scmp.eq.s32.totalorder %s33, 0
      %s36 = sadd.s32 %s35, 1
      %s37 = scalar_select %p34, %s35, %s36
      %p40 = pneg %p34
      %p41 = scmp.eq.s32.totalorder %s11, 3
      %p42 = por %p40, %p41
      %p43 = scmp.ne.s32.totalorder %s35, %s38
      %p44 = scmp.eq.s32.totalorder %s11, 0
      %p45 = por %p43, %p44
      %p46 = scmp.ne.s32.totalorder %s35, %s38
      %p47 = scmp.eq.s32.totalorder %s16, 3
      %p48 = por %p46, %p47
      %p49 = scmp.ne.s32.totalorder %s38, %s39
      %p50 = scmp.eq.s32.totalorder %s16, 0
      %p51 = por %p49, %p50
      %p52 = scmp.ne.s32.totalorder %s38, %s39
      %p53 = scmp.eq.s32.totalorder %s17, 3
      %p54 = por %p52, %p53
      %p56 = scmp.ne.s32.totalorder %s39, %s55
      %p57 = scmp.eq.s32.totalorder %s17, 0
      %p58 = por %p56, %p57
      %s59 = ssub.s32 %s18, %s30
      %s60 = ssub.s32 %s19, %s26
      %s61 = sor.u32 %s59, %s60
      %p62 = scmp.eq.s32.totalorder %s61, 0
      %s64 = sadd.s32 %s63, 1
      %s65 = scalar_select %p62, %s63, %s64
      %p68 = pneg %p62
      %p69 = scmp.eq.s32.totalorder %s11, 3
      %p70 = por %p68, %p69
      %p71 = scmp.ne.s32.totalorder %s63, %s66
      %p72 = scmp.eq.s32.totalorder %s11, 0
      %p73 = por %p71, %p72
      %p74 = scmp.ne.s32.totalorder %s63, %s66
      %p75 = scmp.eq.s32.totalorder %s16, 3
      %p76 = por %p74, %p75
      %p77 = scmp.ne.s32.totalorder %s66, %s67
      %p78 = scmp.eq.s32.totalorder %s16, 0
      %p79 = por %p77, %p78
      %p80 = scmp.ne.s32.totalorder %s66, %s67
      %p81 = scmp.eq.s32.totalorder %s17, 3
      %p82 = por %p80, %p81
      %p84 = scmp.ne.s32.totalorder %s67, %s83
      %p85 = scmp.eq.s32.totalorder %s17, 0
      %p86 = por %p84, %p85
      %s87 = ssub.s32 %s18, %s30
      %s88 = ssub.s32 %s19, %s26
      %s89 = sor.u32 %s87, %s88
      %p90 = scmp.eq.s32.totalorder %s89, 0
      %s92 = sadd.s32 %s91, 1
      %s93 = scalar_select %p90, %s91, %s92
      %p96 = pneg %p90
      %p97 = scmp.eq.s32.totalorder %s11, 3
      %p98 = por %p96, %p97
      %p99 = scmp.ne.s32.totalorder %s91, %s94
      %p100 = scmp.eq.s32.totalorder %s11, 0
      %p101 = por %p99, %p100
      %p102 = scmp.ne.s32.totalorder %s91, %s94
      %p103 = scmp.eq.s32.totalorder %s16, 3
      %p104 = por %p102, %p103
      %p105 = scmp.ne.s32.totalorder %s94, %s95
      %p106 = scmp.eq.s32.totalorder %s16, 0
      %p107 = por %p105, %p106
      %p108 = scmp.ne.s32.totalorder %s94, %s95
      %p109 = scmp.eq.s32.totalorder %s17, 3
      %p110 = por %p108, %p109
      %p112 = scmp.ne.s32.totalorder %s95, %s111
      %p113 = scmp.eq.s32.totalorder %s17, 0
      %p114 = por %p112, %p113
      %s116 = sadd.s32 %s115, 1
      %p119 = scmp.eq.s32.totalorder %s11, 3
      %p120 = scmp.ne.s32.totalorder %s115, %s117
      %p121 = scmp.eq.s32.totalorder %s11, 0
      %p122 = por %p120, %p121
      %p123 = scmp.ne.s32.totalorder %s115, %s117
      %p124 = scmp.eq.s32.totalorder %s16, 3
      %p125 = por %p123, %p124
      %p126 = scmp.ne.s32.totalorder %s117, %s118
      %p127 = scmp.eq.s32.totalorder %s16, 0
      %p128 = por %p126, %p127
      %p129 = scmp.ne.s32.totalorder %s117, %s118
      %p130 = scmp.eq.s32.totalorder %s17, 3
      %p131 = por %p129, %p130
      %p133 = scmp.ne.s32.totalorder %s118, %s132
      %p134 = scmp.eq.s32.totalorder %s17, 0
      %p135 = por %p133, %p134
      %s137 = sadd.s32 %s136, 1
      %p140 = scmp.eq.s32.totalorder %s11, 3
      %p141 = scmp.ne.s32.totalorder %s136, %s138
      %p142 = scmp.eq.s32.totalorder %s11, 0
      %p143 = por %p141, %p142
      %p144 = scmp.ne.s32.totalorder %s136, %s138
      %p145 = scmp.eq.s32.totalorder %s16, 3
      %p146 = por %p144, %p145
      %p147 = scmp.ne.s32.totalorder %s138, %s139
      %p148 = scmp.eq.s32.totalorder %s16, 0
      %p149 = por %p147, %p148
      %p150 = scmp.ne.s32.totalorder %s138, %s139
      %p151 = scmp.eq.s32.totalorder %s17, 3
      %p152 = por %p150, %p151
      %p154 = scmp.ne.s32.totalorder %s139, %s153
      %p155 = scmp.eq.s32.totalorder %s17, 0
      %p156 = por %p154, %p155
      %s157 = ssub.s32 %s18, %s30
      %s158 = ssub.s32 %s19, %s26
      %s159 = sor.u32 %s157, %s158
      %p160 = scmp.eq.s32.totalorder %s159, 0
      %s162 = sadd.s32 %s161, 1
      %s163 = scalar_select %p160, %s161, %s162
      %p166 = pneg %p160
      %p167 = scmp.eq.s32.totalorder %s11, 3
      %p168 = por %p166, %p167
      %p169 = scmp.ne.s32.totalorder %s161, %s164
      %p170 = scmp.eq.s32.totalorder %s11, 0
      %p171 = por %p169, %p170
      %p172 = scmp.ne.s32.totalorder %s161, %s164
      %p173 = scmp.eq.s32.totalorder %s16, 3
      %p174 = por %p172, %p173
      %p175 = scmp.ne.s32.totalorder %s164, %s165
      %p176 = scmp.eq.s32.totalorder %s16, 0
      %p177 = por %p175, %p176
      %p178 = scmp.ne.s32.totalorder %s164, %s165
      %p179 = scmp.eq.s32.totalorder %s17, 3
      %p180 = por %p178, %p179
      %p182 = scmp.ne.s32.totalorder %s165, %s181
      %p183 = scmp.eq.s32.totalorder %s17, 0
      %p184 = por %p182, %p183
      %p185 = scmp.le.s32.totalorder 1, %s11
      %p186 = scmp.lt.s32.totalorder %s11, 5
      %p187 = pnand %p185, %p186
      %p188 = pneg %p187
      // Predicated region
      $region9: #{decoder_forward.20} parent=5 // pred_check
        _
      $region10: #{decoder_forward.20} parent=5 // pred_check_branch
        %190 = sbr.rel (%p187) target = $region12
      $region11: #{decoder_forward.20} parent=5 // pred_region
        %s191 = ssub.s32 %s11, 1
        // Predicated region
        $region13: #{decoder_forward.20} parent=11 // pred_check
          %p192 = pneg %p128
        $region14: #{decoder_forward.20} parent=11 // pred_check_branch
          %194 = sbr.rel (%p192) target = $region16
        $region15: #{decoder_forward.20} parent=11 // pred_region
          _
        $region16: #{decoder_forward.20} parent=11 // pred_fallthru
          _
        // Predicated region
        $region17: #{decoder_forward.20} parent=11 // pred_check
          %p195 = pneg %p149
        $region18: #{decoder_forward.20} parent=11 // pred_check_branch
          %197 = sbr.rel (%p195) target = $region20
        $region19: #{decoder_forward.20} parent=11 // pred_region
          _
        $region20: #{decoder_forward.20} parent=11 // pred_fallthru
          _
      $region12: #{decoder_forward.20} parent=5 // pred_fallthru
        _
      %p198 = scmp.lt.s32.totalorder %s11, 4
      // Predicated region
      $region21: #{decoder_forward.20} parent=5 // pred_check
        %p199 = pneg %p198
      $region22: #{decoder_forward.20} parent=5 // pred_check_branch
        %201 = sbr.rel (%p199) target = $region24
      $region23: #{decoder_forward.20} parent=5 // pred_region
        // Predicated region
        $region25: #{decoder_forward.20} parent=23 // pred_check
          %p202 = pneg %p45
        $region26: #{decoder_forward.20} parent=23 // pred_check_branch
          %204 = sbr.rel (%p202) target = $region28
        $region27: #{decoder_forward.20} parent=23 // pred_region
          %s205 = sand.u32 %s35, 1
          %s206 = sand.u32 %s35, 1
          %s207 = smul.addr %s206, 8
          %s208 = scalar_lea.vmem [#allocation2], %s207
          %s209 = smul.addr %s18, 4
          %s210 = sadd.s32 %s19, %s209
          %s211 = smul.addr %s210, 4
          %s212 = scalar_lea.vmem %s0, %s211
          // Predicated region
          $region29: #{decoder_forward.20} parent=27 // pred_check
            _
          $region30: #{decoder_forward.20} parent=27 // pred_check_branch
            %214 = sbr.rel (0) target = $region32
          $region31: #{decoder_forward.20} parent=27 // pred_region
            // Predicated region
            $region33: #{decoder_forward.20} parent=31 // pred_check
              _
            $region34: #{decoder_forward.20} parent=31 // pred_check_branch
              %216 = sbr.rel target = $region36
            $region35: #{decoder_forward.20} parent=31 // pred_region
              // Predicated region
              $region48: #{decoder_forward.20} parent=35 // pred_check
                _
              $region49: #{decoder_forward.20} parent=35 // pred_check_branch
                %234 = sbr.rel (0) target = $region51
              $region50: #{decoder_forward.20} parent=35 // pred_region
                loop: start=0, step=1, limit=1
                $region52: #{decoder_forward.20} parent=50 // loop_pre_header
                  _
                $region53: #{decoder_forward.20} parent=50 // loop_header
                  %s236 = sphi 0, %s240
                  %p237 = scmp.ge.s32.totalorder %s236, 1
                  %s241 = sphi %s212, %s212
                  %s242 = sphi %s208, %s208
                $region54: #{decoder_forward.20} parent=50 // loop_header_branch
                  %239 = sbr.rel (%p237) target = $region58
                $region55: #{decoder_forward.20} parent=50 // loop_body
                  _
                $region56: #{decoder_forward.20} parent=50 // loop_footer
                  %s240 = sadd.s32 1, %s236
                $region57: #{decoder_forward.20} parent=50 // loop_footer_branch
                  %235 = sbr.rel target = $region53
                $region58: #{decoder_forward.20} parent=50 // loop_exit
                  _
                %s244 = ssub.s32 16, 1
                loop: start=0, step=1, limit=1
                $region59: #{decoder_forward.20} parent=50 // loop_pre_header
                  _
                $region60: #{decoder_forward.20} parent=50 // loop_header
                  %s246 = sphi 0, %s250
                  %p247 = scmp.ge.s32.totalorder %s246, 1
                  %s251 = sphi %s212, %s212
                  %s252 = sphi %s208, %s208
                $region61: #{decoder_forward.20} parent=50 // loop_header_branch
                  %249 = sbr.rel (%p247) target = $region65
                $region62: #{decoder_forward.20} parent=50 // loop_body
                  %v253 = vld [vmem:[%s251] sm:%s244]
                  %254 = vst [vmem:[%s252] sm:%s244] %v253
                  %v255 = vld [vmem:[%s251 + $0x8] sm:%s244]
                  %256 = vst [vmem:[%s252 + $0x4] sm:%s244] %v255
                $region63: #{decoder_forward.20} parent=50 // loop_footer
                  %s250 = sadd.s32 1, %s246
                $region64: #{decoder_forward.20} parent=50 // loop_footer_branch
                  %245 = sbr.rel target = $region60
                $region65: #{decoder_forward.20} parent=50 // loop_exit
                  _
              $region51: #{decoder_forward.20} parent=35 // pred_fallthru
                _
            $region36: #{decoder_forward.20} parent=31 // pred_fallthru
              _
            // Predicated region
            $region37: #{decoder_forward.20} parent=31 // pred_check
              _
            $region38: #{decoder_forward.20} parent=31 // pred_check_branch
              %218 = sbr.rel (0) target = $region40
            $region39: #{decoder_forward.20} parent=31 // pred_region
              %s220 = ssub.s32 16, 1
              loop: start=0, step=1, limit=1
              $region41: #{decoder_forward.20} parent=39 // loop_pre_header
                _
              $region42: #{decoder_forward.20} parent=39 // loop_header
                %s222 = sphi 0, %s226
                %p223 = scmp.ge.s32.totalorder %s222, 1
                %s227 = sphi %s212, %s212
                %s228 = sphi %s208, %s208
              $region43: #{decoder_forward.20} parent=39 // loop_header_branch
                %225 = sbr.rel (%p223) target = $region47
              $region44: #{decoder_forward.20} parent=39 // loop_body
                %v229 = vld [vmem:[%s227] sm:%s220]
                %230 = vst [vmem:[%s228] sm:%s220] %v229
                %v231 = vld [vmem:[%s227 + $0x8] sm:%s220]
                %232 = vst [vmem:[%s228 + $0x4] sm:%s220] %v231
              $region45: #{decoder_forward.20} parent=39 // loop_footer
                %s226 = sadd.s32 1, %s222
              $region46: #{decoder_forward.20} parent=39 // loop_footer_branch
                %221 = sbr.rel target = $region42
              $region47: #{decoder_forward.20} parent=39 // loop_exit
                _
            $region40: #{decoder_forward.20} parent=31 // pred_fallthru
              _
          $region32: #{decoder_forward.20} parent=27 // pred_fallthru
            _
          %257 = vnop
        $region28: #{decoder_forward.20} parent=23 // pred_fallthru
          _
        // Predicated region
        $region66: #{decoder_forward.20} parent=23 // pred_check
          %p258 = pneg %p73
        $region67: #{decoder_forward.20} parent=23 // pred_check_branch
          %260 = sbr.rel (%p258) target = $region69
        $region68: #{decoder_forward.20} parent=23 // pred_region
          %s261 = sand.u32 %s63, 1
          %s262 = sand.u32 %s63, 1
          %s263 = smul.addr %s262, 8
          %s264 = scalar_lea.vmem [#allocation3], %s263
          %s265 = smul.addr %s18, 4
          %s266 = sadd.s32 %s19, %s265
          %s267 = smul.addr %s266, 4
          %s268 = scalar_lea.vmem %s1, %s267
          // Predicated region
          $region70: #{decoder_forward.20} parent=68 // pred_check
            _
          $region71: #{decoder_forward.20} parent=68 // pred_check_branch
            %270 = sbr.rel (0) target = $region73
          $region72: #{decoder_forward.20} parent=68 // pred_region
            // Predicated region
            $region74: #{decoder_forward.20} parent=72 // pred_check
              _
            $region75: #{decoder_forward.20} parent=72 // pred_check_branch
              %272 = sbr.rel target = $region77
            $region76: #{decoder_forward.20} parent=72 // pred_region
              // Predicated region
              $region89: #{decoder_forward.20} parent=76 // pred_check
                _
              $region90: #{decoder_forward.20} parent=76 // pred_check_branch
                %290 = sbr.rel (0) target = $region92
              $region91: #{decoder_forward.20} parent=76 // pred_region
                loop: start=0, step=1, limit=1
                $region93: #{decoder_forward.20} parent=91 // loop_pre_header
                  _
                $region94: #{decoder_forward.20} parent=91 // loop_header
                  %s292 = sphi 0, %s296
                  %p293 = scmp.ge.s32.totalorder %s292, 1
                  %s297 = sphi %s268, %s268
                  %s298 = sphi %s264, %s264
                $region95: #{decoder_forward.20} parent=91 // loop_header_branch
                  %295 = sbr.rel (%p293) target = $region99
                $region96: #{decoder_forward.20} parent=91 // loop_body
                  _
                $region97: #{decoder_forward.20} parent=91 // loop_footer
                  %s296 = sadd.s32 1, %s292
                $region98: #{decoder_forward.20} parent=91 // loop_footer_branch
                  %291 = sbr.rel target = $region94
                $region99: #{decoder_forward.20} parent=91 // loop_exit
                  _
                %s300 = ssub.s32 16, 1
                loop: start=0, step=1, limit=1
                $region100: #{decoder_forward.20} parent=91 // loop_pre_header
                  _
                $region101: #{decoder_forward.20} parent=91 // loop_header
                  %s302 = sphi 0, %s306
                  %p303 = scmp.ge.s32.totalorder %s302, 1
                  %s307 = sphi %s268, %s268
                  %s308 = sphi %s264, %s264
                $region102: #{decoder_forward.20} parent=91 // loop_header_branch
                  %305 = sbr.rel (%p303) target = $region106
                $region103: #{decoder_forward.20} parent=91 // loop_body
                  %v309 = vld [vmem:[%s307] sm:%s300]
                  %310 = vst [vmem:[%s308] sm:%s300] %v309
                  %v311 = vld [vmem:[%s307 + $0x8] sm:%s300]
                  %312 = vst [vmem:[%s308 + $0x4] sm:%s300] %v311
                $region104: #{decoder_forward.20} parent=91 // loop_footer
                  %s306 = sadd.s32 1, %s302
                $region105: #{decoder_forward.20} parent=91 // loop_footer_branch
                  %301 = sbr.rel target = $region101
                $region106: #{decoder_forward.20} parent=91 // loop_exit
                  _
              $region92: #{decoder_forward.20} parent=76 // pred_fallthru
                _
            $region77: #{decoder_forward.20} parent=72 // pred_fallthru
              _
            // Predicated region
            $region78: #{decoder_forward.20} parent=72 // pred_check
              _
            $region79: #{decoder_forward.20} parent=72 // pred_check_branch
              %274 = sbr.rel (0) target = $region81
            $region80: #{decoder_forward.20} parent=72 // pred_region
              %s276 = ssub.s32 16, 1
              loop: start=0, step=1, limit=1
              $region82: #{decoder_forward.20} parent=80 // loop_pre_header
                _
              $region83: #{decoder_forward.20} parent=80 // loop_header
                %s278 = sphi 0, %s282
                %p279 = scmp.ge.s32.totalorder %s278, 1
                %s283 = sphi %s268, %s268
                %s284 = sphi %s264, %s264
              $region84: #{decoder_forward.20} parent=80 // loop_header_branch
                %281 = sbr.rel (%p279) target = $region88
              $region85: #{decoder_forward.20} parent=80 // loop_body
                %v285 = vld [vmem:[%s283] sm:%s276]
                %286 = vst [vmem:[%s284] sm:%s276] %v285
                %v287 = vld [vmem:[%s283 + $0x8] sm:%s276]
                %288 = vst [vmem:[%s284 + $0x4] sm:%s276] %v287
              $region86: #{decoder_forward.20} parent=80 // loop_footer
                %s282 = sadd.s32 1, %s278
              $region87: #{decoder_forward.20} parent=80 // loop_footer_branch
                %277 = sbr.rel target = $region83
              $region88: #{decoder_forward.20} parent=80 // loop_exit
                _
            $region81: #{decoder_forward.20} parent=72 // pred_fallthru
              _
          $region73: #{decoder_forward.20} parent=68 // pred_fallthru
            _
          %313 = vnop
        $region69: #{decoder_forward.20} parent=23 // pred_fallthru
          _
        // Predicated region
        $region107: #{decoder_forward.20} parent=23 // pred_check
          %p314 = pneg %p101
        $region108: #{decoder_forward.20} parent=23 // pred_check_branch
          %316 = sbr.rel (%p314) target = $region110
        $region109: #{decoder_forward.20} parent=23 // pred_region
          %s317 = sand.u32 %s91, 1
          %s318 = sand.u32 %s91, 1
          %s319 = smul.addr %s318, 8
          %s320 = scalar_lea.vmem [#allocation4], %s319
          %s321 = smul.addr %s18, 4
          %s322 = sadd.s32 %s19, %s321
          %s323 = smul.addr %s322, 4
          %s324 = scalar_lea.vmem %s2, %s323
          // Predicated region
          $region111: #{decoder_forward.20} parent=109 // pred_check
            _
          $region112: #{decoder_forward.20} parent=109 // pred_check_branch
            %326 = sbr.rel (0) target = $region114
          $region113: #{decoder_forward.20} parent=109 // pred_region
            // Predicated region
            $region115: #{decoder_forward.20} parent=113 // pred_check
              _
            $region116: #{decoder_forward.20} parent=113 // pred_check_branch
              %328 = sbr.rel target = $region118
            $region117: #{decoder_forward.20} parent=113 // pred_region
              // Predicated region
              $region130: #{decoder_forward.20} parent=117 // pred_check
                _
              $region131: #{decoder_forward.20} parent=117 // pred_check_branch
                %346 = sbr.rel (0) target = $region133
              $region132: #{decoder_forward.20} parent=117 // pred_region
                loop: start=0, step=1, limit=1
                $region134: #{decoder_forward.20} parent=132 // loop_pre_header
                  _
                $region135: #{decoder_forward.20} parent=132 // loop_header
                  %s348 = sphi 0, %s352
                  %p349 = scmp.ge.s32.totalorder %s348, 1
                  %s353 = sphi %s324, %s324
                  %s354 = sphi %s320, %s320
                $region136: #{decoder_forward.20} parent=132 // loop_header_branch
                  %351 = sbr.rel (%p349) target = $region140
                $region137: #{decoder_forward.20} parent=132 // loop_body
                  _
                $region138: #{decoder_forward.20} parent=132 // loop_footer
                  %s352 = sadd.s32 1, %s348
                $region139: #{decoder_forward.20} parent=132 // loop_footer_branch
                  %347 = sbr.rel target = $region135
                $region140: #{decoder_forward.20} parent=132 // loop_exit
                  _
                %s356 = ssub.s32 16, 1
                loop: start=0, step=1, limit=1
                $region141: #{decoder_forward.20} parent=132 // loop_pre_header
                  _
                $region142: #{decoder_forward.20} parent=132 // loop_header
                  %s358 = sphi 0, %s362
                  %p359 = scmp.ge.s32.totalorder %s358, 1
                  %s363 = sphi %s324, %s324
                  %s364 = sphi %s320, %s320
                $region143: #{decoder_forward.20} parent=132 // loop_header_branch
                  %361 = sbr.rel (%p359) target = $region147
                $region144: #{decoder_forward.20} parent=132 // loop_body
                  %v365 = vld [vmem:[%s363] sm:%s356]
                  %366 = vst [vmem:[%s364] sm:%s356] %v365
                  %v367 = vld [vmem:[%s363 + $0x8] sm:%s356]
                  %368 = vst [vmem:[%s364 + $0x4] sm:%s356] %v367
                $region145: #{decoder_forward.20} parent=132 // loop_footer
                  %s362 = sadd.s32 1, %s358
                $region146: #{decoder_forward.20} parent=132 // loop_footer_branch
                  %357 = sbr.rel target = $region142
                $region147: #{decoder_forward.20} parent=132 // loop_exit
                  _
              $region133: #{decoder_forward.20} parent=117 // pred_fallthru
                _
            $region118: #{decoder_forward.20} parent=113 // pred_fallthru
              _
            // Predicated region
            $region119: #{decoder_forward.20} parent=113 // pred_check
              _
            $region120: #{decoder_forward.20} parent=113 // pred_check_branch
              %330 = sbr.rel (0) target = $region122
            $region121: #{decoder_forward.20} parent=113 // pred_region
              %s332 = ssub.s32 16, 1
              loop: start=0, step=1, limit=1
              $region123: #{decoder_forward.20} parent=121 // loop_pre_header
                _
              $region124: #{decoder_forward.20} parent=121 // loop_header
                %s334 = sphi 0, %s338
                %p335 = scmp.ge.s32.totalorder %s334, 1
                %s339 = sphi %s324, %s324
                %s340 = sphi %s320, %s320
              $region125: #{decoder_forward.20} parent=121 // loop_header_branch
                %337 = sbr.rel (%p335) target = $region129
              $region126: #{decoder_forward.20} parent=121 // loop_body
                %v341 = vld [vmem:[%s339] sm:%s332]
                %342 = vst [vmem:[%s340] sm:%s332] %v341
                %v343 = vld [vmem:[%s339 + $0x8] sm:%s332]
                %344 = vst [vmem:[%s340 + $0x4] sm:%s332] %v343
              $region127: #{decoder_forward.20} parent=121 // loop_footer
                %s338 = sadd.s32 1, %s334
              $region128: #{decoder_forward.20} parent=121 // loop_footer_branch
                %333 = sbr.rel target = $region124
              $region129: #{decoder_forward.20} parent=121 // loop_exit
                _
            $region122: #{decoder_forward.20} parent=113 // pred_fallthru
              _
          $region114: #{decoder_forward.20} parent=109 // pred_fallthru
            _
          %369 = vnop
        $region110: #{decoder_forward.20} parent=23 // pred_fallthru
          _
      $region24: #{decoder_forward.20} parent=5 // pred_fallthru
        _
      %p370 = scmp.le.s32.totalorder 1, %s11
      %p371 = scmp.lt.s32.totalorder %s11, 5
      %p372 = pnand %p370, %p371
      %p373 = pneg %p372
      // Predicated region
      $region148: #{decoder_forward.20} parent=5 // pred_check
        _
      $region149: #{decoder_forward.20} parent=5 // pred_check_branch
        %375 = sbr.rel (%p372) target = $region151
      $region150: #{decoder_forward.20} parent=5 // pred_region
        %s376 = ssub.s32 %s11, 1
        %s377 = sand.u32 %s38, 1
        %s378 = sand.u32 %s38, 1
        %s379 = smul.addr %s378, 8
        %s380 = scalar_lea.vmem [#allocation2], %s379
        // Predicated region
        $region152: #{decoder_forward.20} parent=150 // pred_check
          %p381 = pneg %p51
        $region153: #{decoder_forward.20} parent=150 // pred_check_branch
          %383 = sbr.rel (%p381) target = $region155
        $region154: #{decoder_forward.20} parent=150 // pred_region
          _
        $region155: #{decoder_forward.20} parent=150 // pred_fallthru
          _
        %s384 = sand.u32 %s66, 1
        %s385 = sand.u32 %s66, 1
        %s386 = smul.addr %s385, 8
        %s387 = scalar_lea.vmem [#allocation3], %s386
        // Predicated region
        $region156: #{decoder_forward.20} parent=150 // pred_check
          %p388 = pneg %p79
        $region157: #{decoder_forward.20} parent=150 // pred_check_branch
          %390 = sbr.rel (%p388) target = $region159
        $region158: #{decoder_forward.20} parent=150 // pred_region
          _
        $region159: #{decoder_forward.20} parent=150 // pred_fallthru
          _
        %s391 = sand.u32 %s94, 1
        %s392 = sand.u32 %s94, 1
        %s393 = smul.addr %s392, 8
        %s394 = scalar_lea.vmem [#allocation4], %s393
        // Predicated region
        $region160: #{decoder_forward.20} parent=150 // pred_check
          %p395 = pneg %p107
        $region161: #{decoder_forward.20} parent=150 // pred_check_branch
          %397 = sbr.rel (%p395) target = $region163
        $region162: #{decoder_forward.20} parent=150 // pred_region
          _
        $region163: #{decoder_forward.20} parent=150 // pred_fallthru
          _
        %s398 = sand.u32 %s38, 1
        %s399 = sand.u32 %s38, 1
        %s400 = smul.addr %s399, 8
        %s401 = scalar_lea.vmem [#allocation2], %s400
        %p402 = pneg %p51
        %p403 = pneg %p48
        %s404 = sand.u32 %s66, 1
        %s405 = sand.u32 %s66, 1
        %s406 = smul.addr %s405, 8
        %s407 = scalar_lea.vmem [#allocation3], %s406
        %p408 = pneg %p79
        %p409 = pneg %p76
        %s410 = sand.u32 %s94, 1
        %s411 = sand.u32 %s94, 1
        %s412 = smul.addr %s411, 8
        %s413 = scalar_lea.vmem [#allocation4], %s412
        %p414 = pneg %p107
        %p415 = pneg %p104
        %p416 = pneg %p128
        %p417 = pneg %p125
        %p418 = pneg %p149
        %p419 = pneg %p146
        %p420 = pneg %p177
        %p421 = pneg %p174
        %s422 = sand.u32 %s164, 1
        %s423 = sand.u32 %s164, 1
        %s424 = smul.addr %s423, 8
        %s425 = scalar_lea.vmem [#allocation5], %s424
        %v427 = vld [vmem:[%s380] sm:$0xf]
        %v428 = vld [vmem:[%s380 + $0x4] sm:$0xf]
        %v429 = vunpack.c.l.bf16 %v427
        %v430 = vunpack.c.l.bf16 %v428
        %v431 = vld [vmem:[%s387] sm:$0xf]
        %v432 = vld [vmem:[%s387 + $0x4] sm:$0xf]
        %v433 = vunpack.c.l.bf16 %v431
        %v434 = vunpack.c.l.bf16 %v432
        %v435 = vld [vmem:[%s3] sm:$0xff]
        %v436 = vld [vmem:[%s3 + $0x10] sm:$0xff]
        %v437 = vld [vmem:[%s3 + $0x8] sm:$0xff]
        %v438 = vld [vmem:[%s3 + $0x18] sm:$0xff]
        %v439 = vld [vmem:[%s4] sm:$0xff]
        %v440 = vld [vmem:[%s4 + $0x10] sm:$0xff]
        %v441 = vld [vmem:[%s4 + $0x8] sm:$0xff]
        %v442 = vld [vmem:[%s4 + $0x18] sm:$0xff]
        %v443 = vsub.f32 0.0, %v429
        %v444 = vsub.f32 0.0, %v430
        %447 = vrot.lane.b32.xlu0 %v443, 64
        %v448 = vpop.permute.xlu0 %447
        %449 = vrot.lane.b32.xlu0 %v444, 64
        %v450 = vpop.permute.xlu0 %449
        %455 = vrot.lane.b32.xlu0 %v429, 64
        %v456 = vpop.permute.xlu0 %455
        %457 = vrot.lane.b32.xlu0 %v430, 64
        %v458 = vpop.permute.xlu0 %457
        %vm461 = vcmask 523264
        %v462 = vsel %vm461, %v448, %v456
        %v463 = vsel %vm461, %v450, %v458
        %v464 = vmul.f32 %v429, %v435
        %v465 = vmul.f32 %v430, %v436
        %v466 = vmul.f32 %v462, %v437
        %v467 = vmul.f32 %v463, %v438
        %v468 = vadd.f32 %v464, %v466
        %v469 = vadd.f32 %v465, %v467
        %v470 = vpack.c.bf16 %v469, %v468
        %v471 = vsub.f32 0.0, %v433
        %v472 = vsub.f32 0.0, %v434
        %475 = vrot.lane.b32.xlu0 %v471, 64
        %v476 = vpop.permute.xlu0 %475
        %477 = vrot.lane.b32.xlu0 %v472, 64
        %v478 = vpop.permute.xlu0 %477
        %483 = vrot.lane.b32.xlu0 %v433, 64
        %v484 = vpop.permute.xlu0 %483
        %485 = vrot.lane.b32.xlu0 %v434, 64
        %v486 = vpop.permute.xlu0 %485
        %v489 = vsel %vm461, %v476, %v484
        %v490 = vsel %vm461, %v478, %v486
        %v491 = vmul.f32 %v433, %v439
        %v492 = vmul.f32 %v434, %v440
        %v493 = vmul.f32 %v489, %v441
        %v494 = vmul.f32 %v490, %v442
        %v495 = vadd.f32 %v491, %v493
        %v496 = vadd.f32 %v492, %v494
        %v497 = vpack.c.bf16 %v496, %v495
        %498 = vmatpush.bf16.xpose.msra.mxu0 0
        %499 = vmatpush.bf16.xpose.msra.mxu0 0
        %500 = vmatpush.bf16.xpose.msra.mxu0 0
        %501 = vmatpush.bf16.xpose.msra.mxu0 0
        %502 = vmatpush.bf16.xpose.msra.mxu0 0
        %503 = vmatpush.bf16.xpose.msra.mxu0 0
        %504 = vmatpush.bf16.xpose.msra.mxu0 0
        %505 = vmatpush.bf16.xpose.msra.mxu0 %v497
        %506 = vmatmul.bf16.gmra.mxu0 %v470
        %v507 = vpop.f32.mrf.mxu0
        %v508 = vadd.f32 0.0, %v507
        %v509 = vpop.f32.mrf.mxu0
        %v510 = vadd.f32 0.0, %v509
        %511 = vdwg.mxu0
        %v512 = vmul.f32 %v508, 0.088388346
        %v513 = vmul.f32 %v510, 0.088388346
        %v514 = vlaneseq
        %v515 = vshrl.u32 %v514, 7
        %v516 = vadd.s32 %v515, 8
        %v517 = vlaneseq
        %v518 = vand.u32 %v517, 127
        %vm519 = vcmp.le.s32.totalorder %v518, %v515
        %vm520 = vcmp.le.s32.totalorder %v518, %v516
        %v521 = vsel %vm519, %v512, -1e+30
        %v522 = vsel %vm520, %v513, -1e+30
        %vm523 = vcmask 130048
        %v524 = vsel %vm523, %v521, -inf
        %525 = vmax.xlane.f32.xlu0 %v524
        %v526 = vpop.xlane.xlu0 %525
        %v527 = vsel %vm523, %v522, -inf
        %528 = vmax.xlane.f32.xlu0 %v527
        %v529 = vpop.xlane.xlu0 %528
        %v530 = vsub.f32 %v521, %v526
        %v531 = vsub.f32 %v522, %v529
        %v532 = vmul.f32 %v530, 1.442695
        %v533 = vpow.pop %v532
        %v534 = vmul.f32 %v531, 1.442695
        %v535 = vpow.pop %v534
        %v536 = vsel %vm523, %v533, 0.0
        %537 = vadd.xlane.f32.xlu0 %v536
        %v538 = vpop.xlane.xlu0 %537
        %v539 = vsel %vm523, %v535, 0.0
        %540 = vadd.xlane.f32.xlu0 %v539
        %v541 = vpop.xlane.xlu0 %540
        %v542 = vpack.c.bf16 %v535, %v533
        %v543 = vld [vmem:[%s394] sm:$0xf]
        %v544 = vld [vmem:[%s394 + $0x4] sm:$0xf]
        %v547 = vunpack.c.l.b16 %v543
        %v548 = vunpack.c.l.b16 %v544
        %v549 = vpack.c.b16 %v548, %v547
        %v552 = vsel %vm523, %v542, 0
        %554 = vmatpush.bf16.msra.mxu0 0
        %555 = vmatpush.bf16.msra.mxu0 0
        %556 = vmatpush.bf16.msra.mxu0 0
        %557 = vmatpush.bf16.msra.mxu0 0
        %558 = vmatpush.bf16.msra.mxu0 0
        %559 = vmatpush.bf16.msra.mxu0 0
        %560 = vmatpush.bf16.msra.mxu0 0
        %561 = vmatpush.bf16.msra.mxu0 %v549
        %562 = vmatmul.bf16.gmra.mxu0 %v552
        %v563 = vpop.f32.mrf.mxu0
        %v564 = vadd.f32 0.0, %v563
        %v565 = vpop.f32.mrf.mxu0
        %v566 = vadd.f32 0.0, %v565
        %567 = vdwg.mxu0
        %v568 = vrcp.pop %v538
        %v569 = vmul.f32 %v538, %v568
        %v570 = vsub.f32 1.0, %v569
        %v571 = vmul.f32 %v568, %v570
        %v572 = vadd.f32 %v568, %v571
        %vm573 = vweird.f32 %v538
        %vm574 = vweird.f32 %v568
        %vm575 = vmor %vm573, %vm574
        %v576 = vsel %vm575, %v568, %v572
        %v577 = vand.u32 2147483647, %v538
        %vm578 = vcmp.eq.f32.partialorder %v577, 8.507059e+37
        %v579 = vand.u32 %v538, 2147483648
        %v580 = vor.u32 1.1754944e-38, %v579
        %v581 = vsel %vm578, %v580, %v576
        %v582 = vmul.f32 %v564, %v581
        %v583 = vrcp.pop %v541
        %v584 = vmul.f32 %v541, %v583
        %v585 = vsub.f32 1.0, %v584
        %v586 = vmul.f32 %v583, %v585
        %v587 = vadd.f32 %v583, %v586
        %vm588 = vweird.f32 %v541
        %vm589 = vweird.f32 %v583
        %vm590 = vmor %vm588, %vm589
        %v591 = vsel %vm590, %v583, %v587
        %v592 = vand.u32 2147483647, %v541
        %vm593 = vcmp.eq.f32.partialorder %v592, 8.507059e+37
        %v594 = vand.u32 %v541, 2147483648
        %v595 = vor.u32 1.1754944e-38, %v594
        %v596 = vsel %vm593, %v595, %v591
        %v597 = vmul.f32 %v566, %v596
        %v598 = vpack.c.bf16 %v582, %v582
        %v599 = vpack.c.bf16 %v597, %v597
        %600 = vst [vmem:[%s425] sm:$0xf] %v598
        %601 = vst [vmem:[%s425 + $0x4] sm:$0xf] %v599
        %s602 = sand.u32 %s164, 1
        %s603 = sand.u32 %s164, 1
        %s604 = smul.addr %s603, 8
        %s605 = scalar_lea.vmem [#allocation5], %s604
        // Predicated region
        $region164: #{decoder_forward.20} parent=150 // pred_check
          %p606 = pneg %p174
        $region165: #{decoder_forward.20} parent=150 // pred_check_branch
          %608 = sbr.rel (%p606) target = $region167
        $region166: #{decoder_forward.20} parent=150 // pred_region
          %s609 = smul.addr %s20, 4
          %s610 = sadd.s32 %s21, %s609
          %s611 = smul.addr %s610, 4
          %s612 = scalar_lea.vmem %s5, %s611
          // Predicated region
          $region168: #{decoder_forward.20} parent=166 // pred_check
            _
          $region169: #{decoder_forward.20} parent=166 // pred_check_branch
            %614 = sbr.rel (0) target = $region171
          $region170: #{decoder_forward.20} parent=166 // pred_region
            // Predicated region
            $region172: #{decoder_forward.20} parent=170 // pred_check
              _
            $region173: #{decoder_forward.20} parent=170 // pred_check_branch
              %616 = sbr.rel target = $region175
            $region174: #{decoder_forward.20} parent=170 // pred_region
              // Predicated region
              $region187: #{decoder_forward.20} parent=174 // pred_check
                _
              $region188: #{decoder_forward.20} parent=174 // pred_check_branch
                %634 = sbr.rel (0) target = $region190
              $region189: #{decoder_forward.20} parent=174 // pred_region
                loop: start=0, step=1, limit=1
                $region191: #{decoder_forward.20} parent=189 // loop_pre_header
                  _
                $region192: #{decoder_forward.20} parent=189 // loop_header
                  %s636 = sphi 0, %s640
                  %p637 = scmp.ge.s32.totalorder %s636, 1
                  %s641 = sphi %s605, %s605
                  %s642 = sphi %s612, %s612
                $region193: #{decoder_forward.20} parent=189 // loop_header_branch
                  %639 = sbr.rel (%p637) target = $region197
                $region194: #{decoder_forward.20} parent=189 // loop_body
                  _
                $region195: #{decoder_forward.20} parent=189 // loop_footer
                  %s640 = sadd.s32 1, %s636
                $region196: #{decoder_forward.20} parent=189 // loop_footer_branch
                  %635 = sbr.rel target = $region192
                $region197: #{decoder_forward.20} parent=189 // loop_exit
                  _
                %s644 = ssub.s32 16, 1
                loop: start=0, step=1, limit=1
                $region198: #{decoder_forward.20} parent=189 // loop_pre_header
                  _
                $region199: #{decoder_forward.20} parent=189 // loop_header
                  %s646 = sphi 0, %s650
                  %p647 = scmp.ge.s32.totalorder %s646, 1
                  %s651 = sphi %s605, %s605
                  %s652 = sphi %s612, %s612
                $region200: #{decoder_forward.20} parent=189 // loop_header_branch
                  %649 = sbr.rel (%p647) target = $region204
                $region201: #{decoder_forward.20} parent=189 // loop_body
                  %v653 = vld [vmem:[%s651] sm:%s644]
                  %654 = vst [vmem:[%s652] sm:%s644] %v653
                  %v655 = vld [vmem:[%s651 + $0x4] sm:%s644]
                  %656 = vst [vmem:[%s652 + $0x8] sm:%s644] %v655
                $region202: #{decoder_forward.20} parent=189 // loop_footer
                  %s650 = sadd.s32 1, %s646
                $region203: #{decoder_forward.20} parent=189 // loop_footer_branch
                  %645 = sbr.rel target = $region199
                $region204: #{decoder_forward.20} parent=189 // loop_exit
                  _
              $region190: #{decoder_forward.20} parent=174 // pred_fallthru
                _
            $region175: #{decoder_forward.20} parent=170 // pred_fallthru
              _
            // Predicated region
            $region176: #{decoder_forward.20} parent=170 // pred_check
              _
            $region177: #{decoder_forward.20} parent=170 // pred_check_branch
              %618 = sbr.rel (0) target = $region179
            $region178: #{decoder_forward.20} parent=170 // pred_region
              %s620 = ssub.s32 16, 1
              loop: start=0, step=1, limit=1
              $region180: #{decoder_forward.20} parent=178 // loop_pre_header
                _
              $region181: #{decoder_forward.20} parent=178 // loop_header
                %s622 = sphi 0, %s626
                %p623 = scmp.ge.s32.totalorder %s622, 1
                %s627 = sphi %s605, %s605
                %s628 = sphi %s612, %s612
              $region182: #{decoder_forward.20} parent=178 // loop_header_branch
                %625 = sbr.rel (%p623) target = $region186
              $region183: #{decoder_forward.20} parent=178 // loop_body
                %v629 = vld [vmem:[%s627] sm:%s620]
                %630 = vst [vmem:[%s628] sm:%s620] %v629
                %v631 = vld [vmem:[%s627 + $0x4] sm:%s620]
                %632 = vst [vmem:[%s628 + $0x8] sm:%s620] %v631
              $region184: #{decoder_forward.20} parent=178 // loop_footer
                %s626 = sadd.s32 1, %s622
              $region185: #{decoder_forward.20} parent=178 // loop_footer_branch
                %621 = sbr.rel target = $region181
              $region186: #{decoder_forward.20} parent=178 // loop_exit
                _
            $region179: #{decoder_forward.20} parent=170 // pred_fallthru
              _
          $region171: #{decoder_forward.20} parent=166 // pred_fallthru
            _
          %657 = vnop
        $region167: #{decoder_forward.20} parent=150 // pred_fallthru
          _
      $region151: #{decoder_forward.20} parent=5 // pred_fallthru
        _
      %p658 = scmp.le.s32.totalorder 2, %s11
      // Predicated region
      $region205: #{decoder_forward.20} parent=5 // pred_check
        %p659 = pneg %p658
      $region206: #{decoder_forward.20} parent=5 // pred_check_branch
        %661 = sbr.rel (%p659) target = $region208
      $region207: #{decoder_forward.20} parent=5 // pred_region
        %s662 = ssub.s32 %s11, 2
        // Predicated region
        $region209: #{decoder_forward.20} parent=207 // pred_check
          %p663 = pneg %p180
        $region210: #{decoder_forward.20} parent=207 // pred_check_branch
          %665 = sbr.rel (%p663) target = $region212
        $region211: #{decoder_forward.20} parent=207 // pred_region
          %s666 = sand.u32 %s165, 1
          %s667 = sand.u32 %s165, 1
          %s668 = smul.addr %s667, 8
          %s669 = scalar_lea.vmem [#allocation5], %s668
        $region212: #{decoder_forward.20} parent=207 // pred_fallthru
          _
      $region208: #{decoder_forward.20} parent=5 // pred_fallthru
        _
    $region6: #{decoder_forward.20} parent=1 // loop_footer
      %s15 = sadd.s32 1, %s11
    $region7: #{decoder_forward.20} parent=1 // loop_footer_branch
      %10 = sbr.rel target = $region3
    $region8: #{decoder_forward.20} parent=1 // loop_exit
      _

// kernel: decoder_forward.19
$region0: #{decoder_forward.19}
  #allocation0 [shape = 'u32[]', space=smem, size = 0x4, offset = 0x4, fixed_abs, tag = 'smem constant byte address 0x4 - core index']
  #allocation1 [shape = 'u32[72,128]{1,0:T(1,128)}', space=vmem, size = 0x9000, scoped, tag = 'internal scratch']
  %s0 = inlined_call_operand.vmem [shape: f32[32,256], index: 0, kind: input, shape index: {}]
  %s1 = inlined_call_operand.vmem [shape: f32[1,256], index: 1, kind: input, shape index: {}]
  %s2 = inlined_call_operand.hbm [shape: bf16[256,768], index: 2, kind: input, shape index: {}]
  %s3 = inlined_call_operand.vmem [shape: bf16[32,768], index: 3, kind: output, shape index: {}]
  %s4 = sld [smem:[#allocation0]]
  $region71: #{decoder_forward.19} parent=0
    _
  %s6 = ssub.s32 1, %s4
  %s7 = scalar_select 0, %s6, %s4
  $region1: #{decoder_forward.19} parent=0
    #allocation2 [shape = 'u8[393216]{0}', space=vmem, size = 0x60000, scoped, tag = 'input window, operand 2']
    #allocation3 [shape = 's32[2]{0}', space=sflag, size = 0x8, scoped, tag = 'scoped memory for decoder_forward.19']
    #allocation4 [shape = 'u8[49152]{0}', space=vmem, size = 0xc000, scoped, tag = 'output window, operand 0']
    %8 = vsyncpa [#allocation3], 0
    %s9 = scalar_lea.sflag [#allocation3], 1
    %10 = vsyncpa %s9, 0
    loop: start=0, step=1, limit=4
    $region2: #{decoder_forward.19} parent=1 // loop_pre_header
      _
    $region3: #{decoder_forward.19} parent=1 // loop_header
      %s12 = sphi 0, %s16
      %p13 = scmp.ge.s32.totalorder %s12, 4
      %s19 = sphi 0, %s31
      %s20 = sphi 0, %s27
      %s21 = sphi 0, %s19
      %s22 = sphi 0, %s20
      %s23 = sphi 0, %s21
      %s24 = sphi 0, %s22
      %s34 = sphi 0, %s36
      %s37 = sphi 0, %s34
      %s38 = sphi 0, %s37
      %s54 = sphi 0, %s38
      %s58 = sphi 0, %s58
      %s60 = sphi 0, %s58
      %s61 = sphi 0, %s60
      %s75 = sphi 0, %s61
      %s81 = sphi 0, %s83
      %s84 = sphi 0, %s81
      %s85 = sphi 0, %s84
      %s101 = sphi 0, %s85
      %s109 = sphi 0, %s111
      %s112 = sphi 0, %s109
      %s113 = sphi 0, %s112
      %s129 = sphi 0, %s113
    $region4: #{decoder_forward.19} parent=1 // loop_header_branch
      %15 = sbr.rel (%p13) target = $region8
    $region5: #{decoder_forward.19} parent=1 // loop_body
      %s17 = ssub.s32 %s12, 1
      %s18 = ssub.s32 %s12, 2
      %s25 = sadd.s32 1, %s20
      %p26 = scmp.ge.s32.totalorder %s25, 2
      %s27 = scalar_select %p26, 0, %s25
      %s28 = sadd.s32 1, %s19
      %s29 = scalar_select %p26, %s28, %s19
      %p30 = scmp.ge.s32.totalorder %s29, 1
      %s31 = scalar_select %p30, 0, %s29
      %s32 = ssub.s32 %s19, %s31
      %p33 = scmp.eq.s32.totalorder %s32, 0
      %s35 = sadd.s32 %s34, 1
      %s36 = scalar_select %p33, %s34, %s35
      %p39 = pneg %p33
      %p40 = scmp.eq.s32.totalorder %s12, 1
      %p41 = por %p39, %p40
      %p42 = scmp.ne.s32.totalorder %s34, %s37
      %p43 = scmp.eq.s32.totalorder %s12, 0
      %p44 = por %p42, %p43
      %p45 = scmp.ne.s32.totalorder %s34, %s37
      %p46 = scmp.eq.s32.totalorder %s17, 1
      %p47 = por %p45, %p46
      %p48 = scmp.ne.s32.totalorder %s37, %s38
      %p49 = scmp.eq.s32.totalorder %s17, 0
      %p50 = por %p48, %p49
      %p51 = scmp.ne.s32.totalorder %s37, %s38
      %p52 = scmp.eq.s32.totalorder %s18, 1
      %p53 = por %p51, %p52
      %p55 = scmp.ne.s32.totalorder %s38, %s54
      %p56 = scmp.eq.s32.totalorder %s18, 0
      %p57 = por %p55, %p56
      %s59 = sadd.s32 %s58, 1
      %p62 = scmp.eq.s32.totalorder %s12, 1
      %p63 = scmp.ne.s32.totalorder %s58, %s60
      %p64 = scmp.eq.s32.totalorder %s12, 0
      %p65 = por %p63, %p64
      %p66 = scmp.ne.s32.totalorder %s58, %s60
      %p67 = scmp.eq.s32.totalorder %s17, 1
      %p68 = por %p66, %p67
      %p69 = scmp.ne.s32.totalorder %s60, %s61
      %p70 = scmp.eq.s32.totalorder %s17, 0
      %p71 = por %p69, %p70
      %p72 = scmp.ne.s32.totalorder %s60, %s61
      %p73 = scmp.eq.s32.totalorder %s18, 1
      %p74 = por %p72, %p73
      %p76 = scmp.ne.s32.totalorder %s61, %s75
      %p77 = scmp.eq.s32.totalorder %s18, 0
      %p78 = por %p76, %p77
      %s79 = ssub.s32 %s20, %s27
      %p80 = scmp.eq.s32.totalorder %s79, 0
      %s82 = sadd.s32 %s81, 1
      %s83 = scalar_select %p80, %s81, %s82
      %p86 = pneg %p80
      %p87 = scmp.eq.s32.totalorder %s12, 1
      %p88 = por %p86, %p87
      %p89 = scmp.ne.s32.totalorder %s81, %s84
      %p90 = scmp.eq.s32.totalorder %s12, 0
      %p91 = por %p89, %p90
      %p92 = scmp.ne.s32.totalorder %s81, %s84
      %p93 = scmp.eq.s32.totalorder %s17, 1
      %p94 = por %p92, %p93
      %p95 = scmp.ne.s32.totalorder %s84, %s85
      %p96 = scmp.eq.s32.totalorder %s17, 0
      %p97 = por %p95, %p96
      %p98 = scmp.ne.s32.totalorder %s84, %s85
      %p99 = scmp.eq.s32.totalorder %s18, 1
      %p100 = por %p98, %p99
      %p102 = scmp.ne.s32.totalorder %s85, %s101
      %p103 = scmp.eq.s32.totalorder %s18, 0
      %p104 = por %p102, %p103
      %s105 = ssub.s32 %s19, %s31
      %s106 = ssub.s32 %s20, %s27
      %s107 = sor.u32 %s105, %s106
      %p108 = scmp.eq.s32.totalorder %s107, 0
      %s110 = sadd.s32 %s109, 1
      %s111 = scalar_select %p108, %s109, %s110
      %p114 = pneg %p108
      %p115 = scmp.eq.s32.totalorder %s12, 1
      %p116 = por %p114, %p115
      %p117 = scmp.ne.s32.totalorder %s109, %s112
      %p118 = scmp.eq.s32.totalorder %s12, 0
      %p119 = por %p117, %p118
      %p120 = scmp.ne.s32.totalorder %s109, %s112
      %p121 = scmp.eq.s32.totalorder %s17, 1
      %p122 = por %p120, %p121
      %p123 = scmp.ne.s32.totalorder %s112, %s113
      %p124 = scmp.eq.s32.totalorder %s17, 0
      %p125 = por %p123, %p124
      %p126 = scmp.ne.s32.totalorder %s112, %s113
      %p127 = scmp.eq.s32.totalorder %s18, 1
      %p128 = por %p126, %p127
      %p130 = scmp.ne.s32.totalorder %s113, %s129
      %p131 = scmp.eq.s32.totalorder %s18, 0
      %p132 = por %p130, %p131
      %p133 = scmp.le.s32.totalorder 1, %s12
      %p134 = scmp.lt.s32.totalorder %s12, 3
      %p135 = pnand %p133, %p134
      %p136 = pneg %p135
      // Predicated region
      $region9: #{decoder_forward.19} parent=5 // pred_check
        _
      $region10: #{decoder_forward.19} parent=5 // pred_check_branch
        %138 = sbr.rel (%p135) target = $region12
      $region11: #{decoder_forward.19} parent=5 // pred_region
        %s139 = ssub.s32 %s12, 1
        // Predicated region
        $region13: #{decoder_forward.19} parent=11 // pred_check
          %p140 = pneg %p50
        $region14: #{decoder_forward.19} parent=11 // pred_check_branch
          %142 = sbr.rel (%p140) target = $region16
        $region15: #{decoder_forward.19} parent=11 // pred_region
          %s143 = smul.u32 4, %s21
          %p144 = scmp.lt.s32.totalorder %s143, 3
          %s145 = scalar_select %p144, %s143, 3
          %s146 = smul.addr %s145, 2
          %s147 = smul.addr %s146, 8
          %s148 = scalar_lea.vmem %s0, %s147
          %s149 = smul.u32 4, %s21
        $region16: #{decoder_forward.19} parent=11 // pred_fallthru
          _
        // Predicated region
        $region17: #{decoder_forward.19} parent=11 // pred_check
          %p150 = pneg %p71
        $region18: #{decoder_forward.19} parent=11 // pred_check_branch
          %152 = sbr.rel (%p150) target = $region20
        $region19: #{decoder_forward.19} parent=11 // pred_region
          _
        $region20: #{decoder_forward.19} parent=11 // pred_fallthru
          _
      $region12: #{decoder_forward.19} parent=5 // pred_fallthru
        _
      %p153 = scmp.lt.s32.totalorder %s12, 2
      // Predicated region
      $region21: #{decoder_forward.19} parent=5 // pred_check
        %p154 = pneg %p153
      $region22: #{decoder_forward.19} parent=5 // pred_check_branch
        %156 = sbr.rel (%p154) target = $region24
      $region23: #{decoder_forward.19} parent=5 // pred_region
        // Predicated region
        $region25: #{decoder_forward.19} parent=23 // pred_check
          %p157 = pneg %p91
        $region26: #{decoder_forward.19} parent=23 // pred_check_branch
          %159 = sbr.rel (%p157) target = $region28
        $region27: #{decoder_forward.19} parent=23 // pred_region
          %s160 = sand.u32 %s81, 1
          %s161 = scalar_lea.sflag [#allocation3], %s160
          %s162 = sand.u32 %s81, 1
          %s163 = smul.addr %s162, 384
          %s164 = scalar_lea.vmem [#allocation2], %s163
          %s165 = smul.u32 3, %s20
          %167 = vsyncadd %s161, 0
          %s168 = smul.addr %s165, 4
          %s169 = scalar_lea.hbm %s2, %s168
          %s170 = sshll.u32 %s169, 4
          %s171 = int_to_ptr.hbm [resolvable:$true] %s170
          %s172 = sshll.u32 %s164, 4
          %s173 = int_to_ptr.vmem [resolvable:$true] %s172
          %178 = dma.hbm_to_vmem [thread:$0]  %s171, 6144, %s173, %s161, 384, 192, 12
        $region28: #{decoder_forward.19} parent=23 // pred_fallthru
          _
      $region24: #{decoder_forward.19} parent=5 // pred_fallthru
        _
      %p179 = scmp.le.s32.totalorder 1, %s12
      %p180 = scmp.lt.s32.totalorder %s12, 3
      %p181 = pnand %p179, %p180
      %p182 = pneg %p181
      // Predicated region
      $region29: #{decoder_forward.19} parent=5 // pred_check
        _
      $region30: #{decoder_forward.19} parent=5 // pred_check_branch
        %184 = sbr.rel (%p181) target = $region32
      $region31: #{decoder_forward.19} parent=5 // pred_region
        %s185 = ssub.s32 %s12, 1
        %s186 = sand.u32 %s84, 1
        %s187 = scalar_lea.sflag [#allocation3], %s186
        %s188 = sand.u32 %s84, 1
        %s189 = smul.addr %s188, 384
        %s190 = scalar_lea.vmem [#allocation2], %s189
        // Predicated region
        $region33: #{decoder_forward.19} parent=31 // pred_check
          %p191 = pneg %p97
        $region34: #{decoder_forward.19} parent=31 // pred_check_branch
          %193 = sbr.rel (%p191) target = $region36
        $region35: #{decoder_forward.19} parent=31 // pred_region
          %195 = dma.done %s187, 6144
        $region36: #{decoder_forward.19} parent=31 // pred_fallthru
          _
        %s196 = smul.u32 4, %s21
        %p197 = scmp.lt.s32.totalorder %s196, 3
        %s198 = scalar_select %p197, %s196, 3
        %s199 = smul.addr %s198, 2
        %s200 = smul.addr %s199, 8
        %s201 = scalar_lea.vmem %s0, %s200
        %p202 = pneg %p50
        %p203 = pneg %p47
        %p204 = pneg %p71
        %p205 = pneg %p68
        %s206 = sand.u32 %s84, 1
        %s207 = scalar_lea.sflag [#allocation3], %s206
        %s208 = sand.u32 %s84, 1
        %s209 = smul.addr %s208, 384
        %s210 = scalar_lea.vmem [#allocation2], %s209
        %p211 = pneg %p97
        %p212 = pneg %p94
        %p213 = pneg %p125
        %p214 = pneg %p122
        %s215 = sand.u32 %s112, 1
        %s216 = sand.u32 %s112, 1
        %s217 = smul.addr %s216, 48
        %s218 = scalar_lea.vmem [#allocation4], %s217
        %s219 = smul.u32 4, %s21
        %p220 = scmp.lt.s32.totalorder %s219, 3
        %s221 = scalar_select %p220, %s219, 3
        %s222 = smul.addr %s221, 2
        %s223 = smul.addr %s222, 8
        %s224 = scalar_lea.vmem %s0, %s223
        %s225 = smul.u32 4, %s21
        %s226 = smul.u32 3, %s22
        %s227 = smul.u32 4, %s21
        %s228 = smul.u32 3, %s22
        %v229 = vld [vmem:[%s224] sm:$0xff]
        %v230 = vld [vmem:[%s224 + $0x8] sm:$0xff]
        %v231 = vld [vmem:[%s224 + $0x10] sm:$0xff]
        %v232 = vld [vmem:[%s224 + $0x18] sm:$0xff]
        %v233 = vld [vmem:[%s224 + $0x20] sm:$0xff]
        %v234 = vld [vmem:[%s224 + $0x28] sm:$0xff]
        %v235 = vld [vmem:[%s224 + $0x30] sm:$0xff]
        %v236 = vld [vmem:[%s224 + $0x38] sm:$0xff]
        %v237 = vmul.f32 %v229, %v229
        %v238 = vmul.f32 %v230, %v230
        %v239 = vmul.f32 %v231, %v231
        %v240 = vmul.f32 %v232, %v232
        %v241 = vmul.f32 %v233, %v233
        %v242 = vmul.f32 %v234, %v234
        %v243 = vmul.f32 %v235, %v235
        %v244 = vmul.f32 %v236, %v236
        %v245 = vadd.f32 %v237, %v238
        %246 = vadd.xlane.f32.xlu0 %v245
        %v247 = vpop.xlane.xlu0 %246
        %v248 = vadd.f32 %v239, %v240
        %249 = vadd.xlane.f32.xlu0 %v248
        %v250 = vpop.xlane.xlu0 %249
        %v251 = vadd.f32 %v241, %v242
        %252 = vadd.xlane.f32.xlu0 %v251
        %v253 = vpop.xlane.xlu0 %252
        %v254 = vadd.f32 %v243, %v244
        %255 = vadd.xlane.f32.xlu0 %v254
        %v256 = vpop.xlane.xlu0 %255
        %v257 = vrcp.pop 256.0
        %v258 = vmul.f32 256.0, %v257
        %v259 = vsub.f32 1.0, %v258
        %v260 = vmul.f32 %v257, %v259
        %v261 = vadd.f32 %v257, %v260
        %vm262 = vweird.f32 %v257
        %v263 = vsel %vm262, %v257, %v261
        %v264 = vmul.f32 %v247, %v263
        %v265 = vmul.f32 %v250, %v263
        %v266 = vmul.f32 %v253, %v263
        %v267 = vmul.f32 %v256, %v263
        %v268 = vadd.f32 %v264, 1e-05
        %v269 = vadd.f32 %v265, 1e-05
        %v270 = vadd.f32 %v266, 1e-05
        %v271 = vadd.f32 %v267, 1e-05
        %v272 = vrsqrt.pop %v268
        %v273 = vmul.f32 %v272, %v268
        %v274 = vmul.f32 %v273, %v272
        %v275 = vmul.f32 0.5, %v274
        %v276 = vsub.f32 1.5, %v275
        %v277 = vmul.f32 %v272, %v276
        %vm278 = vweird.f32 %v268
        %vm279 = vweird.f32 %v272
        %vm280 = vmor %vm278, %vm279
        %v281 = vsel %vm280, %v272, %v277
        %v282 = vrsqrt.pop %v269
        %v283 = vmul.f32 %v282, %v269
        %v284 = vmul.f32 %v283, %v282
        %v285 = vmul.f32 0.5, %v284
        %v286 = vsub.f32 1.5, %v285
        %v287 = vmul.f32 %v282, %v286
        %vm288 = vweird.f32 %v269
        %vm289 = vweird.f32 %v282
        %vm290 = vmor %vm288, %vm289
        %v291 = vsel %vm290, %v282, %v287
        %v292 = vrsqrt.pop %v270
        %v293 = vmul.f32 %v292, %v270
        %v294 = vmul.f32 %v293, %v292
        %v295 = vmul.f32 0.5, %v294
        %v296 = vsub.f32 1.5, %v295
        %v297 = vmul.f32 %v292, %v296
        %vm298 = vweird.f32 %v270
        %vm299 = vweird.f32 %v292
        %vm300 = vmor %vm298, %vm299
        %v301 = vsel %vm300, %v292, %v297
        %v302 = vrsqrt.pop %v271
        %v303 = vmul.f32 %v302, %v271
        %v304 = vmul.f32 %v303, %v302
        %v305 = vmul.f32 0.5, %v304
        %v306 = vsub.f32 1.5, %v305
        %v307 = vmul.f32 %v302, %v306
        %vm308 = vweird.f32 %v271
        %vm309 = vweird.f32 %v302
        %vm310 = vmor %vm308, %vm309
        %v311 = vsel %vm310, %v302, %v307
        %v312 = vmul.f32 %v229, %v281
        %v313 = vmul.f32 %v230, %v281
        %v314 = vmul.f32 %v231, %v291
        %v315 = vmul.f32 %v232, %v291
        %v316 = vmul.f32 %v233, %v301
        %v317 = vmul.f32 %v234, %v301
        %v318 = vmul.f32 %v235, %v311
        %v319 = vmul.f32 %v236, %v311
        %v320 = vld [vmem:[%s1] sm:$0x3]
        %v322 = vperm.slane %v320, 0
        %v323 = vperm.slane %v320, 1
        %v326 = vmul.f32 %v312, %v322
        %v327 = vmul.f32 %v313, %v323
        %v328 = vmul.f32 %v314, %v322
        %v329 = vmul.f32 %v315, %v323
        %v330 = vmul.f32 %v316, %v322
        %v331 = vmul.f32 %v317, %v323
        %v332 = vmul.f32 %v318, %v322
        %v333 = vmul.f32 %v319, %v323
        %v334 = vpack.c.bf16 %v328, %v326
        %v335 = vpack.c.bf16 %v329, %v327
        %v336 = vpack.c.bf16 %v332, %v330
        %v337 = vpack.c.bf16 %v333, %v331
        %v338 = vld [vmem:[%s190] sm:$0xff]
        %v339 = vld [vmem:[%s190 + $0x8] sm:$0xf]
        %v340 = vld [vmem:[%s190 + $0xc] sm:$0xff]
        %v341 = vld [vmem:[%s190 + $0x14] sm:$0xf]
        %v342 = vld [vmem:[%s190 + $0x18] sm:$0xff]
        %v343 = vld [vmem:[%s190 + $0x20] sm:$0xf]
        %v344 = vld [vmem:[%s190 + $0x24] sm:$0xff]
        %v345 = vld [vmem:[%s190 + $0x2c] sm:$0xf]
        %v346 = vld [vmem:[%s190 + $0x30] sm:$0xff]
        %v347 = vld [vmem:[%s190 + $0x38] sm:$0xf]
        %v348 = vld [vmem:[%s190 + $0x3c] sm:$0xff]
        %v349 = vld [vmem:[%s190 + $0x44] sm:$0xf]
        %v350 = vld [vmem:[%s190 + $0x48] sm:$0xff]
        %v351 = vld [vmem:[%s190 + $0x50] sm:$0xf]
        %v352 = vld [vmem:[%s190 + $0x54] sm:$0xff]
        %v353 = vld [vmem:[%s190 + $0x5c] sm:$0xf]
        %v354 = vld [vmem:[%s190 + $0x60] sm:$0xff]
        %v355 = vld [vmem:[%s190 + $0x68] sm:$0xf]
        %v356 = vld [vmem:[%s190 + $0x6c] sm:$0xff]
        %v357 = vld [vmem:[%s190 + $0x74] sm:$0xf]
        %v358 = vld [vmem:[%s190 + $0x78] sm:$0xff]
        %v359 = vld [vmem:[%s190 + $0x80] sm:$0xf]
        %v360 = vld [vmem:[%s190 + $0x84] sm:$0xff]
        %v361 = vld [vmem:[%s190 + $0x8c] sm:$0xf]
        %v362 = vld [vmem:[%s190 + $0x90] sm:$0xff]
        %v363 = vld [vmem:[%s190 + $0x98] sm:$0xf]
        %v364 = vld [vmem:[%s190 + $0x9c] sm:$0xff]
        %v365 = vld [vmem:[%s190 + $0xa4] sm:$0xf]
        %v366 = vld [vmem:[%s190 + $0xa8] sm:$0xff]
        %v367 = vld [vmem:[%s190 + $0xb0] sm:$0xf]
        %v368 = vld [vmem:[%s190 + $0xb4] sm:$0xff]
        %v369 = vld [vmem:[%s190 + $0xbc] sm:$0xf]
        %v370 = vld [vmem:[%s190 + $0xc0] sm:$0xff]
        %v371 = vld [vmem:[%s190 + $0xc8] sm:$0xf]
        %v372 = vld [vmem:[%s190 + $0xcc] sm:$0xff]
        %v373 = vld [vmem:[%s190 + $0xd4] sm:$0xf]
        %v374 = vld [vmem:[%s190 + $0xd8] sm:$0xff]
        %v375 = vld [vmem:[%s190 + $0xe0] sm:$0xf]
        %v376 = vld [vmem:[%s190 + $0xe4] sm:$0xff]
        %v377 = vld [vmem:[%s190 + $0xec] sm:$0xf]
        %v378 = vld [vmem:[%s190 + $0xf0] sm:$0xff]
        %v379 = vld [vmem:[%s190 + $0xf8] sm:$0xf]
        %v380 = vld [vmem:[%s190 + $0xfc] sm:$0xff]
        %v381 = vld [vmem:[%s190 + $0x104] sm:$0xf]
        %v382 = vld [vmem:[%s190 + $0x108] sm:$0xff]
        %v383 = vld [vmem:[%s190 + $0x110] sm:$0xf]
        %v384 = vld [vmem:[%s190 + $0x114] sm:$0xff]
        %v385 = vld [vmem:[%s190 + $0x11c] sm:$0xf]
        %v386 = vld [vmem:[%s190 + $0x120] sm:$0xff]
        %v387 = vld [vmem:[%s190 + $0x128] sm:$0xf]
        %v388 = vld [vmem:[%s190 + $0x12c] sm:$0xff]
        %v389 = vld [vmem:[%s190 + $0x134] sm:$0xf]
        %v390 = vld [vmem:[%s190 + $0x138] sm:$0xff]
        %v391 = vld [vmem:[%s190 + $0x140] sm:$0xf]
        %v392 = vld [vmem:[%s190 + $0x144] sm:$0xff]
        %v393 = vld [vmem:[%s190 + $0x14c] sm:$0xf]
        %v394 = vld [vmem:[%s190 + $0x150] sm:$0xff]
        %v395 = vld [vmem:[%s190 + $0x158] sm:$0xf]
        %v396 = vld [vmem:[%s190 + $0x15c] sm:$0xff]
        %v397 = vld [vmem:[%s190 + $0x164] sm:$0xf]
        %v398 = vld [vmem:[%s190 + $0x168] sm:$0xff]
        %v399 = vld [vmem:[%s190 + $0x170] sm:$0xf]
        %v400 = vld [vmem:[%s190 + $0x174] sm:$0xff]
        %v401 = vld [vmem:[%s190 + $0x17c] sm:$0xf]
        %v466 = vunpack.c.l.b16 %v338
        %v467 = vunpack.c.h.b16 %v338
        %v468 = vunpack.c.l.b16 %v339
        %v469 = vunpack.c.l.b16 %v340
        %v470 = vunpack.c.h.b16 %v340
        %v471 = vunpack.c.l.b16 %v341
        %v472 = vunpack.c.l.b16 %v342
        %v473 = vunpack.c.h.b16 %v342
        %v474 = vunpack.c.l.b16 %v343
        %v475 = vunpack.c.l.b16 %v344
        %v476 = vunpack.c.h.b16 %v344
        %v477 = vunpack.c.l.b16 %v345
        %v478 = vunpack.c.l.b16 %v346
        %v479 = vunpack.c.h.b16 %v346
        %v480 = vunpack.c.l.b16 %v347
        %v481 = vunpack.c.l.b16 %v348
        %v482 = vunpack.c.h.b16 %v348
        %v483 = vunpack.c.l.b16 %v349
        %v484 = vunpack.c.l.b16 %v350
        %v485 = vunpack.c.h.b16 %v350
        %v486 = vunpack.c.l.b16 %v351
        %v487 = vunpack.c.l.b16 %v352
        %v488 = vunpack.c.h.b16 %v352
        %v489 = vunpack.c.l.b16 %v353
        %v490 = vunpack.c.l.b16 %v354
        %v491 = vunpack.c.h.b16 %v354
        %v492 = vunpack.c.l.b16 %v355
        %v493 = vunpack.c.l.b16 %v356
        %v494 = vunpack.c.h.b16 %v356
        %v495 = vunpack.c.l.b16 %v357
        %v496 = vunpack.c.l.b16 %v358
        %v497 = vunpack.c.h.b16 %v358
        %v498 = vunpack.c.l.b16 %v359
        %v499 = vunpack.c.l.b16 %v360
        %v500 = vunpack.c.h.b16 %v360
        %v501 = vunpack.c.l.b16 %v361
        %v502 = vunpack.c.l.b16 %v362
        %v503 = vunpack.c.h.b16 %v362
        %v504 = vunpack.c.l.b16 %v363
        %v505 = vunpack.c.l.b16 %v364
        %v506 = vunpack.c.h.b16 %v364
        %v507 = vunpack.c.l.b16 %v365
        %v508 = vunpack.c.l.b16 %v366
        %v509 = vunpack.c.h.b16 %v366
        %v510 = vunpack.c.l.b16 %v367
        %v511 = vunpack.c.l.b16 %v368
        %v512 = vunpack.c.h.b16 %v368
        %v513 = vunpack.c.l.b16 %v369
        %v514 = vunpack.c.l.b16 %v370
        %v515 = vunpack.c.h.b16 %v370
        %v516 = vunpack.c.l.b16 %v371
        %v517 = vunpack.c.l.b16 %v372
        %v518 = vunpack.c.h.b16 %v372
        %v519 = vunpack.c.l.b16 %v373
        %v520 = vunpack.c.l.b16 %v374
        %v521 = vunpack.c.h.b16 %v374
        %v522 = vunpack.c.l.b16 %v375
        %v523 = vunpack.c.l.b16 %v376
        %v524 = vunpack.c.h.b16 %v376
        %v525 = vunpack.c.l.b16 %v377
        %v526 = vunpack.c.l.b16 %v378
        %v527 = vunpack.c.h.b16 %v378
        %v528 = vunpack.c.l.b16 %v379
        %v529 = vunpack.c.l.b16 %v380
        %v530 = vunpack.c.h.b16 %v380
        %v531 = vunpack.c.l.b16 %v381
        %v532 = vunpack.c.l.b16 %v382
        %v533 = vunpack.c.h.b16 %v382
        %v534 = vunpack.c.l.b16 %v383
        %v535 = vunpack.c.l.b16 %v384
        %v536 = vunpack.c.h.b16 %v384
        %v537 = vunpack.c.l.b16 %v385
        %v538 = vunpack.c.l.b16 %v386
        %v539 = vunpack.c.h.b16 %v386
        %v540 = vunpack.c.l.b16 %v387
        %v541 = vunpack.c.l.b16 %v388
        %v542 = vunpack.c.h.b16 %v388
        %v543 = vunpack.c.l.b16 %v389
        %v544 = vunpack.c.l.b16 %v390
        %v545 = vunpack.c.h.b16 %v390
        %v546 = vunpack.c.l.b16 %v391
        %v547 = vunpack.c.l.b16 %v392
        %v548 = vunpack.c.h.b16 %v392
        %v549 = vunpack.c.l.b16 %v393
        %v550 = vunpack.c.l.b16 %v394
        %v551 = vunpack.c.h.b16 %v394
        %v552 = vunpack.c.l.b16 %v395
        %v553 = vunpack.c.l.b16 %v396
        %v554 = vunpack.c.h.b16 %v396
        %v555 = vunpack.c.l.b16 %v397
        %v556 = vunpack.c.l.b16 %v398
        %v557 = vunpack.c.h.b16 %v398
        %v558 = vunpack.c.l.b16 %v399
        %v559 = vunpack.c.l.b16 %v400
        %v560 = vunpack.c.h.b16 %v400
        %v561 = vunpack.c.l.b16 %v401
        %v562 = vpack.c.b16 %v469, %v466
        %v563 = vpack.c.b16 %v470, %v467
        %v564 = vpack.c.b16 %v471, %v468
        %v565 = vpack.c.b16 %v475, %v472
        %v566 = vpack.c.b16 %v476, %v473
        %v567 = vpack.c.b16 %v477, %v474
        %v568 = vpack.c.b16 %v481, %v478
        %v569 = vpack.c.b16 %v482, %v479
        %v570 = vpack.c.b16 %v483, %v480
        %v571 = vpack.c.b16 %v487, %v484
        %v572 = vpack.c.b16 %v488, %v485
        %v573 = vpack.c.b16 %v489, %v486
        %v574 = vpack.c.b16 %v493, %v490
        %v575 = vpack.c.b16 %v494, %v491
        %v576 = vpack.c.b16 %v495, %v492
        %v577 = vpack.c.b16 %v499, %v496
        %v578 = vpack.c.b16 %v500, %v497
        %v579 = vpack.c.b16 %v501, %v498
        %v580 = vpack.c.b16 %v505, %v502
        %v581 = vpack.c.b16 %v506, %v503
        %v582 = vpack.c.b16 %v507, %v504
        %v583 = vpack.c.b16 %v511, %v508
        %v584 = vpack.c.b16 %v512, %v509
        %v585 = vpack.c.b16 %v513, %v510
        %v586 = vpack.c.b16 %v517, %v514
        %v587 = vpack.c.b16 %v518, %v515
        %v588 = vpack.c.b16 %v519, %v516
        %v589 = vpack.c.b16 %v523, %v520
        %v590 = vpack.c.b16 %v524, %v521
        %v591 = vpack.c.b16 %v525, %v522
        %v592 = vpack.c.b16 %v529, %v526
        %v593 = vpack.c.b16 %v530, %v527
        %v594 = vpack.c.b16 %v531, %v528
        %v595 = vpack.c.b16 %v535, %v532
        %v596 = vpack.c.b16 %v536, %v533
        %v597 = vpack.c.b16 %v537, %v534
        %v598 = vpack.c.b16 %v541, %v538
        %v599 = vpack.c.b16 %v542, %v539
        %v600 = vpack.c.b16 %v543, %v540
        %v601 = vpack.c.b16 %v547, %v544
        %v602 = vpack.c.b16 %v548, %v545
        %v603 = vpack.c.b16 %v549, %v546
        %v604 = vpack.c.b16 %v553, %v550
        %v605 = vpack.c.b16 %v554, %v551
        %v606 = vpack.c.b16 %v555, %v552
        %v607 = vpack.c.b16 %v559, %v556
        %v608 = vpack.c.b16 %v560, %v557
        %v609 = vpack.c.b16 %v561, %v558
        %658 = vmatpush.bf16.msra.mxu0 %v583
        %659 = vmatpush.bf16.msra.mxu0 %v580
        %660 = vmatpush.bf16.msra.mxu0 %v577
        %661 = vmatpush.bf16.msra.mxu0 %v574
        %662 = vmatpush.bf16.msra.mxu0 %v571
        %663 = vmatpush.bf16.msra.mxu0 %v568
        %664 = vmatpush.bf16.msra.mxu0 %v565
        %665 = vmatpush.bf16.msra.mxu0 %v562
        %666 = vmatmul.bf16.gmra.mxu0 %v334
        %v667 = vpop.f32.mrf.mxu0
        %v668 = vadd.f32 0.0, %v667
        %v669 = vpop.f32.mrf.mxu0
        %v670 = vadd.f32 0.0, %v669
        %671 = vmatmul.bf16.gmra.mxu0 %v336
        %v672 = vpop.f32.mrf.mxu0
        %v673 = vadd.f32 0.0, %v672
        %v674 = vpop.f32.mrf.mxu0
        %v675 = vadd.f32 0.0, %v674
        %676 = vdwg.mxu0
        %677 = vmatpush.bf16.msra.mxu0 %v607
        %678 = vmatpush.bf16.msra.mxu0 %v604
        %679 = vmatpush.bf16.msra.mxu0 %v601
        %680 = vmatpush.bf16.msra.mxu0 %v598
        %681 = vmatpush.bf16.msra.mxu0 %v595
        %682 = vmatpush.bf16.msra.mxu0 %v592
        %683 = vmatpush.bf16.msra.mxu0 %v589
        %684 = vmatpush.bf16.msra.mxu0 %v586
        %685 = vmatmul.bf16.gmra.mxu0 %v335
        %v686 = vpop.f32.mrf.mxu0
        %v687 = vadd.f32 %v668, %v686
        %v688 = vpop.f32.mrf.mxu0
        %v689 = vadd.f32 %v670, %v688
        %690 = vmatmul.bf16.gmra.mxu0 %v337
        %v691 = vpop.f32.mrf.mxu0
        %v692 = vadd.f32 %v673, %v691
        %v693 = vpop.f32.mrf.mxu0
        %v694 = vadd.f32 %v675, %v693
        %695 = vdwg.mxu0
        %696 = vmatpush.bf16.msra.mxu0 %v584
        %697 = vmatpush.bf16.msra.mxu0 %v581
        %698 = vmatpush.bf16.msra.mxu0 %v578
        %699 = vmatpush.bf16.msra.mxu0 %v575
        %700 = vmatpush.bf16.msra.mxu0 %v572
        %701 = vmatpush.bf16.msra.mxu0 %v569
        %702 = vmatpush.bf16.msra.mxu0 %v566
        %703 = vmatpush.bf16.msra.mxu0 %v563
        %704 = vmatmul.bf16.gmra.mxu0 %v334
        %v705 = vpop.f32.mrf.mxu0
        %v706 = vadd.f32 0.0, %v705
        %v707 = vpop.f32.mrf.mxu0
        %v708 = vadd.f32 0.0, %v707
        %709 = vmatmul.bf16.gmra.mxu0 %v336
        %v710 = vpop.f32.mrf.mxu0
        %v711 = vadd.f32 0.0, %v710
        %v712 = vpop.f32.mrf.mxu0
        %v713 = vadd.f32 0.0, %v712
        %714 = vdwg.mxu0
        %715 = vmatpush.bf16.msra.mxu0 %v608
        %716 = vmatpush.bf16.msra.mxu0 %v605
        %717 = vmatpush.bf16.msra.mxu0 %v602
        %718 = vmatpush.bf16.msra.mxu0 %v599
        %719 = vmatpush.bf16.msra.mxu0 %v596
        %720 = vmatpush.bf16.msra.mxu0 %v593
        %721 = vmatpush.bf16.msra.mxu0 %v590
        %722 = vmatpush.bf16.msra.mxu0 %v587
        %723 = vmatmul.bf16.gmra.mxu0 %v335
        %v724 = vpop.f32.mrf.mxu0
        %v725 = vadd.f32 %v706, %v724
        %v726 = vpop.f32.mrf.mxu0
        %v727 = vadd.f32 %v708, %v726
        %728 = vmatmul.bf16.gmra.mxu0 %v337
        %v729 = vpop.f32.mrf.mxu0
        %v730 = vadd.f32 %v711, %v729
        %v731 = vpop.f32.mrf.mxu0
        %v732 = vadd.f32 %v713, %v731
        %733 = vdwg.mxu0
        %734 = vmatpush.bf16.msra.mxu0 %v585
        %735 = vmatpush.bf16.msra.mxu0 %v582
        %736 = vmatpush.bf16.msra.mxu0 %v579
        %737 = vmatpush.bf16.msra.mxu0 %v576
        %738 = vmatpush.bf16.msra.mxu0 %v573
        %739 = vmatpush.bf16.msra.mxu0 %v570
        %740 = vmatpush.bf16.msra.mxu0 %v567
        %741 = vmatpush.bf16.msra.mxu0 %v564
        %742 = vmatmul.bf16.gmra.mxu0 %v334
        %v743 = vpop.f32.mrf.mxu0
        %v744 = vadd.f32 0.0, %v743
        %v745 = vpop.f32.mrf.mxu0
        %v746 = vadd.f32 0.0, %v745
        %747 = vmatmul.bf16.gmra.mxu0 %v336
        %v748 = vpop.f32.mrf.mxu0
        %v749 = vadd.f32 0.0, %v748
        %v750 = vpop.f32.mrf.mxu0
        %v751 = vadd.f32 0.0, %v750
        %752 = vdwg.mxu0
        %753 = vmatpush.bf16.msra.mxu0 %v609
        %754 = vmatpush.bf16.msra.mxu0 %v606
        %755 = vmatpush.bf16.msra.mxu0 %v603
        %756 = vmatpush.bf16.msra.mxu0 %v600
        %757 = vmatpush.bf16.msra.mxu0 %v597
        %758 = vmatpush.bf16.msra.mxu0 %v594
        %759 = vmatpush.bf16.msra.mxu0 %v591
        %760 = vmatpush.bf16.msra.mxu0 %v588
        %761 = vmatmul.bf16.gmra.mxu0 %v335
        %v762 = vpop.f32.mrf.mxu0
        %v763 = vadd.f32 %v744, %v762
        %v764 = vpop.f32.mrf.mxu0
        %v765 = vadd.f32 %v746, %v764
        %766 = vmatmul.bf16.gmra.mxu0 %v337
        %v767 = vpop.f32.mrf.mxu0
        %v768 = vadd.f32 %v749, %v767
        %v769 = vpop.f32.mrf.mxu0
        %v770 = vadd.f32 %v751, %v769
        %771 = vdwg.mxu0
        %v772 = vpack.c.bf16 %v725, %v687
        %v773 = vpack.c.bf16 %v763, %v763
        %v774 = vpack.c.bf16 %v727, %v689
        %v775 = vpack.c.bf16 %v765, %v765
        %v776 = vpack.c.bf16 %v730, %v692
        %v777 = vpack.c.bf16 %v768, %v768
        %v778 = vpack.c.bf16 %v732, %v694
        %v779 = vpack.c.bf16 %v770, %v770
        %780 = vst [vmem:[%s218] sm:$0xff] %v772
        %781 = vst [vmem:[%s218 + $0x8] sm:$0xf] %v773
        %782 = vst [vmem:[%s218 + $0xc] sm:$0xff] %v774
        %783 = vst [vmem:[%s218 + $0x14] sm:$0xf] %v775
        %784 = vst [vmem:[%s218 + $0x18] sm:$0xff] %v776
        %785 = vst [vmem:[%s218 + $0x20] sm:$0xf] %v777
        %786 = vst [vmem:[%s218 + $0x24] sm:$0xff] %v778
        %787 = vst [vmem:[%s218 + $0x2c] sm:$0xf] %v779
        %s788 = sand.u32 %s112, 1
        %s789 = sand.u32 %s112, 1
        %s790 = smul.addr %s789, 48
        %s791 = scalar_lea.vmem [#allocation4], %s790
        // Predicated region
        $region37: #{decoder_forward.19} parent=31 // pred_check
          %p792 = pneg %p122
        $region38: #{decoder_forward.19} parent=31 // pred_check_branch
          %794 = sbr.rel (%p792) target = $region40
        $region39: #{decoder_forward.19} parent=31 // pred_region
          %s795 = smul.u32 4, %s21
          %s796 = smul.u32 3, %s22
          %s797 = smul.addr %s795, 6
          %s798 = sadd.s32 %s796, %s797
          %s799 = smul.addr %s798, 4
          %s800 = scalar_lea.vmem %s3, %s799
          // Predicated region
          $region41: #{decoder_forward.19} parent=39 // pred_check
            _
          $region42: #{decoder_forward.19} parent=39 // pred_check_branch
            %802 = sbr.rel (0) target = $region44
          $region43: #{decoder_forward.19} parent=39 // pred_region
            // Predicated region
            $region45: #{decoder_forward.19} parent=43 // pred_check
              _
            $region46: #{decoder_forward.19} parent=43 // pred_check_branch
              %804 = sbr.rel (0) target = $region48
            $region47: #{decoder_forward.19} parent=43 // pred_region
              %s805 = scalar_lea.vmem %s791, 8 [#allocation4]
              %s806 = scalar_lea.vmem %s800, 8
              loop: start=0, step=1, limit=1
              $region49: #{decoder_forward.19} parent=47 // loop_pre_header
                _
              $region50: #{decoder_forward.19} parent=47 // loop_header
                %s808 = sphi 0, %s812
                %p809 = scmp.ge.s32.totalorder %s808, 1
                %s813 = sphi %s791, %s791
                %s814 = sphi %s800, %s800
              $region51: #{decoder_forward.19} parent=47 // loop_header_branch
                %811 = sbr.rel (%p809) target = $region55
              $region52: #{decoder_forward.19} parent=47 // loop_body
                %v815 = vld [vmem:[%s813] sm:$0xff]
                %816 = vst [vmem:[%s814] sm:$0xff] %v815
                %v817 = vld [vmem:[%s813 + $0xc] sm:$0xff]
                %818 = vst [vmem:[%s814 + $0x18] sm:$0xff] %v817
                %v819 = vld [vmem:[%s813 + $0x18] sm:$0xff]
                %820 = vst [vmem:[%s814 + $0x30] sm:$0xff] %v819
                %v821 = vld [vmem:[%s813 + $0x24] sm:$0xff]
                %822 = vst [vmem:[%s814 + $0x48] sm:$0xff] %v821
              $region53: #{decoder_forward.19} parent=47 // loop_footer
                %s812 = sadd.s32 1, %s808
              $region54: #{decoder_forward.19} parent=47 // loop_footer_branch
                %807 = sbr.rel target = $region50
              $region55: #{decoder_forward.19} parent=47 // loop_exit
                _
              %s824 = ssub.s32 16, 1
              loop: start=0, step=1, limit=1
              $region56: #{decoder_forward.19} parent=47 // loop_pre_header
                _
              $region57: #{decoder_forward.19} parent=47 // loop_header
                %s826 = sphi 0, %s830
                %p827 = scmp.ge.s32.totalorder %s826, 1
                %s831 = sphi %s805, %s805
                %s832 = sphi %s806, %s806
              $region58: #{decoder_forward.19} parent=47 // loop_header_branch
                %829 = sbr.rel (%p827) target = $region62
              $region59: #{decoder_forward.19} parent=47 // loop_body
                %v833 = vld [vmem:[%s831] sm:%s824]
                %834 = vst [vmem:[%s832] sm:%s824] %v833
                %v835 = vld [vmem:[%s831 + $0xc] sm:%s824]
                %836 = vst [vmem:[%s832 + $0x18] sm:%s824] %v835
                %v837 = vld [vmem:[%s831 + $0x18] sm:%s824]
                %838 = vst [vmem:[%s832 + $0x30] sm:%s824] %v837
                %v839 = vld [vmem:[%s831 + $0x24] sm:%s824]
                %840 = vst [vmem:[%s832 + $0x48] sm:%s824] %v839
              $region60: #{decoder_forward.19} parent=47 // loop_footer
                %s830 = sadd.s32 1, %s826
              $region61: #{decoder_forward.19} parent=47 // loop_footer_branch
                %825 = sbr.rel target = $region57
              $region62: #{decoder_forward.19} parent=47 // loop_exit
                _
            $region48: #{decoder_forward.19} parent=43 // pred_fallthru
              _
          $region44: #{decoder_forward.19} parent=39 // pred_fallthru
            _
          %841 = vnop
        $region40: #{decoder_forward.19} parent=31 // pred_fallthru
          _
      $region32: #{decoder_forward.19} parent=5 // pred_fallthru
        _
      %p842 = scmp.le.s32.totalorder 2, %s12
      // Predicated region
      $region63: #{decoder_forward.19} parent=5 // pred_check
        %p843 = pneg %p842
      $region64: #{decoder_forward.19} parent=5 // pred_check_branch
        %845 = sbr.rel (%p843) target = $region66
      $region65: #{decoder_forward.19} parent=5 // pred_region
        %s846 = ssub.s32 %s12, 2
        // Predicated region
        $region67: #{decoder_forward.19} parent=65 // pred_check
          %p847 = pneg %p128
        $region68: #{decoder_forward.19} parent=65 // pred_check_branch
          %849 = sbr.rel (%p847) target = $region70
        $region69: #{decoder_forward.19} parent=65 // pred_region
          %s850 = sand.u32 %s113, 1
          %s851 = sand.u32 %s113, 1
          %s852 = smul.addr %s851, 48
          %s853 = scalar_lea.vmem [#allocation4], %s852
        $region70: #{decoder_forward.19} parent=65 // pred_fallthru
          _
      $region66: #{decoder_forward.19} parent=5 // pred_fallthru
        _
    $region6: #{decoder_forward.19} parent=1 // loop_footer
      %s16 = sadd.s32 1, %s12
    $region7: #{decoder_forward.19} parent=1 // loop_footer_branch
      %11 = sbr.rel target = $region3
    $region8: #{decoder_forward.19} parent=1 // loop_exit
      _
    %854 = vsyncpa [#allocation3], 1
    %s855 = scalar_lea.sflag [#allocation3], 1
    %856 = vsyncpa %s855, 1

// kernel: decoder_forward.21
$region0: #{decoder_forward.21}
  #allocation0 [shape = 'u32[]', space=smem, size = 0x4, offset = 0x4, fixed_abs, tag = 'smem constant byte address 0x4 - core index']
  #allocation1 [shape = 'u32[72,128]{1,0:T(1,128)}', space=vmem, size = 0x9000, scoped, tag = 'internal scratch']
  %s0 = inlined_call_operand.vmem [shape: bf16[32,256], index: 0, kind: input, shape index: {}]
  %s1 = inlined_call_operand.hbm [shape: bf16[256,256], index: 1, kind: input, shape index: {}]
  %s2 = inlined_call_operand.vmem [shape: f32[32,256], index: 2, kind: input, shape index: {}]
  %s3 = inlined_call_operand.vmem [shape: f32[32,256], index: 3, kind: output, shape index: {}]
  %s4 = sld [smem:[#allocation0]]
  $region26: #{decoder_forward.21} parent=0
    _
  %s6 = ssub.s32 1, %s4
  %s7 = scalar_select 0, %s6, %s4
  $region1: #{decoder_forward.21} parent=0
    #allocation2 [shape = 'u8[131072]{0}', space=vmem, size = 0x20000, scoped, tag = 'input window, operand 1, single buffered']
    #allocation3 [shape = 's32[1]{0}', space=sflag, size = 0x4, scoped, tag = 'scoped memory for decoder_forward.21']
    %8 = vsyncpa [#allocation3], 0
    // Predicated region
    $region2: #{decoder_forward.21} parent=1 // pred_check
      _
    $region3: #{decoder_forward.21} parent=1 // pred_check_branch
      %10 = sbr.rel (0) target = $region5
    $region4: #{decoder_forward.21} parent=1 // pred_region
      _
    $region5: #{decoder_forward.21} parent=1 // pred_fallthru
      _
    // Predicated region
    $region6: #{decoder_forward.21} parent=1 // pred_check
      _
    $region7: #{decoder_forward.21} parent=1 // pred_check_branch
      %12 = sbr.rel (0) target = $region9
    $region8: #{decoder_forward.21} parent=1 // pred_region
      %14 = vsyncadd [#allocation3], 0
      %s15 = sshll.u32 %s1, 4
      %s16 = int_to_ptr.hbm [resolvable:$true] %s15
      %s17 = sshll.u32 [#allocation2], 4
      %s18 = int_to_ptr.vmem [resolvable:$true] %s17
      %23 = dma.hbm_to_vmem [thread:$0]  %s16, 4096, %s18, [#allocation3], 128, 128, 8
    $region9: #{decoder_forward.21} parent=1 // pred_fallthru
      _
    // Predicated region
    $region10: #{decoder_forward.21} parent=1 // pred_check
      _
    $region11: #{decoder_forward.21} parent=1 // pred_check_branch
      %25 = sbr.rel (0) target = $region13
    $region12: #{decoder_forward.21} parent=1 // pred_region
      _
    $region13: #{decoder_forward.21} parent=1 // pred_fallthru
      _
    // Predicated region
    $region14: #{decoder_forward.21} parent=1 // pred_check
      _
    $region15: #{decoder_forward.21} parent=1 // pred_check_branch
      %27 = sbr.rel (0) target = $region17
    $region16: #{decoder_forward.21} parent=1 // pred_region
      %29 = dma.done [#allocation3], 4096
    $region17: #{decoder_forward.21} parent=1 // pred_fallthru
      _
    %v30 = vld [vmem:[%s0] sm:$0xff]
    %v31 = vld [vmem:[%s0 + $0x8] sm:$0xff]
    %v32 = vld [vmem:[%s0 + $0x10] sm:$0xff]
    %v33 = vld [vmem:[%s0 + $0x18] sm:$0xff]
    %v34 = vld [vmem:[#allocation2] sm:$0xff]
    %v35 = vld [vmem:[#allocation2 + $0x8] sm:$0xff]
    %v36 = vld [vmem:[#allocation2 + $0x10] sm:$0xff]
    %v37 = vld [vmem:[#allocation2 + $0x18] sm:$0xff]
    %v38 = vld [vmem:[#allocation2 + $0x20] sm:$0xff]
    %v39 = vld [vmem:[#allocation2 + $0x28] sm:$0xff]
    %v40 = vld [vmem:[#allocation2 + $0x30] sm:$0xff]
    %v41 = vld [vmem:[#allocation2 + $0x38] sm:$0xff]
    %v42 = vld [vmem:[#allocation2 + $0x40] sm:$0xff]
    %v43 = vld [vmem:[#allocation2 + $0x48] sm:$0xff]
    %v44 = vld [vmem:[#allocation2 + $0x50] sm:$0xff]
    %v45 = vld [vmem:[#allocation2 + $0x58] sm:$0xff]
    %v46 = vld [vmem:[#allocation2 + $0x60] sm:$0xff]
    %v47 = vld [vmem:[#allocation2 + $0x68] sm:$0xff]
    %v48 = vld [vmem:[#allocation2 + $0x70] sm:$0xff]
    %v49 = vld [vmem:[#allocation2 + $0x78] sm:$0xff]
    %v50 = vld [vmem:[#allocation2 + $0x80] sm:$0xff]
    %v51 = vld [vmem:[#allocation2 + $0x88] sm:$0xff]
    %v52 = vld [vmem:[#allocation2 + $0x90] sm:$0xff]
    %v53 = vld [vmem:[#allocation2 + $0x98] sm:$0xff]
    %v54 = vld [vmem:[#allocation2 + $0xa0] sm:$0xff]
    %v55 = vld [vmem:[#allocation2 + $0xa8] sm:$0xff]
    %v56 = vld [vmem:[#allocation2 + $0xb0] sm:$0xff]
    %v57 = vld [vmem:[#allocation2 + $0xb8] sm:$0xff]
    %v58 = vld [vmem:[#allocation2 + $0xc0] sm:$0xff]
    %v59 = vld [vmem:[#allocation2 + $0xc8] sm:$0xff]
    %v60 = vld [vmem:[#allocation2 + $0xd0] sm:$0xff]
    %v61 = vld [vmem:[#allocation2 + $0xd8] sm:$0xff]
    %v62 = vld [vmem:[#allocation2 + $0xe0] sm:$0xff]
    %v63 = vld [vmem:[#allocation2 + $0xe8] sm:$0xff]
    %v64 = vld [vmem:[#allocation2 + $0xf0] sm:$0xff]
    %v65 = vld [vmem:[#allocation2 + $0xf8] sm:$0xff]
    %v66 = vld [vmem:[%s2] sm:$0xff]
    %v67 = vld [vmem:[%s2 + $0x8] sm:$0xff]
    %v68 = vld [vmem:[%s2 + $0x10] sm:$0xff]
    %v69 = vld [vmem:[%s2 + $0x18] sm:$0xff]
    %v70 = vld [vmem:[%s2 + $0x20] sm:$0xff]
    %v71 = vld [vmem:[%s2 + $0x28] sm:$0xff]
    %v72 = vld [vmem:[%s2 + $0x30] sm:$0xff]
    %v73 = vld [vmem:[%s2 + $0x38] sm:$0xff]
    %v78 = vunpack.c.l.b16 %v30
    %v79 = vunpack.c.h.b16 %v30
    %v80 = vunpack.c.l.b16 %v31
    %v81 = vunpack.c.h.b16 %v31
    %v82 = vunpack.c.l.b16 %v32
    %v83 = vunpack.c.h.b16 %v32
    %v84 = vunpack.c.l.b16 %v33
    %v85 = vunpack.c.h.b16 %v33
    %v86 = vpack.c.b16 %v80, %v78
    %v87 = vpack.c.b16 %v81, %v79
    %v88 = vpack.c.b16 %v84, %v82
    %v89 = vpack.c.b16 %v85, %v83
    %v126 = vunpack.c.l.b16 %v34
    %v127 = vunpack.c.h.b16 %v34
    %v128 = vunpack.c.l.b16 %v35
    %v129 = vunpack.c.h.b16 %v35
    %v130 = vunpack.c.l.b16 %v36
    %v131 = vunpack.c.h.b16 %v36
    %v132 = vunpack.c.l.b16 %v37
    %v133 = vunpack.c.h.b16 %v37
    %v134 = vunpack.c.l.b16 %v38
    %v135 = vunpack.c.h.b16 %v38
    %v136 = vunpack.c.l.b16 %v39
    %v137 = vunpack.c.h.b16 %v39
    %v138 = vunpack.c.l.b16 %v40
    %v139 = vunpack.c.h.b16 %v40
    %v140 = vunpack.c.l.b16 %v41
    %v141 = vunpack.c.h.b16 %v41
    %v142 = vunpack.c.l.b16 %v42
    %v143 = vunpack.c.h.b16 %v42
    %v144 = vunpack.c.l.b16 %v43
    %v145 = vunpack.c.h.b16 %v43
    %v146 = vunpack.c.l.b16 %v44
    %v147 = vunpack.c.h.b16 %v44
    %v148 = vunpack.c.l.b16 %v45
    %v149 = vunpack.c.h.b16 %v45
    %v150 = vunpack.c.l.b16 %v46
    %v151 = vunpack.c.h.b16 %v46
    %v152 = vunpack.c.l.b16 %v47
    %v153 = vunpack.c.h.b16 %v47
    %v154 = vunpack.c.l.b16 %v48
    %v155 = vunpack.c.h.b16 %v48
    %v156 = vunpack.c.l.b16 %v49
    %v157 = vunpack.c.h.b16 %v49
    %v158 = vunpack.c.l.b16 %v50
    %v159 = vunpack.c.h.b16 %v50
    %v160 = vunpack.c.l.b16 %v51
    %v161 = vunpack.c.h.b16 %v51
    %v162 = vunpack.c.l.b16 %v52
    %v163 = vunpack.c.h.b16 %v52
    %v164 = vunpack.c.l.b16 %v53
    %v165 = vunpack.c.h.b16 %v53
    %v166 = vunpack.c.l.b16 %v54
    %v167 = vunpack.c.h.b16 %v54
    %v168 = vunpack.c.l.b16 %v55
    %v169 = vunpack.c.h.b16 %v55
    %v170 = vunpack.c.l.b16 %v56
    %v171 = vunpack.c.h.b16 %v56
    %v172 = vunpack.c.l.b16 %v57
    %v173 = vunpack.c.h.b16 %v57
    %v174 = vunpack.c.l.b16 %v58
    %v175 = vunpack.c.h.b16 %v58
    %v176 = vunpack.c.l.b16 %v59
    %v177 = vunpack.c.h.b16 %v59
    %v178 = vunpack.c.l.b16 %v60
    %v179 = vunpack.c.h.b16 %v60
    %v180 = vunpack.c.l.b16 %v61
    %v181 = vunpack.c.h.b16 %v61
    %v182 = vunpack.c.l.b16 %v62
    %v183 = vunpack.c.h.b16 %v62
    %v184 = vunpack.c.l.b16 %v63
    %v185 = vunpack.c.h.b16 %v63
    %v186 = vunpack.c.l.b16 %v64
    %v187 = vunpack.c.h.b16 %v64
    %v188 = vunpack.c.l.b16 %v65
    %v189 = vunpack.c.h.b16 %v65
    %v190 = vpack.c.b16 %v128, %v126
    %v191 = vpack.c.b16 %v129, %v127
    %v192 = vpack.c.b16 %v132, %v130
    %v193 = vpack.c.b16 %v133, %v131
    %v194 = vpack.c.b16 %v136, %v134
    %v195 = vpack.c.b16 %v137, %v135
    %v196 = vpack.c.b16 %v140, %v138
    %v197 = vpack.c.b16 %v141, %v139
    %v198 = vpack.c.b16 %v144, %v142
    %v199 = vpack.c.b16 %v145, %v143
    %v200 = vpack.c.b16 %v148, %v146
    %v201 = vpack.c.b16 %v149, %v147
    %v202 = vpack.c.b16 %v152, %v150
    %v203 = vpack.c.b16 %v153, %v151
    %v204 = vpack.c.b16 %v156, %v154
    %v205 = vpack.c.b16 %v157, %v155
    %v206 = vpack.c.b16 %v160, %v158
    %v207 = vpack.c.b16 %v161, %v159
    %v208 = vpack.c.b16 %v164, %v162
    %v209 = vpack.c.b16 %v165, %v163
    %v210 = vpack.c.b16 %v168, %v166
    %v211 = vpack.c.b16 %v169, %v167
    %v212 = vpack.c.b16 %v172, %v170
    %v213 = vpack.c.b16 %v173, %v171
    %v214 = vpack.c.b16 %v176, %v174
    %v215 = vpack.c.b16 %v177, %v175
    %v216 = vpack.c.b16 %v180, %v178
    %v217 = vpack.c.b16 %v181, %v179
    %v218 = vpack.c.b16 %v184, %v182
    %v219 = vpack.c.b16 %v185, %v183
    %v220 = vpack.c.b16 %v188, %v186
    %v221 = vpack.c.b16 %v189, %v187
    %254 = vmatpush.bf16.msra.mxu0 %v204
    %255 = vmatpush.bf16.msra.mxu0 %v202
    %256 = vmatpush.bf16.msra.mxu0 %v200
    %257 = vmatpush.bf16.msra.mxu0 %v198
    %258 = vmatpush.bf16.msra.mxu0 %v196
    %259 = vmatpush.bf16.msra.mxu0 %v194
    %260 = vmatpush.bf16.msra.mxu0 %v192
    %261 = vmatpush.bf16.msra.mxu0 %v190
    %262 = vmatmul.bf16.gmra.mxu0 %v86
    %v263 = vpop.f32.mrf.mxu0
    %v264 = vadd.f32 %v66, %v263
    %v265 = vpop.f32.mrf.mxu0
    %v266 = vadd.f32 %v68, %v265
    %267 = vmatmul.bf16.gmra.mxu0 %v88
    %v268 = vpop.f32.mrf.mxu0
    %v269 = vadd.f32 %v70, %v268
    %v270 = vpop.f32.mrf.mxu0
    %v271 = vadd.f32 %v72, %v270
    %272 = vdwg.mxu0
    %273 = vmatpush.bf16.msra.mxu0 %v220
    %274 = vmatpush.bf16.msra.mxu0 %v218
    %275 = vmatpush.bf16.msra.mxu0 %v216
    %276 = vmatpush.bf16.msra.mxu0 %v214
    %277 = vmatpush.bf16.msra.mxu0 %v212
    %278 = vmatpush.bf16.msra.mxu0 %v210
    %279 = vmatpush.bf16.msra.mxu0 %v208
    %280 = vmatpush.bf16.msra.mxu0 %v206
    %281 = vmatmul.bf16.gmra.mxu0 %v87
    %v282 = vpop.f32.mrf.mxu0
    %v283 = vadd.f32 %v264, %v282
    %v284 = vpop.f32.mrf.mxu0
    %v285 = vadd.f32 %v266, %v284
    %286 = vmatmul.bf16.gmra.mxu0 %v89
    %v287 = vpop.f32.mrf.mxu0
    %v288 = vadd.f32 %v269, %v287
    %v289 = vpop.f32.mrf.mxu0
    %v290 = vadd.f32 %v271, %v289
    %291 = vdwg.mxu0
    %292 = vmatpush.bf16.msra.mxu0 %v205
    %293 = vmatpush.bf16.msra.mxu0 %v203
    %294 = vmatpush.bf16.msra.mxu0 %v201
    %295 = vmatpush.bf16.msra.mxu0 %v199
    %296 = vmatpush.bf16.msra.mxu0 %v197
    %297 = vmatpush.bf16.msra.mxu0 %v195
    %298 = vmatpush.bf16.msra.mxu0 %v193
    %299 = vmatpush.bf16.msra.mxu0 %v191
    %300 = vmatmul.bf16.gmra.mxu0 %v86
    %v301 = vpop.f32.mrf.mxu0
    %v302 = vadd.f32 %v67, %v301
    %v303 = vpop.f32.mrf.mxu0
    %v304 = vadd.f32 %v69, %v303
    %305 = vmatmul.bf16.gmra.mxu0 %v88
    %v306 = vpop.f32.mrf.mxu0
    %v307 = vadd.f32 %v71, %v306
    %v308 = vpop.f32.mrf.mxu0
    %v309 = vadd.f32 %v73, %v308
    %310 = vdwg.mxu0
    %311 = vmatpush.bf16.msra.mxu0 %v221
    %312 = vmatpush.bf16.msra.mxu0 %v219
    %313 = vmatpush.bf16.msra.mxu0 %v217
    %314 = vmatpush.bf16.msra.mxu0 %v215
    %315 = vmatpush.bf16.msra.mxu0 %v213
    %316 = vmatpush.bf16.msra.mxu0 %v211
    %317 = vmatpush.bf16.msra.mxu0 %v209
    %318 = vmatpush.bf16.msra.mxu0 %v207
    %319 = vmatmul.bf16.gmra.mxu0 %v87
    %v320 = vpop.f32.mrf.mxu0
    %v321 = vadd.f32 %v302, %v320
    %v322 = vpop.f32.mrf.mxu0
    %v323 = vadd.f32 %v304, %v322
    %324 = vmatmul.bf16.gmra.mxu0 %v89
    %v325 = vpop.f32.mrf.mxu0
    %v326 = vadd.f32 %v307, %v325
    %v327 = vpop.f32.mrf.mxu0
    %v328 = vadd.f32 %v309, %v327
    %329 = vdwg.mxu0
    %330 = vst [vmem:[%s3] sm:$0xff] %v283
    %331 = vst [vmem:[%s3 + $0x8] sm:$0xff] %v321
    %332 = vst [vmem:[%s3 + $0x10] sm:$0xff] %v285
    %333 = vst [vmem:[%s3 + $0x18] sm:$0xff] %v323
    %334 = vst [vmem:[%s3 + $0x20] sm:$0xff] %v288
    %335 = vst [vmem:[%s3 + $0x28] sm:$0xff] %v326
    %336 = vst [vmem:[%s3 + $0x30] sm:$0xff] %v290
    %337 = vst [vmem:[%s3 + $0x38] sm:$0xff] %v328
    // Predicated region
    $region18: #{decoder_forward.21} parent=1 // pred_check
      _
    $region19: #{decoder_forward.21} parent=1 // pred_check_branch
      %339 = sbr.rel (0) target = $region21
    $region20: #{decoder_forward.21} parent=1 // pred_region
      _
    $region21: #{decoder_forward.21} parent=1 // pred_fallthru
      _
    // Predicated region
    $region22: #{decoder_forward.21} parent=1 // pred_check
      _
    $region23: #{decoder_forward.21} parent=1 // pred_check_branch
      %341 = sbr.rel (0) target = $region25
    $region24: #{decoder_forward.21} parent=1 // pred_region
      _
    $region25: #{decoder_forward.21} parent=1 // pred_fallthru
      _
    %342 = vsyncpa [#allocation3], 1

// kernel: decoder_forward.24
$region0: #{decoder_forward.24}
  #allocation0 [shape = 'u32[]', space=smem, size = 0x4, offset = 0x4, fixed_abs, tag = 'smem constant byte address 0x4 - core index']
  #allocation1 [shape = 'u32[72,128]{1,0:T(1,128)}', space=vmem, size = 0x9000, scoped, tag = 'internal scratch']
  %s0 = inlined_call_operand.vmem [shape: bf16[2,16,256], index: 0, kind: input, shape index: {}]
  %s1 = inlined_call_operand.vmem [shape: bf16[1,16,256], index: 1, kind: input, shape index: {}]
  %s2 = inlined_call_operand.vmem [shape: bf16[1,16,256], index: 2, kind: input, shape index: {}]
  %s3 = inlined_call_operand.vmem [shape: f32[16,256], index: 3, kind: input, shape index: {}, may-alias: {3,4}]
  %s4 = inlined_call_operand.vmem [shape: f32[16,256], index: 4, kind: input, shape index: {}, may-alias: {3,4}]
  %s5 = inlined_call_operand.vmem [shape: bf16[2,16,256], index: 5, kind: output, shape index: {}]
  %s6 = sld [smem:[#allocation0]]
  $region213: #{decoder_forward.24} parent=0
    _
  %s8 = ssub.s32 1, %s6
  %s9 = scalar_select 0, %s8, %s6
  $region1: #{decoder_forward.24} parent=0
    #allocation2 [shape = 'u8[8192]{0}', space=vmem, size = 0x2000, scoped, tag = 'input window, operand 0']
    #allocation3 [shape = 'u8[8192]{0}', space=vmem, size = 0x2000, scoped, tag = 'input window, operand 1']
    #allocation4 [shape = 'u8[8192]{0}', space=vmem, size = 0x2000, scoped, tag = 'input window, operand 2']
    #allocation5 [shape = 'u8[8192]{0}', space=vmem, size = 0x2000, scoped, tag = 'output window, operand 0']
    loop: start=0, step=1, limit=6
    $region2: #{decoder_forward.24} parent=1 // loop_pre_header
      _
    $region3: #{decoder_forward.24} parent=1 // loop_header
      %s11 = sphi 0, %s15
      %p12 = scmp.ge.s32.totalorder %s11, 6
      %s18 = sphi 0, %s30
      %s19 = sphi 0, %s26
      %s20 = sphi 0, %s18
      %s21 = sphi 0, %s19
      %s22 = sphi 0, %s20
      %s23 = sphi 0, %s21
      %s35 = sphi 0, %s37
      %s38 = sphi 0, %s35
      %s39 = sphi 0, %s38
      %s55 = sphi 0, %s39
      %s61 = sphi 0, %s63
      %s64 = sphi 0, %s61
      %s65 = sphi 0, %s64
      %s81 = sphi 0, %s65
      %s87 = sphi 0, %s89
      %s90 = sphi 0, %s87
      %s91 = sphi 0, %s90
      %s107 = sphi 0, %s91
      %s111 = sphi 0, %s111
      %s113 = sphi 0, %s111
      %s114 = sphi 0, %s113
      %s128 = sphi 0, %s114
      %s132 = sphi 0, %s132
      %s134 = sphi 0, %s132
      %s135 = sphi 0, %s134
      %s149 = sphi 0, %s135
      %s157 = sphi 0, %s159
      %s160 = sphi 0, %s157
      %s161 = sphi 0, %s160
      %s177 = sphi 0, %s161
    $region4: #{decoder_forward.24} parent=1 // loop_header_branch
      %14 = sbr.rel (%p12) target = $region8
    $region5: #{decoder_forward.24} parent=1 // loop_body
      %s16 = ssub.s32 %s11, 1
      %s17 = ssub.s32 %s11, 2
      %s24 = sadd.s32 1, %s19
      %p25 = scmp.ge.s32.totalorder %s24, 2
      %s26 = scalar_select %p25, 0, %s24
      %s27 = sadd.s32 1, %s18
      %s28 = scalar_select %p25, %s27, %s18
      %p29 = scmp.ge.s32.totalorder %s28, 2
      %s30 = scalar_select %p29, 0, %s28
      %s31 = ssub.s32 %s18, %s30
      %s32 = ssub.s32 %s19, %s26
      %s33 = sor.u32 %s31, %s32
      %p34 = scmp.eq.s32.totalorder %s33, 0
      %s36 = sadd.s32 %s35, 1
      %s37 = scalar_select %p34, %s35, %s36
      %p40 = pneg %p34
      %p41 = scmp.eq.s32.totalorder %s11, 3
      %p42 = por %p40, %p41
      %p43 = scmp.ne.s32.totalorder %s35, %s38
      %p44 = scmp.eq.s32.totalorder %s11, 0
      %p45 = por %p43, %p44
      %p46 = scmp.ne.s32.totalorder %s35, %s38
      %p47 = scmp.eq.s32.totalorder %s16, 3
      %p48 = por %p46, %p47
      %p49 = scmp.ne.s32.totalorder %s38, %s39
      %p50 = scmp.eq.s32.totalorder %s16, 0
      %p51 = por %p49, %p50
      %p52 = scmp.ne.s32.totalorder %s38, %s39
      %p53 = scmp.eq.s32.totalorder %s17, 3
      %p54 = por %p52, %p53
      %p56 = scmp.ne.s32.totalorder %s39, %s55
      %p57 = scmp.eq.s32.totalorder %s17, 0
      %p58 = por %p56, %p57
      %s59 = ssub.s32 %s19, %s26
      %p60 = scmp.eq.s32.totalorder %s59, 0
      %s62 = sadd.s32 %s61, 1
      %s63 = scalar_select %p60, %s61, %s62
      %p66 = pneg %p60
      %p67 = scmp.eq.s32.totalorder %s11, 3
      %p68 = por %p66, %p67
      %p69 = scmp.ne.s32.totalorder %s61, %s64
      %p70 = scmp.eq.s32.totalorder %s11, 0
      %p71 = por %p69, %p70
      %p72 = scmp.ne.s32.totalorder %s61, %s64
      %p73 = scmp.eq.s32.totalorder %s16, 3
      %p74 = por %p72, %p73
      %p75 = scmp.ne.s32.totalorder %s64, %s65
      %p76 = scmp.eq.s32.totalorder %s16, 0
      %p77 = por %p75, %p76
      %p78 = scmp.ne.s32.totalorder %s64, %s65
      %p79 = scmp.eq.s32.totalorder %s17, 3
      %p80 = por %p78, %p79
      %p82 = scmp.ne.s32.totalorder %s65, %s81
      %p83 = scmp.eq.s32.totalorder %s17, 0
      %p84 = por %p82, %p83
      %s85 = ssub.s32 %s19, %s26
      %p86 = scmp.eq.s32.totalorder %s85, 0
      %s88 = sadd.s32 %s87, 1
      %s89 = scalar_select %p86, %s87, %s88
      %p92 = pneg %p86
      %p93 = scmp.eq.s32.totalorder %s11, 3
      %p94 = por %p92, %p93
      %p95 = scmp.ne.s32.totalorder %s87, %s90
      %p96 = scmp.eq.s32.totalorder %s11, 0
      %p97 = por %p95, %p96
      %p98 = scmp.ne.s32.totalorder %s87, %s90
      %p99 = scmp.eq.s32.totalorder %s16, 3
      %p100 = por %p98, %p99
      %p101 = scmp.ne.s32.totalorder %s90, %s91
      %p102 = scmp.eq.s32.totalorder %s16, 0
      %p103 = por %p101, %p102
      %p104 = scmp.ne.s32.totalorder %s90, %s91
      %p105 = scmp.eq.s32.totalorder %s17, 3
      %p106 = por %p104, %p105
      %p108 = scmp.ne.s32.totalorder %s91, %s107
      %p109 = scmp.eq.s32.totalorder %s17, 0
      %p110 = por %p108, %p109
      %s112 = sadd.s32 %s111, 1
      %p115 = scmp.eq.s32.totalorder %s11, 3
      %p116 = scmp.ne.s32.totalorder %s111, %s113
      %p117 = scmp.eq.s32.totalorder %s11, 0
      %p118 = por %p116, %p117
      %p119 = scmp.ne.s32.totalorder %s111, %s113
      %p120 = scmp.eq.s32.totalorder %s16, 3
      %p121 = por %p119, %p120
      %p122 = scmp.ne.s32.totalorder %s113, %s114
      %p123 = scmp.eq.s32.totalorder %s16, 0
      %p124 = por %p122, %p123
      %p125 = scmp.ne.s32.totalorder %s113, %s114
      %p126 = scmp.eq.s32.totalorder %s17, 3
      %p127 = por %p125, %p126
      %p129 = scmp.ne.s32.totalorder %s114, %s128
      %p130 = scmp.eq.s32.totalorder %s17, 0
      %p131 = por %p129, %p130
      %s133 = sadd.s32 %s132, 1
      %p136 = scmp.eq.s32.totalorder %s11, 3
      %p137 = scmp.ne.s32.totalorder %s132, %s134
      %p138 = scmp.eq.s32.totalorder %s11, 0
      %p139 = por %p137, %p138
      %p140 = scmp.ne.s32.totalorder %s132, %s134
      %p141 = scmp.eq.s32.totalorder %s16, 3
      %p142 = por %p140, %p141
      %p143 = scmp.ne.s32.totalorder %s134, %s135
      %p144 = scmp.eq.s32.totalorder %s16, 0
      %p145 = por %p143, %p144
      %p146 = scmp.ne.s32.totalorder %s134, %s135
      %p147 = scmp.eq.s32.totalorder %s17, 3
      %p148 = por %p146, %p147
      %p150 = scmp.ne.s32.totalorder %s135, %s149
      %p151 = scmp.eq.s32.totalorder %s17, 0
      %p152 = por %p150, %p151
      %s153 = ssub.s32 %s18, %s30
      %s154 = ssub.s32 %s19, %s26
      %s155 = sor.u32 %s153, %s154
      %p156 = scmp.eq.s32.totalorder %s155, 0
      %s158 = sadd.s32 %s157, 1
      %s159 = scalar_select %p156, %s157, %s158
      %p162 = pneg %p156
      %p163 = scmp.eq.s32.totalorder %s11, 3
      %p164 = por %p162, %p163
      %p165 = scmp.ne.s32.totalorder %s157, %s160
      %p166 = scmp.eq.s32.totalorder %s11, 0
      %p167 = por %p165, %p166
      %p168 = scmp.ne.s32.totalorder %s157, %s160
      %p169 = scmp.eq.s32.totalorder %s16, 3
      %p170 = por %p168, %p169
      %p171 = scmp.ne.s32.totalorder %s160, %s161
      %p172 = scmp.eq.s32.totalorder %s16, 0
      %p173 = por %p171, %p172
      %p174 = scmp.ne.s32.totalorder %s160, %s161
      %p175 = scmp.eq.s32.totalorder %s17, 3
      %p176 = por %p174, %p175
      %p178 = scmp.ne.s32.totalorder %s161, %s177
      %p179 = scmp.eq.s32.totalorder %s17, 0
      %p180 = por %p178, %p179
      %p181 = scmp.le.s32.totalorder 1, %s11
      %p182 = scmp.lt.s32.totalorder %s11, 5
      %p183 = pnand %p181, %p182
      %p184 = pneg %p183
      // Predicated region
      $region9: #{decoder_forward.24} parent=5 // pred_check
        _
      $region10: #{decoder_forward.24} parent=5 // pred_check_branch
        %186 = sbr.rel (%p183) target = $region12
      $region11: #{decoder_forward.24} parent=5 // pred_region
        %s187 = ssub.s32 %s11, 1
        // Predicated region
        $region13: #{decoder_forward.24} parent=11 // pred_check
          %p188 = pneg %p124
        $region14: #{decoder_forward.24} parent=11 // pred_check_branch
          %190 = sbr.rel (%p188) target = $region16
        $region15: #{decoder_forward.24} parent=11 // pred_region
          _
        $region16: #{decoder_forward.24} parent=11 // pred_fallthru
          _
        // Predicated region
        $region17: #{decoder_forward.24} parent=11 // pred_check
          %p191 = pneg %p145
        $region18: #{decoder_forward.24} parent=11 // pred_check_branch
          %193 = sbr.rel (%p191) target = $region20
        $region19: #{decoder_forward.24} parent=11 // pred_region
          _
        $region20: #{decoder_forward.24} parent=11 // pred_fallthru
          _
      $region12: #{decoder_forward.24} parent=5 // pred_fallthru
        _
      %p194 = scmp.lt.s32.totalorder %s11, 4
      // Predicated region
      $region21: #{decoder_forward.24} parent=5 // pred_check
        %p195 = pneg %p194
      $region22: #{decoder_forward.24} parent=5 // pred_check_branch
        %197 = sbr.rel (%p195) target = $region24
      $region23: #{decoder_forward.24} parent=5 // pred_region
        // Predicated region
        $region25: #{decoder_forward.24} parent=23 // pred_check
          %p198 = pneg %p45
        $region26: #{decoder_forward.24} parent=23 // pred_check_branch
          %200 = sbr.rel (%p198) target = $region28
        $region27: #{decoder_forward.24} parent=23 // pred_region
          %s201 = sand.u32 %s35, 1
          %s202 = sand.u32 %s35, 1
          %s203 = smul.addr %s202, 8
          %s204 = scalar_lea.vmem [#allocation2], %s203
          %s205 = smul.addr %s18, 4
          %s206 = sadd.s32 %s19, %s205
          %s207 = smul.addr %s206, 4
          %s208 = scalar_lea.vmem %s0, %s207
          // Predicated region
          $region29: #{decoder_forward.24} parent=27 // pred_check
            _
          $region30: #{decoder_forward.24} parent=27 // pred_check_branch
            %210 = sbr.rel (0) target = $region32
          $region31: #{decoder_forward.24} parent=27 // pred_region
            // Predicated region
            $region33: #{decoder_forward.24} parent=31 // pred_check
              _
            $region34: #{decoder_forward.24} parent=31 // pred_check_branch
              %212 = sbr.rel target = $region36
            $region35: #{decoder_forward.24} parent=31 // pred_region
              // Predicated region
              $region48: #{decoder_forward.24} parent=35 // pred_check
                _
              $region49: #{decoder_forward.24} parent=35 // pred_check_branch
                %230 = sbr.rel (0) target = $region51
              $region50: #{decoder_forward.24} parent=35 // pred_region
                loop: start=0, step=1, limit=1
                $region52: #{decoder_forward.24} parent=50 // loop_pre_header
                  _
                $region53: #{decoder_forward.24} parent=50 // loop_header
                  %s232 = sphi 0, %s236
                  %p233 = scmp.ge.s32.totalorder %s232, 1
                  %s237 = sphi %s208, %s208
                  %s238 = sphi %s204, %s204
                $region54: #{decoder_forward.24} parent=50 // loop_header_branch
                  %235 = sbr.rel (%p233) target = $region58
                $region55: #{decoder_forward.24} parent=50 // loop_body
                  _
                $region56: #{decoder_forward.24} parent=50 // loop_footer
                  %s236 = sadd.s32 1, %s232
                $region57: #{decoder_forward.24} parent=50 // loop_footer_branch
                  %231 = sbr.rel target = $region53
                $region58: #{decoder_forward.24} parent=50 // loop_exit
                  _
                %s240 = ssub.s32 16, 1
                loop: start=0, step=1, limit=1
                $region59: #{decoder_forward.24} parent=50 // loop_pre_header
                  _
                $region60: #{decoder_forward.24} parent=50 // loop_header
                  %s242 = sphi 0, %s246
                  %p243 = scmp.ge.s32.totalorder %s242, 1
                  %s247 = sphi %s208, %s208
                  %s248 = sphi %s204, %s204
                $region61: #{decoder_forward.24} parent=50 // loop_header_branch
                  %245 = sbr.rel (%p243) target = $region65
                $region62: #{decoder_forward.24} parent=50 // loop_body
                  %v249 = vld [vmem:[%s247] sm:%s240]
                  %250 = vst [vmem:[%s248] sm:%s240] %v249
                  %v251 = vld [vmem:[%s247 + $0x8] sm:%s240]
                  %252 = vst [vmem:[%s248 + $0x4] sm:%s240] %v251
                $region63: #{decoder_forward.24} parent=50 // loop_footer
                  %s246 = sadd.s32 1, %s242
                $region64: #{decoder_forward.24} parent=50 // loop_footer_branch
                  %241 = sbr.rel target = $region60
                $region65: #{decoder_forward.24} parent=50 // loop_exit
                  _
              $region51: #{decoder_forward.24} parent=35 // pred_fallthru
                _
            $region36: #{decoder_forward.24} parent=31 // pred_fallthru
              _
            // Predicated region
            $region37: #{decoder_forward.24} parent=31 // pred_check
              _
            $region38: #{decoder_forward.24} parent=31 // pred_check_branch
              %214 = sbr.rel (0) target = $region40
            $region39: #{decoder_forward.24} parent=31 // pred_region
              %s216 = ssub.s32 16, 1
              loop: start=0, step=1, limit=1
              $region41: #{decoder_forward.24} parent=39 // loop_pre_header
                _
              $region42: #{decoder_forward.24} parent=39 // loop_header
                %s218 = sphi 0, %s222
                %p219 = scmp.ge.s32.totalorder %s218, 1
                %s223 = sphi %s208, %s208
                %s224 = sphi %s204, %s204
              $region43: #{decoder_forward.24} parent=39 // loop_header_branch
                %221 = sbr.rel (%p219) target = $region47
              $region44: #{decoder_forward.24} parent=39 // loop_body
                %v225 = vld [vmem:[%s223] sm:%s216]
                %226 = vst [vmem:[%s224] sm:%s216] %v225
                %v227 = vld [vmem:[%s223 + $0x8] sm:%s216]
                %228 = vst [vmem:[%s224 + $0x4] sm:%s216] %v227
              $region45: #{decoder_forward.24} parent=39 // loop_footer
                %s222 = sadd.s32 1, %s218
              $region46: #{decoder_forward.24} parent=39 // loop_footer_branch
                %217 = sbr.rel target = $region42
              $region47: #{decoder_forward.24} parent=39 // loop_exit
                _
            $region40: #{decoder_forward.24} parent=31 // pred_fallthru
              _
          $region32: #{decoder_forward.24} parent=27 // pred_fallthru
            _
          %253 = vnop
        $region28: #{decoder_forward.24} parent=23 // pred_fallthru
          _
        // Predicated region
        $region66: #{decoder_forward.24} parent=23 // pred_check
          %p254 = pneg %p71
        $region67: #{decoder_forward.24} parent=23 // pred_check_branch
          %256 = sbr.rel (%p254) target = $region69
        $region68: #{decoder_forward.24} parent=23 // pred_region
          %s257 = sand.u32 %s61, 1
          %s258 = sand.u32 %s61, 1
          %s259 = smul.addr %s258, 8
          %s260 = scalar_lea.vmem [#allocation3], %s259
          %s261 = smul.addr %s19, 4
          %s262 = scalar_lea.vmem %s1, %s261
          // Predicated region
          $region70: #{decoder_forward.24} parent=68 // pred_check
            _
          $region71: #{decoder_forward.24} parent=68 // pred_check_branch
            %264 = sbr.rel (0) target = $region73
          $region72: #{decoder_forward.24} parent=68 // pred_region
            // Predicated region
            $region74: #{decoder_forward.24} parent=72 // pred_check
              _
            $region75: #{decoder_forward.24} parent=72 // pred_check_branch
              %266 = sbr.rel target = $region77
            $region76: #{decoder_forward.24} parent=72 // pred_region
              // Predicated region
              $region89: #{decoder_forward.24} parent=76 // pred_check
                _
              $region90: #{decoder_forward.24} parent=76 // pred_check_branch
                %284 = sbr.rel (0) target = $region92
              $region91: #{decoder_forward.24} parent=76 // pred_region
                loop: start=0, step=1, limit=1
                $region93: #{decoder_forward.24} parent=91 // loop_pre_header
                  _
                $region94: #{decoder_forward.24} parent=91 // loop_header
                  %s286 = sphi 0, %s290
                  %p287 = scmp.ge.s32.totalorder %s286, 1
                  %s291 = sphi %s262, %s262
                  %s292 = sphi %s260, %s260
                $region95: #{decoder_forward.24} parent=91 // loop_header_branch
                  %289 = sbr.rel (%p287) target = $region99
                $region96: #{decoder_forward.24} parent=91 // loop_body
                  _
                $region97: #{decoder_forward.24} parent=91 // loop_footer
                  %s290 = sadd.s32 1, %s286
                $region98: #{decoder_forward.24} parent=91 // loop_footer_branch
                  %285 = sbr.rel target = $region94
                $region99: #{decoder_forward.24} parent=91 // loop_exit
                  _
                %s294 = ssub.s32 16, 1
                loop: start=0, step=1, limit=1
                $region100: #{decoder_forward.24} parent=91 // loop_pre_header
                  _
                $region101: #{decoder_forward.24} parent=91 // loop_header
                  %s296 = sphi 0, %s300
                  %p297 = scmp.ge.s32.totalorder %s296, 1
                  %s301 = sphi %s262, %s262
                  %s302 = sphi %s260, %s260
                $region102: #{decoder_forward.24} parent=91 // loop_header_branch
                  %299 = sbr.rel (%p297) target = $region106
                $region103: #{decoder_forward.24} parent=91 // loop_body
                  %v303 = vld [vmem:[%s301] sm:%s294]
                  %304 = vst [vmem:[%s302] sm:%s294] %v303
                  %v305 = vld [vmem:[%s301 + $0x8] sm:%s294]
                  %306 = vst [vmem:[%s302 + $0x4] sm:%s294] %v305
                $region104: #{decoder_forward.24} parent=91 // loop_footer
                  %s300 = sadd.s32 1, %s296
                $region105: #{decoder_forward.24} parent=91 // loop_footer_branch
                  %295 = sbr.rel target = $region101
                $region106: #{decoder_forward.24} parent=91 // loop_exit
                  _
              $region92: #{decoder_forward.24} parent=76 // pred_fallthru
                _
            $region77: #{decoder_forward.24} parent=72 // pred_fallthru
              _
            // Predicated region
            $region78: #{decoder_forward.24} parent=72 // pred_check
              _
            $region79: #{decoder_forward.24} parent=72 // pred_check_branch
              %268 = sbr.rel (0) target = $region81
            $region80: #{decoder_forward.24} parent=72 // pred_region
              %s270 = ssub.s32 16, 1
              loop: start=0, step=1, limit=1
              $region82: #{decoder_forward.24} parent=80 // loop_pre_header
                _
              $region83: #{decoder_forward.24} parent=80 // loop_header
                %s272 = sphi 0, %s276
                %p273 = scmp.ge.s32.totalorder %s272, 1
                %s277 = sphi %s262, %s262
                %s278 = sphi %s260, %s260
              $region84: #{decoder_forward.24} parent=80 // loop_header_branch
                %275 = sbr.rel (%p273) target = $region88
              $region85: #{decoder_forward.24} parent=80 // loop_body
                %v279 = vld [vmem:[%s277] sm:%s270]
                %280 = vst [vmem:[%s278] sm:%s270] %v279
                %v281 = vld [vmem:[%s277 + $0x8] sm:%s270]
                %282 = vst [vmem:[%s278 + $0x4] sm:%s270] %v281
              $region86: #{decoder_forward.24} parent=80 // loop_footer
                %s276 = sadd.s32 1, %s272
              $region87: #{decoder_forward.24} parent=80 // loop_footer_branch
                %271 = sbr.rel target = $region83
              $region88: #{decoder_forward.24} parent=80 // loop_exit
                _
            $region81: #{decoder_forward.24} parent=72 // pred_fallthru
              _
          $region73: #{decoder_forward.24} parent=68 // pred_fallthru
            _
          %307 = vnop
        $region69: #{decoder_forward.24} parent=23 // pred_fallthru
          _
        // Predicated region
        $region107: #{decoder_forward.24} parent=23 // pred_check
          %p308 = pneg %p97
        $region108: #{decoder_forward.24} parent=23 // pred_check_branch
          %310 = sbr.rel (%p308) target = $region110
        $region109: #{decoder_forward.24} parent=23 // pred_region
          %s311 = sand.u32 %s87, 1
          %s312 = sand.u32 %s87, 1
          %s313 = smul.addr %s312, 8
          %s314 = scalar_lea.vmem [#allocation4], %s313
          %s315 = smul.addr %s19, 4
          %s316 = scalar_lea.vmem %s2, %s315
          // Predicated region
          $region111: #{decoder_forward.24} parent=109 // pred_check
            _
          $region112: #{decoder_forward.24} parent=109 // pred_check_branch
            %318 = sbr.rel (0) target = $region114
          $region113: #{decoder_forward.24} parent=109 // pred_region
            // Predicated region
            $region115: #{decoder_forward.24} parent=113 // pred_check
              _
            $region116: #{decoder_forward.24} parent=113 // pred_check_branch
              %320 = sbr.rel target = $region118
            $region117: #{decoder_forward.24} parent=113 // pred_region
              // Predicated region
              $region130: #{decoder_forward.24} parent=117 // pred_check
                _
              $region131: #{decoder_forward.24} parent=117 // pred_check_branch
                %338 = sbr.rel (0) target = $region133
              $region132: #{decoder_forward.24} parent=117 // pred_region
                loop: start=0, step=1, limit=1
                $region134: #{decoder_forward.24} parent=132 // loop_pre_header
                  _
                $region135: #{decoder_forward.24} parent=132 // loop_header
                  %s340 = sphi 0, %s344
                  %p341 = scmp.ge.s32.totalorder %s340, 1
                  %s345 = sphi %s316, %s316
                  %s346 = sphi %s314, %s314
                $region136: #{decoder_forward.24} parent=132 // loop_header_branch
                  %343 = sbr.rel (%p341) target = $region140
                $region137: #{decoder_forward.24} parent=132 // loop_body
                  _
                $region138: #{decoder_forward.24} parent=132 // loop_footer
                  %s344 = sadd.s32 1, %s340
                $region139: #{decoder_forward.24} parent=132 // loop_footer_branch
                  %339 = sbr.rel target = $region135
                $region140: #{decoder_forward.24} parent=132 // loop_exit
                  _
                %s348 = ssub.s32 16, 1
                loop: start=0, step=1, limit=1
                $region141: #{decoder_forward.24} parent=132 // loop_pre_header
                  _
                $region142: #{decoder_forward.24} parent=132 // loop_header
                  %s350 = sphi 0, %s354
                  %p351 = scmp.ge.s32.totalorder %s350, 1
                  %s355 = sphi %s316, %s316
                  %s356 = sphi %s314, %s314
                $region143: #{decoder_forward.24} parent=132 // loop_header_branch
                  %353 = sbr.rel (%p351) target = $region147
                $region144: #{decoder_forward.24} parent=132 // loop_body
                  %v357 = vld [vmem:[%s355] sm:%s348]
                  %358 = vst [vmem:[%s356] sm:%s348] %v357
                  %v359 = vld [vmem:[%s355 + $0x8] sm:%s348]
                  %360 = vst [vmem:[%s356 + $0x4] sm:%s348] %v359
                $region145: #{decoder_forward.24} parent=132 // loop_footer
                  %s354 = sadd.s32 1, %s350
                $region146: #{decoder_forward.24} parent=132 // loop_footer_branch
                  %349 = sbr.rel target = $region142
                $region147: #{decoder_forward.24} parent=132 // loop_exit
                  _
              $region133: #{decoder_forward.24} parent=117 // pred_fallthru
                _
            $region118: #{decoder_forward.24} parent=113 // pred_fallthru
              _
            // Predicated region
            $region119: #{decoder_forward.24} parent=113 // pred_check
              _
            $region120: #{decoder_forward.24} parent=113 // pred_check_branch
              %322 = sbr.rel (0) target = $region122
            $region121: #{decoder_forward.24} parent=113 // pred_region
              %s324 = ssub.s32 16, 1
              loop: start=0, step=1, limit=1
              $region123: #{decoder_forward.24} parent=121 // loop_pre_header
                _
              $region124: #{decoder_forward.24} parent=121 // loop_header
                %s326 = sphi 0, %s330
                %p327 = scmp.ge.s32.totalorder %s326, 1
                %s331 = sphi %s316, %s316
                %s332 = sphi %s314, %s314
              $region125: #{decoder_forward.24} parent=121 // loop_header_branch
                %329 = sbr.rel (%p327) target = $region129
              $region126: #{decoder_forward.24} parent=121 // loop_body
                %v333 = vld [vmem:[%s331] sm:%s324]
                %334 = vst [vmem:[%s332] sm:%s324] %v333
                %v335 = vld [vmem:[%s331 + $0x8] sm:%s324]
                %336 = vst [vmem:[%s332 + $0x4] sm:%s324] %v335
              $region127: #{decoder_forward.24} parent=121 // loop_footer
                %s330 = sadd.s32 1, %s326
              $region128: #{decoder_forward.24} parent=121 // loop_footer_branch
                %325 = sbr.rel target = $region124
              $region129: #{decoder_forward.24} parent=121 // loop_exit
                _
            $region122: #{decoder_forward.24} parent=113 // pred_fallthru
              _
          $region114: #{decoder_forward.24} parent=109 // pred_fallthru
            _
          %361 = vnop
        $region110: #{decoder_forward.24} parent=23 // pred_fallthru
          _
      $region24: #{decoder_forward.24} parent=5 // pred_fallthru
        _
      %p362 = scmp.le.s32.totalorder 1, %s11
      %p363 = scmp.lt.s32.totalorder %s11, 5
      %p364 = pnand %p362, %p363
      %p365 = pneg %p364
      // Predicated region
      $region148: #{decoder_forward.24} parent=5 // pred_check
        _
      $region149: #{decoder_forward.24} parent=5 // pred_check_branch
        %367 = sbr.rel (%p364) target = $region151
      $region150: #{decoder_forward.24} parent=5 // pred_region
        %s368 = ssub.s32 %s11, 1
        %s369 = sand.u32 %s38, 1
        %s370 = sand.u32 %s38, 1
        %s371 = smul.addr %s370, 8
        %s372 = scalar_lea.vmem [#allocation2], %s371
        // Predicated region
        $region152: #{decoder_forward.24} parent=150 // pred_check
          %p373 = pneg %p51
        $region153: #{decoder_forward.24} parent=150 // pred_check_branch
          %375 = sbr.rel (%p373) target = $region155
        $region154: #{decoder_forward.24} parent=150 // pred_region
          _
        $region155: #{decoder_forward.24} parent=150 // pred_fallthru
          _
        %s376 = sand.u32 %s64, 1
        %s377 = sand.u32 %s64, 1
        %s378 = smul.addr %s377, 8
        %s379 = scalar_lea.vmem [#allocation3], %s378
        // Predicated region
        $region156: #{decoder_forward.24} parent=150 // pred_check
          %p380 = pneg %p77
        $region157: #{decoder_forward.24} parent=150 // pred_check_branch
          %382 = sbr.rel (%p380) target = $region159
        $region158: #{decoder_forward.24} parent=150 // pred_region
          _
        $region159: #{decoder_forward.24} parent=150 // pred_fallthru
          _
        %s383 = sand.u32 %s90, 1
        %s384 = sand.u32 %s90, 1
        %s385 = smul.addr %s384, 8
        %s386 = scalar_lea.vmem [#allocation4], %s385
        // Predicated region
        $region160: #{decoder_forward.24} parent=150 // pred_check
          %p387 = pneg %p103
        $region161: #{decoder_forward.24} parent=150 // pred_check_branch
          %389 = sbr.rel (%p387) target = $region163
        $region162: #{decoder_forward.24} parent=150 // pred_region
          _
        $region163: #{decoder_forward.24} parent=150 // pred_fallthru
          _
        %s390 = sand.u32 %s38, 1
        %s391 = sand.u32 %s38, 1
        %s392 = smul.addr %s391, 8
        %s393 = scalar_lea.vmem [#allocation2], %s392
        %p394 = pneg %p51
        %p395 = pneg %p48
        %s396 = sand.u32 %s64, 1
        %s397 = sand.u32 %s64, 1
        %s398 = smul.addr %s397, 8
        %s399 = scalar_lea.vmem [#allocation3], %s398
        %p400 = pneg %p77
        %p401 = pneg %p74
        %s402 = sand.u32 %s90, 1
        %s403 = sand.u32 %s90, 1
        %s404 = smul.addr %s403, 8
        %s405 = scalar_lea.vmem [#allocation4], %s404
        %p406 = pneg %p103
        %p407 = pneg %p100
        %p408 = pneg %p124
        %p409 = pneg %p121
        %p410 = pneg %p145
        %p411 = pneg %p142
        %p412 = pneg %p173
        %p413 = pneg %p170
        %s414 = sand.u32 %s160, 1
        %s415 = sand.u32 %s160, 1
        %s416 = smul.addr %s415, 8
        %s417 = scalar_lea.vmem [#allocation5], %s416
        %v419 = vld [vmem:[%s372] sm:$0xf]
        %v420 = vld [vmem:[%s372 + $0x4] sm:$0xf]
        %v421 = vunpack.c.l.bf16 %v419
        %v422 = vunpack.c.l.bf16 %v420
        %v423 = vld [vmem:[%s379] sm:$0xf]
        %v424 = vld [vmem:[%s379 + $0x4] sm:$0xf]
        %v425 = vunpack.c.l.bf16 %v423
        %v426 = vunpack.c.l.bf16 %v424
        %v427 = vld [vmem:[%s3] sm:$0xff]
        %v428 = vld [vmem:[%s3 + $0x10] sm:$0xff]
        %v429 = vld [vmem:[%s3 + $0x8] sm:$0xff]
        %v430 = vld [vmem:[%s3 + $0x18] sm:$0xff]
        %v431 = vld [vmem:[%s4] sm:$0xff]
        %v432 = vld [vmem:[%s4 + $0x10] sm:$0xff]
        %v433 = vld [vmem:[%s4 + $0x8] sm:$0xff]
        %v434 = vld [vmem:[%s4 + $0x18] sm:$0xff]
        %v435 = vsub.f32 0.0, %v421
        %v436 = vsub.f32 0.0, %v422
        %439 = vrot.lane.b32.xlu0 %v435, 64
        %v440 = vpop.permute.xlu0 %439
        %441 = vrot.lane.b32.xlu0 %v436, 64
        %v442 = vpop.permute.xlu0 %441
        %447 = vrot.lane.b32.xlu0 %v421, 64
        %v448 = vpop.permute.xlu0 %447
        %449 = vrot.lane.b32.xlu0 %v422, 64
        %v450 = vpop.permute.xlu0 %449
        %vm453 = vcmask 523264
        %v454 = vsel %vm453, %v440, %v448
        %v455 = vsel %vm453, %v442, %v450
        %v456 = vmul.f32 %v421, %v427
        %v457 = vmul.f32 %v422, %v428
        %v458 = vmul.f32 %v454, %v429
        %v459 = vmul.f32 %v455, %v430
        %v460 = vadd.f32 %v456, %v458
        %v461 = vadd.f32 %v457, %v459
        %v462 = vpack.c.bf16 %v461, %v460
        %v463 = vsub.f32 0.0, %v425
        %v464 = vsub.f32 0.0, %v426
        %467 = vrot.lane.b32.xlu0 %v463, 64
        %v468 = vpop.permute.xlu0 %467
        %469 = vrot.lane.b32.xlu0 %v464, 64
        %v470 = vpop.permute.xlu0 %469
        %475 = vrot.lane.b32.xlu0 %v425, 64
        %v476 = vpop.permute.xlu0 %475
        %477 = vrot.lane.b32.xlu0 %v426, 64
        %v478 = vpop.permute.xlu0 %477
        %v481 = vsel %vm453, %v468, %v476
        %v482 = vsel %vm453, %v470, %v478
        %v483 = vmul.f32 %v425, %v431
        %v484 = vmul.f32 %v426, %v432
        %v485 = vmul.f32 %v481, %v433
        %v486 = vmul.f32 %v482, %v434
        %v487 = vadd.f32 %v483, %v485
        %v488 = vadd.f32 %v484, %v486
        %v489 = vpack.c.bf16 %v488, %v487
        %490 = vmatpush.bf16.xpose.msra.mxu0 0
        %491 = vmatpush.bf16.xpose.msra.mxu0 0
        %492 = vmatpush.bf16.xpose.msra.mxu0 0
        %493 = vmatpush.bf16.xpose.msra.mxu0 0
        %494 = vmatpush.bf16.xpose.msra.mxu0 0
        %495 = vmatpush.bf16.xpose.msra.mxu0 0
        %496 = vmatpush.bf16.xpose.msra.mxu0 0
        %497 = vmatpush.bf16.xpose.msra.mxu0 %v489
        %498 = vmatmul.bf16.gmra.mxu0 %v462
        %v499 = vpop.f32.mrf.mxu0
        %v500 = vadd.f32 0.0, %v499
        %v501 = vpop.f32.mrf.mxu0
        %v502 = vadd.f32 0.0, %v501
        %503 = vdwg.mxu0
        %v504 = vmul.f32 %v500, 0.088388346
        %v505 = vmul.f32 %v502, 0.088388346
        %v506 = vlaneseq
        %v507 = vshrl.u32 %v506, 7
        %v508 = vadd.s32 %v507, 8
        %v509 = vlaneseq
        %v510 = vand.u32 %v509, 127
        %vm511 = vcmp.le.s32.totalorder %v510, %v507
        %vm512 = vcmp.le.s32.totalorder %v510, %v508
        %v513 = vsel %vm511, %v504, -1e+30
        %v514 = vsel %vm512, %v505, -1e+30
        %vm515 = vcmask 130048
        %v516 = vsel %vm515, %v513, -inf
        %517 = vmax.xlane.f32.xlu0 %v516
        %v518 = vpop.xlane.xlu0 %517
        %v519 = vsel %vm515, %v514, -inf
        %520 = vmax.xlane.f32.xlu0 %v519
        %v521 = vpop.xlane.xlu0 %520
        %v522 = vsub.f32 %v513, %v518
        %v523 = vsub.f32 %v514, %v521
        %v524 = vmul.f32 %v522, 1.442695
        %v525 = vpow.pop %v524
        %v526 = vmul.f32 %v523, 1.442695
        %v527 = vpow.pop %v526
        %v528 = vsel %vm515, %v525, 0.0
        %529 = vadd.xlane.f32.xlu0 %v528
        %v530 = vpop.xlane.xlu0 %529
        %v531 = vsel %vm515, %v527, 0.0
        %532 = vadd.xlane.f32.xlu0 %v531
        %v533 = vpop.xlane.xlu0 %532
        %v534 = vpack.c.bf16 %v527, %v525
        %v535 = vld [vmem:[%s386] sm:$0xf]
        %v536 = vld [vmem:[%s386 + $0x4] sm:$0xf]
        %v539 = vunpack.c.l.b16 %v535
        %v540 = vunpack.c.l.b16 %v536
        %v541 = vpack.c.b16 %v540, %v539
        %v544 = vsel %vm515, %v534, 0
        %546 = vmatpush.bf16.msra.mxu0 0
        %547 = vmatpush.bf16.msra.mxu0 0
        %548 = vmatpush.bf16.msra.mxu0 0
        %549 = vmatpush.bf16.msra.mxu0 0
        %550 = vmatpush.bf16.msra.mxu0 0
        %551 = vmatpush.bf16.msra.mxu0 0
        %552 = vmatpush.bf16.msra.mxu0 0
        %553 = vmatpush.bf16.msra.mxu0 %v541
        %554 = vmatmul.bf16.gmra.mxu0 %v544
        %v555 = vpop.f32.mrf.mxu0
        %v556 = vadd.f32 0.0, %v555
        %v557 = vpop.f32.mrf.mxu0
        %v558 = vadd.f32 0.0, %v557
        %559 = vdwg.mxu0
        %v560 = vrcp.pop %v530
        %v561 = vmul.f32 %v530, %v560
        %v562 = vsub.f32 1.0, %v561
        %v563 = vmul.f32 %v560, %v562
        %v564 = vadd.f32 %v560, %v563
        %vm565 = vweird.f32 %v530
        %vm566 = vweird.f32 %v560
        %vm567 = vmor %vm565, %vm566
        %v568 = vsel %vm567, %v560, %v564
        %v569 = vand.u32 2147483647, %v530
        %vm570 = vcmp.eq.f32.partialorder %v569, 8.507059e+37
        %v571 = vand.u32 %v530, 2147483648
        %v572 = vor.u32 1.1754944e-38, %v571
        %v573 = vsel %vm570, %v572, %v568
        %v574 = vmul.f32 %v556, %v573
        %v575 = vrcp.pop %v533
        %v576 = vmul.f32 %v533, %v575
        %v577 = vsub.f32 1.0, %v576
        %v578 = vmul.f32 %v575, %v577
        %v579 = vadd.f32 %v575, %v578
        %vm580 = vweird.f32 %v533
        %vm581 = vweird.f32 %v575
        %vm582 = vmor %vm580, %vm581
        %v583 = vsel %vm582, %v575, %v579
        %v584 = vand.u32 2147483647, %v533
        %vm585 = vcmp.eq.f32.partialorder %v584, 8.507059e+37
        %v586 = vand.u32 %v533, 2147483648
        %v587 = vor.u32 1.1754944e-38, %v586
        %v588 = vsel %vm585, %v587, %v583
        %v589 = vmul.f32 %v558, %v588
        %v590 = vpack.c.bf16 %v574, %v574
        %v591 = vpack.c.bf16 %v589, %v589
        %592 = vst [vmem:[%s417] sm:$0xf] %v590
        %593 = vst [vmem:[%s417 + $0x4] sm:$0xf] %v591
        %s594 = sand.u32 %s160, 1
        %s595 = sand.u32 %s160, 1
        %s596 = smul.addr %s595, 8
        %s597 = scalar_lea.vmem [#allocation5], %s596
        // Predicated region
        $region164: #{decoder_forward.24} parent=150 // pred_check
          %p598 = pneg %p170
        $region165: #{decoder_forward.24} parent=150 // pred_check_branch
          %600 = sbr.rel (%p598) target = $region167
        $region166: #{decoder_forward.24} parent=150 // pred_region
          %s601 = smul.addr %s20, 4
          %s602 = sadd.s32 %s21, %s601
          %s603 = smul.addr %s602, 4
          %s604 = scalar_lea.vmem %s5, %s603
          // Predicated region
          $region168: #{decoder_forward.24} parent=166 // pred_check
            _
          $region169: #{decoder_forward.24} parent=166 // pred_check_branch
            %606 = sbr.rel (0) target = $region171
          $region170: #{decoder_forward.24} parent=166 // pred_region
            // Predicated region
            $region172: #{decoder_forward.24} parent=170 // pred_check
              _
            $region173: #{decoder_forward.24} parent=170 // pred_check_branch
              %608 = sbr.rel target = $region175
            $region174: #{decoder_forward.24} parent=170 // pred_region
              // Predicated region
              $region187: #{decoder_forward.24} parent=174 // pred_check
                _
              $region188: #{decoder_forward.24} parent=174 // pred_check_branch
                %626 = sbr.rel (0) target = $region190
              $region189: #{decoder_forward.24} parent=174 // pred_region
                loop: start=0, step=1, limit=1
                $region191: #{decoder_forward.24} parent=189 // loop_pre_header
                  _
                $region192: #{decoder_forward.24} parent=189 // loop_header
                  %s628 = sphi 0, %s632
                  %p629 = scmp.ge.s32.totalorder %s628, 1
                  %s633 = sphi %s597, %s597
                  %s634 = sphi %s604, %s604
                $region193: #{decoder_forward.24} parent=189 // loop_header_branch
                  %631 = sbr.rel (%p629) target = $region197
                $region194: #{decoder_forward.24} parent=189 // loop_body
                  _
                $region195: #{decoder_forward.24} parent=189 // loop_footer
                  %s632 = sadd.s32 1, %s628
                $region196: #{decoder_forward.24} parent=189 // loop_footer_branch
                  %627 = sbr.rel target = $region192
                $region197: #{decoder_forward.24} parent=189 // loop_exit
                  _
                %s636 = ssub.s32 16, 1
                loop: start=0, step=1, limit=1
                $region198: #{decoder_forward.24} parent=189 // loop_pre_header
                  _
                $region199: #{decoder_forward.24} parent=189 // loop_header
                  %s638 = sphi 0, %s642
                  %p639 = scmp.ge.s32.totalorder %s638, 1
                  %s643 = sphi %s597, %s597
                  %s644 = sphi %s604, %s604
                $region200: #{decoder_forward.24} parent=189 // loop_header_branch
                  %641 = sbr.rel (%p639) target = $region204
                $region201: #{decoder_forward.24} parent=189 // loop_body
                  %v645 = vld [vmem:[%s643] sm:%s636]
                  %646 = vst [vmem:[%s644] sm:%s636] %v645
                  %v647 = vld [vmem:[%s643 + $0x4] sm:%s636]
                  %648 = vst [vmem:[%s644 + $0x8] sm:%s636] %v647
                $region202: #{decoder_forward.24} parent=189 // loop_footer
                  %s642 = sadd.s32 1, %s638
                $region203: #{decoder_forward.24} parent=189 // loop_footer_branch
                  %637 = sbr.rel target = $region199
                $region204: #{decoder_forward.24} parent=189 // loop_exit
                  _
              $region190: #{decoder_forward.24} parent=174 // pred_fallthru
                _
            $region175: #{decoder_forward.24} parent=170 // pred_fallthru
              _
            // Predicated region
            $region176: #{decoder_forward.24} parent=170 // pred_check
              _
            $region177: #{decoder_forward.24} parent=170 // pred_check_branch
              %610 = sbr.rel (0) target = $region179
            $region178: #{decoder_forward.24} parent=170 // pred_region
              %s612 = ssub.s32 16, 1
              loop: start=0, step=1, limit=1
              $region180: #{decoder_forward.24} parent=178 // loop_pre_header
                _
              $region181: #{decoder_forward.24} parent=178 // loop_header
                %s614 = sphi 0, %s618
                %p615 = scmp.ge.s32.totalorder %s614, 1
                %s619 = sphi %s597, %s597
                %s620 = sphi %s604, %s604
              $region182: #{decoder_forward.24} parent=178 // loop_header_branch
                %617 = sbr.rel (%p615) target = $region186
              $region183: #{decoder_forward.24} parent=178 // loop_body
                %v621 = vld [vmem:[%s619] sm:%s612]
                %622 = vst [vmem:[%s620] sm:%s612] %v621
                %v623 = vld [vmem:[%s619 + $0x4] sm:%s612]
                %624 = vst [vmem:[%s620 + $0x8] sm:%s612] %v623
              $region184: #{decoder_forward.24} parent=178 // loop_footer
                %s618 = sadd.s32 1, %s614
              $region185: #{decoder_forward.24} parent=178 // loop_footer_branch
                %613 = sbr.rel target = $region181
              $region186: #{decoder_forward.24} parent=178 // loop_exit
                _
            $region179: #{decoder_forward.24} parent=170 // pred_fallthru
              _
          $region171: #{decoder_forward.24} parent=166 // pred_fallthru
            _
          %649 = vnop
        $region167: #{decoder_forward.24} parent=150 // pred_fallthru
          _
      $region151: #{decoder_forward.24} parent=5 // pred_fallthru
        _
      %p650 = scmp.le.s32.totalorder 2, %s11
      // Predicated region
      $region205: #{decoder_forward.24} parent=5 // pred_check
        %p651 = pneg %p650
      $region206: #{decoder_forward.24} parent=5 // pred_check_branch
        %653 = sbr.rel (%p651) target = $region208
      $region207: #{decoder_forward.24} parent=5 // pred_region
        %s654 = ssub.s32 %s11, 2
        // Predicated region
        $region209: #{decoder_forward.24} parent=207 // pred_check
          %p655 = pneg %p176
        $region210: #{decoder_forward.24} parent=207 // pred_check_branch
          %657 = sbr.rel (%p655) target = $region212
        $region211: #{decoder_forward.24} parent=207 // pred_region
          %s658 = sand.u32 %s161, 1
          %s659 = sand.u32 %s161, 1
          %s660 = smul.addr %s659, 8
          %s661 = scalar_lea.vmem [#allocation5], %s660
        $region212: #{decoder_forward.24} parent=207 // pred_fallthru
          _
      $region208: #{decoder_forward.24} parent=5 // pred_fallthru
        _
    $region6: #{decoder_forward.24} parent=1 // loop_footer
      %s15 = sadd.s32 1, %s11
    $region7: #{decoder_forward.24} parent=1 // loop_footer_branch
      %10 = sbr.rel target = $region3
    $region8: #{decoder_forward.24} parent=1 // loop_exit
      _

// kernel: decoder_forward.23
$region0: #{decoder_forward.23}
  #allocation0 [shape = 'u32[]', space=smem, size = 0x4, offset = 0x4, fixed_abs, tag = 'smem constant byte address 0x4 - core index']
  #allocation1 [shape = 'u32[72,128]{1,0:T(1,128)}', space=vmem, size = 0x9000, scoped, tag = 'internal scratch']
  %s0 = inlined_call_operand.vmem [shape: f32[16,256], index: 0, kind: input, shape index: {}]
  %s1 = inlined_call_operand.hbm [shape: bf16[256,512], index: 1, kind: input, shape index: {}]
  %s2 = inlined_call_operand.vmem [shape: bf16[16,512], index: 2, kind: output, shape index: {}]
  %s3 = sld [smem:[#allocation0]]
  $region22: #{decoder_forward.23} parent=0
    _
  %s5 = ssub.s32 1, %s3
  %s6 = scalar_select 0, %s5, %s3
  $region1: #{decoder_forward.23} parent=0
    #allocation2 [shape = 'u8[262144]{0}', space=vmem, size = 0x40000, scoped, tag = 'input window, operand 1, single buffered']
    #allocation3 [shape = 's32[1]{0}', space=sflag, size = 0x4, scoped, tag = 'scoped memory for decoder_forward.23']
    %7 = vsyncpa [#allocation3], 0
    // Predicated region
    $region2: #{decoder_forward.23} parent=1 // pred_check
      _
    $region3: #{decoder_forward.23} parent=1 // pred_check_branch
      %9 = sbr.rel (0) target = $region5
    $region4: #{decoder_forward.23} parent=1 // pred_region
      _
    $region5: #{decoder_forward.23} parent=1 // pred_fallthru
      _
    // Predicated region
    $region6: #{decoder_forward.23} parent=1 // pred_check
      _
    $region7: #{decoder_forward.23} parent=1 // pred_check_branch
      %11 = sbr.rel (0) target = $region9
    $region8: #{decoder_forward.23} parent=1 // pred_region
      %13 = vsyncadd [#allocation3], 0
      %s14 = sshll.u32 %s1, 4
      %s15 = int_to_ptr.hbm [resolvable:$true] %s14
      %s16 = sshll.u32 [#allocation2], 4
      %s17 = int_to_ptr.vmem [resolvable:$true] %s16
      %22 = dma.hbm_to_vmem [thread:$0]  %s15, 8192, %s17, [#allocation3], 256, 256, 16
    $region9: #{decoder_forward.23} parent=1 // pred_fallthru
      _
    // Predicated region
    $region10: #{decoder_forward.23} parent=1 // pred_check
      _
    $region11: #{decoder_forward.23} parent=1 // pred_check_branch
      %24 = sbr.rel (0) target = $region13
    $region12: #{decoder_forward.23} parent=1 // pred_region
      %26 = dma.done [#allocation3], 8192
    $region13: #{decoder_forward.23} parent=1 // pred_fallthru
      _
    %v27 = vld [vmem:[%s0] sm:$0xff]
    %v28 = vld [vmem:[%s0 + $0x8] sm:$0xff]
    %v29 = vld [vmem:[%s0 + $0x10] sm:$0xff]
    %v30 = vld [vmem:[%s0 + $0x18] sm:$0xff]
    %v31 = vpack.c.bf16 %v29, %v27
    %v32 = vpack.c.bf16 %v30, %v28
    %v33 = vld [vmem:[#allocation2] sm:$0xff]
    %v34 = vld [vmem:[#allocation2 + $0x8] sm:$0xff]
    %v35 = vld [vmem:[#allocation2 + $0x10] sm:$0xff]
    %v36 = vld [vmem:[#allocation2 + $0x18] sm:$0xff]
    %v37 = vld [vmem:[#allocation2 + $0x20] sm:$0xff]
    %v38 = vld [vmem:[#allocation2 + $0x28] sm:$0xff]
    %v39 = vld [vmem:[#allocation2 + $0x30] sm:$0xff]
    %v40 = vld [vmem:[#allocation2 + $0x38] sm:$0xff]
    %v41 = vld [vmem:[#allocation2 + $0x40] sm:$0xff]
    %v42 = vld [vmem:[#allocation2 + $0x48] sm:$0xff]
    %v43 = vld [vmem:[#allocation2 + $0x50] sm:$0xff]
    %v44 = vld [vmem:[#allocation2 + $0x58] sm:$0xff]
    %v45 = vld [vmem:[#allocation2 + $0x60] sm:$0xff]
    %v46 = vld [vmem:[#allocation2 + $0x68] sm:$0xff]
    %v47 = vld [vmem:[#allocation2 + $0x70] sm:$0xff]
    %v48 = vld [vmem:[#allocation2 + $0x78] sm:$0xff]
    %v49 = vld [vmem:[#allocation2 + $0x80] sm:$0xff]
    %v50 = vld [vmem:[#allocation2 + $0x88] sm:$0xff]
    %v51 = vld [vmem:[#allocation2 + $0x90] sm:$0xff]
    %v52 = vld [vmem:[#allocation2 + $0x98] sm:$0xff]
    %v53 = vld [vmem:[#allocation2 + $0xa0] sm:$0xff]
    %v54 = vld [vmem:[#allocation2 + $0xa8] sm:$0xff]
    %v55 = vld [vmem:[#allocation2 + $0xb0] sm:$0xff]
    %v56 = vld [vmem:[#allocation2 + $0xb8] sm:$0xff]
    %v57 = vld [vmem:[#allocation2 + $0xc0] sm:$0xff]
    %v58 = vld [vmem:[#allocation2 + $0xc8] sm:$0xff]
    %v59 = vld [vmem:[#allocation2 + $0xd0] sm:$0xff]
    %v60 = vld [vmem:[#allocation2 + $0xd8] sm:$0xff]
    %v61 = vld [vmem:[#allocation2 + $0xe0] sm:$0xff]
    %v62 = vld [vmem:[#allocation2 + $0xe8] sm:$0xff]
    %v63 = vld [vmem:[#allocation2 + $0xf0] sm:$0xff]
    %v64 = vld [vmem:[#allocation2 + $0xf8] sm:$0xff]
    %v65 = vld [vmem:[#allocation2 + $0x100] sm:$0xff]
    %v66 = vld [vmem:[#allocation2 + $0x108] sm:$0xff]
    %v67 = vld [vmem:[#allocation2 + $0x110] sm:$0xff]
    %v68 = vld [vmem:[#allocation2 + $0x118] sm:$0xff]
    %v69 = vld [vmem:[#allocation2 + $0x120] sm:$0xff]
    %v70 = vld [vmem:[#allocation2 + $0x128] sm:$0xff]
    %v71 = vld [vmem:[#allocation2 + $0x130] sm:$0xff]
    %v72 = vld [vmem:[#allocation2 + $0x138] sm:$0xff]
    %v73 = vld [vmem:[#allocation2 + $0x140] sm:$0xff]
    %v74 = vld [vmem:[#allocation2 + $0x148] sm:$0xff]
    %v75 = vld [vmem:[#allocation2 + $0x150] sm:$0xff]
    %v76 = vld [vmem:[#allocation2 + $0x158] sm:$0xff]
    %v77 = vld [vmem:[#allocation2 + $0x160] sm:$0xff]
    %v78 = vld [vmem:[#allocation2 + $0x168] sm:$0xff]
    %v79 = vld [vmem:[#allocation2 + $0x170] sm:$0xff]
    %v80 = vld [vmem:[#allocation2 + $0x178] sm:$0xff]
    %v81 = vld [vmem:[#allocation2 + $0x180] sm:$0xff]
    %v82 = vld [vmem:[#allocation2 + $0x188] sm:$0xff]
    %v83 = vld [vmem:[#allocation2 + $0x190] sm:$0xff]
    %v84 = vld [vmem:[#allocation2 + $0x198] sm:$0xff]
    %v85 = vld [vmem:[#allocation2 + $0x1a0] sm:$0xff]
    %v86 = vld [vmem:[#allocation2 + $0x1a8] sm:$0xff]
    %v87 = vld [vmem:[#allocation2 + $0x1b0] sm:$0xff]
    %v88 = vld [vmem:[#allocation2 + $0x1b8] sm:$0xff]
    %v89 = vld [vmem:[#allocation2 + $0x1c0] sm:$0xff]
    %v90 = vld [vmem:[#allocation2 + $0x1c8] sm:$0xff]
    %v91 = vld [vmem:[#allocation2 + $0x1d0] sm:$0xff]
    %v92 = vld [vmem:[#allocation2 + $0x1d8] sm:$0xff]
    %v93 = vld [vmem:[#allocation2 + $0x1e0] sm:$0xff]
    %v94 = vld [vmem:[#allocation2 + $0x1e8] sm:$0xff]
    %v95 = vld [vmem:[#allocation2 + $0x1f0] sm:$0xff]
    %v96 = vld [vmem:[#allocation2 + $0x1f8] sm:$0xff]
    %v161 = vunpack.c.l.b16 %v33
    %v162 = vunpack.c.h.b16 %v33
    %v163 = vunpack.c.l.b16 %v34
    %v164 = vunpack.c.h.b16 %v34
    %v165 = vunpack.c.l.b16 %v35
    %v166 = vunpack.c.h.b16 %v35
    %v167 = vunpack.c.l.b16 %v36
    %v168 = vunpack.c.h.b16 %v36
    %v169 = vunpack.c.l.b16 %v37
    %v170 = vunpack.c.h.b16 %v37
    %v171 = vunpack.c.l.b16 %v38
    %v172 = vunpack.c.h.b16 %v38
    %v173 = vunpack.c.l.b16 %v39
    %v174 = vunpack.c.h.b16 %v39
    %v175 = vunpack.c.l.b16 %v40
    %v176 = vunpack.c.h.b16 %v40
    %v177 = vunpack.c.l.b16 %v41
    %v178 = vunpack.c.h.b16 %v41
    %v179 = vunpack.c.l.b16 %v42
    %v180 = vunpack.c.h.b16 %v42
    %v181 = vunpack.c.l.b16 %v43
    %v182 = vunpack.c.h.b16 %v43
    %v183 = vunpack.c.l.b16 %v44
    %v184 = vunpack.c.h.b16 %v44
    %v185 = vunpack.c.l.b16 %v45
    %v186 = vunpack.c.h.b16 %v45
    %v187 = vunpack.c.l.b16 %v46
    %v188 = vunpack.c.h.b16 %v46
    %v189 = vunpack.c.l.b16 %v47
    %v190 = vunpack.c.h.b16 %v47
    %v191 = vunpack.c.l.b16 %v48
    %v192 = vunpack.c.h.b16 %v48
    %v193 = vunpack.c.l.b16 %v49
    %v194 = vunpack.c.h.b16 %v49
    %v195 = vunpack.c.l.b16 %v50
    %v196 = vunpack.c.h.b16 %v50
    %v197 = vunpack.c.l.b16 %v51
    %v198 = vunpack.c.h.b16 %v51
    %v199 = vunpack.c.l.b16 %v52
    %v200 = vunpack.c.h.b16 %v52
    %v201 = vunpack.c.l.b16 %v53
    %v202 = vunpack.c.h.b16 %v53
    %v203 = vunpack.c.l.b16 %v54
    %v204 = vunpack.c.h.b16 %v54
    %v205 = vunpack.c.l.b16 %v55
    %v206 = vunpack.c.h.b16 %v55
    %v207 = vunpack.c.l.b16 %v56
    %v208 = vunpack.c.h.b16 %v56
    %v209 = vunpack.c.l.b16 %v57
    %v210 = vunpack.c.h.b16 %v57
    %v211 = vunpack.c.l.b16 %v58
    %v212 = vunpack.c.h.b16 %v58
    %v213 = vunpack.c.l.b16 %v59
    %v214 = vunpack.c.h.b16 %v59
    %v215 = vunpack.c.l.b16 %v60
    %v216 = vunpack.c.h.b16 %v60
    %v217 = vunpack.c.l.b16 %v61
    %v218 = vunpack.c.h.b16 %v61
    %v219 = vunpack.c.l.b16 %v62
    %v220 = vunpack.c.h.b16 %v62
    %v221 = vunpack.c.l.b16 %v63
    %v222 = vunpack.c.h.b16 %v63
    %v223 = vunpack.c.l.b16 %v64
    %v224 = vunpack.c.h.b16 %v64
    %v225 = vunpack.c.l.b16 %v65
    %v226 = vunpack.c.h.b16 %v65
    %v227 = vunpack.c.l.b16 %v66
    %v228 = vunpack.c.h.b16 %v66
    %v229 = vunpack.c.l.b16 %v67
    %v230 = vunpack.c.h.b16 %v67
    %v231 = vunpack.c.l.b16 %v68
    %v232 = vunpack.c.h.b16 %v68
    %v233 = vunpack.c.l.b16 %v69
    %v234 = vunpack.c.h.b16 %v69
    %v235 = vunpack.c.l.b16 %v70
    %v236 = vunpack.c.h.b16 %v70
    %v237 = vunpack.c.l.b16 %v71
    %v238 = vunpack.c.h.b16 %v71
    %v239 = vunpack.c.l.b16 %v72
    %v240 = vunpack.c.h.b16 %v72
    %v241 = vunpack.c.l.b16 %v73
    %v242 = vunpack.c.h.b16 %v73
    %v243 = vunpack.c.l.b16 %v74
    %v244 = vunpack.c.h.b16 %v74
    %v245 = vunpack.c.l.b16 %v75
    %v246 = vunpack.c.h.b16 %v75
    %v247 = vunpack.c.l.b16 %v76
    %v248 = vunpack.c.h.b16 %v76
    %v249 = vunpack.c.l.b16 %v77
    %v250 = vunpack.c.h.b16 %v77
    %v251 = vunpack.c.l.b16 %v78
    %v252 = vunpack.c.h.b16 %v78
    %v253 = vunpack.c.l.b16 %v79
    %v254 = vunpack.c.h.b16 %v79
    %v255 = vunpack.c.l.b16 %v80
    %v256 = vunpack.c.h.b16 %v80
    %v257 = vunpack.c.l.b16 %v81
    %v258 = vunpack.c.h.b16 %v81
    %v259 = vunpack.c.l.b16 %v82
    %v260 = vunpack.c.h.b16 %v82
    %v261 = vunpack.c.l.b16 %v83
    %v262 = vunpack.c.h.b16 %v83
    %v263 = vunpack.c.l.b16 %v84
    %v264 = vunpack.c.h.b16 %v84
    %v265 = vunpack.c.l.b16 %v85
    %v266 = vunpack.c.h.b16 %v85
    %v267 = vunpack.c.l.b16 %v86
    %v268 = vunpack.c.h.b16 %v86
    %v269 = vunpack.c.l.b16 %v87
    %v270 = vunpack.c.h.b16 %v87
    %v271 = vunpack.c.l.b16 %v88
    %v272 = vunpack.c.h.b16 %v88
    %v273 = vunpack.c.l.b16 %v89
    %v274 = vunpack.c.h.b16 %v89
    %v275 = vunpack.c.l.b16 %v90
    %v276 = vunpack.c.h.b16 %v90
    %v277 = vunpack.c.l.b16 %v91
    %v278 = vunpack.c.h.b16 %v91
    %v279 = vunpack.c.l.b16 %v92
    %v280 = vunpack.c.h.b16 %v92
    %v281 = vunpack.c.l.b16 %v93
    %v282 = vunpack.c.h.b16 %v93
    %v283 = vunpack.c.l.b16 %v94
    %v284 = vunpack.c.h.b16 %v94
    %v285 = vunpack.c.l.b16 %v95
    %v286 = vunpack.c.h.b16 %v95
    %v287 = vunpack.c.l.b16 %v96
    %v288 = vunpack.c.h.b16 %v96
    %v289 = vpack.c.b16 %v165, %v161
    %v290 = vpack.c.b16 %v166, %v162
    %v291 = vpack.c.b16 %v167, %v163
    %v292 = vpack.c.b16 %v168, %v164
    %v293 = vpack.c.b16 %v173, %v169
    %v294 = vpack.c.b16 %v174, %v170
    %v295 = vpack.c.b16 %v175, %v171
    %v296 = vpack.c.b16 %v176, %v172
    %v297 = vpack.c.b16 %v181, %v177
    %v298 = vpack.c.b16 %v182, %v178
    %v299 = vpack.c.b16 %v183, %v179
    %v300 = vpack.c.b16 %v184, %v180
    %v301 = vpack.c.b16 %v189, %v185
    %v302 = vpack.c.b16 %v190, %v186
    %v303 = vpack.c.b16 %v191, %v187
    %v304 = vpack.c.b16 %v192, %v188
    %v305 = vpack.c.b16 %v197, %v193
    %v306 = vpack.c.b16 %v198, %v194
    %v307 = vpack.c.b16 %v199, %v195
    %v308 = vpack.c.b16 %v200, %v196
    %v309 = vpack.c.b16 %v205, %v201
    %v310 = vpack.c.b16 %v206, %v202
    %v311 = vpack.c.b16 %v207, %v203
    %v312 = vpack.c.b16 %v208, %v204
    %v313 = vpack.c.b16 %v213, %v209
    %v314 = vpack.c.b16 %v214, %v210
    %v315 = vpack.c.b16 %v215, %v211
    %v316 = vpack.c.b16 %v216, %v212
    %v317 = vpack.c.b16 %v221, %v217
    %v318 = vpack.c.b16 %v222, %v218
    %v319 = vpack.c.b16 %v223, %v219
    %v320 = vpack.c.b16 %v224, %v220
    %v321 = vpack.c.b16 %v229, %v225
    %v322 = vpack.c.b16 %v230, %v226
    %v323 = vpack.c.b16 %v231, %v227
    %v324 = vpack.c.b16 %v232, %v228
    %v325 = vpack.c.b16 %v237, %v233
    %v326 = vpack.c.b16 %v238, %v234
    %v327 = vpack.c.b16 %v239, %v235
    %v328 = vpack.c.b16 %v240, %v236
    %v329 = vpack.c.b16 %v245, %v241
    %v330 = vpack.c.b16 %v246, %v242
    %v331 = vpack.c.b16 %v247, %v243
    %v332 = vpack.c.b16 %v248, %v244
    %v333 = vpack.c.b16 %v253, %v249
    %v334 = vpack.c.b16 %v254, %v250
    %v335 = vpack.c.b16 %v255, %v251
    %v336 = vpack.c.b16 %v256, %v252
    %v337 = vpack.c.b16 %v261, %v257
    %v338 = vpack.c.b16 %v262, %v258
    %v339 = vpack.c.b16 %v263, %v259
    %v340 = vpack.c.b16 %v264, %v260
    %v341 = vpack.c.b16 %v269, %v265
    %v342 = vpack.c.b16 %v270, %v266
    %v343 = vpack.c.b16 %v271, %v267
    %v344 = vpack.c.b16 %v272, %v268
    %v345 = vpack.c.b16 %v277, %v273
    %v346 = vpack.c.b16 %v278, %v274
    %v347 = vpack.c.b16 %v279, %v275
    %v348 = vpack.c.b16 %v280, %v276
    %v349 = vpack.c.b16 %v285, %v281
    %v350 = vpack.c.b16 %v286, %v282
    %v351 = vpack.c.b16 %v287, %v283
    %v352 = vpack.c.b16 %v288, %v284
    %417 = vmatpush.bf16.msra.mxu0 %v317
    %418 = vmatpush.bf16.msra.mxu0 %v313
    %419 = vmatpush.bf16.msra.mxu0 %v309
    %420 = vmatpush.bf16.msra.mxu0 %v305
    %421 = vmatpush.bf16.msra.mxu0 %v301
    %422 = vmatpush.bf16.msra.mxu0 %v297
    %423 = vmatpush.bf16.msra.mxu0 %v293
    %424 = vmatpush.bf16.msra.mxu0 %v289
    %425 = vmatmul.bf16.gmra.mxu0 %v31
    %v426 = vpop.f32.mrf.mxu0
    %v427 = vadd.f32 0.0, %v426
    %v428 = vpop.f32.mrf.mxu0
    %v429 = vadd.f32 0.0, %v428
    %430 = vdwg.mxu0
    %431 = vmatpush.bf16.msra.mxu0 %v349
    %432 = vmatpush.bf16.msra.mxu0 %v345
    %433 = vmatpush.bf16.msra.mxu0 %v341
    %434 = vmatpush.bf16.msra.mxu0 %v337
    %435 = vmatpush.bf16.msra.mxu0 %v333
    %436 = vmatpush.bf16.msra.mxu0 %v329
    %437 = vmatpush.bf16.msra.mxu0 %v325
    %438 = vmatpush.bf16.msra.mxu0 %v321
    %439 = vmatmul.bf16.gmra.mxu0 %v32
    %v440 = vpop.f32.mrf.mxu0
    %v441 = vadd.f32 %v427, %v440
    %v442 = vpop.f32.mrf.mxu0
    %v443 = vadd.f32 %v429, %v442
    %444 = vdwg.mxu0
    %445 = vmatpush.bf16.msra.mxu0 %v318
    %446 = vmatpush.bf16.msra.mxu0 %v314
    %447 = vmatpush.bf16.msra.mxu0 %v310
    %448 = vmatpush.bf16.msra.mxu0 %v306
    %449 = vmatpush.bf16.msra.mxu0 %v302
    %450 = vmatpush.bf16.msra.mxu0 %v298
    %451 = vmatpush.bf16.msra.mxu0 %v294
    %452 = vmatpush.bf16.msra.mxu0 %v290
    %453 = vmatmul.bf16.gmra.mxu0 %v31
    %v454 = vpop.f32.mrf.mxu0
    %v455 = vadd.f32 0.0, %v454
    %v456 = vpop.f32.mrf.mxu0
    %v457 = vadd.f32 0.0, %v456
    %458 = vdwg.mxu0
    %459 = vmatpush.bf16.msra.mxu0 %v350
    %460 = vmatpush.bf16.msra.mxu0 %v346
    %461 = vmatpush.bf16.msra.mxu0 %v342
    %462 = vmatpush.bf16.msra.mxu0 %v338
    %463 = vmatpush.bf16.msra.mxu0 %v334
    %464 = vmatpush.bf16.msra.mxu0 %v330
    %465 = vmatpush.bf16.msra.mxu0 %v326
    %466 = vmatpush.bf16.msra.mxu0 %v322
    %467 = vmatmul.bf16.gmra.mxu0 %v32
    %v468 = vpop.f32.mrf.mxu0
    %v469 = vadd.f32 %v455, %v468
    %v470 = vpop.f32.mrf.mxu0
    %v471 = vadd.f32 %v457, %v470
    %472 = vdwg.mxu0
    %473 = vmatpush.bf16.msra.mxu0 %v319
    %474 = vmatpush.bf16.msra.mxu0 %v315
    %475 = vmatpush.bf16.msra.mxu0 %v311
    %476 = vmatpush.bf16.msra.mxu0 %v307
    %477 = vmatpush.bf16.msra.mxu0 %v303
    %478 = vmatpush.bf16.msra.mxu0 %v299
    %479 = vmatpush.bf16.msra.mxu0 %v295
    %480 = vmatpush.bf16.msra.mxu0 %v291
    %481 = vmatmul.bf16.gmra.mxu0 %v31
    %v482 = vpop.f32.mrf.mxu0
    %v483 = vadd.f32 0.0, %v482
    %v484 = vpop.f32.mrf.mxu0
    %v485 = vadd.f32 0.0, %v484
    %486 = vdwg.mxu0
    %487 = vmatpush.bf16.msra.mxu0 %v351
    %488 = vmatpush.bf16.msra.mxu0 %v347
    %489 = vmatpush.bf16.msra.mxu0 %v343
    %490 = vmatpush.bf16.msra.mxu0 %v339
    %491 = vmatpush.bf16.msra.mxu0 %v335
    %492 = vmatpush.bf16.msra.mxu0 %v331
    %493 = vmatpush.bf16.msra.mxu0 %v327
    %494 = vmatpush.bf16.msra.mxu0 %v323
    %495 = vmatmul.bf16.gmra.mxu0 %v32
    %v496 = vpop.f32.mrf.mxu0
    %v497 = vadd.f32 %v483, %v496
    %v498 = vpop.f32.mrf.mxu0
    %v499 = vadd.f32 %v485, %v498
    %500 = vdwg.mxu0
    %501 = vmatpush.bf16.msra.mxu0 %v320
    %502 = vmatpush.bf16.msra.mxu0 %v316
    %503 = vmatpush.bf16.msra.mxu0 %v312
    %504 = vmatpush.bf16.msra.mxu0 %v308
    %505 = vmatpush.bf16.msra.mxu0 %v304
    %506 = vmatpush.bf16.msra.mxu0 %v300
    %507 = vmatpush.bf16.msra.mxu0 %v296
    %508 = vmatpush.bf16.msra.mxu0 %v292
    %509 = vmatmul.bf16.gmra.mxu0 %v31
    %v510 = vpop.f32.mrf.mxu0
    %v511 = vadd.f32 0.0, %v510
    %v512 = vpop.f32.mrf.mxu0
    %v513 = vadd.f32 0.0, %v512
    %514 = vdwg.mxu0
    %515 = vmatpush.bf16.msra.mxu0 %v352
    %516 = vmatpush.bf16.msra.mxu0 %v348
    %517 = vmatpush.bf16.msra.mxu0 %v344
    %518 = vmatpush.bf16.msra.mxu0 %v340
    %519 = vmatpush.bf16.msra.mxu0 %v336
    %520 = vmatpush.bf16.msra.mxu0 %v332
    %521 = vmatpush.bf16.msra.mxu0 %v328
    %522 = vmatpush.bf16.msra.mxu0 %v324
    %523 = vmatmul.bf16.gmra.mxu0 %v32
    %v524 = vpop.f32.mrf.mxu0
    %v525 = vadd.f32 %v511, %v524
    %v526 = vpop.f32.mrf.mxu0
    %v527 = vadd.f32 %v513, %v526
    %528 = vdwg.mxu0
    %v529 = vpack.c.bf16 %v469, %v441
    %v530 = vpack.c.bf16 %v525, %v497
    %v531 = vpack.c.bf16 %v471, %v443
    %v532 = vpack.c.bf16 %v527, %v499
    %533 = vst [vmem:[%s2] sm:$0xff] %v529
    %534 = vst [vmem:[%s2 + $0x8] sm:$0xff] %v530
    %535 = vst [vmem:[%s2 + $0x10] sm:$0xff] %v531
    %536 = vst [vmem:[%s2 + $0x18] sm:$0xff] %v532
    // Predicated region
    $region14: #{decoder_forward.23} parent=1 // pred_check
      _
    $region15: #{decoder_forward.23} parent=1 // pred_check_branch
      %538 = sbr.rel (0) target = $region17
    $region16: #{decoder_forward.23} parent=1 // pred_region
      _
    $region17: #{decoder_forward.23} parent=1 // pred_fallthru
      _
    // Predicated region
    $region18: #{decoder_forward.23} parent=1 // pred_check
      _
    $region19: #{decoder_forward.23} parent=1 // pred_check_branch
      %540 = sbr.rel (0) target = $region21
    $region20: #{decoder_forward.23} parent=1 // pred_region
      _
    $region21: #{decoder_forward.23} parent=1 // pred_fallthru
      _
    %541 = vsyncpa [#allocation3], 1

// kernel: decoder_forward.27
$region0: #{decoder_forward.27}
  #allocation0 [shape = 'u32[]', space=smem, size = 0x4, offset = 0x4, fixed_abs, tag = 'smem constant byte address 0x4 - core index']
  #allocation1 [shape = 'u32[72,128]{1,0:T(1,128)}', space=vmem, size = 0x9000, scoped, tag = 'internal scratch']
  %s0 = inlined_call_operand.vmem [shape: bf16[32,512], index: 0, kind: input, shape index: {}]
  %s1 = inlined_call_operand.hbm [shape: bf16[512,256], index: 1, kind: input, shape index: {}]
  %s2 = inlined_call_operand.vmem [shape: f32[32,256], index: 2, kind: input, shape index: {}]
  %s3 = inlined_call_operand.vmem [shape: f32[32,256], index: 3, kind: output, shape index: {}]
  %s4 = sld [smem:[#allocation0]]
  $region26: #{decoder_forward.27} parent=0
    _
  %s6 = ssub.s32 1, %s4
  %s7 = scalar_select 0, %s6, %s4
  $region1: #{decoder_forward.27} parent=0
    #allocation2 [shape = 'u8[262144]{0}', space=vmem, size = 0x40000, scoped, tag = 'input window, operand 1, single buffered']
    #allocation3 [shape = 's32[1]{0}', space=sflag, size = 0x4, scoped, tag = 'scoped memory for decoder_forward.27']
    %8 = vsyncpa [#allocation3], 0
    // Predicated region
    $region2: #{decoder_forward.27} parent=1 // pred_check
      _
    $region3: #{decoder_forward.27} parent=1 // pred_check_branch
      %10 = sbr.rel (0) target = $region5
    $region4: #{decoder_forward.27} parent=1 // pred_region
      _
    $region5: #{decoder_forward.27} parent=1 // pred_fallthru
      _
    // Predicated region
    $region6: #{decoder_forward.27} parent=1 // pred_check
      _
    $region7: #{decoder_forward.27} parent=1 // pred_check_branch
      %12 = sbr.rel (0) target = $region9
    $region8: #{decoder_forward.27} parent=1 // pred_region
      %14 = vsyncadd [#allocation3], 0
      %s15 = sshll.u32 %s1, 4
      %s16 = int_to_ptr.hbm [resolvable:$true] %s15
      %s17 = sshll.u32 [#allocation2], 4
      %s18 = int_to_ptr.vmem [resolvable:$true] %s17
      %23 = dma.hbm_to_vmem [thread:$0]  %s16, 8192, %s18, [#allocation3], 128, 128, 8
    $region9: #{decoder_forward.27} parent=1 // pred_fallthru
      _
    // Predicated region
    $region10: #{decoder_forward.27} parent=1 // pred_check
      _
    $region11: #{decoder_forward.27} parent=1 // pred_check_branch
      %25 = sbr.rel (0) target = $region13
    $region12: #{decoder_forward.27} parent=1 // pred_region
      _
    $region13: #{decoder_forward.27} parent=1 // pred_fallthru
      _
    // Predicated region
    $region14: #{decoder_forward.27} parent=1 // pred_check
      _
    $region15: #{decoder_forward.27} parent=1 // pred_check_branch
      %27 = sbr.rel (0) target = $region17
    $region16: #{decoder_forward.27} parent=1 // pred_region
      %29 = dma.done [#allocation3], 8192
    $region17: #{decoder_forward.27} parent=1 // pred_fallthru
      _
    %v30 = vld [vmem:[%s0] sm:$0xff]
    %v31 = vld [vmem:[%s0 + $0x8] sm:$0xff]
    %v32 = vld [vmem:[%s0 + $0x10] sm:$0xff]
    %v33 = vld [vmem:[%s0 + $0x18] sm:$0xff]
    %v34 = vld [vmem:[%s0 + $0x20] sm:$0xff]
    %v35 = vld [vmem:[%s0 + $0x28] sm:$0xff]
    %v36 = vld [vmem:[%s0 + $0x30] sm:$0xff]
    %v37 = vld [vmem:[%s0 + $0x38] sm:$0xff]
    %v38 = vld [vmem:[#allocation2] sm:$0xff]
    %v39 = vld [vmem:[#allocation2 + $0x8] sm:$0xff]
    %v40 = vld [vmem:[#allocation2 + $0x10] sm:$0xff]
    %v41 = vld [vmem:[#allocation2 + $0x18] sm:$0xff]
    %v42 = vld [vmem:[#allocation2 + $0x20] sm:$0xff]
    %v43 = vld [vmem:[#allocation2 + $0x28] sm:$0xff]
    %v44 = vld [vmem:[#allocation2 + $0x30] sm:$0xff]
    %v45 = vld [vmem:[#allocation2 + $0x38] sm:$0xff]
    %v46 = vld [vmem:[#allocation2 + $0x40] sm:$0xff]
    %v47 = vld [vmem:[#allocation2 + $0x48] sm:$0xff]
    %v48 = vld [vmem:[#allocation2 + $0x50] sm:$0xff]
    %v49 = vld [vmem:[#allocation2 + $0x58] sm:$0xff]
    %v50 = vld [vmem:[#allocation2 + $0x60] sm:$0xff]
    %v51 = vld [vmem:[#allocation2 + $0x68] sm:$0xff]
    %v52 = vld [vmem:[#allocation2 + $0x70] sm:$0xff]
    %v53 = vld [vmem:[#allocation2 + $0x78] sm:$0xff]
    %v54 = vld [vmem:[#allocation2 + $0x80] sm:$0xff]
    %v55 = vld [vmem:[#allocation2 + $0x88] sm:$0xff]
    %v56 = vld [vmem:[#allocation2 + $0x90] sm:$0xff]
    %v57 = vld [vmem:[#allocation2 + $0x98] sm:$0xff]
    %v58 = vld [vmem:[#allocation2 + $0xa0] sm:$0xff]
    %v59 = vld [vmem:[#allocation2 + $0xa8] sm:$0xff]
    %v60 = vld [vmem:[#allocation2 + $0xb0] sm:$0xff]
    %v61 = vld [vmem:[#allocation2 + $0xb8] sm:$0xff]
    %v62 = vld [vmem:[#allocation2 + $0xc0] sm:$0xff]
    %v63 = vld [vmem:[#allocation2 + $0xc8] sm:$0xff]
    %v64 = vld [vmem:[#allocation2 + $0xd0] sm:$0xff]
    %v65 = vld [vmem:[#allocation2 + $0xd8] sm:$0xff]
    %v66 = vld [vmem:[#allocation2 + $0xe0] sm:$0xff]
    %v67 = vld [vmem:[#allocation2 + $0xe8] sm:$0xff]
    %v68 = vld [vmem:[#allocation2 + $0xf0] sm:$0xff]
    %v69 = vld [vmem:[#allocation2 + $0xf8] sm:$0xff]
    %v70 = vld [vmem:[#allocation2 + $0x100] sm:$0xff]
    %v71 = vld [vmem:[#allocation2 + $0x108] sm:$0xff]
    %v72 = vld [vmem:[#allocation2 + $0x110] sm:$0xff]
    %v73 = vld [vmem:[#allocation2 + $0x118] sm:$0xff]
    %v74 = vld [vmem:[#allocation2 + $0x120] sm:$0xff]
    %v75 = vld [vmem:[#allocation2 + $0x128] sm:$0xff]
    %v76 = vld [vmem:[#allocation2 + $0x130] sm:$0xff]
    %v77 = vld [vmem:[#allocation2 + $0x138] sm:$0xff]
    %v78 = vld [vmem:[#allocation2 + $0x140] sm:$0xff]
    %v79 = vld [vmem:[#allocation2 + $0x148] sm:$0xff]
    %v80 = vld [vmem:[#allocation2 + $0x150] sm:$0xff]
    %v81 = vld [vmem:[#allocation2 + $0x158] sm:$0xff]
    %v82 = vld [vmem:[#allocation2 + $0x160] sm:$0xff]
    %v83 = vld [vmem:[#allocation2 + $0x168] sm:$0xff]
    %v84 = vld [vmem:[#allocation2 + $0x170] sm:$0xff]
    %v85 = vld [vmem:[#allocation2 + $0x178] sm:$0xff]
    %v86 = vld [vmem:[#allocation2 + $0x180] sm:$0xff]
    %v87 = vld [vmem:[#allocation2 + $0x188] sm:$0xff]
    %v88 = vld [vmem:[#allocation2 + $0x190] sm:$0xff]
    %v89 = vld [vmem:[#allocation2 + $0x198] sm:$0xff]
    %v90 = vld [vmem:[#allocation2 + $0x1a0] sm:$0xff]
    %v91 = vld [vmem:[#allocation2 + $0x1a8] sm:$0xff]
    %v92 = vld [vmem:[#allocation2 + $0x1b0] sm:$0xff]
    %v93 = vld [vmem:[#allocation2 + $0x1b8] sm:$0xff]
    %v94 = vld [vmem:[#allocation2 + $0x1c0] sm:$0xff]
    %v95 = vld [vmem:[#allocation2 + $0x1c8] sm:$0xff]
    %v96 = vld [vmem:[#allocation2 + $0x1d0] sm:$0xff]
    %v97 = vld [vmem:[#allocation2 + $0x1d8] sm:$0xff]
    %v98 = vld [vmem:[#allocation2 + $0x1e0] sm:$0xff]
    %v99 = vld [vmem:[#allocation2 + $0x1e8] sm:$0xff]
    %v100 = vld [vmem:[#allocation2 + $0x1f0] sm:$0xff]
    %v101 = vld [vmem:[#allocation2 + $0x1f8] sm:$0xff]
    %v102 = vld [vmem:[%s2] sm:$0xff]
    %v103 = vld [vmem:[%s2 + $0x8] sm:$0xff]
    %v104 = vld [vmem:[%s2 + $0x10] sm:$0xff]
    %v105 = vld [vmem:[%s2 + $0x18] sm:$0xff]
    %v106 = vld [vmem:[%s2 + $0x20] sm:$0xff]
    %v107 = vld [vmem:[%s2 + $0x28] sm:$0xff]
    %v108 = vld [vmem:[%s2 + $0x30] sm:$0xff]
    %v109 = vld [vmem:[%s2 + $0x38] sm:$0xff]
    %v118 = vunpack.c.l.b16 %v30
    %v119 = vunpack.c.h.b16 %v30
    %v120 = vunpack.c.l.b16 %v31
    %v121 = vunpack.c.h.b16 %v31
    %v122 = vunpack.c.l.b16 %v32
    %v123 = vunpack.c.h.b16 %v32
    %v124 = vunpack.c.l.b16 %v33
    %v125 = vunpack.c.h.b16 %v33
    %v126 = vunpack.c.l.b16 %v34
    %v127 = vunpack.c.h.b16 %v34
    %v128 = vunpack.c.l.b16 %v35
    %v129 = vunpack.c.h.b16 %v35
    %v130 = vunpack.c.l.b16 %v36
    %v131 = vunpack.c.h.b16 %v36
    %v132 = vunpack.c.l.b16 %v37
    %v133 = vunpack.c.h.b16 %v37
    %v134 = vpack.c.b16 %v122, %v118
    %v135 = vpack.c.b16 %v123, %v119
    %v136 = vpack.c.b16 %v124, %v120
    %v137 = vpack.c.b16 %v125, %v121
    %v138 = vpack.c.b16 %v130, %v126
    %v139 = vpack.c.b16 %v131, %v127
    %v140 = vpack.c.b16 %v132, %v128
    %v141 = vpack.c.b16 %v133, %v129
    %v214 = vunpack.c.l.b16 %v38
    %v215 = vunpack.c.h.b16 %v38
    %v216 = vunpack.c.l.b16 %v39
    %v217 = vunpack.c.h.b16 %v39
    %v218 = vunpack.c.l.b16 %v40
    %v219 = vunpack.c.h.b16 %v40
    %v220 = vunpack.c.l.b16 %v41
    %v221 = vunpack.c.h.b16 %v41
    %v222 = vunpack.c.l.b16 %v42
    %v223 = vunpack.c.h.b16 %v42
    %v224 = vunpack.c.l.b16 %v43
    %v225 = vunpack.c.h.b16 %v43
    %v226 = vunpack.c.l.b16 %v44
    %v227 = vunpack.c.h.b16 %v44
    %v228 = vunpack.c.l.b16 %v45
    %v229 = vunpack.c.h.b16 %v45
    %v230 = vunpack.c.l.b16 %v46
    %v231 = vunpack.c.h.b16 %v46
    %v232 = vunpack.c.l.b16 %v47
    %v233 = vunpack.c.h.b16 %v47
    %v234 = vunpack.c.l.b16 %v48
    %v235 = vunpack.c.h.b16 %v48
    %v236 = vunpack.c.l.b16 %v49
    %v237 = vunpack.c.h.b16 %v49
    %v238 = vunpack.c.l.b16 %v50
    %v239 = vunpack.c.h.b16 %v50
    %v240 = vunpack.c.l.b16 %v51
    %v241 = vunpack.c.h.b16 %v51
    %v242 = vunpack.c.l.b16 %v52
    %v243 = vunpack.c.h.b16 %v52
    %v244 = vunpack.c.l.b16 %v53
    %v245 = vunpack.c.h.b16 %v53
    %v246 = vunpack.c.l.b16 %v54
    %v247 = vunpack.c.h.b16 %v54
    %v248 = vunpack.c.l.b16 %v55
    %v249 = vunpack.c.h.b16 %v55
    %v250 = vunpack.c.l.b16 %v56
    %v251 = vunpack.c.h.b16 %v56
    %v252 = vunpack.c.l.b16 %v57
    %v253 = vunpack.c.h.b16 %v57
    %v254 = vunpack.c.l.b16 %v58
    %v255 = vunpack.c.h.b16 %v58
    %v256 = vunpack.c.l.b16 %v59
    %v257 = vunpack.c.h.b16 %v59
    %v258 = vunpack.c.l.b16 %v60
    %v259 = vunpack.c.h.b16 %v60
    %v260 = vunpack.c.l.b16 %v61
    %v261 = vunpack.c.h.b16 %v61
    %v262 = vunpack.c.l.b16 %v62
    %v263 = vunpack.c.h.b16 %v62
    %v264 = vunpack.c.l.b16 %v63
    %v265 = vunpack.c.h.b16 %v63
    %v266 = vunpack.c.l.b16 %v64
    %v267 = vunpack.c.h.b16 %v64
    %v268 = vunpack.c.l.b16 %v65
    %v269 = vunpack.c.h.b16 %v65
    %v270 = vunpack.c.l.b16 %v66
    %v271 = vunpack.c.h.b16 %v66
    %v272 = vunpack.c.l.b16 %v67
    %v273 = vunpack.c.h.b16 %v67
    %v274 = vunpack.c.l.b16 %v68
    %v275 = vunpack.c.h.b16 %v68
    %v276 = vunpack.c.l.b16 %v69
    %v277 = vunpack.c.h.b16 %v69
    %v278 = vunpack.c.l.b16 %v70
    %v279 = vunpack.c.h.b16 %v70
    %v280 = vunpack.c.l.b16 %v71
    %v281 = vunpack.c.h.b16 %v71
    %v282 = vunpack.c.l.b16 %v72
    %v283 = vunpack.c.h.b16 %v72
    %v284 = vunpack.c.l.b16 %v73
    %v285 = vunpack.c.h.b16 %v73
    %v286 = vunpack.c.l.b16 %v74
    %v287 = vunpack.c.h.b16 %v74
    %v288 = vunpack.c.l.b16 %v75
    %v289 = vunpack.c.h.b16 %v75
    %v290 = vunpack.c.l.b16 %v76
    %v291 = vunpack.c.h.b16 %v76
    %v292 = vunpack.c.l.b16 %v77
    %v293 = vunpack.c.h.b16 %v77
    %v294 = vunpack.c.l.b16 %v78
    %v295 = vunpack.c.h.b16 %v78
    %v296 = vunpack.c.l.b16 %v79
    %v297 = vunpack.c.h.b16 %v79
    %v298 = vunpack.c.l.b16 %v80
    %v299 = vunpack.c.h.b16 %v80
    %v300 = vunpack.c.l.b16 %v81
    %v301 = vunpack.c.h.b16 %v81
    %v302 = vunpack.c.l.b16 %v82
    %v303 = vunpack.c.h.b16 %v82
    %v304 = vunpack.c.l.b16 %v83
    %v305 = vunpack.c.h.b16 %v83
    %v306 = vunpack.c.l.b16 %v84
    %v307 = vunpack.c.h.b16 %v84
    %v308 = vunpack.c.l.b16 %v85
    %v309 = vunpack.c.h.b16 %v85
    %v310 = vunpack.c.l.b16 %v86
    %v311 = vunpack.c.h.b16 %v86
    %v312 = vunpack.c.l.b16 %v87
    %v313 = vunpack.c.h.b16 %v87
    %v314 = vunpack.c.l.b16 %v88
    %v315 = vunpack.c.h.b16 %v88
    %v316 = vunpack.c.l.b16 %v89
    %v317 = vunpack.c.h.b16 %v89
    %v318 = vunpack.c.l.b16 %v90
    %v319 = vunpack.c.h.b16 %v90
    %v320 = vunpack.c.l.b16 %v91
    %v321 = vunpack.c.h.b16 %v91
    %v322 = vunpack.c.l.b16 %v92
    %v323 = vunpack.c.h.b16 %v92
    %v324 = vunpack.c.l.b16 %v93
    %v325 = vunpack.c.h.b16 %v93
    %v326 = vunpack.c.l.b16 %v94
    %v327 = vunpack.c.h.b16 %v94
    %v328 = vunpack.c.l.b16 %v95
    %v329 = vunpack.c.h.b16 %v95
    %v330 = vunpack.c.l.b16 %v96
    %v331 = vunpack.c.h.b16 %v96
    %v332 = vunpack.c.l.b16 %v97
    %v333 = vunpack.c.h.b16 %v97
    %v334 = vunpack.c.l.b16 %v98
    %v335 = vunpack.c.h.b16 %v98
    %v336 = vunpack.c.l.b16 %v99
    %v337 = vunpack.c.h.b16 %v99
    %v338 = vunpack.c.l.b16 %v100
    %v339 = vunpack.c.h.b16 %v100
    %v340 = vunpack.c.l.b16 %v101
    %v341 = vunpack.c.h.b16 %v101
    %v342 = vpack.c.b16 %v216, %v214
    %v343 = vpack.c.b16 %v217, %v215
    %v344 = vpack.c.b16 %v220, %v218
    %v345 = vpack.c.b16 %v221, %v219
    %v346 = vpack.c.b16 %v224, %v222
    %v347 = vpack.c.b16 %v225, %v223
    %v348 = vpack.c.b16 %v228, %v226
    %v349 = vpack.c.b16 %v229, %v227
    %v350 = vpack.c.b16 %v232, %v230
    %v351 = vpack.c.b16 %v233, %v231
    %v352 = vpack.c.b16 %v236, %v234
    %v353 = vpack.c.b16 %v237, %v235
    %v354 = vpack.c.b16 %v240, %v238
    %v355 = vpack.c.b16 %v241, %v239
    %v356 = vpack.c.b16 %v244, %v242
    %v357 = vpack.c.b16 %v245, %v243
    %v358 = vpack.c.b16 %v248, %v246
    %v359 = vpack.c.b16 %v249, %v247
    %v360 = vpack.c.b16 %v252, %v250
    %v361 = vpack.c.b16 %v253, %v251
    %v362 = vpack.c.b16 %v256, %v254
    %v363 = vpack.c.b16 %v257, %v255
    %v364 = vpack.c.b16 %v260, %v258
    %v365 = vpack.c.b16 %v261, %v259
    %v366 = vpack.c.b16 %v264, %v262
    %v367 = vpack.c.b16 %v265, %v263
    %v368 = vpack.c.b16 %v268, %v266
    %v369 = vpack.c.b16 %v269, %v267
    %v370 = vpack.c.b16 %v272, %v270
    %v371 = vpack.c.b16 %v273, %v271
    %v372 = vpack.c.b16 %v276, %v274
    %v373 = vpack.c.b16 %v277, %v275
    %v374 = vpack.c.b16 %v280, %v278
    %v375 = vpack.c.b16 %v281, %v279
    %v376 = vpack.c.b16 %v284, %v282
    %v377 = vpack.c.b16 %v285, %v283
    %v378 = vpack.c.b16 %v288, %v286
    %v379 = vpack.c.b16 %v289, %v287
    %v380 = vpack.c.b16 %v292, %v290
    %v381 = vpack.c.b16 %v293, %v291
    %v382 = vpack.c.b16 %v296, %v294
    %v383 = vpack.c.b16 %v297, %v295
    %v384 = vpack.c.b16 %v300, %v298
    %v385 = vpack.c.b16 %v301, %v299
    %v386 = vpack.c.b16 %v304, %v302
    %v387 = vpack.c.b16 %v305, %v303
    %v388 = vpack.c.b16 %v308, %v306
    %v389 = vpack.c.b16 %v309, %v307
    %v390 = vpack.c.b16 %v312, %v310
    %v391 = vpack.c.b16 %v313, %v311
    %v392 = vpack.c.b16 %v316, %v314
    %v393 = vpack.c.b16 %v317, %v315
    %v394 = vpack.c.b16 %v320, %v318
    %v395 = vpack.c.b16 %v321, %v319
    %v396 = vpack.c.b16 %v324, %v322
    %v397 = vpack.c.b16 %v325, %v323
    %v398 = vpack.c.b16 %v328, %v326
    %v399 = vpack.c.b16 %v329, %v327
    %v400 = vpack.c.b16 %v332, %v330
    %v401 = vpack.c.b16 %v333, %v331
    %v402 = vpack.c.b16 %v336, %v334
    %v403 = vpack.c.b16 %v337, %v335
    %v404 = vpack.c.b16 %v340, %v338
    %v405 = vpack.c.b16 %v341, %v339
    %470 = vmatpush.bf16.msra.mxu0 %v356
    %471 = vmatpush.bf16.msra.mxu0 %v354
    %472 = vmatpush.bf16.msra.mxu0 %v352
    %473 = vmatpush.bf16.msra.mxu0 %v350
    %474 = vmatpush.bf16.msra.mxu0 %v348
    %475 = vmatpush.bf16.msra.mxu0 %v346
    %476 = vmatpush.bf16.msra.mxu0 %v344
    %477 = vmatpush.bf16.msra.mxu0 %v342
    %478 = vmatmul.bf16.gmra.mxu0 %v134
    %v479 = vpop.f32.mrf.mxu0
    %v480 = vadd.f32 %v102, %v479
    %v481 = vpop.f32.mrf.mxu0
    %v482 = vadd.f32 %v104, %v481
    %483 = vmatmul.bf16.gmra.mxu0 %v138
    %v484 = vpop.f32.mrf.mxu0
    %v485 = vadd.f32 %v106, %v484
    %v486 = vpop.f32.mrf.mxu0
    %v487 = vadd.f32 %v108, %v486
    %488 = vdwg.mxu0
    %489 = vmatpush.bf16.msra.mxu0 %v372
    %490 = vmatpush.bf16.msra.mxu0 %v370
    %491 = vmatpush.bf16.msra.mxu0 %v368
    %492 = vmatpush.bf16.msra.mxu0 %v366
    %493 = vmatpush.bf16.msra.mxu0 %v364
    %494 = vmatpush.bf16.msra.mxu0 %v362
    %495 = vmatpush.bf16.msra.mxu0 %v360
    %496 = vmatpush.bf16.msra.mxu0 %v358
    %497 = vmatmul.bf16.gmra.mxu0 %v135
    %v498 = vpop.f32.mrf.mxu0
    %v499 = vadd.f32 %v480, %v498
    %v500 = vpop.f32.mrf.mxu0
    %v501 = vadd.f32 %v482, %v500
    %502 = vmatmul.bf16.gmra.mxu0 %v139
    %v503 = vpop.f32.mrf.mxu0
    %v504 = vadd.f32 %v485, %v503
    %v505 = vpop.f32.mrf.mxu0
    %v506 = vadd.f32 %v487, %v505
    %507 = vdwg.mxu0
    %508 = vmatpush.bf16.msra.mxu0 %v388
    %509 = vmatpush.bf16.msra.mxu0 %v386
    %510 = vmatpush.bf16.msra.mxu0 %v384
    %511 = vmatpush.bf16.msra.mxu0 %v382
    %512 = vmatpush.bf16.msra.mxu0 %v380
    %513 = vmatpush.bf16.msra.mxu0 %v378
    %514 = vmatpush.bf16.msra.mxu0 %v376
    %515 = vmatpush.bf16.msra.mxu0 %v374
    %516 = vmatmul.bf16.gmra.mxu0 %v136
    %v517 = vpop.f32.mrf.mxu0
    %v518 = vadd.f32 %v499, %v517
    %v519 = vpop.f32.mrf.mxu0
    %v520 = vadd.f32 %v501, %v519
    %521 = vmatmul.bf16.gmra.mxu0 %v140
    %v522 = vpop.f32.mrf.mxu0
    %v523 = vadd.f32 %v504, %v522
    %v524 = vpop.f32.mrf.mxu0
    %v525 = vadd.f32 %v506, %v524
    %526 = vdwg.mxu0
    %527 = vmatpush.bf16.msra.mxu0 %v404
    %528 = vmatpush.bf16.msra.mxu0 %v402
    %529 = vmatpush.bf16.msra.mxu0 %v400
    %530 = vmatpush.bf16.msra.mxu0 %v398
    %531 = vmatpush.bf16.msra.mxu0 %v396
    %532 = vmatpush.bf16.msra.mxu0 %v394
    %533 = vmatpush.bf16.msra.mxu0 %v392
    %534 = vmatpush.bf16.msra.mxu0 %v390
    %535 = vmatmul.bf16.gmra.mxu0 %v137
    %v536 = vpop.f32.mrf.mxu0
    %v537 = vadd.f32 %v518, %v536
    %v538 = vpop.f32.mrf.mxu0
    %v539 = vadd.f32 %v520, %v538
    %540 = vmatmul.bf16.gmra.mxu0 %v141
    %v541 = vpop.f32.mrf.mxu0
    %v542 = vadd.f32 %v523, %v541
    %v543 = vpop.f32.mrf.mxu0
    %v544 = vadd.f32 %v525, %v543
    %545 = vdwg.mxu0
    %546 = vmatpush.bf16.msra.mxu0 %v357
    %547 = vmatpush.bf16.msra.mxu0 %v355
    %548 = vmatpush.bf16.msra.mxu0 %v353
    %549 = vmatpush.bf16.msra.mxu0 %v351
    %550 = vmatpush.bf16.msra.mxu0 %v349
    %551 = vmatpush.bf16.msra.mxu0 %v347
    %552 = vmatpush.bf16.msra.mxu0 %v345
    %553 = vmatpush.bf16.msra.mxu0 %v343
    %554 = vmatmul.bf16.gmra.mxu0 %v134
    %v555 = vpop.f32.mrf.mxu0
    %v556 = vadd.f32 %v103, %v555
    %v557 = vpop.f32.mrf.mxu0
    %v558 = vadd.f32 %v105, %v557
    %559 = vmatmul.bf16.gmra.mxu0 %v138
    %v560 = vpop.f32.mrf.mxu0
    %v561 = vadd.f32 %v107, %v560
    %v562 = vpop.f32.mrf.mxu0
    %v563 = vadd.f32 %v109, %v562
    %564 = vdwg.mxu0
    %565 = vmatpush.bf16.msra.mxu0 %v373
    %566 = vmatpush.bf16.msra.mxu0 %v371
    %567 = vmatpush.bf16.msra.mxu0 %v369
    %568 = vmatpush.bf16.msra.mxu0 %v367
    %569 = vmatpush.bf16.msra.mxu0 %v365
    %570 = vmatpush.bf16.msra.mxu0 %v363
    %571 = vmatpush.bf16.msra.mxu0 %v361
    %572 = vmatpush.bf16.msra.mxu0 %v359
    %573 = vmatmul.bf16.gmra.mxu0 %v135
    %v574 = vpop.f32.mrf.mxu0
    %v575 = vadd.f32 %v556, %v574
    %v576 = vpop.f32.mrf.mxu0
    %v577 = vadd.f32 %v558, %v576
    %578 = vmatmul.bf16.gmra.mxu0 %v139
    %v579 = vpop.f32.mrf.mxu0
    %v580 = vadd.f32 %v561, %v579
    %v581 = vpop.f32.mrf.mxu0
    %v582 = vadd.f32 %v563, %v581
    %583 = vdwg.mxu0
    %584 = vmatpush.bf16.msra.mxu0 %v389
    %585 = vmatpush.bf16.msra.mxu0 %v387
    %586 = vmatpush.bf16.msra.mxu0 %v385
    %587 = vmatpush.bf16.msra.mxu0 %v383
    %588 = vmatpush.bf16.msra.mxu0 %v381
    %589 = vmatpush.bf16.msra.mxu0 %v379
    %590 = vmatpush.bf16.msra.mxu0 %v377
    %591 = vmatpush.bf16.msra.mxu0 %v375
    %592 = vmatmul.bf16.gmra.mxu0 %v136
    %v593 = vpop.f32.mrf.mxu0
    %v594 = vadd.f32 %v575, %v593
    %v595 = vpop.f32.mrf.mxu0
    %v596 = vadd.f32 %v577, %v595
    %597 = vmatmul.bf16.gmra.mxu0 %v140
    %v598 = vpop.f32.mrf.mxu0
    %v599 = vadd.f32 %v580, %v598
    %v600 = vpop.f32.mrf.mxu0
    %v601 = vadd.f32 %v582, %v600
    %602 = vdwg.mxu0
    %603 = vmatpush.bf16.msra.mxu0 %v405
    %604 = vmatpush.bf16.msra.mxu0 %v403
    %605 = vmatpush.bf16.msra.mxu0 %v401
    %606 = vmatpush.bf16.msra.mxu0 %v399
    %607 = vmatpush.bf16.msra.mxu0 %v397
    %608 = vmatpush.bf16.msra.mxu0 %v395
    %609 = vmatpush.bf16.msra.mxu0 %v393
    %610 = vmatpush.bf16.msra.mxu0 %v391
    %611 = vmatmul.bf16.gmra.mxu0 %v137
    %v612 = vpop.f32.mrf.mxu0
    %v613 = vadd.f32 %v594, %v612
    %v614 = vpop.f32.mrf.mxu0
    %v615 = vadd.f32 %v596, %v614
    %616 = vmatmul.bf16.gmra.mxu0 %v141
    %v617 = vpop.f32.mrf.mxu0
    %v618 = vadd.f32 %v599, %v617
    %v619 = vpop.f32.mrf.mxu0
    %v620 = vadd.f32 %v601, %v619
    %621 = vdwg.mxu0
    %622 = vst [vmem:[%s3] sm:$0xff] %v537
    %623 = vst [vmem:[%s3 + $0x8] sm:$0xff] %v613
    %624 = vst [vmem:[%s3 + $0x10] sm:$0xff] %v539
    %625 = vst [vmem:[%s3 + $0x18] sm:$0xff] %v615
    %626 = vst [vmem:[%s3 + $0x20] sm:$0xff] %v542
    %627 = vst [vmem:[%s3 + $0x28] sm:$0xff] %v618
    %628 = vst [vmem:[%s3 + $0x30] sm:$0xff] %v544
    %629 = vst [vmem:[%s3 + $0x38] sm:$0xff] %v620
    // Predicated region
    $region18: #{decoder_forward.27} parent=1 // pred_check
      _
    $region19: #{decoder_forward.27} parent=1 // pred_check_branch
      %631 = sbr.rel (0) target = $region21
    $region20: #{decoder_forward.27} parent=1 // pred_region
      _
    $region21: #{decoder_forward.27} parent=1 // pred_fallthru
      _
    // Predicated region
    $region22: #{decoder_forward.27} parent=1 // pred_check
      _
    $region23: #{decoder_forward.27} parent=1 // pred_check_branch
      %633 = sbr.rel (0) target = $region25
    $region24: #{decoder_forward.27} parent=1 // pred_region
      _
    $region25: #{decoder_forward.27} parent=1 // pred_fallthru
      _
    %634 = vsyncpa [#allocation3], 1

// kernel: decoder_forward.26
$region0: #{decoder_forward.26}
  #allocation0 [shape = 'u32[]', space=smem, size = 0x4, offset = 0x4, fixed_abs, tag = 'smem constant byte address 0x4 - core index']
  #allocation1 [shape = 'u32[72,128]{1,0:T(1,128)}', space=vmem, size = 0x9000, scoped, tag = 'internal scratch']
  %s0 = inlined_call_operand.vmem [shape: f32[32,256], index: 0, kind: input, shape index: {}]
  %s1 = inlined_call_operand.vmem [shape: f32[1,256], index: 1, kind: input, shape index: {}]
  %s2 = inlined_call_operand.hbm [shape: bf16[256,512], index: 2, kind: input, shape index: {}]
  %s3 = inlined_call_operand.hbm [shape: bf16[256,512], index: 3, kind: input, shape index: {}]
  %s4 = inlined_call_operand.vmem [shape: bf16[32,512], index: 4, kind: output, shape index: {}]
  %s5 = sld [smem:[#allocation0]]
  $region34: #{decoder_forward.26} parent=0
    _
  %s7 = ssub.s32 1, %s5
  %s8 = scalar_select 0, %s7, %s5
  $region1: #{decoder_forward.26} parent=0
    #allocation2 [shape = 'u8[262144]{0}', space=vmem, size = 0x40000, scoped, tag = 'input window, operand 2, single buffered']
    #allocation3 [shape = 's32[1]{0}', space=sflag, size = 0x4, scoped, tag = 'scoped memory for decoder_forward.26']
    #allocation4 [shape = 'u8[262144]{0}', space=vmem, size = 0x40000, scoped, tag = 'input window, operand 3, single buffered']
    #allocation5 [shape = 's32[1]{0}', space=sflag, size = 0x4, scoped, tag = 'scoped memory for decoder_forward.26']
    %9 = vsyncpa [#allocation3], 0
    %10 = vsyncpa [#allocation5], 0
    // Predicated region
    $region2: #{decoder_forward.26} parent=1 // pred_check
      _
    $region3: #{decoder_forward.26} parent=1 // pred_check_branch
      %12 = sbr.rel (0) target = $region5
    $region4: #{decoder_forward.26} parent=1 // pred_region
      _
    $region5: #{decoder_forward.26} parent=1 // pred_fallthru
      _
    // Predicated region
    $region6: #{decoder_forward.26} parent=1 // pred_check
      _
    $region7: #{decoder_forward.26} parent=1 // pred_check_branch
      %14 = sbr.rel (0) target = $region9
    $region8: #{decoder_forward.26} parent=1 // pred_region
      _
    $region9: #{decoder_forward.26} parent=1 // pred_fallthru
      _
    // Predicated region
    $region10: #{decoder_forward.26} parent=1 // pred_check
      _
    $region11: #{decoder_forward.26} parent=1 // pred_check_branch
      %16 = sbr.rel (0) target = $region13
    $region12: #{decoder_forward.26} parent=1 // pred_region
      %18 = vsyncadd [#allocation3], 0
      %s19 = sshll.u32 %s2, 4
      %s20 = int_to_ptr.hbm [resolvable:$true] %s19
      %s21 = sshll.u32 [#allocation2], 4
      %s22 = int_to_ptr.vmem [resolvable:$true] %s21
      %27 = dma.hbm_to_vmem [thread:$0]  %s20, 8192, %s22, [#allocation3], 256, 256, 16
    $region13: #{decoder_forward.26} parent=1 // pred_fallthru
      _
    // Predicated region
    $region14: #{decoder_forward.26} parent=1 // pred_check
      _
    $region15: #{decoder_forward.26} parent=1 // pred_check_branch
      %29 = sbr.rel (0) target = $region17
    $region16: #{decoder_forward.26} parent=1 // pred_region
      %31 = vsyncadd [#allocation5], 0
      %s32 = sshll.u32 %s3, 4
      %s33 = int_to_ptr.hbm [resolvable:$true] %s32
      %s34 = sshll.u32 [#allocation4], 4
      %s35 = int_to_ptr.vmem [resolvable:$true] %s34
      %40 = dma.hbm_to_vmem [thread:$0]  %s33, 8192, %s35, [#allocation5], 256, 256, 16
    $region17: #{decoder_forward.26} parent=1 // pred_fallthru
      _
    // Predicated region
    $region18: #{decoder_forward.26} parent=1 // pred_check
      _
    $region19: #{decoder_forward.26} parent=1 // pred_check_branch
      %42 = sbr.rel (0) target = $region21
    $region20: #{decoder_forward.26} parent=1 // pred_region
      %44 = dma.done [#allocation3], 8192
    $region21: #{decoder_forward.26} parent=1 // pred_fallthru
      _
    // Predicated region
    $region22: #{decoder_forward.26} parent=1 // pred_check
      _
    $region23: #{decoder_forward.26} parent=1 // pred_check_branch
      %46 = sbr.rel (0) target = $region25
    $region24: #{decoder_forward.26} parent=1 // pred_region
      %48 = dma.done [#allocation5], 8192
    $region25: #{decoder_forward.26} parent=1 // pred_fallthru
      _
    %v49 = vld [vmem:[%s0] sm:$0xff]
    %v50 = vld [vmem:[%s0 + $0x8] sm:$0xff]
    %v51 = vld [vmem:[%s0 + $0x10] sm:$0xff]
    %v52 = vld [vmem:[%s0 + $0x18] sm:$0xff]
    %v53 = vld [vmem:[%s0 + $0x20] sm:$0xff]
    %v54 = vld [vmem:[%s0 + $0x28] sm:$0xff]
    %v55 = vld [vmem:[%s0 + $0x30] sm:$0xff]
    %v56 = vld [vmem:[%s0 + $0x38] sm:$0xff]
    %v57 = vmul.f32 %v49, %v49
    %v58 = vmul.f32 %v50, %v50
    %v59 = vmul.f32 %v51, %v51
    %v60 = vmul.f32 %v52, %v52
    %v61 = vmul.f32 %v53, %v53
    %v62 = vmul.f32 %v54, %v54
    %v63 = vmul.f32 %v55, %v55
    %v64 = vmul.f32 %v56, %v56
    %v65 = vadd.f32 %v57, %v58
    %66 = vadd.xlane.f32.xlu0 %v65
    %v67 = vpop.xlane.xlu0 %66
    %v68 = vadd.f32 %v59, %v60
    %69 = vadd.xlane.f32.xlu0 %v68
    %v70 = vpop.xlane.xlu0 %69
    %v71 = vadd.f32 %v61, %v62
    %72 = vadd.xlane.f32.xlu0 %v71
    %v73 = vpop.xlane.xlu0 %72
    %v74 = vadd.f32 %v63, %v64
    %75 = vadd.xlane.f32.xlu0 %v74
    %v76 = vpop.xlane.xlu0 %75
    %v77 = vrcp.pop 256.0
    %v78 = vmul.f32 256.0, %v77
    %v79 = vsub.f32 1.0, %v78
    %v80 = vmul.f32 %v77, %v79
    %v81 = vadd.f32 %v77, %v80
    %vm82 = vweird.f32 %v77
    %v83 = vsel %vm82, %v77, %v81
    %v84 = vmul.f32 %v67, %v83
    %v85 = vmul.f32 %v70, %v83
    %v86 = vmul.f32 %v73, %v83
    %v87 = vmul.f32 %v76, %v83
    %v88 = vadd.f32 %v84, 1e-05
    %v89 = vadd.f32 %v85, 1e-05
    %v90 = vadd.f32 %v86, 1e-05
    %v91 = vadd.f32 %v87, 1e-05
    %v92 = vrsqrt.pop %v88
    %v93 = vmul.f32 %v92, %v88
    %v94 = vmul.f32 %v93, %v92
    %v95 = vmul.f32 0.5, %v94
    %v96 = vsub.f32 1.5, %v95
    %v97 = vmul.f32 %v92, %v96
    %vm98 = vweird.f32 %v88
    %vm99 = vweird.f32 %v92
    %vm100 = vmor %vm98, %vm99
    %v101 = vsel %vm100, %v92, %v97
    %v102 = vrsqrt.pop %v89
    %v103 = vmul.f32 %v102, %v89
    %v104 = vmul.f32 %v103, %v102
    %v105 = vmul.f32 0.5, %v104
    %v106 = vsub.f32 1.5, %v105
    %v107 = vmul.f32 %v102, %v106
    %vm108 = vweird.f32 %v89
    %vm109 = vweird.f32 %v102
    %vm110 = vmor %vm108, %vm109
    %v111 = vsel %vm110, %v102, %v107
    %v112 = vrsqrt.pop %v90
    %v113 = vmul.f32 %v112, %v90
    %v114 = vmul.f32 %v113, %v112
    %v115 = vmul.f32 0.5, %v114
    %v116 = vsub.f32 1.5, %v115
    %v117 = vmul.f32 %v112, %v116
    %vm118 = vweird.f32 %v90
    %vm119 = vweird.f32 %v112
    %vm120 = vmor %vm118, %vm119
    %v121 = vsel %vm120, %v112, %v117
    %v122 = vrsqrt.pop %v91
    %v123 = vmul.f32 %v122, %v91
    %v124 = vmul.f32 %v123, %v122
    %v125 = vmul.f32 0.5, %v124
    %v126 = vsub.f32 1.5, %v125
    %v127 = vmul.f32 %v122, %v126
    %vm128 = vweird.f32 %v91
    %vm129 = vweird.f32 %v122
    %vm130 = vmor %vm128, %vm129
    %v131 = vsel %vm130, %v122, %v127
    %v132 = vmul.f32 %v49, %v101
    %v133 = vmul.f32 %v50, %v101
    %v134 = vmul.f32 %v51, %v111
    %v135 = vmul.f32 %v52, %v111
    %v136 = vmul.f32 %v53, %v121
    %v137 = vmul.f32 %v54, %v121
    %v138 = vmul.f32 %v55, %v131
    %v139 = vmul.f32 %v56, %v131
    %v140 = vld [vmem:[%s1] sm:$0x3]
    %v142 = vperm.slane %v140, 0
    %v143 = vperm.slane %v140, 1
    %v146 = vmul.f32 %v132, %v142
    %v147 = vmul.f32 %v133, %v143
    %v148 = vmul.f32 %v134, %v142
    %v149 = vmul.f32 %v135, %v143
    %v150 = vmul.f32 %v136, %v142
    %v151 = vmul.f32 %v137, %v143
    %v152 = vmul.f32 %v138, %v142
    %v153 = vmul.f32 %v139, %v143
    %v154 = vpack.c.bf16 %v148, %v146
    %v155 = vpack.c.bf16 %v149, %v147
    %v156 = vpack.c.bf16 %v152, %v150
    %v157 = vpack.c.bf16 %v153, %v151
    %v158 = vld [vmem:[#allocation2] sm:$0xff]
    %v159 = vld [vmem:[#allocation2 + $0x8] sm:$0xff]
    %v160 = vld [vmem:[#allocation2 + $0x10] sm:$0xff]
    %v161 = vld [vmem:[#allocation2 + $0x18] sm:$0xff]
    %v162 = vld [vmem:[#allocation2 + $0x20] sm:$0xff]
    %v163 = vld [vmem:[#allocation2 + $0x28] sm:$0xff]
    %v164 = vld [vmem:[#allocation2 + $0x30] sm:$0xff]
    %v165 = vld [vmem:[#allocation2 + $0x38] sm:$0xff]
    %v166 = vld [vmem:[#allocation2 + $0x40] sm:$0xff]
    %v167 = vld [vmem:[#allocation2 + $0x48] sm:$0xff]
    %v168 = vld [vmem:[#allocation2 + $0x50] sm:$0xff]
    %v169 = vld [vmem:[#allocation2 + $0x58] sm:$0xff]
    %v170 = vld [vmem:[#allocation2 + $0x60] sm:$0xff]
    %v171 = vld [vmem:[#allocation2 + $0x68] sm:$0xff]
    %v172 = vld [vmem:[#allocation2 + $0x70] sm:$0xff]
    %v173 = vld [vmem:[#allocation2 + $0x78] sm:$0xff]
    %v174 = vld [vmem:[#allocation2 + $0x80] sm:$0xff]
    %v175 = vld [vmem:[#allocation2 + $0x88] sm:$0xff]
    %v176 = vld [vmem:[#allocation2 + $0x90] sm:$0xff]
    %v177 = vld [vmem:[#allocation2 + $0x98] sm:$0xff]
    %v178 = vld [vmem:[#allocation2 + $0xa0] sm:$0xff]
    %v179 = vld [vmem:[#allocation2 + $0xa8] sm:$0xff]
    %v180 = vld [vmem:[#allocation2 + $0xb0] sm:$0xff]
    %v181 = vld [vmem:[#allocation2 + $0xb8] sm:$0xff]
    %v182 = vld [vmem:[#allocation2 + $0xc0] sm:$0xff]
    %v183 = vld [vmem:[#allocation2 + $0xc8] sm:$0xff]
    %v184 = vld [vmem:[#allocation2 + $0xd0] sm:$0xff]
    %v185 = vld [vmem:[#allocation2 + $0xd8] sm:$0xff]
    %v186 = vld [vmem:[#allocation2 + $0xe0] sm:$0xff]
    %v187 = vld [vmem:[#allocation2 + $0xe8] sm:$0xff]
    %v188 = vld [vmem:[#allocation2 + $0xf0] sm:$0xff]
    %v189 = vld [vmem:[#allocation2 + $0xf8] sm:$0xff]
    %v190 = vld [vmem:[#allocation2 + $0x100] sm:$0xff]
    %v191 = vld [vmem:[#allocation2 + $0x108] sm:$0xff]
    %v192 = vld [vmem:[#allocation2 + $0x110] sm:$0xff]
    %v193 = vld [vmem:[#allocation2 + $0x118] sm:$0xff]
    %v194 = vld [vmem:[#allocation2 + $0x120] sm:$0xff]
    %v195 = vld [vmem:[#allocation2 + $0x128] sm:$0xff]
    %v196 = vld [vmem:[#allocation2 + $0x130] sm:$0xff]
    %v197 = vld [vmem:[#allocation2 + $0x138] sm:$0xff]
    %v198 = vld [vmem:[#allocation2 + $0x140] sm:$0xff]
    %v199 = vld [vmem:[#allocation2 + $0x148] sm:$0xff]
    %v200 = vld [vmem:[#allocation2 + $0x150] sm:$0xff]
    %v201 = vld [vmem:[#allocation2 + $0x158] sm:$0xff]
    %v202 = vld [vmem:[#allocation2 + $0x160] sm:$0xff]
    %v203 = vld [vmem:[#allocation2 + $0x168] sm:$0xff]
    %v204 = vld [vmem:[#allocation2 + $0x170] sm:$0xff]
    %v205 = vld [vmem:[#allocation2 + $0x178] sm:$0xff]
    %v206 = vld [vmem:[#allocation2 + $0x180] sm:$0xff]
    %v207 = vld [vmem:[#allocation2 + $0x188] sm:$0xff]
    %v208 = vld [vmem:[#allocation2 + $0x190] sm:$0xff]
    %v209 = vld [vmem:[#allocation2 + $0x198] sm:$0xff]
    %v210 = vld [vmem:[#allocation2 + $0x1a0] sm:$0xff]
    %v211 = vld [vmem:[#allocation2 + $0x1a8] sm:$0xff]
    %v212 = vld [vmem:[#allocation2 + $0x1b0] sm:$0xff]
    %v213 = vld [vmem:[#allocation2 + $0x1b8] sm:$0xff]
    %v214 = vld [vmem:[#allocation2 + $0x1c0] sm:$0xff]
    %v215 = vld [vmem:[#allocation2 + $0x1c8] sm:$0xff]
    %v216 = vld [vmem:[#allocation2 + $0x1d0] sm:$0xff]
    %v217 = vld [vmem:[#allocation2 + $0x1d8] sm:$0xff]
    %v218 = vld [vmem:[#allocation2 + $0x1e0] sm:$0xff]
    %v219 = vld [vmem:[#allocation2 + $0x1e8] sm:$0xff]
    %v220 = vld [vmem:[#allocation2 + $0x1f0] sm:$0xff]
    %v221 = vld [vmem:[#allocation2 + $0x1f8] sm:$0xff]
    %v286 = vunpack.c.l.b16 %v158
    %v287 = vunpack.c.h.b16 %v158
    %v288 = vunpack.c.l.b16 %v159
    %v289 = vunpack.c.h.b16 %v159
    %v290 = vunpack.c.l.b16 %v160
    %v291 = vunpack.c.h.b16 %v160
    %v292 = vunpack.c.l.b16 %v161
    %v293 = vunpack.c.h.b16 %v161
    %v294 = vunpack.c.l.b16 %v162
    %v295 = vunpack.c.h.b16 %v162
    %v296 = vunpack.c.l.b16 %v163
    %v297 = vunpack.c.h.b16 %v163
    %v298 = vunpack.c.l.b16 %v164
    %v299 = vunpack.c.h.b16 %v164
    %v300 = vunpack.c.l.b16 %v165
    %v301 = vunpack.c.h.b16 %v165
    %v302 = vunpack.c.l.b16 %v166
    %v303 = vunpack.c.h.b16 %v166
    %v304 = vunpack.c.l.b16 %v167
    %v305 = vunpack.c.h.b16 %v167
    %v306 = vunpack.c.l.b16 %v168
    %v307 = vunpack.c.h.b16 %v168
    %v308 = vunpack.c.l.b16 %v169
    %v309 = vunpack.c.h.b16 %v169
    %v310 = vunpack.c.l.b16 %v170
    %v311 = vunpack.c.h.b16 %v170
    %v312 = vunpack.c.l.b16 %v171
    %v313 = vunpack.c.h.b16 %v171
    %v314 = vunpack.c.l.b16 %v172
    %v315 = vunpack.c.h.b16 %v172
    %v316 = vunpack.c.l.b16 %v173
    %v317 = vunpack.c.h.b16 %v173
    %v318 = vunpack.c.l.b16 %v174
    %v319 = vunpack.c.h.b16 %v174
    %v320 = vunpack.c.l.b16 %v175
    %v321 = vunpack.c.h.b16 %v175
    %v322 = vunpack.c.l.b16 %v176
    %v323 = vunpack.c.h.b16 %v176
    %v324 = vunpack.c.l.b16 %v177
    %v325 = vunpack.c.h.b16 %v177
    %v326 = vunpack.c.l.b16 %v178
    %v327 = vunpack.c.h.b16 %v178
    %v328 = vunpack.c.l.b16 %v179
    %v329 = vunpack.c.h.b16 %v179
    %v330 = vunpack.c.l.b16 %v180
    %v331 = vunpack.c.h.b16 %v180
    %v332 = vunpack.c.l.b16 %v181
    %v333 = vunpack.c.h.b16 %v181
    %v334 = vunpack.c.l.b16 %v182
    %v335 = vunpack.c.h.b16 %v182
    %v336 = vunpack.c.l.b16 %v183
    %v337 = vunpack.c.h.b16 %v183
    %v338 = vunpack.c.l.b16 %v184
    %v339 = vunpack.c.h.b16 %v184
    %v340 = vunpack.c.l.b16 %v185
    %v341 = vunpack.c.h.b16 %v185
    %v342 = vunpack.c.l.b16 %v186
    %v343 = vunpack.c.h.b16 %v186
    %v344 = vunpack.c.l.b16 %v187
    %v345 = vunpack.c.h.b16 %v187
    %v346 = vunpack.c.l.b16 %v188
    %v347 = vunpack.c.h.b16 %v188
    %v348 = vunpack.c.l.b16 %v189
    %v349 = vunpack.c.h.b16 %v189
    %v350 = vunpack.c.l.b16 %v190
    %v351 = vunpack.c.h.b16 %v190
    %v352 = vunpack.c.l.b16 %v191
    %v353 = vunpack.c.h.b16 %v191
    %v354 = vunpack.c.l.b16 %v192
    %v355 = vunpack.c.h.b16 %v192
    %v356 = vunpack.c.l.b16 %v193
    %v357 = vunpack.c.h.b16 %v193
    %v358 = vunpack.c.l.b16 %v194
    %v359 = vunpack.c.h.b16 %v194
    %v360 = vunpack.c.l.b16 %v195
    %v361 = vunpack.c.h.b16 %v195
    %v362 = vunpack.c.l.b16 %v196
    %v363 = vunpack.c.h.b16 %v196
    %v364 = vunpack.c.l.b16 %v197
    %v365 = vunpack.c.h.b16 %v197
    %v366 = vunpack.c.l.b16 %v198
    %v367 = vunpack.c.h.b16 %v198
    %v368 = vunpack.c.l.b16 %v199
    %v369 = vunpack.c.h.b16 %v199
    %v370 = vunpack.c.l.b16 %v200
    %v371 = vunpack.c.h.b16 %v200
    %v372 = vunpack.c.l.b16 %v201
    %v373 = vunpack.c.h.b16 %v201
    %v374 = vunpack.c.l.b16 %v202
    %v375 = vunpack.c.h.b16 %v202
    %v376 = vunpack.c.l.b16 %v203
    %v377 = vunpack.c.h.b16 %v203
    %v378 = vunpack.c.l.b16 %v204
    %v379 = vunpack.c.h.b16 %v204
    %v380 = vunpack.c.l.b16 %v205
    %v381 = vunpack.c.h.b16 %v205
    %v382 = vunpack.c.l.b16 %v206
    %v383 = vunpack.c.h.b16 %v206
    %v384 = vunpack.c.l.b16 %v207
    %v385 = vunpack.c.h.b16 %v207
    %v386 = vunpack.c.l.b16 %v208
    %v387 = vunpack.c.h.b16 %v208
    %v388 = vunpack.c.l.b16 %v209
    %v389 = vunpack.c.h.b16 %v209
    %v390 = vunpack.c.l.b16 %v210
    %v391 = vunpack.c.h.b16 %v210
    %v392 = vunpack.c.l.b16 %v211
    %v393 = vunpack.c.h.b16 %v211
    %v394 = vunpack.c.l.b16 %v212
    %v395 = vunpack.c.h.b16 %v212
    %v396 = vunpack.c.l.b16 %v213
    %v397 = vunpack.c.h.b16 %v213
    %v398 = vunpack.c.l.b16 %v214
    %v399 = vunpack.c.h.b16 %v214
    %v400 = vunpack.c.l.b16 %v215
    %v401 = vunpack.c.h.b16 %v215
    %v402 = vunpack.c.l.b16 %v216
    %v403 = vunpack.c.h.b16 %v216
    %v404 = vunpack.c.l.b16 %v217
    %v405 = vunpack.c.h.b16 %v217
    %v406 = vunpack.c.l.b16 %v218
    %v407 = vunpack.c.h.b16 %v218
    %v408 = vunpack.c.l.b16 %v219
    %v409 = vunpack.c.h.b16 %v219
    %v410 = vunpack.c.l.b16 %v220
    %v411 = vunpack.c.h.b16 %v220
    %v412 = vunpack.c.l.b16 %v221
    %v413 = vunpack.c.h.b16 %v221
    %v414 = vpack.c.b16 %v290, %v286
    %v415 = vpack.c.b16 %v291, %v287
    %v416 = vpack.c.b16 %v292, %v288
    %v417 = vpack.c.b16 %v293, %v289
    %v418 = vpack.c.b16 %v298, %v294
    %v419 = vpack.c.b16 %v299, %v295
    %v420 = vpack.c.b16 %v300, %v296
    %v421 = vpack.c.b16 %v301, %v297
    %v422 = vpack.c.b16 %v306, %v302
    %v423 = vpack.c.b16 %v307, %v303
    %v424 = vpack.c.b16 %v308, %v304
    %v425 = vpack.c.b16 %v309, %v305
    %v426 = vpack.c.b16 %v314, %v310
    %v427 = vpack.c.b16 %v315, %v311
    %v428 = vpack.c.b16 %v316, %v312
    %v429 = vpack.c.b16 %v317, %v313
    %v430 = vpack.c.b16 %v322, %v318
    %v431 = vpack.c.b16 %v323, %v319
    %v432 = vpack.c.b16 %v324, %v320
    %v433 = vpack.c.b16 %v325, %v321
    %v434 = vpack.c.b16 %v330, %v326
    %v435 = vpack.c.b16 %v331, %v327
    %v436 = vpack.c.b16 %v332, %v328
    %v437 = vpack.c.b16 %v333, %v329
    %v438 = vpack.c.b16 %v338, %v334
    %v439 = vpack.c.b16 %v339, %v335
    %v440 = vpack.c.b16 %v340, %v336
    %v441 = vpack.c.b16 %v341, %v337
    %v442 = vpack.c.b16 %v346, %v342
    %v443 = vpack.c.b16 %v347, %v343
    %v444 = vpack.c.b16 %v348, %v344
    %v445 = vpack.c.b16 %v349, %v345
    %v446 = vpack.c.b16 %v354, %v350
    %v447 = vpack.c.b16 %v355, %v351
    %v448 = vpack.c.b16 %v356, %v352
    %v449 = vpack.c.b16 %v357, %v353
    %v450 = vpack.c.b16 %v362, %v358
    %v451 = vpack.c.b16 %v363, %v359
    %v452 = vpack.c.b16 %v364, %v360
    %v453 = vpack.c.b16 %v365, %v361
    %v454 = vpack.c.b16 %v370, %v366
    %v455 = vpack.c.b16 %v371, %v367
    %v456 = vpack.c.b16 %v372, %v368
    %v457 = vpack.c.b16 %v373, %v369
    %v458 = vpack.c.b16 %v378, %v374
    %v459 = vpack.c.b16 %v379, %v375
    %v460 = vpack.c.b16 %v380, %v376
    %v461 = vpack.c.b16 %v381, %v377
    %v462 = vpack.c.b16 %v386, %v382
    %v463 = vpack.c.b16 %v387, %v383
    %v464 = vpack.c.b16 %v388, %v384
    %v465 = vpack.c.b16 %v389, %v385
    %v466 = vpack.c.b16 %v394, %v390
    %v467 = vpack.c.b16 %v395, %v391
    %v468 = vpack.c.b16 %v396, %v392
    %v469 = vpack.c.b16 %v397, %v393
    %v470 = vpack.c.b16 %v402, %v398
    %v471 = vpack.c.b16 %v403, %v399
    %v472 = vpack.c.b16 %v404, %v400
    %v473 = vpack.c.b16 %v405, %v401
    %v474 = vpack.c.b16 %v410, %v406
    %v475 = vpack.c.b16 %v411, %v407
    %v476 = vpack.c.b16 %v412, %v408
    %v477 = vpack.c.b16 %v413, %v409
    %542 = vmatpush.bf16.msra.mxu0 %v442
    %543 = vmatpush.bf16.msra.mxu0 %v438
    %544 = vmatpush.bf16.msra.mxu0 %v434
    %545 = vmatpush.bf16.msra.mxu0 %v430
    %546 = vmatpush.bf16.msra.mxu0 %v426
    %547 = vmatpush.bf16.msra.mxu0 %v422
    %548 = vmatpush.bf16.msra.mxu0 %v418
    %549 = vmatpush.bf16.msra.mxu0 %v414
    %550 = vmatmul.bf16.gmra.mxu0 %v154
    %v551 = vpop.f32.mrf.mxu0
    %v552 = vadd.f32 0.0, %v551
    %v553 = vpop.f32.mrf.mxu0
    %v554 = vadd.f32 0.0, %v553
    %555 = vmatmul.bf16.gmra.mxu0 %v156
    %v556 = vpop.f32.mrf.mxu0
    %v557 = vadd.f32 0.0, %v556
    %v558 = vpop.f32.mrf.mxu0
    %v559 = vadd.f32 0.0, %v558
    %560 = vdwg.mxu0
    %561 = vmatpush.bf16.msra.mxu0 %v474
    %562 = vmatpush.bf16.msra.mxu0 %v470
    %563 = vmatpush.bf16.msra.mxu0 %v466
    %564 = vmatpush.bf16.msra.mxu0 %v462
    %565 = vmatpush.bf16.msra.mxu0 %v458
    %566 = vmatpush.bf16.msra.mxu0 %v454
    %567 = vmatpush.bf16.msra.mxu0 %v450
    %568 = vmatpush.bf16.msra.mxu0 %v446
    %569 = vmatmul.bf16.gmra.mxu0 %v155
    %v570 = vpop.f32.mrf.mxu0
    %v571 = vadd.f32 %v552, %v570
    %v572 = vpop.f32.mrf.mxu0
    %v573 = vadd.f32 %v554, %v572
    %574 = vmatmul.bf16.gmra.mxu0 %v157
    %v575 = vpop.f32.mrf.mxu0
    %v576 = vadd.f32 %v557, %v575
    %v577 = vpop.f32.mrf.mxu0
    %v578 = vadd.f32 %v559, %v577
    %579 = vdwg.mxu0
    %580 = vmatpush.bf16.msra.mxu0 %v443
    %581 = vmatpush.bf16.msra.mxu0 %v439
    %582 = vmatpush.bf16.msra.mxu0 %v435
    %583 = vmatpush.bf16.msra.mxu0 %v431
    %584 = vmatpush.bf16.msra.mxu0 %v427
    %585 = vmatpush.bf16.msra.mxu0 %v423
    %586 = vmatpush.bf16.msra.mxu0 %v419
    %587 = vmatpush.bf16.msra.mxu0 %v415
    %588 = vmatmul.bf16.gmra.mxu0 %v154
    %v589 = vpop.f32.mrf.mxu0
    %v590 = vadd.f32 0.0, %v589
    %v591 = vpop.f32.mrf.mxu0
    %v592 = vadd.f32 0.0, %v591
    %593 = vmatmul.bf16.gmra.mxu0 %v156
    %v594 = vpop.f32.mrf.mxu0
    %v595 = vadd.f32 0.0, %v594
    %v596 = vpop.f32.mrf.mxu0
    %v597 = vadd.f32 0.0, %v596
    %598 = vdwg.mxu0
    %599 = vmatpush.bf16.msra.mxu0 %v475
    %600 = vmatpush.bf16.msra.mxu0 %v471
    %601 = vmatpush.bf16.msra.mxu0 %v467
    %602 = vmatpush.bf16.msra.mxu0 %v463
    %603 = vmatpush.bf16.msra.mxu0 %v459
    %604 = vmatpush.bf16.msra.mxu0 %v455
    %605 = vmatpush.bf16.msra.mxu0 %v451
    %606 = vmatpush.bf16.msra.mxu0 %v447
    %607 = vmatmul.bf16.gmra.mxu0 %v155
    %v608 = vpop.f32.mrf.mxu0
    %v609 = vadd.f32 %v590, %v608
    %v610 = vpop.f32.mrf.mxu0
    %v611 = vadd.f32 %v592, %v610
    %612 = vmatmul.bf16.gmra.mxu0 %v157
    %v613 = vpop.f32.mrf.mxu0
    %v614 = vadd.f32 %v595, %v613
    %v615 = vpop.f32.mrf.mxu0
    %v616 = vadd.f32 %v597, %v615
    %617 = vdwg.mxu0
    %618 = vmatpush.bf16.msra.mxu0 %v444
    %619 = vmatpush.bf16.msra.mxu0 %v440
    %620 = vmatpush.bf16.msra.mxu0 %v436
    %621 = vmatpush.bf16.msra.mxu0 %v432
    %622 = vmatpush.bf16.msra.mxu0 %v428
    %623 = vmatpush.bf16.msra.mxu0 %v424
    %624 = vmatpush.bf16.msra.mxu0 %v420
    %625 = vmatpush.bf16.msra.mxu0 %v416
    %626 = vmatmul.bf16.gmra.mxu0 %v154
    %v627 = vpop.f32.mrf.mxu0
    %v628 = vadd.f32 0.0, %v627
    %v629 = vpop.f32.mrf.mxu0
    %v630 = vadd.f32 0.0, %v629
    %631 = vmatmul.bf16.gmra.mxu0 %v156
    %v632 = vpop.f32.mrf.mxu0
    %v633 = vadd.f32 0.0, %v632
    %v634 = vpop.f32.mrf.mxu0
    %v635 = vadd.f32 0.0, %v634
    %636 = vdwg.mxu0
    %637 = vmatpush.bf16.msra.mxu0 %v476
    %638 = vmatpush.bf16.msra.mxu0 %v472
    %639 = vmatpush.bf16.msra.mxu0 %v468
    %640 = vmatpush.bf16.msra.mxu0 %v464
    %641 = vmatpush.bf16.msra.mxu0 %v460
    %642 = vmatpush.bf16.msra.mxu0 %v456
    %643 = vmatpush.bf16.msra.mxu0 %v452
    %644 = vmatpush.bf16.msra.mxu0 %v448
    %645 = vmatmul.bf16.gmra.mxu0 %v155
    %v646 = vpop.f32.mrf.mxu0
    %v647 = vadd.f32 %v628, %v646
    %v648 = vpop.f32.mrf.mxu0
    %v649 = vadd.f32 %v630, %v648
    %650 = vmatmul.bf16.gmra.mxu0 %v157
    %v651 = vpop.f32.mrf.mxu0
    %v652 = vadd.f32 %v633, %v651
    %v653 = vpop.f32.mrf.mxu0
    %v654 = vadd.f32 %v635, %v653
    %655 = vdwg.mxu0
    %656 = vmatpush.bf16.msra.mxu0 %v445
    %657 = vmatpush.bf16.msra.mxu0 %v441
    %658 = vmatpush.bf16.msra.mxu0 %v437
    %659 = vmatpush.bf16.msra.mxu0 %v433
    %660 = vmatpush.bf16.msra.mxu0 %v429
    %661 = vmatpush.bf16.msra.mxu0 %v425
    %662 = vmatpush.bf16.msra.mxu0 %v421
    %663 = vmatpush.bf16.msra.mxu0 %v417
    %664 = vmatmul.bf16.gmra.mxu0 %v154
    %v665 = vpop.f32.mrf.mxu0
    %v666 = vadd.f32 0.0, %v665
    %v667 = vpop.f32.mrf.mxu0
    %v668 = vadd.f32 0.0, %v667
    %669 = vmatmul.bf16.gmra.mxu0 %v156
    %v670 = vpop.f32.mrf.mxu0
    %v671 = vadd.f32 0.0, %v670
    %v672 = vpop.f32.mrf.mxu0
    %v673 = vadd.f32 0.0, %v672
    %674 = vdwg.mxu0
    %675 = vmatpush.bf16.msra.mxu0 %v477
    %676 = vmatpush.bf16.msra.mxu0 %v473
    %677 = vmatpush.bf16.msra.mxu0 %v469
    %678 = vmatpush.bf16.msra.mxu0 %v465
    %679 = vmatpush.bf16.msra.mxu0 %v461
    %680 = vmatpush.bf16.msra.mxu0 %v457
    %681 = vmatpush.bf16.msra.mxu0 %v453
    %682 = vmatpush.bf16.msra.mxu0 %v449
    %683 = vmatmul.bf16.gmra.mxu0 %v155
    %v684 = vpop.f32.mrf.mxu0
    %v685 = vadd.f32 %v666, %v684
    %v686 = vpop.f32.mrf.mxu0
    %v687 = vadd.f32 %v668, %v686
    %688 = vmatmul.bf16.gmra.mxu0 %v157
    %v689 = vpop.f32.mrf.mxu0
    %v690 = vadd.f32 %v671, %v689
    %v691 = vpop.f32.mrf.mxu0
    %v692 = vadd.f32 %v673, %v691
    %693 = vdwg.mxu0
    %v694 = vld [vmem:[#allocation4] sm:$0xff]
    %v695 = vld [vmem:[#allocation4 + $0x8] sm:$0xff]
    %v696 = vld [vmem:[#allocation4 + $0x10] sm:$0xff]
    %v697 = vld [vmem:[#allocation4 + $0x18] sm:$0xff]
    %v698 = vld [vmem:[#allocation4 + $0x20] sm:$0xff]
    %v699 = vld [vmem:[#allocation4 + $0x28] sm:$0xff]
    %v700 = vld [vmem:[#allocation4 + $0x30] sm:$0xff]
    %v701 = vld [vmem:[#allocation4 + $0x38] sm:$0xff]
    %v702 = vld [vmem:[#allocation4 + $0x40] sm:$0xff]
    %v703 = vld [vmem:[#allocation4 + $0x48] sm:$0xff]
    %v704 = vld [vmem:[#allocation4 + $0x50] sm:$0xff]
    %v705 = vld [vmem:[#allocation4 + $0x58] sm:$0xff]
    %v706 = vld [vmem:[#allocation4 + $0x60] sm:$0xff]
    %v707 = vld [vmem:[#allocation4 + $0x68] sm:$0xff]
    %v708 = vld [vmem:[#allocation4 + $0x70] sm:$0xff]
    %v709 = vld [vmem:[#allocation4 + $0x78] sm:$0xff]
    %v710 = vld [vmem:[#allocation4 + $0x80] sm:$0xff]
    %v711 = vld [vmem:[#allocation4 + $0x88] sm:$0xff]
    %v712 = vld [vmem:[#allocation4 + $0x90] sm:$0xff]
    %v713 = vld [vmem:[#allocation4 + $0x98] sm:$0xff]
    %v714 = vld [vmem:[#allocation4 + $0xa0] sm:$0xff]
    %v715 = vld [vmem:[#allocation4 + $0xa8] sm:$0xff]
    %v716 = vld [vmem:[#allocation4 + $0xb0] sm:$0xff]
    %v717 = vld [vmem:[#allocation4 + $0xb8] sm:$0xff]
    %v718 = vld [vmem:[#allocation4 + $0xc0] sm:$0xff]
    %v719 = vld [vmem:[#allocation4 + $0xc8] sm:$0xff]
    %v720 = vld [vmem:[#allocation4 + $0xd0] sm:$0xff]
    %v721 = vld [vmem:[#allocation4 + $0xd8] sm:$0xff]
    %v722 = vld [vmem:[#allocation4 + $0xe0] sm:$0xff]
    %v723 = vld [vmem:[#allocation4 + $0xe8] sm:$0xff]
    %v724 = vld [vmem:[#allocation4 + $0xf0] sm:$0xff]
    %v725 = vld [vmem:[#allocation4 + $0xf8] sm:$0xff]
    %v726 = vld [vmem:[#allocation4 + $0x100] sm:$0xff]
    %v727 = vld [vmem:[#allocation4 + $0x108] sm:$0xff]
    %v728 = vld [vmem:[#allocation4 + $0x110] sm:$0xff]
    %v729 = vld [vmem:[#allocation4 + $0x118] sm:$0xff]
    %v730 = vld [vmem:[#allocation4 + $0x120] sm:$0xff]
    %v731 = vld [vmem:[#allocation4 + $0x128] sm:$0xff]
    %v732 = vld [vmem:[#allocation4 + $0x130] sm:$0xff]
    %v733 = vld [vmem:[#allocation4 + $0x138] sm:$0xff]
    %v734 = vld [vmem:[#allocation4 + $0x140] sm:$0xff]
    %v735 = vld [vmem:[#allocation4 + $0x148] sm:$0xff]
    %v736 = vld [vmem:[#allocation4 + $0x150] sm:$0xff]
    %v737 = vld [vmem:[#allocation4 + $0x158] sm:$0xff]
    %v738 = vld [vmem:[#allocation4 + $0x160] sm:$0xff]
    %v739 = vld [vmem:[#allocation4 + $0x168] sm:$0xff]
    %v740 = vld [vmem:[#allocation4 + $0x170] sm:$0xff]
    %v741 = vld [vmem:[#allocation4 + $0x178] sm:$0xff]
    %v742 = vld [vmem:[#allocation4 + $0x180] sm:$0xff]
    %v743 = vld [vmem:[#allocation4 + $0x188] sm:$0xff]
    %v744 = vld [vmem:[#allocation4 + $0x190] sm:$0xff]
    %v745 = vld [vmem:[#allocation4 + $0x198] sm:$0xff]
    %v746 = vld [vmem:[#allocation4 + $0x1a0] sm:$0xff]
    %v747 = vld [vmem:[#allocation4 + $0x1a8] sm:$0xff]
    %v748 = vld [vmem:[#allocation4 + $0x1b0] sm:$0xff]
    %v749 = vld [vmem:[#allocation4 + $0x1b8] sm:$0xff]
    %v750 = vld [vmem:[#allocation4 + $0x1c0] sm:$0xff]
    %v751 = vld [vmem:[#allocation4 + $0x1c8] sm:$0xff]
    %v752 = vld [vmem:[#allocation4 + $0x1d0] sm:$0xff]
    %v753 = vld [vmem:[#allocation4 + $0x1d8] sm:$0xff]
    %v754 = vld [vmem:[#allocation4 + $0x1e0] sm:$0xff]
    %v755 = vld [vmem:[#allocation4 + $0x1e8] sm:$0xff]
    %v756 = vld [vmem:[#allocation4 + $0x1f0] sm:$0xff]
    %v757 = vld [vmem:[#allocation4 + $0x1f8] sm:$0xff]
    %v822 = vunpack.c.l.b16 %v694
    %v823 = vunpack.c.h.b16 %v694
    %v824 = vunpack.c.l.b16 %v695
    %v825 = vunpack.c.h.b16 %v695
    %v826 = vunpack.c.l.b16 %v696
    %v827 = vunpack.c.h.b16 %v696
    %v828 = vunpack.c.l.b16 %v697
    %v829 = vunpack.c.h.b16 %v697
    %v830 = vunpack.c.l.b16 %v698
    %v831 = vunpack.c.h.b16 %v698
    %v832 = vunpack.c.l.b16 %v699
    %v833 = vunpack.c.h.b16 %v699
    %v834 = vunpack.c.l.b16 %v700
    %v835 = vunpack.c.h.b16 %v700
    %v836 = vunpack.c.l.b16 %v701
    %v837 = vunpack.c.h.b16 %v701
    %v838 = vunpack.c.l.b16 %v702
    %v839 = vunpack.c.h.b16 %v702
    %v840 = vunpack.c.l.b16 %v703
    %v841 = vunpack.c.h.b16 %v703
    %v842 = vunpack.c.l.b16 %v704
    %v843 = vunpack.c.h.b16 %v704
    %v844 = vunpack.c.l.b16 %v705
    %v845 = vunpack.c.h.b16 %v705
    %v846 = vunpack.c.l.b16 %v706
    %v847 = vunpack.c.h.b16 %v706
    %v848 = vunpack.c.l.b16 %v707
    %v849 = vunpack.c.h.b16 %v707
    %v850 = vunpack.c.l.b16 %v708
    %v851 = vunpack.c.h.b16 %v708
    %v852 = vunpack.c.l.b16 %v709
    %v853 = vunpack.c.h.b16 %v709
    %v854 = vunpack.c.l.b16 %v710
    %v855 = vunpack.c.h.b16 %v710
    %v856 = vunpack.c.l.b16 %v711
    %v857 = vunpack.c.h.b16 %v711
    %v858 = vunpack.c.l.b16 %v712
    %v859 = vunpack.c.h.b16 %v712
    %v860 = vunpack.c.l.b16 %v713
    %v861 = vunpack.c.h.b16 %v713
    %v862 = vunpack.c.l.b16 %v714
    %v863 = vunpack.c.h.b16 %v714
    %v864 = vunpack.c.l.b16 %v715
    %v865 = vunpack.c.h.b16 %v715
    %v866 = vunpack.c.l.b16 %v716
    %v867 = vunpack.c.h.b16 %v716
    %v868 = vunpack.c.l.b16 %v717
    %v869 = vunpack.c.h.b16 %v717
    %v870 = vunpack.c.l.b16 %v718
    %v871 = vunpack.c.h.b16 %v718
    %v872 = vunpack.c.l.b16 %v719
    %v873 = vunpack.c.h.b16 %v719
    %v874 = vunpack.c.l.b16 %v720
    %v875 = vunpack.c.h.b16 %v720
    %v876 = vunpack.c.l.b16 %v721
    %v877 = vunpack.c.h.b16 %v721
    %v878 = vunpack.c.l.b16 %v722
    %v879 = vunpack.c.h.b16 %v722
    %v880 = vunpack.c.l.b16 %v723
    %v881 = vunpack.c.h.b16 %v723
    %v882 = vunpack.c.l.b16 %v724
    %v883 = vunpack.c.h.b16 %v724
    %v884 = vunpack.c.l.b16 %v725
    %v885 = vunpack.c.h.b16 %v725
    %v886 = vunpack.c.l.b16 %v726
    %v887 = vunpack.c.h.b16 %v726
    %v888 = vunpack.c.l.b16 %v727
    %v889 = vunpack.c.h.b16 %v727
    %v890 = vunpack.c.l.b16 %v728
    %v891 = vunpack.c.h.b16 %v728
    %v892 = vunpack.c.l.b16 %v729
    %v893 = vunpack.c.h.b16 %v729
    %v894 = vunpack.c.l.b16 %v730
    %v895 = vunpack.c.h.b16 %v730
    %v896 = vunpack.c.l.b16 %v731
    %v897 = vunpack.c.h.b16 %v731
    %v898 = vunpack.c.l.b16 %v732
    %v899 = vunpack.c.h.b16 %v732
    %v900 = vunpack.c.l.b16 %v733
    %v901 = vunpack.c.h.b16 %v733
    %v902 = vunpack.c.l.b16 %v734
    %v903 = vunpack.c.h.b16 %v734
    %v904 = vunpack.c.l.b16 %v735
    %v905 = vunpack.c.h.b16 %v735
    %v906 = vunpack.c.l.b16 %v736
    %v907 = vunpack.c.h.b16 %v736
    %v908 = vunpack.c.l.b16 %v737
    %v909 = vunpack.c.h.b16 %v737
    %v910 = vunpack.c.l.b16 %v738
    %v911 = vunpack.c.h.b16 %v738
    %v912 = vunpack.c.l.b16 %v739
    %v913 = vunpack.c.h.b16 %v739
    %v914 = vunpack.c.l.b16 %v740
    %v915 = vunpack.c.h.b16 %v740
    %v916 = vunpack.c.l.b16 %v741
    %v917 = vunpack.c.h.b16 %v741
    %v918 = vunpack.c.l.b16 %v742
    %v919 = vunpack.c.h.b16 %v742
    %v920 = vunpack.c.l.b16 %v743
    %v921 = vunpack.c.h.b16 %v743
    %v922 = vunpack.c.l.b16 %v744
    %v923 = vunpack.c.h.b16 %v744
    %v924 = vunpack.c.l.b16 %v745
    %v925 = vunpack.c.h.b16 %v745
    %v926 = vunpack.c.l.b16 %v746
    %v927 = vunpack.c.h.b16 %v746
    %v928 = vunpack.c.l.b16 %v747
    %v929 = vunpack.c.h.b16 %v747
    %v930 = vunpack.c.l.b16 %v748
    %v931 = vunpack.c.h.b16 %v748
    %v932 = vunpack.c.l.b16 %v749
    %v933 = vunpack.c.h.b16 %v749
    %v934 = vunpack.c.l.b16 %v750
    %v935 = vunpack.c.h.b16 %v750
    %v936 = vunpack.c.l.b16 %v751
    %v937 = vunpack.c.h.b16 %v751
    %v938 = vunpack.c.l.b16 %v752
    %v939 = vunpack.c.h.b16 %v752
    %v940 = vunpack.c.l.b16 %v753
    %v941 = vunpack.c.h.b16 %v753
    %v942 = vunpack.c.l.b16 %v754
    %v943 = vunpack.c.h.b16 %v754
    %v944 = vunpack.c.l.b16 %v755
    %v945 = vunpack.c.h.b16 %v755
    %v946 = vunpack.c.l.b16 %v756
    %v947 = vunpack.c.h.b16 %v756
    %v948 = vunpack.c.l.b16 %v757
    %v949 = vunpack.c.h.b16 %v757
    %v950 = vpack.c.b16 %v826, %v822
    %v951 = vpack.c.b16 %v827, %v823
    %v952 = vpack.c.b16 %v828, %v824
    %v953 = vpack.c.b16 %v829, %v825
    %v954 = vpack.c.b16 %v834, %v830
    %v955 = vpack.c.b16 %v835, %v831
    %v956 = vpack.c.b16 %v836, %v832
    %v957 = vpack.c.b16 %v837, %v833
    %v958 = vpack.c.b16 %v842, %v838
    %v959 = vpack.c.b16 %v843, %v839
    %v960 = vpack.c.b16 %v844, %v840
    %v961 = vpack.c.b16 %v845, %v841
    %v962 = vpack.c.b16 %v850, %v846
    %v963 = vpack.c.b16 %v851, %v847
    %v964 = vpack.c.b16 %v852, %v848
    %v965 = vpack.c.b16 %v853, %v849
    %v966 = vpack.c.b16 %v858, %v854
    %v967 = vpack.c.b16 %v859, %v855
    %v968 = vpack.c.b16 %v860, %v856
    %v969 = vpack.c.b16 %v861, %v857
    %v970 = vpack.c.b16 %v866, %v862
    %v971 = vpack.c.b16 %v867, %v863
    %v972 = vpack.c.b16 %v868, %v864
    %v973 = vpack.c.b16 %v869, %v865
    %v974 = vpack.c.b16 %v874, %v870
    %v975 = vpack.c.b16 %v875, %v871
    %v976 = vpack.c.b16 %v876, %v872
    %v977 = vpack.c.b16 %v877, %v873
    %v978 = vpack.c.b16 %v882, %v878
    %v979 = vpack.c.b16 %v883, %v879
    %v980 = vpack.c.b16 %v884, %v880
    %v981 = vpack.c.b16 %v885, %v881
    %v982 = vpack.c.b16 %v890, %v886
    %v983 = vpack.c.b16 %v891, %v887
    %v984 = vpack.c.b16 %v892, %v888
    %v985 = vpack.c.b16 %v893, %v889
    %v986 = vpack.c.b16 %v898, %v894
    %v987 = vpack.c.b16 %v899, %v895
    %v988 = vpack.c.b16 %v900, %v896
    %v989 = vpack.c.b16 %v901, %v897
    %v990 = vpack.c.b16 %v906, %v902
    %v991 = vpack.c.b16 %v907, %v903
    %v992 = vpack.c.b16 %v908, %v904
    %v993 = vpack.c.b16 %v909, %v905
    %v994 = vpack.c.b16 %v914, %v910
    %v995 = vpack.c.b16 %v915, %v911
    %v996 = vpack.c.b16 %v916, %v912
    %v997 = vpack.c.b16 %v917, %v913
    %v998 = vpack.c.b16 %v922, %v918
    %v999 = vpack.c.b16 %v923, %v919
    %v1000 = vpack.c.b16 %v924, %v920
    %v1001 = vpack.c.b16 %v925, %v921
    %v1002 = vpack.c.b16 %v930, %v926
    %v1003 = vpack.c.b16 %v931, %v927
    %v1004 = vpack.c.b16 %v932, %v928
    %v1005 = vpack.c.b16 %v933, %v929
    %v1006 = vpack.c.b16 %v938, %v934
    %v1007 = vpack.c.b16 %v939, %v935
    %v1008 = vpack.c.b16 %v940, %v936
    %v1009 = vpack.c.b16 %v941, %v937
    %v1010 = vpack.c.b16 %v946, %v942
    %v1011 = vpack.c.b16 %v947, %v943
    %v1012 = vpack.c.b16 %v948, %v944
    %v1013 = vpack.c.b16 %v949, %v945
    %1078 = vmatpush.bf16.msra.mxu0 %v978
    %1079 = vmatpush.bf16.msra.mxu0 %v974
    %1080 = vmatpush.bf16.msra.mxu0 %v970
    %1081 = vmatpush.bf16.msra.mxu0 %v966
    %1082 = vmatpush.bf16.msra.mxu0 %v962
    %1083 = vmatpush.bf16.msra.mxu0 %v958
    %1084 = vmatpush.bf16.msra.mxu0 %v954
    %1085 = vmatpush.bf16.msra.mxu0 %v950
    %1086 = vmatmul.bf16.gmra.mxu0 %v154
    %v1087 = vpop.f32.mrf.mxu0
    %v1088 = vadd.f32 0.0, %v1087
    %v1089 = vpop.f32.mrf.mxu0
    %v1090 = vadd.f32 0.0, %v1089
    %1091 = vmatmul.bf16.gmra.mxu0 %v156
    %v1092 = vpop.f32.mrf.mxu0
    %v1093 = vadd.f32 0.0, %v1092
    %v1094 = vpop.f32.mrf.mxu0
    %v1095 = vadd.f32 0.0, %v1094
    %1096 = vdwg.mxu0
    %1097 = vmatpush.bf16.msra.mxu0 %v1010
    %1098 = vmatpush.bf16.msra.mxu0 %v1006
    %1099 = vmatpush.bf16.msra.mxu0 %v1002
    %1100 = vmatpush.bf16.msra.mxu0 %v998
    %1101 = vmatpush.bf16.msra.mxu0 %v994
    %1102 = vmatpush.bf16.msra.mxu0 %v990
    %1103 = vmatpush.bf16.msra.mxu0 %v986
    %1104 = vmatpush.bf16.msra.mxu0 %v982
    %1105 = vmatmul.bf16.gmra.mxu0 %v155
    %v1106 = vpop.f32.mrf.mxu0
    %v1107 = vadd.f32 %v1088, %v1106
    %v1108 = vpop.f32.mrf.mxu0
    %v1109 = vadd.f32 %v1090, %v1108
    %1110 = vmatmul.bf16.gmra.mxu0 %v157
    %v1111 = vpop.f32.mrf.mxu0
    %v1112 = vadd.f32 %v1093, %v1111
    %v1113 = vpop.f32.mrf.mxu0
    %v1114 = vadd.f32 %v1095, %v1113
    %1115 = vdwg.mxu0
    %1116 = vmatpush.bf16.msra.mxu0 %v979
    %1117 = vmatpush.bf16.msra.mxu0 %v975
    %1118 = vmatpush.bf16.msra.mxu0 %v971
    %1119 = vmatpush.bf16.msra.mxu0 %v967
    %1120 = vmatpush.bf16.msra.mxu0 %v963
    %1121 = vmatpush.bf16.msra.mxu0 %v959
    %1122 = vmatpush.bf16.msra.mxu0 %v955
    %1123 = vmatpush.bf16.msra.mxu0 %v951
    %1124 = vmatmul.bf16.gmra.mxu0 %v154
    %v1125 = vpop.f32.mrf.mxu0
    %v1126 = vadd.f32 0.0, %v1125
    %v1127 = vpop.f32.mrf.mxu0
    %v1128 = vadd.f32 0.0, %v1127
    %1129 = vmatmul.bf16.gmra.mxu0 %v156
    %v1130 = vpop.f32.mrf.mxu0
    %v1131 = vadd.f32 0.0, %v1130
    %v1132 = vpop.f32.mrf.mxu0
    %v1133 = vadd.f32 0.0, %v1132
    %1134 = vdwg.mxu0
    %1135 = vmatpush.bf16.msra.mxu0 %v1011
    %1136 = vmatpush.bf16.msra.mxu0 %v1007
    %1137 = vmatpush.bf16.msra.mxu0 %v1003
    %1138 = vmatpush.bf16.msra.mxu0 %v999
    %1139 = vmatpush.bf16.msra.mxu0 %v995
    %1140 = vmatpush.bf16.msra.mxu0 %v991
    %1141 = vmatpush.bf16.msra.mxu0 %v987
    %1142 = vmatpush.bf16.msra.mxu0 %v983
    %1143 = vmatmul.bf16.gmra.mxu0 %v155
    %v1144 = vpop.f32.mrf.mxu0
    %v1145 = vadd.f32 %v1126, %v1144
    %v1146 = vpop.f32.mrf.mxu0
    %v1147 = vadd.f32 %v1128, %v1146
    %1148 = vmatmul.bf16.gmra.mxu0 %v157
    %v1149 = vpop.f32.mrf.mxu0
    %v1150 = vadd.f32 %v1131, %v1149
    %v1151 = vpop.f32.mrf.mxu0
    %v1152 = vadd.f32 %v1133, %v1151
    %1153 = vdwg.mxu0
    %1154 = vmatpush.bf16.msra.mxu0 %v980
    %1155 = vmatpush.bf16.msra.mxu0 %v976
    %1156 = vmatpush.bf16.msra.mxu0 %v972
    %1157 = vmatpush.bf16.msra.mxu0 %v968
    %1158 = vmatpush.bf16.msra.mxu0 %v964
    %1159 = vmatpush.bf16.msra.mxu0 %v960
    %1160 = vmatpush.bf16.msra.mxu0 %v956
    %1161 = vmatpush.bf16.msra.mxu0 %v952
    %1162 = vmatmul.bf16.gmra.mxu0 %v154
    %v1163 = vpop.f32.mrf.mxu0
    %v1164 = vadd.f32 0.0, %v1163
    %v1165 = vpop.f32.mrf.mxu0
    %v1166 = vadd.f32 0.0, %v1165
    %1167 = vmatmul.bf16.gmra.mxu0 %v156
    %v1168 = vpop.f32.mrf.mxu0
    %v1169 = vadd.f32 0.0, %v1168
    %v1170 = vpop.f32.mrf.mxu0
    %v1171 = vadd.f32 0.0, %v1170
    %1172 = vdwg.mxu0
    %1173 = vmatpush.bf16.msra.mxu0 %v1012
    %1174 = vmatpush.bf16.msra.mxu0 %v1008
    %1175 = vmatpush.bf16.msra.mxu0 %v1004
    %1176 = vmatpush.bf16.msra.mxu0 %v1000
    %1177 = vmatpush.bf16.msra.mxu0 %v996
    %1178 = vmatpush.bf16.msra.mxu0 %v992
    %1179 = vmatpush.bf16.msra.mxu0 %v988
    %1180 = vmatpush.bf16.msra.mxu0 %v984
    %1181 = vmatmul.bf16.gmra.mxu0 %v155
    %v1182 = vpop.f32.mrf.mxu0
    %v1183 = vadd.f32 %v1164, %v1182
    %v1184 = vpop.f32.mrf.mxu0
    %v1185 = vadd.f32 %v1166, %v1184
    %1186 = vmatmul.bf16.gmra.mxu0 %v157
    %v1187 = vpop.f32.mrf.mxu0
    %v1188 = vadd.f32 %v1169, %v1187
    %v1189 = vpop.f32.mrf.mxu0
    %v1190 = vadd.f32 %v1171, %v1189
    %1191 = vdwg.mxu0
    %1192 = vmatpush.bf16.msra.mxu0 %v981
    %1193 = vmatpush.bf16.msra.mxu0 %v977
    %1194 = vmatpush.bf16.msra.mxu0 %v973
    %1195 = vmatpush.bf16.msra.mxu0 %v969
    %1196 = vmatpush.bf16.msra.mxu0 %v965
    %1197 = vmatpush.bf16.msra.mxu0 %v961
    %1198 = vmatpush.bf16.msra.mxu0 %v957
    %1199 = vmatpush.bf16.msra.mxu0 %v953
    %1200 = vmatmul.bf16.gmra.mxu0 %v154
    %v1201 = vpop.f32.mrf.mxu0
    %v1202 = vadd.f32 0.0, %v1201
    %v1203 = vpop.f32.mrf.mxu0
    %v1204 = vadd.f32 0.0, %v1203
    %1205 = vmatmul.bf16.gmra.mxu0 %v156
    %v1206 = vpop.f32.mrf.mxu0
    %v1207 = vadd.f32 0.0, %v1206
    %v1208 = vpop.f32.mrf.mxu0
    %v1209 = vadd.f32 0.0, %v1208
    %1210 = vdwg.mxu0
    %1211 = vmatpush.bf16.msra.mxu0 %v1013
    %1212 = vmatpush.bf16.msra.mxu0 %v1009
    %1213 = vmatpush.bf16.msra.mxu0 %v1005
    %1214 = vmatpush.bf16.msra.mxu0 %v1001
    %1215 = vmatpush.bf16.msra.mxu0 %v997
    %1216 = vmatpush.bf16.msra.mxu0 %v993
    %1217 = vmatpush.bf16.msra.mxu0 %v989
    %1218 = vmatpush.bf16.msra.mxu0 %v985
    %1219 = vmatmul.bf16.gmra.mxu0 %v155
    %v1220 = vpop.f32.mrf.mxu0
    %v1221 = vadd.f32 %v1202, %v1220
    %v1222 = vpop.f32.mrf.mxu0
    %v1223 = vadd.f32 %v1204, %v1222
    %1224 = vmatmul.bf16.gmra.mxu0 %v157
    %v1225 = vpop.f32.mrf.mxu0
    %v1226 = vadd.f32 %v1207, %v1225
    %v1227 = vpop.f32.mrf.mxu0
    %v1228 = vadd.f32 %v1209, %v1227
    %1229 = vdwg.mxu0
    %v1230 = vsub.f32 0.0, %v571
    %v1231 = vsub.f32 0.0, %v609
    %v1232 = vsub.f32 0.0, %v647
    %v1233 = vsub.f32 0.0, %v685
    %v1234 = vsub.f32 0.0, %v573
    %v1235 = vsub.f32 0.0, %v611
    %v1236 = vsub.f32 0.0, %v649
    %v1237 = vsub.f32 0.0, %v687
    %v1238 = vsub.f32 0.0, %v576
    %v1239 = vsub.f32 0.0, %v614
    %v1240 = vsub.f32 0.0, %v652
    %v1241 = vsub.f32 0.0, %v690
    %v1242 = vsub.f32 0.0, %v578
    %v1243 = vsub.f32 0.0, %v616
    %v1244 = vsub.f32 0.0, %v654
    %v1245 = vsub.f32 0.0, %v692
    %v1246 = vmul.f32 %v1230, 1.442695
    %v1247 = vpow.pop %v1246
    %v1248 = vmul.f32 %v1231, 1.442695
    %v1249 = vpow.pop %v1248
    %v1250 = vmul.f32 %v1232, 1.442695
    %v1251 = vpow.pop %v1250
    %v1252 = vmul.f32 %v1233, 1.442695
    %v1253 = vpow.pop %v1252
    %v1254 = vmul.f32 %v1234, 1.442695
    %v1255 = vpow.pop %v1254
    %v1256 = vmul.f32 %v1235, 1.442695
    %v1257 = vpow.pop %v1256
    %v1258 = vmul.f32 %v1236, 1.442695
    %v1259 = vpow.pop %v1258
    %v1260 = vmul.f32 %v1237, 1.442695
    %v1261 = vpow.pop %v1260
    %v1262 = vmul.f32 %v1238, 1.442695
    %v1263 = vpow.pop %v1262
    %v1264 = vmul.f32 %v1239, 1.442695
    %v1265 = vpow.pop %v1264
    %v1266 = vmul.f32 %v1240, 1.442695
    %v1267 = vpow.pop %v1266
    %v1268 = vmul.f32 %v1241, 1.442695
    %v1269 = vpow.pop %v1268
    %v1270 = vmul.f32 %v1242, 1.442695
    %v1271 = vpow.pop %v1270
    %v1272 = vmul.f32 %v1243, 1.442695
    %v1273 = vpow.pop %v1272
    %v1274 = vmul.f32 %v1244, 1.442695
    %v1275 = vpow.pop %v1274
    %v1276 = vmul.f32 %v1245, 1.442695
    %v1277 = vpow.pop %v1276
    %v1278 = vadd.f32 %v1247, 1.0
    %v1279 = vadd.f32 %v1249, 1.0
    %v1280 = vadd.f32 %v1251, 1.0
    %v1281 = vadd.f32 %v1253, 1.0
    %v1282 = vadd.f32 %v1255, 1.0
    %v1283 = vadd.f32 %v1257, 1.0
    %v1284 = vadd.f32 %v1259, 1.0
    %v1285 = vadd.f32 %v1261, 1.0
    %v1286 = vadd.f32 %v1263, 1.0
    %v1287 = vadd.f32 %v1265, 1.0
    %v1288 = vadd.f32 %v1267, 1.0
    %v1289 = vadd.f32 %v1269, 1.0
    %v1290 = vadd.f32 %v1271, 1.0
    %v1291 = vadd.f32 %v1273, 1.0
    %v1292 = vadd.f32 %v1275, 1.0
    %v1293 = vadd.f32 %v1277, 1.0
    %v1294 = vrcp.pop %v1278
    %v1295 = vmul.f32 %v1278, %v1294
    %v1296 = vsub.f32 1.0, %v1295
    %v1297 = vmul.f32 %v1294, %v1296
    %v1298 = vadd.f32 %v1294, %v1297
    %vm1299 = vweird.f32 %v1278
    %vm1300 = vweird.f32 %v1294
    %vm1301 = vmor %vm1299, %vm1300
    %v1302 = vsel %vm1301, %v1294, %v1298
    %v1303 = vand.u32 2147483647, %v1278
    %vm1304 = vcmp.eq.f32.partialorder %v1303, 8.507059e+37
    %v1305 = vand.u32 %v1278, 2147483648
    %v1306 = vor.u32 1.1754944e-38, %v1305
    %v1307 = vsel %vm1304, %v1306, %v1302
    %v1308 = vmul.f32 1.0, %v1307
    %v1309 = vrcp.pop %v1279
    %v1310 = vmul.f32 %v1279, %v1309
    %v1311 = vsub.f32 1.0, %v1310
    %v1312 = vmul.f32 %v1309, %v1311
    %v1313 = vadd.f32 %v1309, %v1312
    %vm1314 = vweird.f32 %v1279
    %vm1315 = vweird.f32 %v1309
    %vm1316 = vmor %vm1314, %vm1315
    %v1317 = vsel %vm1316, %v1309, %v1313
    %v1318 = vand.u32 2147483647, %v1279
    %vm1319 = vcmp.eq.f32.partialorder %v1318, 8.507059e+37
    %v1320 = vand.u32 %v1279, 2147483648
    %v1321 = vor.u32 1.1754944e-38, %v1320
    %v1322 = vsel %vm1319, %v1321, %v1317
    %v1323 = vmul.f32 1.0, %v1322
    %v1324 = vrcp.pop %v1280
    %v1325 = vmul.f32 %v1280, %v1324
    %v1326 = vsub.f32 1.0, %v1325
    %v1327 = vmul.f32 %v1324, %v1326
    %v1328 = vadd.f32 %v1324, %v1327
    %vm1329 = vweird.f32 %v1280
    %vm1330 = vweird.f32 %v1324
    %vm1331 = vmor %vm1329, %vm1330
    %v1332 = vsel %vm1331, %v1324, %v1328
    %v1333 = vand.u32 2147483647, %v1280
    %vm1334 = vcmp.eq.f32.partialorder %v1333, 8.507059e+37
    %v1335 = vand.u32 %v1280, 2147483648
    %v1336 = vor.u32 1.1754944e-38, %v1335
    %v1337 = vsel %vm1334, %v1336, %v1332
    %v1338 = vmul.f32 1.0, %v1337
    %v1339 = vrcp.pop %v1281
    %v1340 = vmul.f32 %v1281, %v1339
    %v1341 = vsub.f32 1.0, %v1340
    %v1342 = vmul.f32 %v1339, %v1341
    %v1343 = vadd.f32 %v1339, %v1342
    %vm1344 = vweird.f32 %v1281
    %vm1345 = vweird.f32 %v1339
    %vm1346 = vmor %vm1344, %vm1345
    %v1347 = vsel %vm1346, %v1339, %v1343
    %v1348 = vand.u32 2147483647, %v1281
    %vm1349 = vcmp.eq.f32.partialorder %v1348, 8.507059e+37
    %v1350 = vand.u32 %v1281, 2147483648
    %v1351 = vor.u32 1.1754944e-38, %v1350
    %v1352 = vsel %vm1349, %v1351, %v1347
    %v1353 = vmul.f32 1.0, %v1352
    %v1354 = vrcp.pop %v1282
    %v1355 = vmul.f32 %v1282, %v1354
    %v1356 = vsub.f32 1.0, %v1355
    %v1357 = vmul.f32 %v1354, %v1356
    %v1358 = vadd.f32 %v1354, %v1357
    %vm1359 = vweird.f32 %v1282
    %vm1360 = vweird.f32 %v1354
    %vm1361 = vmor %vm1359, %vm1360
    %v1362 = vsel %vm1361, %v1354, %v1358
    %v1363 = vand.u32 2147483647, %v1282
    %vm1364 = vcmp.eq.f32.partialorder %v1363, 8.507059e+37
    %v1365 = vand.u32 %v1282, 2147483648
    %v1366 = vor.u32 1.1754944e-38, %v1365
    %v1367 = vsel %vm1364, %v1366, %v1362
    %v1368 = vmul.f32 1.0, %v1367
    %v1369 = vrcp.pop %v1283
    %v1370 = vmul.f32 %v1283, %v1369
    %v1371 = vsub.f32 1.0, %v1370
    %v1372 = vmul.f32 %v1369, %v1371
    %v1373 = vadd.f32 %v1369, %v1372
    %vm1374 = vweird.f32 %v1283
    %vm1375 = vweird.f32 %v1369
    %vm1376 = vmor %vm1374, %vm1375
    %v1377 = vsel %vm1376, %v1369, %v1373
    %v1378 = vand.u32 2147483647, %v1283
    %vm1379 = vcmp.eq.f32.partialorder %v1378, 8.507059e+37
    %v1380 = vand.u32 %v1283, 2147483648
    %v1381 = vor.u32 1.1754944e-38, %v1380
    %v1382 = vsel %vm1379, %v1381, %v1377
    %v1383 = vmul.f32 1.0, %v1382
    %v1384 = vrcp.pop %v1284
    %v1385 = vmul.f32 %v1284, %v1384
    %v1386 = vsub.f32 1.0, %v1385
    %v1387 = vmul.f32 %v1384, %v1386
    %v1388 = vadd.f32 %v1384, %v1387
    %vm1389 = vweird.f32 %v1284
    %vm1390 = vweird.f32 %v1384
    %vm1391 = vmor %vm1389, %vm1390
    %v1392 = vsel %vm1391, %v1384, %v1388
    %v1393 = vand.u32 2147483647, %v1284
    %vm1394 = vcmp.eq.f32.partialorder %v1393, 8.507059e+37
    %v1395 = vand.u32 %v1284, 2147483648
    %v1396 = vor.u32 1.1754944e-38, %v1395
    %v1397 = vsel %vm1394, %v1396, %v1392
    %v1398 = vmul.f32 1.0, %v1397
    %v1399 = vrcp.pop %v1285
    %v1400 = vmul.f32 %v1285, %v1399
    %v1401 = vsub.f32 1.0, %v1400
    %v1402 = vmul.f32 %v1399, %v1401
    %v1403 = vadd.f32 %v1399, %v1402
    %vm1404 = vweird.f32 %v1285
    %vm1405 = vweird.f32 %v1399
    %vm1406 = vmor %vm1404, %vm1405
    %v1407 = vsel %vm1406, %v1399, %v1403
    %v1408 = vand.u32 2147483647, %v1285
    %vm1409 = vcmp.eq.f32.partialorder %v1408, 8.507059e+37
    %v1410 = vand.u32 %v1285, 2147483648
    %v1411 = vor.u32 1.1754944e-38, %v1410
    %v1412 = vsel %vm1409, %v1411, %v1407
    %v1413 = vmul.f32 1.0, %v1412
    %v1414 = vrcp.pop %v1286
    %v1415 = vmul.f32 %v1286, %v1414
    %v1416 = vsub.f32 1.0, %v1415
    %v1417 = vmul.f32 %v1414, %v1416
    %v1418 = vadd.f32 %v1414, %v1417
    %vm1419 = vweird.f32 %v1286
    %vm1420 = vweird.f32 %v1414
    %vm1421 = vmor %vm1419, %vm1420
    %v1422 = vsel %vm1421, %v1414, %v1418
    %v1423 = vand.u32 2147483647, %v1286
    %vm1424 = vcmp.eq.f32.partialorder %v1423, 8.507059e+37
    %v1425 = vand.u32 %v1286, 2147483648
    %v1426 = vor.u32 1.1754944e-38, %v1425
    %v1427 = vsel %vm1424, %v1426, %v1422
    %v1428 = vmul.f32 1.0, %v1427
    %v1429 = vrcp.pop %v1287
    %v1430 = vmul.f32 %v1287, %v1429
    %v1431 = vsub.f32 1.0, %v1430
    %v1432 = vmul.f32 %v1429, %v1431
    %v1433 = vadd.f32 %v1429, %v1432
    %vm1434 = vweird.f32 %v1287
    %vm1435 = vweird.f32 %v1429
    %vm1436 = vmor %vm1434, %vm1435
    %v1437 = vsel %vm1436, %v1429, %v1433
    %v1438 = vand.u32 2147483647, %v1287
    %vm1439 = vcmp.eq.f32.partialorder %v1438, 8.507059e+37
    %v1440 = vand.u32 %v1287, 2147483648
    %v1441 = vor.u32 1.1754944e-38, %v1440
    %v1442 = vsel %vm1439, %v1441, %v1437
    %v1443 = vmul.f32 1.0, %v1442
    %v1444 = vrcp.pop %v1288
    %v1445 = vmul.f32 %v1288, %v1444
    %v1446 = vsub.f32 1.0, %v1445
    %v1447 = vmul.f32 %v1444, %v1446
    %v1448 = vadd.f32 %v1444, %v1447
    %vm1449 = vweird.f32 %v1288
    %vm1450 = vweird.f32 %v1444
    %vm1451 = vmor %vm1449, %vm1450
    %v1452 = vsel %vm1451, %v1444, %v1448
    %v1453 = vand.u32 2147483647, %v1288
    %vm1454 = vcmp.eq.f32.partialorder %v1453, 8.507059e+37
    %v1455 = vand.u32 %v1288, 2147483648
    %v1456 = vor.u32 1.1754944e-38, %v1455
    %v1457 = vsel %vm1454, %v1456, %v1452
    %v1458 = vmul.f32 1.0, %v1457
    %v1459 = vrcp.pop %v1289
    %v1460 = vmul.f32 %v1289, %v1459
    %v1461 = vsub.f32 1.0, %v1460
    %v1462 = vmul.f32 %v1459, %v1461
    %v1463 = vadd.f32 %v1459, %v1462
    %vm1464 = vweird.f32 %v1289
    %vm1465 = vweird.f32 %v1459
    %vm1466 = vmor %vm1464, %vm1465
    %v1467 = vsel %vm1466, %v1459, %v1463
    %v1468 = vand.u32 2147483647, %v1289
    %vm1469 = vcmp.eq.f32.partialorder %v1468, 8.507059e+37
    %v1470 = vand.u32 %v1289, 2147483648
    %v1471 = vor.u32 1.1754944e-38, %v1470
    %v1472 = vsel %vm1469, %v1471, %v1467
    %v1473 = vmul.f32 1.0, %v1472
    %v1474 = vrcp.pop %v1290
    %v1475 = vmul.f32 %v1290, %v1474
    %v1476 = vsub.f32 1.0, %v1475
    %v1477 = vmul.f32 %v1474, %v1476
    %v1478 = vadd.f32 %v1474, %v1477
    %vm1479 = vweird.f32 %v1290
    %vm1480 = vweird.f32 %v1474
    %vm1481 = vmor %vm1479, %vm1480
    %v1482 = vsel %vm1481, %v1474, %v1478
    %v1483 = vand.u32 2147483647, %v1290
    %vm1484 = vcmp.eq.f32.partialorder %v1483, 8.507059e+37
    %v1485 = vand.u32 %v1290, 2147483648
    %v1486 = vor.u32 1.1754944e-38, %v1485
    %v1487 = vsel %vm1484, %v1486, %v1482
    %v1488 = vmul.f32 1.0, %v1487
    %v1489 = vrcp.pop %v1291
    %v1490 = vmul.f32 %v1291, %v1489
    %v1491 = vsub.f32 1.0, %v1490
    %v1492 = vmul.f32 %v1489, %v1491
    %v1493 = vadd.f32 %v1489, %v1492
    %vm1494 = vweird.f32 %v1291
    %vm1495 = vweird.f32 %v1489
    %vm1496 = vmor %vm1494, %vm1495
    %v1497 = vsel %vm1496, %v1489, %v1493
    %v1498 = vand.u32 2147483647, %v1291
    %vm1499 = vcmp.eq.f32.partialorder %v1498, 8.507059e+37
    %v1500 = vand.u32 %v1291, 2147483648
    %v1501 = vor.u32 1.1754944e-38, %v1500
    %v1502 = vsel %vm1499, %v1501, %v1497
    %v1503 = vmul.f32 1.0, %v1502
    %v1504 = vrcp.pop %v1292
    %v1505 = vmul.f32 %v1292, %v1504
    %v1506 = vsub.f32 1.0, %v1505
    %v1507 = vmul.f32 %v1504, %v1506
    %v1508 = vadd.f32 %v1504, %v1507
    %vm1509 = vweird.f32 %v1292
    %vm1510 = vweird.f32 %v1504
    %vm1511 = vmor %vm1509, %vm1510
    %v1512 = vsel %vm1511, %v1504, %v1508
    %v1513 = vand.u32 2147483647, %v1292
    %vm1514 = vcmp.eq.f32.partialorder %v1513, 8.507059e+37
    %v1515 = vand.u32 %v1292, 2147483648
    %v1516 = vor.u32 1.1754944e-38, %v1515
    %v1517 = vsel %vm1514, %v1516, %v1512
    %v1518 = vmul.f32 1.0, %v1517
    %v1519 = vrcp.pop %v1293
    %v1520 = vmul.f32 %v1293, %v1519
    %v1521 = vsub.f32 1.0, %v1520
    %v1522 = vmul.f32 %v1519, %v1521
    %v1523 = vadd.f32 %v1519, %v1522
    %vm1524 = vweird.f32 %v1293
    %vm1525 = vweird.f32 %v1519
    %vm1526 = vmor %vm1524, %vm1525
    %v1527 = vsel %vm1526, %v1519, %v1523
    %v1528 = vand.u32 2147483647, %v1293
    %vm1529 = vcmp.eq.f32.partialorder %v1528, 8.507059e+37
    %v1530 = vand.u32 %v1293, 2147483648
    %v1531 = vor.u32 1.1754944e-38, %v1530
    %v1532 = vsel %vm1529, %v1531, %v1527
    %v1533 = vmul.f32 1.0, %v1532
    %v1534 = vmul.f32 %v571, %v1308
    %v1535 = vmul.f32 %v609, %v1323
    %v1536 = vmul.f32 %v647, %v1338
    %v1537 = vmul.f32 %v685, %v1353
    %v1538 = vmul.f32 %v573, %v1368
    %v1539 = vmul.f32 %v611, %v1383
    %v1540 = vmul.f32 %v649, %v1398
    %v1541 = vmul.f32 %v687, %v1413
    %v1542 = vmul.f32 %v576, %v1428
    %v1543 = vmul.f32 %v614, %v1443
    %v1544 = vmul.f32 %v652, %v1458
    %v1545 = vmul.f32 %v690, %v1473
    %v1546 = vmul.f32 %v578, %v1488
    %v1547 = vmul.f32 %v616, %v1503
    %v1548 = vmul.f32 %v654, %v1518
    %v1549 = vmul.f32 %v692, %v1533
    %v1550 = vmul.f32 %v1534, %v1107
    %v1551 = vmul.f32 %v1535, %v1145
    %v1552 = vmul.f32 %v1536, %v1183
    %v1553 = vmul.f32 %v1537, %v1221
    %v1554 = vmul.f32 %v1538, %v1109
    %v1555 = vmul.f32 %v1539, %v1147
    %v1556 = vmul.f32 %v1540, %v1185
    %v1557 = vmul.f32 %v1541, %v1223
    %v1558 = vmul.f32 %v1542, %v1112
    %v1559 = vmul.f32 %v1543, %v1150
    %v1560 = vmul.f32 %v1544, %v1188
    %v1561 = vmul.f32 %v1545, %v1226
    %v1562 = vmul.f32 %v1546, %v1114
    %v1563 = vmul.f32 %v1547, %v1152
    %v1564 = vmul.f32 %v1548, %v1190
    %v1565 = vmul.f32 %v1549, %v1228
    %v1566 = vpack.c.bf16 %v1551, %v1550
    %v1567 = vpack.c.bf16 %v1553, %v1552
    %v1568 = vpack.c.bf16 %v1555, %v1554
    %v1569 = vpack.c.bf16 %v1557, %v1556
    %v1570 = vpack.c.bf16 %v1559, %v1558
    %v1571 = vpack.c.bf16 %v1561, %v1560
    %v1572 = vpack.c.bf16 %v1563, %v1562
    %v1573 = vpack.c.bf16 %v1565, %v1564
    %1574 = vst [vmem:[%s4] sm:$0xff] %v1566
    %1575 = vst [vmem:[%s4 + $0x8] sm:$0xff] %v1567
    %1576 = vst [vmem:[%s4 + $0x10] sm:$0xff] %v1568
    %1577 = vst [vmem:[%s4 + $0x18] sm:$0xff] %v1569
    %1578 = vst [vmem:[%s4 + $0x20] sm:$0xff] %v1570
    %1579 = vst [vmem:[%s4 + $0x28] sm:$0xff] %v1571
    %1580 = vst [vmem:[%s4 + $0x30] sm:$0xff] %v1572
    %1581 = vst [vmem:[%s4 + $0x38] sm:$0xff] %v1573
    // Predicated region
    $region26: #{decoder_forward.26} parent=1 // pred_check
      _
    $region27: #{decoder_forward.26} parent=1 // pred_check_branch
      %1583 = sbr.rel (0) target = $region29
    $region28: #{decoder_forward.26} parent=1 // pred_region
      _
    $region29: #{decoder_forward.26} parent=1 // pred_fallthru
      _
    // Predicated region
    $region30: #{decoder_forward.26} parent=1 // pred_check
      _
    $region31: #{decoder_forward.26} parent=1 // pred_check_branch
      %1585 = sbr.rel (0) target = $region33
    $region32: #{decoder_forward.26} parent=1 // pred_region
      _
    $region33: #{decoder_forward.26} parent=1 // pred_fallthru
      _
    %1586 = vsyncpa [#allocation3], 1
    %1587 = vsyncpa [#allocation5], 1

// kernel: decoder_forward.30
$region0: #{decoder_forward.30}
  #allocation0 [shape = 'u32[]', space=smem, size = 0x4, offset = 0x4, fixed_abs, tag = 'smem constant byte address 0x4 - core index']
  #allocation1 [shape = 'u32[72,128]{1,0:T(1,128)}', space=vmem, size = 0x9000, scoped, tag = 'internal scratch']
  %s0 = inlined_call_operand.vmem [shape: bf16[32,256], index: 0, kind: input, shape index: {}]
  %s1 = inlined_call_operand.vmem [shape: bf16[256,256], index: 1, kind: input, shape index: {}]
  %s2 = inlined_call_operand.vmem [shape: f32[32,256], index: 2, kind: input, shape index: {}]
  %s3 = inlined_call_operand.vmem [shape: f32[32,256], index: 3, kind: output, shape index: {}]
  %s4 = sld [smem:[#allocation0]]
  $region22: #{decoder_forward.30} parent=0
    _
  %s6 = ssub.s32 1, %s4
  %s7 = scalar_select 0, %s6, %s4
  // Predicated region
  $region2: #{decoder_forward.30} parent=0 // pred_check
    _
  $region3: #{decoder_forward.30} parent=0 // pred_check_branch
    %9 = sbr.rel (0) target = $region5
  $region4: #{decoder_forward.30} parent=0 // pred_region
    _
  $region5: #{decoder_forward.30} parent=0 // pred_fallthru
    _
  // Predicated region
  $region6: #{decoder_forward.30} parent=0 // pred_check
    _
  $region7: #{decoder_forward.30} parent=0 // pred_check_branch
    %11 = sbr.rel (0) target = $region9
  $region8: #{decoder_forward.30} parent=0 // pred_region
    _
  $region9: #{decoder_forward.30} parent=0 // pred_fallthru
    _
  // Predicated region
  $region10: #{decoder_forward.30} parent=0 // pred_check
    _
  $region11: #{decoder_forward.30} parent=0 // pred_check_branch
    %13 = sbr.rel (0) target = $region13
  $region12: #{decoder_forward.30} parent=0 // pred_region
    _
  $region13: #{decoder_forward.30} parent=0 // pred_fallthru
    _
  %v14 = vld [vmem:[%s0] sm:$0xff]
  %v15 = vld [vmem:[%s0 + $0x8] sm:$0xff]
  %v16 = vld [vmem:[%s0 + $0x10] sm:$0xff]
  %v17 = vld [vmem:[%s0 + $0x18] sm:$0xff]
  %v18 = vld [vmem:[%s1] sm:$0xff]
  %v19 = vld [vmem:[%s1 + $0x8] sm:$0xff]
  %v20 = vld [vmem:[%s1 + $0x10] sm:$0xff]
  %v21 = vld [vmem:[%s1 + $0x18] sm:$0xff]
  %v22 = vld [vmem:[%s1 + $0x20] sm:$0xff]
  %v23 = vld [vmem:[%s1 + $0x28] sm:$0xff]
  %v24 = vld [vmem:[%s1 + $0x30] sm:$0xff]
  %v25 = vld [vmem:[%s1 + $0x38] sm:$0xff]
  %v26 = vld [vmem:[%s1 + $0x40] sm:$0xff]
  %v27 = vld [vmem:[%s1 + $0x48] sm:$0xff]
  %v28 = vld [vmem:[%s1 + $0x50] sm:$0xff]
  %v29 = vld [vmem:[%s1 + $0x58] sm:$0xff]
  %v30 = vld [vmem:[%s1 + $0x60] sm:$0xff]
  %v31 = vld [vmem:[%s1 + $0x68] sm:$0xff]
  %v32 = vld [vmem:[%s1 + $0x70] sm:$0xff]
  %v33 = vld [vmem:[%s1 + $0x78] sm:$0xff]
  %v34 = vld [vmem:[%s1 + $0x80] sm:$0xff]
  %v35 = vld [vmem:[%s1 + $0x88] sm:$0xff]
  %v36 = vld [vmem:[%s1 + $0x90] sm:$0xff]
  %v37 = vld [vmem:[%s1 + $0x98] sm:$0xff]
  %v38 = vld [vmem:[%s1 + $0xa0] sm:$0xff]
  %v39 = vld [vmem:[%s1 + $0xa8] sm:$0xff]
  %v40 = vld [vmem:[%s1 + $0xb0] sm:$0xff]
  %v41 = vld [vmem:[%s1 + $0xb8] sm:$0xff]
  %v42 = vld [vmem:[%s1 + $0xc0] sm:$0xff]
  %v43 = vld [vmem:[%s1 + $0xc8] sm:$0xff]
  %v44 = vld [vmem:[%s1 + $0xd0] sm:$0xff]
  %v45 = vld [vmem:[%s1 + $0xd8] sm:$0xff]
  %v46 = vld [vmem:[%s1 + $0xe0] sm:$0xff]
  %v47 = vld [vmem:[%s1 + $0xe8] sm:$0xff]
  %v48 = vld [vmem:[%s1 + $0xf0] sm:$0xff]
  %v49 = vld [vmem:[%s1 + $0xf8] sm:$0xff]
  %v50 = vld [vmem:[%s2] sm:$0xff]
  %v51 = vld [vmem:[%s2 + $0x8] sm:$0xff]
  %v52 = vld [vmem:[%s2 + $0x10] sm:$0xff]
  %v53 = vld [vmem:[%s2 + $0x18] sm:$0xff]
  %v54 = vld [vmem:[%s2 + $0x20] sm:$0xff]
  %v55 = vld [vmem:[%s2 + $0x28] sm:$0xff]
  %v56 = vld [vmem:[%s2 + $0x30] sm:$0xff]
  %v57 = vld [vmem:[%s2 + $0x38] sm:$0xff]
  %v62 = vunpack.c.l.b16 %v14
  %v63 = vunpack.c.h.b16 %v14
  %v64 = vunpack.c.l.b16 %v15
  %v65 = vunpack.c.h.b16 %v15
  %v66 = vunpack.c.l.b16 %v16
  %v67 = vunpack.c.h.b16 %v16
  %v68 = vunpack.c.l.b16 %v17
  %v69 = vunpack.c.h.b16 %v17
  %v70 = vpack.c.b16 %v64, %v62
  %v71 = vpack.c.b16 %v65, %v63
  %v72 = vpack.c.b16 %v68, %v66
  %v73 = vpack.c.b16 %v69, %v67
  %v110 = vunpack.c.l.b16 %v18
  %v111 = vunpack.c.h.b16 %v18
  %v112 = vunpack.c.l.b16 %v19
  %v113 = vunpack.c.h.b16 %v19
  %v114 = vunpack.c.l.b16 %v20
  %v115 = vunpack.c.h.b16 %v20
  %v116 = vunpack.c.l.b16 %v21
  %v117 = vunpack.c.h.b16 %v21
  %v118 = vunpack.c.l.b16 %v22
  %v119 = vunpack.c.h.b16 %v22
  %v120 = vunpack.c.l.b16 %v23
  %v121 = vunpack.c.h.b16 %v23
  %v122 = vunpack.c.l.b16 %v24
  %v123 = vunpack.c.h.b16 %v24
  %v124 = vunpack.c.l.b16 %v25
  %v125 = vunpack.c.h.b16 %v25
  %v126 = vunpack.c.l.b16 %v26
  %v127 = vunpack.c.h.b16 %v26
  %v128 = vunpack.c.l.b16 %v27
  %v129 = vunpack.c.h.b16 %v27
  %v130 = vunpack.c.l.b16 %v28
  %v131 = vunpack.c.h.b16 %v28
  %v132 = vunpack.c.l.b16 %v29
  %v133 = vunpack.c.h.b16 %v29
  %v134 = vunpack.c.l.b16 %v30
  %v135 = vunpack.c.h.b16 %v30
  %v136 = vunpack.c.l.b16 %v31
  %v137 = vunpack.c.h.b16 %v31
  %v138 = vunpack.c.l.b16 %v32
  %v139 = vunpack.c.h.b16 %v32
  %v140 = vunpack.c.l.b16 %v33
  %v141 = vunpack.c.h.b16 %v33
  %v142 = vunpack.c.l.b16 %v34
  %v143 = vunpack.c.h.b16 %v34
  %v144 = vunpack.c.l.b16 %v35
  %v145 = vunpack.c.h.b16 %v35
  %v146 = vunpack.c.l.b16 %v36
  %v147 = vunpack.c.h.b16 %v36
  %v148 = vunpack.c.l.b16 %v37
  %v149 = vunpack.c.h.b16 %v37
  %v150 = vunpack.c.l.b16 %v38
  %v151 = vunpack.c.h.b16 %v38
  %v152 = vunpack.c.l.b16 %v39
  %v153 = vunpack.c.h.b16 %v39
  %v154 = vunpack.c.l.b16 %v40
  %v155 = vunpack.c.h.b16 %v40
  %v156 = vunpack.c.l.b16 %v41
  %v157 = vunpack.c.h.b16 %v41
  %v158 = vunpack.c.l.b16 %v42
  %v159 = vunpack.c.h.b16 %v42
  %v160 = vunpack.c.l.b16 %v43
  %v161 = vunpack.c.h.b16 %v43
  %v162 = vunpack.c.l.b16 %v44
  %v163 = vunpack.c.h.b16 %v44
  %v164 = vunpack.c.l.b16 %v45
  %v165 = vunpack.c.h.b16 %v45
  %v166 = vunpack.c.l.b16 %v46
  %v167 = vunpack.c.h.b16 %v46
  %v168 = vunpack.c.l.b16 %v47
  %v169 = vunpack.c.h.b16 %v47
  %v170 = vunpack.c.l.b16 %v48
  %v171 = vunpack.c.h.b16 %v48
  %v172 = vunpack.c.l.b16 %v49
  %v173 = vunpack.c.h.b16 %v49
  %v174 = vpack.c.b16 %v112, %v110
  %v175 = vpack.c.b16 %v113, %v111
  %v176 = vpack.c.b16 %v116, %v114
  %v177 = vpack.c.b16 %v117, %v115
  %v178 = vpack.c.b16 %v120, %v118
  %v179 = vpack.c.b16 %v121, %v119
  %v180 = vpack.c.b16 %v124, %v122
  %v181 = vpack.c.b16 %v125, %v123
  %v182 = vpack.c.b16 %v128, %v126
  %v183 = vpack.c.b16 %v129, %v127
  %v184 = vpack.c.b16 %v132, %v130
  %v185 = vpack.c.b16 %v133, %v131
  %v186 = vpack.c.b16 %v136, %v134
  %v187 = vpack.c.b16 %v137, %v135
  %v188 = vpack.c.b16 %v140, %v138
  %v189 = vpack.c.b16 %v141, %v139
  %v190 = vpack.c.b16 %v144, %v142
  %v191 = vpack.c.b16 %v145, %v143
  %v192 = vpack.c.b16 %v148, %v146
  %v193 = vpack.c.b16 %v149, %v147
  %v194 = vpack.c.b16 %v152, %v150
  %v195 = vpack.c.b16 %v153, %v151
  %v196 = vpack.c.b16 %v156, %v154
  %v197 = vpack.c.b16 %v157, %v155
  %v198 = vpack.c.b16 %v160, %v158
  %v199 = vpack.c.b16 %v161, %v159
  %v200 = vpack.c.b16 %v164, %v162
  %v201 = vpack.c.b16 %v165, %v163
  %v202 = vpack.c.b16 %v168, %v166
  %v203 = vpack.c.b16 %v169, %v167
  %v204 = vpack.c.b16 %v172, %v170
  %v205 = vpack.c.b16 %v173, %v171
  %238 = vmatpush.bf16.msra.mxu0 %v188
  %239 = vmatpush.bf16.msra.mxu0 %v186
  %240 = vmatpush.bf16.msra.mxu0 %v184
  %241 = vmatpush.bf16.msra.mxu0 %v182
  %242 = vmatpush.bf16.msra.mxu0 %v180
  %243 = vmatpush.bf16.msra.mxu0 %v178
  %244 = vmatpush.bf16.msra.mxu0 %v176
  %245 = vmatpush.bf16.msra.mxu0 %v174
  %246 = vmatmul.bf16.gmra.mxu0 %v70
  %v247 = vpop.f32.mrf.mxu0
  %v248 = vadd.f32 %v50, %v247
  %v249 = vpop.f32.mrf.mxu0
  %v250 = vadd.f32 %v52, %v249
  %251 = vmatmul.bf16.gmra.mxu0 %v72
  %v252 = vpop.f32.mrf.mxu0
  %v253 = vadd.f32 %v54, %v252
  %v254 = vpop.f32.mrf.mxu0
  %v255 = vadd.f32 %v56, %v254
  %256 = vdwg.mxu0
  %257 = vmatpush.bf16.msra.mxu0 %v204
  %258 = vmatpush.bf16.msra.mxu0 %v202
  %259 = vmatpush.bf16.msra.mxu0 %v200
  %260 = vmatpush.bf16.msra.mxu0 %v198
  %261 = vmatpush.bf16.msra.mxu0 %v196
  %262 = vmatpush.bf16.msra.mxu0 %v194
  %263 = vmatpush.bf16.msra.mxu0 %v192
  %264 = vmatpush.bf16.msra.mxu0 %v190
  %265 = vmatmul.bf16.gmra.mxu0 %v71
  %v266 = vpop.f32.mrf.mxu0
  %v267 = vadd.f32 %v248, %v266
  %v268 = vpop.f32.mrf.mxu0
  %v269 = vadd.f32 %v250, %v268
  %270 = vmatmul.bf16.gmra.mxu0 %v73
  %v271 = vpop.f32.mrf.mxu0
  %v272 = vadd.f32 %v253, %v271
  %v273 = vpop.f32.mrf.mxu0
  %v274 = vadd.f32 %v255, %v273
  %275 = vdwg.mxu0
  %276 = vmatpush.bf16.msra.mxu0 %v189
  %277 = vmatpush.bf16.msra.mxu0 %v187
  %278 = vmatpush.bf16.msra.mxu0 %v185
  %279 = vmatpush.bf16.msra.mxu0 %v183
  %280 = vmatpush.bf16.msra.mxu0 %v181
  %281 = vmatpush.bf16.msra.mxu0 %v179
  %282 = vmatpush.bf16.msra.mxu0 %v177
  %283 = vmatpush.bf16.msra.mxu0 %v175
  %284 = vmatmul.bf16.gmra.mxu0 %v70
  %v285 = vpop.f32.mrf.mxu0
  %v286 = vadd.f32 %v51, %v285
  %v287 = vpop.f32.mrf.mxu0
  %v288 = vadd.f32 %v53, %v287
  %289 = vmatmul.bf16.gmra.mxu0 %v72
  %v290 = vpop.f32.mrf.mxu0
  %v291 = vadd.f32 %v55, %v290
  %v292 = vpop.f32.mrf.mxu0
  %v293 = vadd.f32 %v57, %v292
  %294 = vdwg.mxu0
  %295 = vmatpush.bf16.msra.mxu0 %v205
  %296 = vmatpush.bf16.msra.mxu0 %v203
  %297 = vmatpush.bf16.msra.mxu0 %v201
  %298 = vmatpush.bf16.msra.mxu0 %v199
  %299 = vmatpush.bf16.msra.mxu0 %v197
  %300 = vmatpush.bf16.msra.mxu0 %v195
  %301 = vmatpush.bf16.msra.mxu0 %v193
  %302 = vmatpush.bf16.msra.mxu0 %v191
  %303 = vmatmul.bf16.gmra.mxu0 %v71
  %v304 = vpop.f32.mrf.mxu0
  %v305 = vadd.f32 %v286, %v304
  %v306 = vpop.f32.mrf.mxu0
  %v307 = vadd.f32 %v288, %v306
  %308 = vmatmul.bf16.gmra.mxu0 %v73
  %v309 = vpop.f32.mrf.mxu0
  %v310 = vadd.f32 %v291, %v309
  %v311 = vpop.f32.mrf.mxu0
  %v312 = vadd.f32 %v293, %v311
  %313 = vdwg.mxu0
  %314 = vst [vmem:[%s3] sm:$0xff] %v267
  %315 = vst [vmem:[%s3 + $0x8] sm:$0xff] %v305
  %316 = vst [vmem:[%s3 + $0x10] sm:$0xff] %v269
  %317 = vst [vmem:[%s3 + $0x18] sm:$0xff] %v307
  %318 = vst [vmem:[%s3 + $0x20] sm:$0xff] %v272
  %319 = vst [vmem:[%s3 + $0x28] sm:$0xff] %v310
  %320 = vst [vmem:[%s3 + $0x30] sm:$0xff] %v274
  %321 = vst [vmem:[%s3 + $0x38] sm:$0xff] %v312
  // Predicated region
  $region14: #{decoder_forward.30} parent=0 // pred_check
    _
  $region15: #{decoder_forward.30} parent=0 // pred_check_branch
    %323 = sbr.rel (0) target = $region17
  $region16: #{decoder_forward.30} parent=0 // pred_region
    _
  $region17: #{decoder_forward.30} parent=0 // pred_fallthru
    _
  // Predicated region
  $region18: #{decoder_forward.30} parent=0 // pred_check
    _
  $region19: #{decoder_forward.30} parent=0 // pred_check_branch
    %325 = sbr.rel (0) target = $region21
  $region20: #{decoder_forward.30} parent=0 // pred_region
    _
  $region21: #{decoder_forward.30} parent=0 // pred_fallthru
    _

// kernel: decoder_forward.28
$region0: #{decoder_forward.28}
  #allocation0 [shape = 'u32[]', space=smem, size = 0x4, offset = 0x4, fixed_abs, tag = 'smem constant byte address 0x4 - core index']
  #allocation1 [shape = 'u32[72,128]{1,0:T(1,128)}', space=vmem, size = 0x9000, scoped, tag = 'internal scratch']
  %s0 = inlined_call_operand.vmem [shape: f32[32,256], index: 0, kind: input, shape index: {}]
  %s1 = inlined_call_operand.vmem [shape: f32[1,256], index: 1, kind: input, shape index: {}]
  %s2 = inlined_call_operand.vmem [shape: bf16[256,768], index: 2, kind: input, shape index: {}]
  %s3 = inlined_call_operand.vmem [shape: bf16[32,768], index: 3, kind: output, shape index: {}]
  %s4 = sld [smem:[#allocation0]]
  $region93: #{decoder_forward.28} parent=0
    _
  %s6 = ssub.s32 1, %s4
  %s7 = scalar_select 0, %s6, %s4
  $region1: #{decoder_forward.28} parent=0
    #allocation2 [shape = 'u8[393216]{0}', space=vmem, size = 0x60000, scoped, tag = 'input window, operand 2']
    #allocation3 [shape = 'u8[49152]{0}', space=vmem, size = 0xc000, scoped, tag = 'output window, operand 0']
    loop: start=0, step=1, limit=4
    $region2: #{decoder_forward.28} parent=1 // loop_pre_header
      _
    $region3: #{decoder_forward.28} parent=1 // loop_header
      %s9 = sphi 0, %s13
      %p10 = scmp.ge.s32.totalorder %s9, 4
      %s16 = sphi 0, %s28
      %s17 = sphi 0, %s24
      %s18 = sphi 0, %s16
      %s19 = sphi 0, %s17
      %s20 = sphi 0, %s18
      %s21 = sphi 0, %s19
      %s31 = sphi 0, %s33
      %s34 = sphi 0, %s31
      %s35 = sphi 0, %s34
      %s51 = sphi 0, %s35
      %s55 = sphi 0, %s55
      %s57 = sphi 0, %s55
      %s58 = sphi 0, %s57
      %s72 = sphi 0, %s58
      %s78 = sphi 0, %s80
      %s81 = sphi 0, %s78
      %s82 = sphi 0, %s81
      %s98 = sphi 0, %s82
      %s106 = sphi 0, %s108
      %s109 = sphi 0, %s106
      %s110 = sphi 0, %s109
      %s126 = sphi 0, %s110
    $region4: #{decoder_forward.28} parent=1 // loop_header_branch
      %12 = sbr.rel (%p10) target = $region8
    $region5: #{decoder_forward.28} parent=1 // loop_body
      %s14 = ssub.s32 %s9, 1
      %s15 = ssub.s32 %s9, 2
      %s22 = sadd.s32 1, %s17
      %p23 = scmp.ge.s32.totalorder %s22, 2
      %s24 = scalar_select %p23, 0, %s22
      %s25 = sadd.s32 1, %s16
      %s26 = scalar_select %p23, %s25, %s16
      %p27 = scmp.ge.s32.totalorder %s26, 1
      %s28 = scalar_select %p27, 0, %s26
      %s29 = ssub.s32 %s16, %s28
      %p30 = scmp.eq.s32.totalorder %s29, 0
      %s32 = sadd.s32 %s31, 1
      %s33 = scalar_select %p30, %s31, %s32
      %p36 = pneg %p30
      %p37 = scmp.eq.s32.totalorder %s9, 1
      %p38 = por %p36, %p37
      %p39 = scmp.ne.s32.totalorder %s31, %s34
      %p40 = scmp.eq.s32.totalorder %s9, 0
      %p41 = por %p39, %p40
      %p42 = scmp.ne.s32.totalorder %s31, %s34
      %p43 = scmp.eq.s32.totalorder %s14, 1
      %p44 = por %p42, %p43
      %p45 = scmp.ne.s32.totalorder %s34, %s35
      %p46 = scmp.eq.s32.totalorder %s14, 0
      %p47 = por %p45, %p46
      %p48 = scmp.ne.s32.totalorder %s34, %s35
      %p49 = scmp.eq.s32.totalorder %s15, 1
      %p50 = por %p48, %p49
      %p52 = scmp.ne.s32.totalorder %s35, %s51
      %p53 = scmp.eq.s32.totalorder %s15, 0
      %p54 = por %p52, %p53
      %s56 = sadd.s32 %s55, 1
      %p59 = scmp.eq.s32.totalorder %s9, 1
      %p60 = scmp.ne.s32.totalorder %s55, %s57
      %p61 = scmp.eq.s32.totalorder %s9, 0
      %p62 = por %p60, %p61
      %p63 = scmp.ne.s32.totalorder %s55, %s57
      %p64 = scmp.eq.s32.totalorder %s14, 1
      %p65 = por %p63, %p64
      %p66 = scmp.ne.s32.totalorder %s57, %s58
      %p67 = scmp.eq.s32.totalorder %s14, 0
      %p68 = por %p66, %p67
      %p69 = scmp.ne.s32.totalorder %s57, %s58
      %p70 = scmp.eq.s32.totalorder %s15, 1
      %p71 = por %p69, %p70
      %p73 = scmp.ne.s32.totalorder %s58, %s72
      %p74 = scmp.eq.s32.totalorder %s15, 0
      %p75 = por %p73, %p74
      %s76 = ssub.s32 %s17, %s24
      %p77 = scmp.eq.s32.totalorder %s76, 0
      %s79 = sadd.s32 %s78, 1
      %s80 = scalar_select %p77, %s78, %s79
      %p83 = pneg %p77
      %p84 = scmp.eq.s32.totalorder %s9, 1
      %p85 = por %p83, %p84
      %p86 = scmp.ne.s32.totalorder %s78, %s81
      %p87 = scmp.eq.s32.totalorder %s9, 0
      %p88 = por %p86, %p87
      %p89 = scmp.ne.s32.totalorder %s78, %s81
      %p90 = scmp.eq.s32.totalorder %s14, 1
      %p91 = por %p89, %p90
      %p92 = scmp.ne.s32.totalorder %s81, %s82
      %p93 = scmp.eq.s32.totalorder %s14, 0
      %p94 = por %p92, %p93
      %p95 = scmp.ne.s32.totalorder %s81, %s82
      %p96 = scmp.eq.s32.totalorder %s15, 1
      %p97 = por %p95, %p96
      %p99 = scmp.ne.s32.totalorder %s82, %s98
      %p100 = scmp.eq.s32.totalorder %s15, 0
      %p101 = por %p99, %p100
      %s102 = ssub.s32 %s16, %s28
      %s103 = ssub.s32 %s17, %s24
      %s104 = sor.u32 %s102, %s103
      %p105 = scmp.eq.s32.totalorder %s104, 0
      %s107 = sadd.s32 %s106, 1
      %s108 = scalar_select %p105, %s106, %s107
      %p111 = pneg %p105
      %p112 = scmp.eq.s32.totalorder %s9, 1
      %p113 = por %p111, %p112
      %p114 = scmp.ne.s32.totalorder %s106, %s109
      %p115 = scmp.eq.s32.totalorder %s9, 0
      %p116 = por %p114, %p115
      %p117 = scmp.ne.s32.totalorder %s106, %s109
      %p118 = scmp.eq.s32.totalorder %s14, 1
      %p119 = por %p117, %p118
      %p120 = scmp.ne.s32.totalorder %s109, %s110
      %p121 = scmp.eq.s32.totalorder %s14, 0
      %p122 = por %p120, %p121
      %p123 = scmp.ne.s32.totalorder %s109, %s110
      %p124 = scmp.eq.s32.totalorder %s15, 1
      %p125 = por %p123, %p124
      %p127 = scmp.ne.s32.totalorder %s110, %s126
      %p128 = scmp.eq.s32.totalorder %s15, 0
      %p129 = por %p127, %p128
      %p130 = scmp.le.s32.totalorder 1, %s9
      %p131 = scmp.lt.s32.totalorder %s9, 3
      %p132 = pnand %p130, %p131
      %p133 = pneg %p132
      // Predicated region
      $region9: #{decoder_forward.28} parent=5 // pred_check
        _
      $region10: #{decoder_forward.28} parent=5 // pred_check_branch
        %135 = sbr.rel (%p132) target = $region12
      $region11: #{decoder_forward.28} parent=5 // pred_region
        %s136 = ssub.s32 %s9, 1
        // Predicated region
        $region13: #{decoder_forward.28} parent=11 // pred_check
          %p137 = pneg %p47
        $region14: #{decoder_forward.28} parent=11 // pred_check_branch
          %139 = sbr.rel (%p137) target = $region16
        $region15: #{decoder_forward.28} parent=11 // pred_region
          %s140 = smul.u32 4, %s18
          %p141 = scmp.lt.s32.totalorder %s140, 3
          %s142 = scalar_select %p141, %s140, 3
          %s143 = smul.addr %s142, 2
          %s144 = smul.addr %s143, 8
          %s145 = scalar_lea.vmem %s0, %s144
          %s146 = smul.u32 4, %s18
        $region16: #{decoder_forward.28} parent=11 // pred_fallthru
          _
        // Predicated region
        $region17: #{decoder_forward.28} parent=11 // pred_check
          %p147 = pneg %p68
        $region18: #{decoder_forward.28} parent=11 // pred_check_branch
          %149 = sbr.rel (%p147) target = $region20
        $region19: #{decoder_forward.28} parent=11 // pred_region
          _
        $region20: #{decoder_forward.28} parent=11 // pred_fallthru
          _
      $region12: #{decoder_forward.28} parent=5 // pred_fallthru
        _
      %p150 = scmp.lt.s32.totalorder %s9, 2
      // Predicated region
      $region21: #{decoder_forward.28} parent=5 // pred_check
        %p151 = pneg %p150
      $region22: #{decoder_forward.28} parent=5 // pred_check_branch
        %153 = sbr.rel (%p151) target = $region24
      $region23: #{decoder_forward.28} parent=5 // pred_region
        // Predicated region
        $region25: #{decoder_forward.28} parent=23 // pred_check
          %p154 = pneg %p88
        $region26: #{decoder_forward.28} parent=23 // pred_check_branch
          %156 = sbr.rel (%p154) target = $region28
        $region27: #{decoder_forward.28} parent=23 // pred_region
          %s157 = sand.u32 %s78, 1
          %s158 = sand.u32 %s78, 1
          %s159 = smul.addr %s158, 384
          %s160 = scalar_lea.vmem [#allocation2], %s159
          %s161 = smul.u32 3, %s17
          %s162 = smul.addr %s161, 4
          %s163 = scalar_lea.vmem %s2, %s162
          // Predicated region
          $region29: #{decoder_forward.28} parent=27 // pred_check
            _
          $region30: #{decoder_forward.28} parent=27 // pred_check_branch
            %165 = sbr.rel (0) target = $region32
          $region31: #{decoder_forward.28} parent=27 // pred_region
            // Predicated region
            $region33: #{decoder_forward.28} parent=31 // pred_check
              _
            $region34: #{decoder_forward.28} parent=31 // pred_check_branch
              %167 = sbr.rel (0) target = $region36
            $region35: #{decoder_forward.28} parent=31 // pred_region
              %s168 = scalar_lea.vmem %s163, 8
              %s169 = scalar_lea.vmem %s160, 8 [#allocation2]
              loop: start=0, step=1, limit=1
              $region37: #{decoder_forward.28} parent=35 // loop_pre_header
                _
              $region38: #{decoder_forward.28} parent=35 // loop_header
                %s171 = sphi 0, %s175
                %p172 = scmp.ge.s32.totalorder %s171, 1
                %s176 = sphi %s163, %s163
                %s177 = sphi %s160, %s160
              $region39: #{decoder_forward.28} parent=35 // loop_header_branch
                %174 = sbr.rel (%p172) target = $region43
              $region40: #{decoder_forward.28} parent=35 // loop_body
                %v178 = vld [vmem:[%s176] sm:$0xff]
                %179 = vst [vmem:[%s177] sm:$0xff] %v178
                %v180 = vld [vmem:[%s176 + $0x18] sm:$0xff]
                %181 = vst [vmem:[%s177 + $0xc] sm:$0xff] %v180
                %v182 = vld [vmem:[%s176 + $0x30] sm:$0xff]
                %183 = vst [vmem:[%s177 + $0x18] sm:$0xff] %v182
                %v184 = vld [vmem:[%s176 + $0x48] sm:$0xff]
                %185 = vst [vmem:[%s177 + $0x24] sm:$0xff] %v184
                %v186 = vld [vmem:[%s176 + $0x60] sm:$0xff]
                %187 = vst [vmem:[%s177 + $0x30] sm:$0xff] %v186
                %v188 = vld [vmem:[%s176 + $0x78] sm:$0xff]
                %189 = vst [vmem:[%s177 + $0x3c] sm:$0xff] %v188
                %v190 = vld [vmem:[%s176 + $0x90] sm:$0xff]
                %191 = vst [vmem:[%s177 + $0x48] sm:$0xff] %v190
                %v192 = vld [vmem:[%s176 + $0xa8] sm:$0xff]
                %193 = vst [vmem:[%s177 + $0x54] sm:$0xff] %v192
                %v194 = vld [vmem:[%s176 + $0xc0] sm:$0xff]
                %195 = vst [vmem:[%s177 + $0x60] sm:$0xff] %v194
                %v196 = vld [vmem:[%s176 + $0xd8] sm:$0xff]
                %197 = vst [vmem:[%s177 + $0x6c] sm:$0xff] %v196
                %v198 = vld [vmem:[%s176 + $0xf0] sm:$0xff]
                %199 = vst [vmem:[%s177 + $0x78] sm:$0xff] %v198
                %v200 = vld [vmem:[%s176 + $0x108] sm:$0xff]
                %201 = vst [vmem:[%s177 + $0x84] sm:$0xff] %v200
                %v202 = vld [vmem:[%s176 + $0x120] sm:$0xff]
                %203 = vst [vmem:[%s177 + $0x90] sm:$0xff] %v202
                %v204 = vld [vmem:[%s176 + $0x138] sm:$0xff]
                %205 = vst [vmem:[%s177 + $0x9c] sm:$0xff] %v204
                %v206 = vld [vmem:[%s176 + $0x150] sm:$0xff]
                %207 = vst [vmem:[%s177 + $0xa8] sm:$0xff] %v206
                %v208 = vld [vmem:[%s176 + $0x168] sm:$0xff]
                %209 = vst [vmem:[%s177 + $0xb4] sm:$0xff] %v208
                %v210 = vld [vmem:[%s176 + $0x180] sm:$0xff]
                %211 = vst [vmem:[%s177 + $0xc0] sm:$0xff] %v210
                %v212 = vld [vmem:[%s176 + $0x198] sm:$0xff]
                %213 = vst [vmem:[%s177 + $0xcc] sm:$0xff] %v212
                %v214 = vld [vmem:[%s176 + $0x1b0] sm:$0xff]
                %215 = vst [vmem:[%s177 + $0xd8] sm:$0xff] %v214
                %v216 = vld [vmem:[%s176 + $0x1c8] sm:$0xff]
                %217 = vst [vmem:[%s177 + $0xe4] sm:$0xff] %v216
                %v218 = vld [vmem:[%s176 + $0x1e0] sm:$0xff]
                %219 = vst [vmem:[%s177 + $0xf0] sm:$0xff] %v218
                %v220 = vld [vmem:[%s176 + $0x1f8] sm:$0xff]
                %221 = vst [vmem:[%s177 + $0xfc] sm:$0xff] %v220
                %v222 = vld [vmem:[%s176 + $0x210] sm:$0xff]
                %223 = vst [vmem:[%s177 + $0x108] sm:$0xff] %v222
                %v224 = vld [vmem:[%s176 + $0x228] sm:$0xff]
                %225 = vst [vmem:[%s177 + $0x114] sm:$0xff] %v224
                %v226 = vld [vmem:[%s176 + $0x240] sm:$0xff]
                %227 = vst [vmem:[%s177 + $0x120] sm:$0xff] %v226
                %v228 = vld [vmem:[%s176 + $0x258] sm:$0xff]
                %229 = vst [vmem:[%s177 + $0x12c] sm:$0xff] %v228
                %v230 = vld [vmem:[%s176 + $0x270] sm:$0xff]
                %231 = vst [vmem:[%s177 + $0x138] sm:$0xff] %v230
                %v232 = vld [vmem:[%s176 + $0x288] sm:$0xff]
                %233 = vst [vmem:[%s177 + $0x144] sm:$0xff] %v232
                %v234 = vld [vmem:[%s176 + $0x2a0] sm:$0xff]
                %235 = vst [vmem:[%s177 + $0x150] sm:$0xff] %v234
                %v236 = vld [vmem:[%s176 + $0x2b8] sm:$0xff]
                %237 = vst [vmem:[%s177 + $0x15c] sm:$0xff] %v236
                %v238 = vld [vmem:[%s176 + $0x2d0] sm:$0xff]
                %239 = vst [vmem:[%s177 + $0x168] sm:$0xff] %v238
                %v240 = vld [vmem:[%s176 + $0x2e8] sm:$0xff]
                %241 = vst [vmem:[%s177 + $0x174] sm:$0xff] %v240
              $region41: #{decoder_forward.28} parent=35 // loop_footer
                %s175 = sadd.s32 1, %s171
              $region42: #{decoder_forward.28} parent=35 // loop_footer_branch
                %170 = sbr.rel target = $region38
              $region43: #{decoder_forward.28} parent=35 // loop_exit
                _
              %s243 = ssub.s32 16, 1
              loop: start=0, step=1, limit=1
              $region44: #{decoder_forward.28} parent=35 // loop_pre_header
                _
              $region45: #{decoder_forward.28} parent=35 // loop_header
                %s245 = sphi 0, %s249
                %p246 = scmp.ge.s32.totalorder %s245, 1
                %s250 = sphi %s168, %s168
                %s251 = sphi %s169, %s169
              $region46: #{decoder_forward.28} parent=35 // loop_header_branch
                %248 = sbr.rel (%p246) target = $region50
              $region47: #{decoder_forward.28} parent=35 // loop_body
                %v252 = vld [vmem:[%s250] sm:%s243]
                %253 = vst [vmem:[%s251] sm:%s243] %v252
                %v254 = vld [vmem:[%s250 + $0x18] sm:%s243]
                %255 = vst [vmem:[%s251 + $0xc] sm:%s243] %v254
                %v256 = vld [vmem:[%s250 + $0x30] sm:%s243]
                %257 = vst [vmem:[%s251 + $0x18] sm:%s243] %v256
                %v258 = vld [vmem:[%s250 + $0x48] sm:%s243]
                %259 = vst [vmem:[%s251 + $0x24] sm:%s243] %v258
                %v260 = vld [vmem:[%s250 + $0x60] sm:%s243]
                %261 = vst [vmem:[%s251 + $0x30] sm:%s243] %v260
                %v262 = vld [vmem:[%s250 + $0x78] sm:%s243]
                %263 = vst [vmem:[%s251 + $0x3c] sm:%s243] %v262
                %v264 = vld [vmem:[%s250 + $0x90] sm:%s243]
                %265 = vst [vmem:[%s251 + $0x48] sm:%s243] %v264
                %v266 = vld [vmem:[%s250 + $0xa8] sm:%s243]
                %267 = vst [vmem:[%s251 + $0x54] sm:%s243] %v266
                %v268 = vld [vmem:[%s250 + $0xc0] sm:%s243]
                %269 = vst [vmem:[%s251 + $0x60] sm:%s243] %v268
                %v270 = vld [vmem:[%s250 + $0xd8] sm:%s243]
                %271 = vst [vmem:[%s251 + $0x6c] sm:%s243] %v270
                %v272 = vld [vmem:[%s250 + $0xf0] sm:%s243]
                %273 = vst [vmem:[%s251 + $0x78] sm:%s243] %v272
                %v274 = vld [vmem:[%s250 + $0x108] sm:%s243]
                %275 = vst [vmem:[%s251 + $0x84] sm:%s243] %v274
                %v276 = vld [vmem:[%s250 + $0x120] sm:%s243]
                %277 = vst [vmem:[%s251 + $0x90] sm:%s243] %v276
                %v278 = vld [vmem:[%s250 + $0x138] sm:%s243]
                %279 = vst [vmem:[%s251 + $0x9c] sm:%s243] %v278
                %v280 = vld [vmem:[%s250 + $0x150] sm:%s243]
                %281 = vst [vmem:[%s251 + $0xa8] sm:%s243] %v280
                %v282 = vld [vmem:[%s250 + $0x168] sm:%s243]
                %283 = vst [vmem:[%s251 + $0xb4] sm:%s243] %v282
                %v284 = vld [vmem:[%s250 + $0x180] sm:%s243]
                %285 = vst [vmem:[%s251 + $0xc0] sm:%s243] %v284
                %v286 = vld [vmem:[%s250 + $0x198] sm:%s243]
                %287 = vst [vmem:[%s251 + $0xcc] sm:%s243] %v286
                %v288 = vld [vmem:[%s250 + $0x1b0] sm:%s243]
                %289 = vst [vmem:[%s251 + $0xd8] sm:%s243] %v288
                %v290 = vld [vmem:[%s250 + $0x1c8] sm:%s243]
                %291 = vst [vmem:[%s251 + $0xe4] sm:%s243] %v290
                %v292 = vld [vmem:[%s250 + $0x1e0] sm:%s243]
                %293 = vst [vmem:[%s251 + $0xf0] sm:%s243] %v292
                %v294 = vld [vmem:[%s250 + $0x1f8] sm:%s243]
                %295 = vst [vmem:[%s251 + $0xfc] sm:%s243] %v294
                %v296 = vld [vmem:[%s250 + $0x210] sm:%s243]
                %297 = vst [vmem:[%s251 + $0x108] sm:%s243] %v296
                %v298 = vld [vmem:[%s250 + $0x228] sm:%s243]
                %299 = vst [vmem:[%s251 + $0x114] sm:%s243] %v298
                %v300 = vld [vmem:[%s250 + $0x240] sm:%s243]
                %301 = vst [vmem:[%s251 + $0x120] sm:%s243] %v300
                %v302 = vld [vmem:[%s250 + $0x258] sm:%s243]
                %303 = vst [vmem:[%s251 + $0x12c] sm:%s243] %v302
                %v304 = vld [vmem:[%s250 + $0x270] sm:%s243]
                %305 = vst [vmem:[%s251 + $0x138] sm:%s243] %v304
                %v306 = vld [vmem:[%s250 + $0x288] sm:%s243]
                %307 = vst [vmem:[%s251 + $0x144] sm:%s243] %v306
                %v308 = vld [vmem:[%s250 + $0x2a0] sm:%s243]
                %309 = vst [vmem:[%s251 + $0x150] sm:%s243] %v308
                %v310 = vld [vmem:[%s250 + $0x2b8] sm:%s243]
                %311 = vst [vmem:[%s251 + $0x15c] sm:%s243] %v310
                %v312 = vld [vmem:[%s250 + $0x2d0] sm:%s243]
                %313 = vst [vmem:[%s251 + $0x168] sm:%s243] %v312
                %v314 = vld [vmem:[%s250 + $0x2e8] sm:%s243]
                %315 = vst [vmem:[%s251 + $0x174] sm:%s243] %v314
              $region48: #{decoder_forward.28} parent=35 // loop_footer
                %s249 = sadd.s32 1, %s245
              $region49: #{decoder_forward.28} parent=35 // loop_footer_branch
                %244 = sbr.rel target = $region45
              $region50: #{decoder_forward.28} parent=35 // loop_exit
                _
            $region36: #{decoder_forward.28} parent=31 // pred_fallthru
              _
          $region32: #{decoder_forward.28} parent=27 // pred_fallthru
            _
          %316 = vnop
        $region28: #{decoder_forward.28} parent=23 // pred_fallthru
          _
      $region24: #{decoder_forward.28} parent=5 // pred_fallthru
        _
      %p317 = scmp.le.s32.totalorder 1, %s9
      %p318 = scmp.lt.s32.totalorder %s9, 3
      %p319 = pnand %p317, %p318
      %p320 = pneg %p319
      // Predicated region
      $region51: #{decoder_forward.28} parent=5 // pred_check
        _
      $region52: #{decoder_forward.28} parent=5 // pred_check_branch
        %322 = sbr.rel (%p319) target = $region54
      $region53: #{decoder_forward.28} parent=5 // pred_region
        %s323 = ssub.s32 %s9, 1
        %s324 = sand.u32 %s81, 1
        %s325 = sand.u32 %s81, 1
        %s326 = smul.addr %s325, 384
        %s327 = scalar_lea.vmem [#allocation2], %s326
        // Predicated region
        $region55: #{decoder_forward.28} parent=53 // pred_check
          %p328 = pneg %p94
        $region56: #{decoder_forward.28} parent=53 // pred_check_branch
          %330 = sbr.rel (%p328) target = $region58
        $region57: #{decoder_forward.28} parent=53 // pred_region
          _
        $region58: #{decoder_forward.28} parent=53 // pred_fallthru
          _
        %s331 = smul.u32 4, %s18
        %p332 = scmp.lt.s32.totalorder %s331, 3
        %s333 = scalar_select %p332, %s331, 3
        %s334 = smul.addr %s333, 2
        %s335 = smul.addr %s334, 8
        %s336 = scalar_lea.vmem %s0, %s335
        %p337 = pneg %p47
        %p338 = pneg %p44
        %p339 = pneg %p68
        %p340 = pneg %p65
        %s341 = sand.u32 %s81, 1
        %s342 = sand.u32 %s81, 1
        %s343 = smul.addr %s342, 384
        %s344 = scalar_lea.vmem [#allocation2], %s343
        %p345 = pneg %p94
        %p346 = pneg %p91
        %p347 = pneg %p122
        %p348 = pneg %p119
        %s349 = sand.u32 %s109, 1
        %s350 = sand.u32 %s109, 1
        %s351 = smul.addr %s350, 48
        %s352 = scalar_lea.vmem [#allocation3], %s351
        %s353 = smul.u32 4, %s18
        %p354 = scmp.lt.s32.totalorder %s353, 3
        %s355 = scalar_select %p354, %s353, 3
        %s356 = smul.addr %s355, 2
        %s357 = smul.addr %s356, 8
        %s358 = scalar_lea.vmem %s0, %s357
        %s359 = smul.u32 4, %s18
        %s360 = smul.u32 3, %s19
        %s361 = smul.u32 4, %s18
        %s362 = smul.u32 3, %s19
        %v363 = vld [vmem:[%s358] sm:$0xff]
        %v364 = vld [vmem:[%s358 + $0x8] sm:$0xff]
        %v365 = vld [vmem:[%s358 + $0x10] sm:$0xff]
        %v366 = vld [vmem:[%s358 + $0x18] sm:$0xff]
        %v367 = vld [vmem:[%s358 + $0x20] sm:$0xff]
        %v368 = vld [vmem:[%s358 + $0x28] sm:$0xff]
        %v369 = vld [vmem:[%s358 + $0x30] sm:$0xff]
        %v370 = vld [vmem:[%s358 + $0x38] sm:$0xff]
        %v371 = vmul.f32 %v363, %v363
        %v372 = vmul.f32 %v364, %v364
        %v373 = vmul.f32 %v365, %v365
        %v374 = vmul.f32 %v366, %v366
        %v375 = vmul.f32 %v367, %v367
        %v376 = vmul.f32 %v368, %v368
        %v377 = vmul.f32 %v369, %v369
        %v378 = vmul.f32 %v370, %v370
        %v379 = vadd.f32 %v371, %v372
        %380 = vadd.xlane.f32.xlu0 %v379
        %v381 = vpop.xlane.xlu0 %380
        %v382 = vadd.f32 %v373, %v374
        %383 = vadd.xlane.f32.xlu0 %v382
        %v384 = vpop.xlane.xlu0 %383
        %v385 = vadd.f32 %v375, %v376
        %386 = vadd.xlane.f32.xlu0 %v385
        %v387 = vpop.xlane.xlu0 %386
        %v388 = vadd.f32 %v377, %v378
        %389 = vadd.xlane.f32.xlu0 %v388
        %v390 = vpop.xlane.xlu0 %389
        %v391 = vrcp.pop 256.0
        %v392 = vmul.f32 256.0, %v391
        %v393 = vsub.f32 1.0, %v392
        %v394 = vmul.f32 %v391, %v393
        %v395 = vadd.f32 %v391, %v394
        %vm396 = vweird.f32 %v391
        %v397 = vsel %vm396, %v391, %v395
        %v398 = vmul.f32 %v381, %v397
        %v399 = vmul.f32 %v384, %v397
        %v400 = vmul.f32 %v387, %v397
        %v401 = vmul.f32 %v390, %v397
        %v402 = vadd.f32 %v398, 1e-05
        %v403 = vadd.f32 %v399, 1e-05
        %v404 = vadd.f32 %v400, 1e-05
        %v405 = vadd.f32 %v401, 1e-05
        %v406 = vrsqrt.pop %v402
        %v407 = vmul.f32 %v406, %v402
        %v408 = vmul.f32 %v407, %v406
        %v409 = vmul.f32 0.5, %v408
        %v410 = vsub.f32 1.5, %v409
        %v411 = vmul.f32 %v406, %v410
        %vm412 = vweird.f32 %v402
        %vm413 = vweird.f32 %v406
        %vm414 = vmor %vm412, %vm413
        %v415 = vsel %vm414, %v406, %v411
        %v416 = vrsqrt.pop %v403
        %v417 = vmul.f32 %v416, %v403
        %v418 = vmul.f32 %v417, %v416
        %v419 = vmul.f32 0.5, %v418
        %v420 = vsub.f32 1.5, %v419
        %v421 = vmul.f32 %v416, %v420
        %vm422 = vweird.f32 %v403
        %vm423 = vweird.f32 %v416
        %vm424 = vmor %vm422, %vm423
        %v425 = vsel %vm424, %v416, %v421
        %v426 = vrsqrt.pop %v404
        %v427 = vmul.f32 %v426, %v404
        %v428 = vmul.f32 %v427, %v426
        %v429 = vmul.f32 0.5, %v428
        %v430 = vsub.f32 1.5, %v429
        %v431 = vmul.f32 %v426, %v430
        %vm432 = vweird.f32 %v404
        %vm433 = vweird.f32 %v426
        %vm434 = vmor %vm432, %vm433
        %v435 = vsel %vm434, %v426, %v431
        %v436 = vrsqrt.pop %v405
        %v437 = vmul.f32 %v436, %v405
        %v438 = vmul.f32 %v437, %v436
        %v439 = vmul.f32 0.5, %v438
        %v440 = vsub.f32 1.5, %v439
        %v441 = vmul.f32 %v436, %v440
        %vm442 = vweird.f32 %v405
        %vm443 = vweird.f32 %v436
        %vm444 = vmor %vm442, %vm443
        %v445 = vsel %vm444, %v436, %v441
        %v446 = vmul.f32 %v363, %v415
        %v447 = vmul.f32 %v364, %v415
        %v448 = vmul.f32 %v365, %v425
        %v449 = vmul.f32 %v366, %v425
        %v450 = vmul.f32 %v367, %v435
        %v451 = vmul.f32 %v368, %v435
        %v452 = vmul.f32 %v369, %v445
        %v453 = vmul.f32 %v370, %v445
        %v454 = vld [vmem:[%s1] sm:$0x3]
        %v456 = vperm.slane %v454, 0
        %v457 = vperm.slane %v454, 1
        %v460 = vmul.f32 %v446, %v456
        %v461 = vmul.f32 %v447, %v457
        %v462 = vmul.f32 %v448, %v456
        %v463 = vmul.f32 %v449, %v457
        %v464 = vmul.f32 %v450, %v456
        %v465 = vmul.f32 %v451, %v457
        %v466 = vmul.f32 %v452, %v456
        %v467 = vmul.f32 %v453, %v457
        %v468 = vpack.c.bf16 %v462, %v460
        %v469 = vpack.c.bf16 %v463, %v461
        %v470 = vpack.c.bf16 %v466, %v464
        %v471 = vpack.c.bf16 %v467, %v465
        %v472 = vld [vmem:[%s327] sm:$0xff]
        %v473 = vld [vmem:[%s327 + $0x8] sm:$0xf]
        %v474 = vld [vmem:[%s327 + $0xc] sm:$0xff]
        %v475 = vld [vmem:[%s327 + $0x14] sm:$0xf]
        %v476 = vld [vmem:[%s327 + $0x18] sm:$0xff]
        %v477 = vld [vmem:[%s327 + $0x20] sm:$0xf]
        %v478 = vld [vmem:[%s327 + $0x24] sm:$0xff]
        %v479 = vld [vmem:[%s327 + $0x2c] sm:$0xf]
        %v480 = vld [vmem:[%s327 + $0x30] sm:$0xff]
        %v481 = vld [vmem:[%s327 + $0x38] sm:$0xf]
        %v482 = vld [vmem:[%s327 + $0x3c] sm:$0xff]
        %v483 = vld [vmem:[%s327 + $0x44] sm:$0xf]
        %v484 = vld [vmem:[%s327 + $0x48] sm:$0xff]
        %v485 = vld [vmem:[%s327 + $0x50] sm:$0xf]
        %v486 = vld [vmem:[%s327 + $0x54] sm:$0xff]
        %v487 = vld [vmem:[%s327 + $0x5c] sm:$0xf]
        %v488 = vld [vmem:[%s327 + $0x60] sm:$0xff]
        %v489 = vld [vmem:[%s327 + $0x68] sm:$0xf]
        %v490 = vld [vmem:[%s327 + $0x6c] sm:$0xff]
        %v491 = vld [vmem:[%s327 + $0x74] sm:$0xf]
        %v492 = vld [vmem:[%s327 + $0x78] sm:$0xff]
        %v493 = vld [vmem:[%s327 + $0x80] sm:$0xf]
        %v494 = vld [vmem:[%s327 + $0x84] sm:$0xff]
        %v495 = vld [vmem:[%s327 + $0x8c] sm:$0xf]
        %v496 = vld [vmem:[%s327 + $0x90] sm:$0xff]
        %v497 = vld [vmem:[%s327 + $0x98] sm:$0xf]
        %v498 = vld [vmem:[%s327 + $0x9c] sm:$0xff]
        %v499 = vld [vmem:[%s327 + $0xa4] sm:$0xf]
        %v500 = vld [vmem:[%s327 + $0xa8] sm:$0xff]
        %v501 = vld [vmem:[%s327 + $0xb0] sm:$0xf]
        %v502 = vld [vmem:[%s327 + $0xb4] sm:$0xff]
        %v503 = vld [vmem:[%s327 + $0xbc] sm:$0xf]
        %v504 = vld [vmem:[%s327 + $0xc0] sm:$0xff]
        %v505 = vld [vmem:[%s327 + $0xc8] sm:$0xf]
        %v506 = vld [vmem:[%s327 + $0xcc] sm:$0xff]
        %v507 = vld [vmem:[%s327 + $0xd4] sm:$0xf]
        %v508 = vld [vmem:[%s327 + $0xd8] sm:$0xff]
        %v509 = vld [vmem:[%s327 + $0xe0] sm:$0xf]
        %v510 = vld [vmem:[%s327 + $0xe4] sm:$0xff]
        %v511 = vld [vmem:[%s327 + $0xec] sm:$0xf]
        %v512 = vld [vmem:[%s327 + $0xf0] sm:$0xff]
        %v513 = vld [vmem:[%s327 + $0xf8] sm:$0xf]
        %v514 = vld [vmem:[%s327 + $0xfc] sm:$0xff]
        %v515 = vld [vmem:[%s327 + $0x104] sm:$0xf]
        %v516 = vld [vmem:[%s327 + $0x108] sm:$0xff]
        %v517 = vld [vmem:[%s327 + $0x110] sm:$0xf]
        %v518 = vld [vmem:[%s327 + $0x114] sm:$0xff]
        %v519 = vld [vmem:[%s327 + $0x11c] sm:$0xf]
        %v520 = vld [vmem:[%s327 + $0x120] sm:$0xff]
        %v521 = vld [vmem:[%s327 + $0x128] sm:$0xf]
        %v522 = vld [vmem:[%s327 + $0x12c] sm:$0xff]
        %v523 = vld [vmem:[%s327 + $0x134] sm:$0xf]
        %v524 = vld [vmem:[%s327 + $0x138] sm:$0xff]
        %v525 = vld [vmem:[%s327 + $0x140] sm:$0xf]
        %v526 = vld [vmem:[%s327 + $0x144] sm:$0xff]
        %v527 = vld [vmem:[%s327 + $0x14c] sm:$0xf]
        %v528 = vld [vmem:[%s327 + $0x150] sm:$0xff]
        %v529 = vld [vmem:[%s327 + $0x158] sm:$0xf]
        %v530 = vld [vmem:[%s327 + $0x15c] sm:$0xff]
        %v531 = vld [vmem:[%s327 + $0x164] sm:$0xf]
        %v532 = vld [vmem:[%s327 + $0x168] sm:$0xff]
        %v533 = vld [vmem:[%s327 + $0x170] sm:$0xf]
        %v534 = vld [vmem:[%s327 + $0x174] sm:$0xff]
        %v535 = vld [vmem:[%s327 + $0x17c] sm:$0xf]
        %v600 = vunpack.c.l.b16 %v472
        %v601 = vunpack.c.h.b16 %v472
        %v602 = vunpack.c.l.b16 %v473
        %v603 = vunpack.c.l.b16 %v474
        %v604 = vunpack.c.h.b16 %v474
        %v605 = vunpack.c.l.b16 %v475
        %v606 = vunpack.c.l.b16 %v476
        %v607 = vunpack.c.h.b16 %v476
        %v608 = vunpack.c.l.b16 %v477
        %v609 = vunpack.c.l.b16 %v478
        %v610 = vunpack.c.h.b16 %v478
        %v611 = vunpack.c.l.b16 %v479
        %v612 = vunpack.c.l.b16 %v480
        %v613 = vunpack.c.h.b16 %v480
        %v614 = vunpack.c.l.b16 %v481
        %v615 = vunpack.c.l.b16 %v482
        %v616 = vunpack.c.h.b16 %v482
        %v617 = vunpack.c.l.b16 %v483
        %v618 = vunpack.c.l.b16 %v484
        %v619 = vunpack.c.h.b16 %v484
        %v620 = vunpack.c.l.b16 %v485
        %v621 = vunpack.c.l.b16 %v486
        %v622 = vunpack.c.h.b16 %v486
        %v623 = vunpack.c.l.b16 %v487
        %v624 = vunpack.c.l.b16 %v488
        %v625 = vunpack.c.h.b16 %v488
        %v626 = vunpack.c.l.b16 %v489
        %v627 = vunpack.c.l.b16 %v490
        %v628 = vunpack.c.h.b16 %v490
        %v629 = vunpack.c.l.b16 %v491
        %v630 = vunpack.c.l.b16 %v492
        %v631 = vunpack.c.h.b16 %v492
        %v632 = vunpack.c.l.b16 %v493
        %v633 = vunpack.c.l.b16 %v494
        %v634 = vunpack.c.h.b16 %v494
        %v635 = vunpack.c.l.b16 %v495
        %v636 = vunpack.c.l.b16 %v496
        %v637 = vunpack.c.h.b16 %v496
        %v638 = vunpack.c.l.b16 %v497
        %v639 = vunpack.c.l.b16 %v498
        %v640 = vunpack.c.h.b16 %v498
        %v641 = vunpack.c.l.b16 %v499
        %v642 = vunpack.c.l.b16 %v500
        %v643 = vunpack.c.h.b16 %v500
        %v644 = vunpack.c.l.b16 %v501
        %v645 = vunpack.c.l.b16 %v502
        %v646 = vunpack.c.h.b16 %v502
        %v647 = vunpack.c.l.b16 %v503
        %v648 = vunpack.c.l.b16 %v504
        %v649 = vunpack.c.h.b16 %v504
        %v650 = vunpack.c.l.b16 %v505
        %v651 = vunpack.c.l.b16 %v506
        %v652 = vunpack.c.h.b16 %v506
        %v653 = vunpack.c.l.b16 %v507
        %v654 = vunpack.c.l.b16 %v508
        %v655 = vunpack.c.h.b16 %v508
        %v656 = vunpack.c.l.b16 %v509
        %v657 = vunpack.c.l.b16 %v510
        %v658 = vunpack.c.h.b16 %v510
        %v659 = vunpack.c.l.b16 %v511
        %v660 = vunpack.c.l.b16 %v512
        %v661 = vunpack.c.h.b16 %v512
        %v662 = vunpack.c.l.b16 %v513
        %v663 = vunpack.c.l.b16 %v514
        %v664 = vunpack.c.h.b16 %v514
        %v665 = vunpack.c.l.b16 %v515
        %v666 = vunpack.c.l.b16 %v516
        %v667 = vunpack.c.h.b16 %v516
        %v668 = vunpack.c.l.b16 %v517
        %v669 = vunpack.c.l.b16 %v518
        %v670 = vunpack.c.h.b16 %v518
        %v671 = vunpack.c.l.b16 %v519
        %v672 = vunpack.c.l.b16 %v520
        %v673 = vunpack.c.h.b16 %v520
        %v674 = vunpack.c.l.b16 %v521
        %v675 = vunpack.c.l.b16 %v522
        %v676 = vunpack.c.h.b16 %v522
        %v677 = vunpack.c.l.b16 %v523
        %v678 = vunpack.c.l.b16 %v524
        %v679 = vunpack.c.h.b16 %v524
        %v680 = vunpack.c.l.b16 %v525
        %v681 = vunpack.c.l.b16 %v526
        %v682 = vunpack.c.h.b16 %v526
        %v683 = vunpack.c.l.b16 %v527
        %v684 = vunpack.c.l.b16 %v528
        %v685 = vunpack.c.h.b16 %v528
        %v686 = vunpack.c.l.b16 %v529
        %v687 = vunpack.c.l.b16 %v530
        %v688 = vunpack.c.h.b16 %v530
        %v689 = vunpack.c.l.b16 %v531
        %v690 = vunpack.c.l.b16 %v532
        %v691 = vunpack.c.h.b16 %v532
        %v692 = vunpack.c.l.b16 %v533
        %v693 = vunpack.c.l.b16 %v534
        %v694 = vunpack.c.h.b16 %v534
        %v695 = vunpack.c.l.b16 %v535
        %v696 = vpack.c.b16 %v603, %v600
        %v697 = vpack.c.b16 %v604, %v601
        %v698 = vpack.c.b16 %v605, %v602
        %v699 = vpack.c.b16 %v609, %v606
        %v700 = vpack.c.b16 %v610, %v607
        %v701 = vpack.c.b16 %v611, %v608
        %v702 = vpack.c.b16 %v615, %v612
        %v703 = vpack.c.b16 %v616, %v613
        %v704 = vpack.c.b16 %v617, %v614
        %v705 = vpack.c.b16 %v621, %v618
        %v706 = vpack.c.b16 %v622, %v619
        %v707 = vpack.c.b16 %v623, %v620
        %v708 = vpack.c.b16 %v627, %v624
        %v709 = vpack.c.b16 %v628, %v625
        %v710 = vpack.c.b16 %v629, %v626
        %v711 = vpack.c.b16 %v633, %v630
        %v712 = vpack.c.b16 %v634, %v631
        %v713 = vpack.c.b16 %v635, %v632
        %v714 = vpack.c.b16 %v639, %v636
        %v715 = vpack.c.b16 %v640, %v637
        %v716 = vpack.c.b16 %v641, %v638
        %v717 = vpack.c.b16 %v645, %v642
        %v718 = vpack.c.b16 %v646, %v643
        %v719 = vpack.c.b16 %v647, %v644
        %v720 = vpack.c.b16 %v651, %v648
        %v721 = vpack.c.b16 %v652, %v649
        %v722 = vpack.c.b16 %v653, %v650
        %v723 = vpack.c.b16 %v657, %v654
        %v724 = vpack.c.b16 %v658, %v655
        %v725 = vpack.c.b16 %v659, %v656
        %v726 = vpack.c.b16 %v663, %v660
        %v727 = vpack.c.b16 %v664, %v661
        %v728 = vpack.c.b16 %v665, %v662
        %v729 = vpack.c.b16 %v669, %v666
        %v730 = vpack.c.b16 %v670, %v667
        %v731 = vpack.c.b16 %v671, %v668
        %v732 = vpack.c.b16 %v675, %v672
        %v733 = vpack.c.b16 %v676, %v673
        %v734 = vpack.c.b16 %v677, %v674
        %v735 = vpack.c.b16 %v681, %v678
        %v736 = vpack.c.b16 %v682, %v679
        %v737 = vpack.c.b16 %v683, %v680
        %v738 = vpack.c.b16 %v687, %v684
        %v739 = vpack.c.b16 %v688, %v685
        %v740 = vpack.c.b16 %v689, %v686
        %v741 = vpack.c.b16 %v693, %v690
        %v742 = vpack.c.b16 %v694, %v691
        %v743 = vpack.c.b16 %v695, %v692
        %792 = vmatpush.bf16.msra.mxu0 %v717
        %793 = vmatpush.bf16.msra.mxu0 %v714
        %794 = vmatpush.bf16.msra.mxu0 %v711
        %795 = vmatpush.bf16.msra.mxu0 %v708
        %796 = vmatpush.bf16.msra.mxu0 %v705
        %797 = vmatpush.bf16.msra.mxu0 %v702
        %798 = vmatpush.bf16.msra.mxu0 %v699
        %799 = vmatpush.bf16.msra.mxu0 %v696
        %800 = vmatmul.bf16.gmra.mxu0 %v468
        %v801 = vpop.f32.mrf.mxu0
        %v802 = vadd.f32 0.0, %v801
        %v803 = vpop.f32.mrf.mxu0
        %v804 = vadd.f32 0.0, %v803
        %805 = vmatmul.bf16.gmra.mxu0 %v470
        %v806 = vpop.f32.mrf.mxu0
        %v807 = vadd.f32 0.0, %v806
        %v808 = vpop.f32.mrf.mxu0
        %v809 = vadd.f32 0.0, %v808
        %810 = vdwg.mxu0
        %811 = vmatpush.bf16.msra.mxu0 %v741
        %812 = vmatpush.bf16.msra.mxu0 %v738
        %813 = vmatpush.bf16.msra.mxu0 %v735
        %814 = vmatpush.bf16.msra.mxu0 %v732
        %815 = vmatpush.bf16.msra.mxu0 %v729
        %816 = vmatpush.bf16.msra.mxu0 %v726
        %817 = vmatpush.bf16.msra.mxu0 %v723
        %818 = vmatpush.bf16.msra.mxu0 %v720
        %819 = vmatmul.bf16.gmra.mxu0 %v469
        %v820 = vpop.f32.mrf.mxu0
        %v821 = vadd.f32 %v802, %v820
        %v822 = vpop.f32.mrf.mxu0
        %v823 = vadd.f32 %v804, %v822
        %824 = vmatmul.bf16.gmra.mxu0 %v471
        %v825 = vpop.f32.mrf.mxu0
        %v826 = vadd.f32 %v807, %v825
        %v827 = vpop.f32.mrf.mxu0
        %v828 = vadd.f32 %v809, %v827
        %829 = vdwg.mxu0
        %830 = vmatpush.bf16.msra.mxu0 %v718
        %831 = vmatpush.bf16.msra.mxu0 %v715
        %832 = vmatpush.bf16.msra.mxu0 %v712
        %833 = vmatpush.bf16.msra.mxu0 %v709
        %834 = vmatpush.bf16.msra.mxu0 %v706
        %835 = vmatpush.bf16.msra.mxu0 %v703
        %836 = vmatpush.bf16.msra.mxu0 %v700
        %837 = vmatpush.bf16.msra.mxu0 %v697
        %838 = vmatmul.bf16.gmra.mxu0 %v468
        %v839 = vpop.f32.mrf.mxu0
        %v840 = vadd.f32 0.0, %v839
        %v841 = vpop.f32.mrf.mxu0
        %v842 = vadd.f32 0.0, %v841
        %843 = vmatmul.bf16.gmra.mxu0 %v470
        %v844 = vpop.f32.mrf.mxu0
        %v845 = vadd.f32 0.0, %v844
        %v846 = vpop.f32.mrf.mxu0
        %v847 = vadd.f32 0.0, %v846
        %848 = vdwg.mxu0
        %849 = vmatpush.bf16.msra.mxu0 %v742
        %850 = vmatpush.bf16.msra.mxu0 %v739
        %851 = vmatpush.bf16.msra.mxu0 %v736
        %852 = vmatpush.bf16.msra.mxu0 %v733
        %853 = vmatpush.bf16.msra.mxu0 %v730
        %854 = vmatpush.bf16.msra.mxu0 %v727
        %855 = vmatpush.bf16.msra.mxu0 %v724
        %856 = vmatpush.bf16.msra.mxu0 %v721
        %857 = vmatmul.bf16.gmra.mxu0 %v469
        %v858 = vpop.f32.mrf.mxu0
        %v859 = vadd.f32 %v840, %v858
        %v860 = vpop.f32.mrf.mxu0
        %v861 = vadd.f32 %v842, %v860
        %862 = vmatmul.bf16.gmra.mxu0 %v471
        %v863 = vpop.f32.mrf.mxu0
        %v864 = vadd.f32 %v845, %v863
        %v865 = vpop.f32.mrf.mxu0
        %v866 = vadd.f32 %v847, %v865
        %867 = vdwg.mxu0
        %868 = vmatpush.bf16.msra.mxu0 %v719
        %869 = vmatpush.bf16.msra.mxu0 %v716
        %870 = vmatpush.bf16.msra.mxu0 %v713
        %871 = vmatpush.bf16.msra.mxu0 %v710
        %872 = vmatpush.bf16.msra.mxu0 %v707
        %873 = vmatpush.bf16.msra.mxu0 %v704
        %874 = vmatpush.bf16.msra.mxu0 %v701
        %875 = vmatpush.bf16.msra.mxu0 %v698
        %876 = vmatmul.bf16.gmra.mxu0 %v468
        %v877 = vpop.f32.mrf.mxu0
        %v878 = vadd.f32 0.0, %v877
        %v879 = vpop.f32.mrf.mxu0
        %v880 = vadd.f32 0.0, %v879
        %881 = vmatmul.bf16.gmra.mxu0 %v470
        %v882 = vpop.f32.mrf.mxu0
        %v883 = vadd.f32 0.0, %v882
        %v884 = vpop.f32.mrf.mxu0
        %v885 = vadd.f32 0.0, %v884
        %886 = vdwg.mxu0
        %887 = vmatpush.bf16.msra.mxu0 %v743
        %888 = vmatpush.bf16.msra.mxu0 %v740
        %889 = vmatpush.bf16.msra.mxu0 %v737
        %890 = vmatpush.bf16.msra.mxu0 %v734
        %891 = vmatpush.bf16.msra.mxu0 %v731
        %892 = vmatpush.bf16.msra.mxu0 %v728
        %893 = vmatpush.bf16.msra.mxu0 %v725
        %894 = vmatpush.bf16.msra.mxu0 %v722
        %895 = vmatmul.bf16.gmra.mxu0 %v469
        %v896 = vpop.f32.mrf.mxu0
        %v897 = vadd.f32 %v878, %v896
        %v898 = vpop.f32.mrf.mxu0
        %v899 = vadd.f32 %v880, %v898
        %900 = vmatmul.bf16.gmra.mxu0 %v471
        %v901 = vpop.f32.mrf.mxu0
        %v902 = vadd.f32 %v883, %v901
        %v903 = vpop.f32.mrf.mxu0
        %v904 = vadd.f32 %v885, %v903
        %905 = vdwg.mxu0
        %v906 = vpack.c.bf16 %v859, %v821
        %v907 = vpack.c.bf16 %v897, %v897
        %v908 = vpack.c.bf16 %v861, %v823
        %v909 = vpack.c.bf16 %v899, %v899
        %v910 = vpack.c.bf16 %v864, %v826
        %v911 = vpack.c.bf16 %v902, %v902
        %v912 = vpack.c.bf16 %v866, %v828
        %v913 = vpack.c.bf16 %v904, %v904
        %914 = vst [vmem:[%s352] sm:$0xff] %v906
        %915 = vst [vmem:[%s352 + $0x8] sm:$0xf] %v907
        %916 = vst [vmem:[%s352 + $0xc] sm:$0xff] %v908
        %917 = vst [vmem:[%s352 + $0x14] sm:$0xf] %v909
        %918 = vst [vmem:[%s352 + $0x18] sm:$0xff] %v910
        %919 = vst [vmem:[%s352 + $0x20] sm:$0xf] %v911
        %920 = vst [vmem:[%s352 + $0x24] sm:$0xff] %v912
        %921 = vst [vmem:[%s352 + $0x2c] sm:$0xf] %v913
        %s922 = sand.u32 %s109, 1
        %s923 = sand.u32 %s109, 1
        %s924 = smul.addr %s923, 48
        %s925 = scalar_lea.vmem [#allocation3], %s924
        // Predicated region
        $region59: #{decoder_forward.28} parent=53 // pred_check
          %p926 = pneg %p119
        $region60: #{decoder_forward.28} parent=53 // pred_check_branch
          %928 = sbr.rel (%p926) target = $region62
        $region61: #{decoder_forward.28} parent=53 // pred_region
          %s929 = smul.u32 4, %s18
          %s930 = smul.u32 3, %s19
          %s931 = smul.addr %s929, 6
          %s932 = sadd.s32 %s930, %s931
          %s933 = smul.addr %s932, 4
          %s934 = scalar_lea.vmem %s3, %s933
          // Predicated region
          $region63: #{decoder_forward.28} parent=61 // pred_check
            _
          $region64: #{decoder_forward.28} parent=61 // pred_check_branch
            %936 = sbr.rel (0) target = $region66
          $region65: #{decoder_forward.28} parent=61 // pred_region
            // Predicated region
            $region67: #{decoder_forward.28} parent=65 // pred_check
              _
            $region68: #{decoder_forward.28} parent=65 // pred_check_branch
              %938 = sbr.rel (0) target = $region70
            $region69: #{decoder_forward.28} parent=65 // pred_region
              %s939 = scalar_lea.vmem %s925, 8 [#allocation3]
              %s940 = scalar_lea.vmem %s934, 8
              loop: start=0, step=1, limit=1
              $region71: #{decoder_forward.28} parent=69 // loop_pre_header
                _
              $region72: #{decoder_forward.28} parent=69 // loop_header
                %s942 = sphi 0, %s946
                %p943 = scmp.ge.s32.totalorder %s942, 1
                %s947 = sphi %s925, %s925
                %s948 = sphi %s934, %s934
              $region73: #{decoder_forward.28} parent=69 // loop_header_branch
                %945 = sbr.rel (%p943) target = $region77
              $region74: #{decoder_forward.28} parent=69 // loop_body
                %v949 = vld [vmem:[%s947] sm:$0xff]
                %950 = vst [vmem:[%s948] sm:$0xff] %v949
                %v951 = vld [vmem:[%s947 + $0xc] sm:$0xff]
                %952 = vst [vmem:[%s948 + $0x18] sm:$0xff] %v951
                %v953 = vld [vmem:[%s947 + $0x18] sm:$0xff]
                %954 = vst [vmem:[%s948 + $0x30] sm:$0xff] %v953
                %v955 = vld [vmem:[%s947 + $0x24] sm:$0xff]
                %956 = vst [vmem:[%s948 + $0x48] sm:$0xff] %v955
              $region75: #{decoder_forward.28} parent=69 // loop_footer
                %s946 = sadd.s32 1, %s942
              $region76: #{decoder_forward.28} parent=69 // loop_footer_branch
                %941 = sbr.rel target = $region72
              $region77: #{decoder_forward.28} parent=69 // loop_exit
                _
              %s958 = ssub.s32 16, 1
              loop: start=0, step=1, limit=1
              $region78: #{decoder_forward.28} parent=69 // loop_pre_header
                _
              $region79: #{decoder_forward.28} parent=69 // loop_header
                %s960 = sphi 0, %s964
                %p961 = scmp.ge.s32.totalorder %s960, 1
                %s965 = sphi %s939, %s939
                %s966 = sphi %s940, %s940
              $region80: #{decoder_forward.28} parent=69 // loop_header_branch
                %963 = sbr.rel (%p961) target = $region84
              $region81: #{decoder_forward.28} parent=69 // loop_body
                %v967 = vld [vmem:[%s965] sm:%s958]
                %968 = vst [vmem:[%s966] sm:%s958] %v967
                %v969 = vld [vmem:[%s965 + $0xc] sm:%s958]
                %970 = vst [vmem:[%s966 + $0x18] sm:%s958] %v969
                %v971 = vld [vmem:[%s965 + $0x18] sm:%s958]
                %972 = vst [vmem:[%s966 + $0x30] sm:%s958] %v971
                %v973 = vld [vmem:[%s965 + $0x24] sm:%s958]
                %974 = vst [vmem:[%s966 + $0x48] sm:%s958] %v973
              $region82: #{decoder_forward.28} parent=69 // loop_footer
                %s964 = sadd.s32 1, %s960
              $region83: #{decoder_forward.28} parent=69 // loop_footer_branch
                %959 = sbr.rel target = $region79
              $region84: #{decoder_forward.28} parent=69 // loop_exit
                _
            $region70: #{decoder_forward.28} parent=65 // pred_fallthru
              _
          $region66: #{decoder_forward.28} parent=61 // pred_fallthru
            _
          %975 = vnop
        $region62: #{decoder_forward.28} parent=53 // pred_fallthru
          _
      $region54: #{decoder_forward.28} parent=5 // pred_fallthru
        _
      %p976 = scmp.le.s32.totalorder 2, %s9
      // Predicated region
      $region85: #{decoder_forward.28} parent=5 // pred_check
        %p977 = pneg %p976
      $region86: #{decoder_forward.28} parent=5 // pred_check_branch
        %979 = sbr.rel (%p977) target = $region88
      $region87: #{decoder_forward.28} parent=5 // pred_region
        %s980 = ssub.s32 %s9, 2
        // Predicated region
        $region89: #{decoder_forward.28} parent=87 // pred_check
          %p981 = pneg %p125
        $region90: #{decoder_forward.28} parent=87 // pred_check_branch
          %983 = sbr.rel (%p981) target = $region92
        $region91: #{decoder_forward.28} parent=87 // pred_region
          %s984 = sand.u32 %s110, 1
          %s985 = sand.u32 %s110, 1
          %s986 = smul.addr %s985, 48
          %s987 = scalar_lea.vmem [#allocation3], %s986
        $region92: #{decoder_forward.28} parent=87 // pred_fallthru
          _
      $region88: #{decoder_forward.28} parent=5 // pred_fallthru
        _
    $region6: #{decoder_forward.28} parent=1 // loop_footer
      %s13 = sadd.s32 1, %s9
    $region7: #{decoder_forward.28} parent=1 // loop_footer_branch
      %8 = sbr.rel target = $region3
    $region8: #{decoder_forward.28} parent=1 // loop_exit
      _

// kernel: decoder_forward.37
$region0: #{decoder_forward.37}
  #allocation0 [shape = 'u32[]', space=smem, size = 0x4, offset = 0x4, fixed_abs, tag = 'smem constant byte address 0x4 - core index']
  #allocation1 [shape = 'u32[72,128]{1,0:T(1,128)}', space=vmem, size = 0x9000, scoped, tag = 'internal scratch']
  %s0 = inlined_call_operand.vmem [shape: f32[32,256], index: 0, kind: input, shape index: {}]
  %s1 = inlined_call_operand.vmem [shape: f32[1,256], index: 1, kind: input, shape index: {}]
  %s2 = inlined_call_operand.hbm [shape: bf16[256,256], index: 2, kind: input, shape index: {}]
  %s3 = inlined_call_operand.hbm [shape: f32[32,256], index: 3, kind: output, shape index: {}]
  %s4 = sld [smem:[#allocation0]]
  $region26: #{decoder_forward.37} parent=0
    _
  %s6 = ssub.s32 1, %s4
  %s7 = scalar_select 0, %s6, %s4
  $region1: #{decoder_forward.37} parent=0
    #allocation2 [shape = 'u8[131072]{0}', space=vmem, size = 0x20000, scoped, tag = 'input window, operand 2, single buffered']
    #allocation3 [shape = 's32[1]{0}', space=sflag, size = 0x4, scoped, tag = 'scoped memory for decoder_forward.37']
    #allocation4 [shape = 's32[1]{0}', space=sflag, size = 0x4, scoped, tag = 'scoped memory for decoder_forward.37']
    #allocation5 [shape = 'u8[32768]{0}', space=vmem, size = 0x8000, scoped, tag = 'output window, operand 0, single buffered']
    %8 = vsyncpa [#allocation3], 0
    %9 = vsyncpa [#allocation4], 0
    // Predicated region
    $region2: #{decoder_forward.37} parent=1 // pred_check
      _
    $region3: #{decoder_forward.37} parent=1 // pred_check_branch
      %11 = sbr.rel (0) target = $region5
    $region4: #{decoder_forward.37} parent=1 // pred_region
      _
    $region5: #{decoder_forward.37} parent=1 // pred_fallthru
      _
    // Predicated region
    $region6: #{decoder_forward.37} parent=1 // pred_check
      _
    $region7: #{decoder_forward.37} parent=1 // pred_check_branch
      %13 = sbr.rel (0) target = $region9
    $region8: #{decoder_forward.37} parent=1 // pred_region
      _
    $region9: #{decoder_forward.37} parent=1 // pred_fallthru
      _
    // Predicated region
    $region10: #{decoder_forward.37} parent=1 // pred_check
      _
    $region11: #{decoder_forward.37} parent=1 // pred_check_branch
      %15 = sbr.rel (0) target = $region13
    $region12: #{decoder_forward.37} parent=1 // pred_region
      %17 = vsyncadd [#allocation3], 0
      %s18 = sshll.u32 %s2, 4
      %s19 = int_to_ptr.hbm [resolvable:$true] %s18
      %s20 = sshll.u32 [#allocation2], 4
      %s21 = int_to_ptr.vmem [resolvable:$true] %s20
      %26 = dma.hbm_to_vmem [thread:$0]  %s19, 4096, %s21, [#allocation3], 128, 128, 8
    $region13: #{decoder_forward.37} parent=1 // pred_fallthru
      _
    // Predicated region
    $region14: #{decoder_forward.37} parent=1 // pred_check
      _
    $region15: #{decoder_forward.37} parent=1 // pred_check_branch
      %28 = sbr.rel (0) target = $region17
    $region16: #{decoder_forward.37} parent=1 // pred_region
      %30 = dma.done [#allocation3], 4096
    $region17: #{decoder_forward.37} parent=1 // pred_fallthru
      _
    %v31 = vld [vmem:[%s0] sm:$0xff]
    %v32 = vld [vmem:[%s0 + $0x8] sm:$0xff]
    %v33 = vld [vmem:[%s0 + $0x10] sm:$0xff]
    %v34 = vld [vmem:[%s0 + $0x18] sm:$0xff]
    %v35 = vld [vmem:[%s0 + $0x20] sm:$0xff]
    %v36 = vld [vmem:[%s0 + $0x28] sm:$0xff]
    %v37 = vld [vmem:[%s0 + $0x30] sm:$0xff]
    %v38 = vld [vmem:[%s0 + $0x38] sm:$0xff]
    %v39 = vmul.f32 %v31, %v31
    %v40 = vmul.f32 %v32, %v32
    %v41 = vmul.f32 %v33, %v33
    %v42 = vmul.f32 %v34, %v34
    %v43 = vmul.f32 %v35, %v35
    %v44 = vmul.f32 %v36, %v36
    %v45 = vmul.f32 %v37, %v37
    %v46 = vmul.f32 %v38, %v38
    %v47 = vadd.f32 %v39, %v40
    %48 = vadd.xlane.f32.xlu0 %v47
    %v49 = vpop.xlane.xlu0 %48
    %v50 = vadd.f32 %v41, %v42
    %51 = vadd.xlane.f32.xlu0 %v50
    %v52 = vpop.xlane.xlu0 %51
    %v53 = vadd.f32 %v43, %v44
    %54 = vadd.xlane.f32.xlu0 %v53
    %v55 = vpop.xlane.xlu0 %54
    %v56 = vadd.f32 %v45, %v46
    %57 = vadd.xlane.f32.xlu0 %v56
    %v58 = vpop.xlane.xlu0 %57
    %v59 = vrcp.pop 256.0
    %v60 = vmul.f32 256.0, %v59
    %v61 = vsub.f32 1.0, %v60
    %v62 = vmul.f32 %v59, %v61
    %v63 = vadd.f32 %v59, %v62
    %vm64 = vweird.f32 %v59
    %v65 = vsel %vm64, %v59, %v63
    %v66 = vmul.f32 %v49, %v65
    %v67 = vmul.f32 %v52, %v65
    %v68 = vmul.f32 %v55, %v65
    %v69 = vmul.f32 %v58, %v65
    %v70 = vadd.f32 %v66, 1e-05
    %v71 = vadd.f32 %v67, 1e-05
    %v72 = vadd.f32 %v68, 1e-05
    %v73 = vadd.f32 %v69, 1e-05
    %v74 = vrsqrt.pop %v70
    %v75 = vmul.f32 %v74, %v70
    %v76 = vmul.f32 %v75, %v74
    %v77 = vmul.f32 0.5, %v76
    %v78 = vsub.f32 1.5, %v77
    %v79 = vmul.f32 %v74, %v78
    %vm80 = vweird.f32 %v70
    %vm81 = vweird.f32 %v74
    %vm82 = vmor %vm80, %vm81
    %v83 = vsel %vm82, %v74, %v79
    %v84 = vrsqrt.pop %v71
    %v85 = vmul.f32 %v84, %v71
    %v86 = vmul.f32 %v85, %v84
    %v87 = vmul.f32 0.5, %v86
    %v88 = vsub.f32 1.5, %v87
    %v89 = vmul.f32 %v84, %v88
    %vm90 = vweird.f32 %v71
    %vm91 = vweird.f32 %v84
    %vm92 = vmor %vm90, %vm91
    %v93 = vsel %vm92, %v84, %v89
    %v94 = vrsqrt.pop %v72
    %v95 = vmul.f32 %v94, %v72
    %v96 = vmul.f32 %v95, %v94
    %v97 = vmul.f32 0.5, %v96
    %v98 = vsub.f32 1.5, %v97
    %v99 = vmul.f32 %v94, %v98
    %vm100 = vweird.f32 %v72
    %vm101 = vweird.f32 %v94
    %vm102 = vmor %vm100, %vm101
    %v103 = vsel %vm102, %v94, %v99
    %v104 = vrsqrt.pop %v73
    %v105 = vmul.f32 %v104, %v73
    %v106 = vmul.f32 %v105, %v104
    %v107 = vmul.f32 0.5, %v106
    %v108 = vsub.f32 1.5, %v107
    %v109 = vmul.f32 %v104, %v108
    %vm110 = vweird.f32 %v73
    %vm111 = vweird.f32 %v104
    %vm112 = vmor %vm110, %vm111
    %v113 = vsel %vm112, %v104, %v109
    %v114 = vmul.f32 %v31, %v83
    %v115 = vmul.f32 %v32, %v83
    %v116 = vmul.f32 %v33, %v93
    %v117 = vmul.f32 %v34, %v93
    %v118 = vmul.f32 %v35, %v103
    %v119 = vmul.f32 %v36, %v103
    %v120 = vmul.f32 %v37, %v113
    %v121 = vmul.f32 %v38, %v113
    %v122 = vld [vmem:[%s1] sm:$0x3]
    %v124 = vperm.slane %v122, 0
    %v125 = vperm.slane %v122, 1
    %v128 = vmul.f32 %v114, %v124
    %v129 = vmul.f32 %v115, %v125
    %v130 = vmul.f32 %v116, %v124
    %v131 = vmul.f32 %v117, %v125
    %v132 = vmul.f32 %v118, %v124
    %v133 = vmul.f32 %v119, %v125
    %v134 = vmul.f32 %v120, %v124
    %v135 = vmul.f32 %v121, %v125
    %v136 = vpack.c.bf16 %v130, %v128
    %v137 = vpack.c.bf16 %v131, %v129
    %v138 = vpack.c.bf16 %v134, %v132
    %v139 = vpack.c.bf16 %v135, %v133
    %v140 = vld [vmem:[#allocation2] sm:$0xff]
    %v141 = vld [vmem:[#allocation2 + $0x8] sm:$0xff]
    %v142 = vld [vmem:[#allocation2 + $0x10] sm:$0xff]
    %v143 = vld [vmem:[#allocation2 + $0x18] sm:$0xff]
    %v144 = vld [vmem:[#allocation2 + $0x20] sm:$0xff]
    %v145 = vld [vmem:[#allocation2 + $0x28] sm:$0xff]
    %v146 = vld [vmem:[#allocation2 + $0x30] sm:$0xff]
    %v147 = vld [vmem:[#allocation2 + $0x38] sm:$0xff]
    %v148 = vld [vmem:[#allocation2 + $0x40] sm:$0xff]
    %v149 = vld [vmem:[#allocation2 + $0x48] sm:$0xff]
    %v150 = vld [vmem:[#allocation2 + $0x50] sm:$0xff]
    %v151 = vld [vmem:[#allocation2 + $0x58] sm:$0xff]
    %v152 = vld [vmem:[#allocation2 + $0x60] sm:$0xff]
    %v153 = vld [vmem:[#allocation2 + $0x68] sm:$0xff]
    %v154 = vld [vmem:[#allocation2 + $0x70] sm:$0xff]
    %v155 = vld [vmem:[#allocation2 + $0x78] sm:$0xff]
    %v156 = vld [vmem:[#allocation2 + $0x80] sm:$0xff]
    %v157 = vld [vmem:[#allocation2 + $0x88] sm:$0xff]
    %v158 = vld [vmem:[#allocation2 + $0x90] sm:$0xff]
    %v159 = vld [vmem:[#allocation2 + $0x98] sm:$0xff]
    %v160 = vld [vmem:[#allocation2 + $0xa0] sm:$0xff]
    %v161 = vld [vmem:[#allocation2 + $0xa8] sm:$0xff]
    %v162 = vld [vmem:[#allocation2 + $0xb0] sm:$0xff]
    %v163 = vld [vmem:[#allocation2 + $0xb8] sm:$0xff]
    %v164 = vld [vmem:[#allocation2 + $0xc0] sm:$0xff]
    %v165 = vld [vmem:[#allocation2 + $0xc8] sm:$0xff]
    %v166 = vld [vmem:[#allocation2 + $0xd0] sm:$0xff]
    %v167 = vld [vmem:[#allocation2 + $0xd8] sm:$0xff]
    %v168 = vld [vmem:[#allocation2 + $0xe0] sm:$0xff]
    %v169 = vld [vmem:[#allocation2 + $0xe8] sm:$0xff]
    %v170 = vld [vmem:[#allocation2 + $0xf0] sm:$0xff]
    %v171 = vld [vmem:[#allocation2 + $0xf8] sm:$0xff]
    %v204 = vunpack.c.l.b16 %v140
    %v205 = vunpack.c.h.b16 %v140
    %v206 = vunpack.c.l.b16 %v141
    %v207 = vunpack.c.h.b16 %v141
    %v208 = vunpack.c.l.b16 %v142
    %v209 = vunpack.c.h.b16 %v142
    %v210 = vunpack.c.l.b16 %v143
    %v211 = vunpack.c.h.b16 %v143
    %v212 = vunpack.c.l.b16 %v144
    %v213 = vunpack.c.h.b16 %v144
    %v214 = vunpack.c.l.b16 %v145
    %v215 = vunpack.c.h.b16 %v145
    %v216 = vunpack.c.l.b16 %v146
    %v217 = vunpack.c.h.b16 %v146
    %v218 = vunpack.c.l.b16 %v147
    %v219 = vunpack.c.h.b16 %v147
    %v220 = vunpack.c.l.b16 %v148
    %v221 = vunpack.c.h.b16 %v148
    %v222 = vunpack.c.l.b16 %v149
    %v223 = vunpack.c.h.b16 %v149
    %v224 = vunpack.c.l.b16 %v150
    %v225 = vunpack.c.h.b16 %v150
    %v226 = vunpack.c.l.b16 %v151
    %v227 = vunpack.c.h.b16 %v151
    %v228 = vunpack.c.l.b16 %v152
    %v229 = vunpack.c.h.b16 %v152
    %v230 = vunpack.c.l.b16 %v153
    %v231 = vunpack.c.h.b16 %v153
    %v232 = vunpack.c.l.b16 %v154
    %v233 = vunpack.c.h.b16 %v154
    %v234 = vunpack.c.l.b16 %v155
    %v235 = vunpack.c.h.b16 %v155
    %v236 = vunpack.c.l.b16 %v156
    %v237 = vunpack.c.h.b16 %v156
    %v238 = vunpack.c.l.b16 %v157
    %v239 = vunpack.c.h.b16 %v157
    %v240 = vunpack.c.l.b16 %v158
    %v241 = vunpack.c.h.b16 %v158
    %v242 = vunpack.c.l.b16 %v159
    %v243 = vunpack.c.h.b16 %v159
    %v244 = vunpack.c.l.b16 %v160
    %v245 = vunpack.c.h.b16 %v160
    %v246 = vunpack.c.l.b16 %v161
    %v247 = vunpack.c.h.b16 %v161
    %v248 = vunpack.c.l.b16 %v162
    %v249 = vunpack.c.h.b16 %v162
    %v250 = vunpack.c.l.b16 %v163
    %v251 = vunpack.c.h.b16 %v163
    %v252 = vunpack.c.l.b16 %v164
    %v253 = vunpack.c.h.b16 %v164
    %v254 = vunpack.c.l.b16 %v165
    %v255 = vunpack.c.h.b16 %v165
    %v256 = vunpack.c.l.b16 %v166
    %v257 = vunpack.c.h.b16 %v166
    %v258 = vunpack.c.l.b16 %v167
    %v259 = vunpack.c.h.b16 %v167
    %v260 = vunpack.c.l.b16 %v168
    %v261 = vunpack.c.h.b16 %v168
    %v262 = vunpack.c.l.b16 %v169
    %v263 = vunpack.c.h.b16 %v169
    %v264 = vunpack.c.l.b16 %v170
    %v265 = vunpack.c.h.b16 %v170
    %v266 = vunpack.c.l.b16 %v171
    %v267 = vunpack.c.h.b16 %v171
    %v268 = vpack.c.b16 %v206, %v204
    %v269 = vpack.c.b16 %v207, %v205
    %v270 = vpack.c.b16 %v210, %v208
    %v271 = vpack.c.b16 %v211, %v209
    %v272 = vpack.c.b16 %v214, %v212
    %v273 = vpack.c.b16 %v215, %v213
    %v274 = vpack.c.b16 %v218, %v216
    %v275 = vpack.c.b16 %v219, %v217
    %v276 = vpack.c.b16 %v222, %v220
    %v277 = vpack.c.b16 %v223, %v221
    %v278 = vpack.c.b16 %v226, %v224
    %v279 = vpack.c.b16 %v227, %v225
    %v280 = vpack.c.b16 %v230, %v228
    %v281 = vpack.c.b16 %v231, %v229
    %v282 = vpack.c.b16 %v234, %v232
    %v283 = vpack.c.b16 %v235, %v233
    %v284 = vpack.c.b16 %v238, %v236
    %v285 = vpack.c.b16 %v239, %v237
    %v286 = vpack.c.b16 %v242, %v240
    %v287 = vpack.c.b16 %v243, %v241
    %v288 = vpack.c.b16 %v246, %v244
    %v289 = vpack.c.b16 %v247, %v245
    %v290 = vpack.c.b16 %v250, %v248
    %v291 = vpack.c.b16 %v251, %v249
    %v292 = vpack.c.b16 %v254, %v252
    %v293 = vpack.c.b16 %v255, %v253
    %v294 = vpack.c.b16 %v258, %v256
    %v295 = vpack.c.b16 %v259, %v257
    %v296 = vpack.c.b16 %v262, %v260
    %v297 = vpack.c.b16 %v263, %v261
    %v298 = vpack.c.b16 %v266, %v264
    %v299 = vpack.c.b16 %v267, %v265
    %332 = vmatpush.bf16.msra.mxu0 %v282
    %333 = vmatpush.bf16.msra.mxu0 %v280
    %334 = vmatpush.bf16.msra.mxu0 %v278
    %335 = vmatpush.bf16.msra.mxu0 %v276
    %336 = vmatpush.bf16.msra.mxu0 %v274
    %337 = vmatpush.bf16.msra.mxu0 %v272
    %338 = vmatpush.bf16.msra.mxu0 %v270
    %339 = vmatpush.bf16.msra.mxu0 %v268
    %340 = vmatmul.bf16.gmra.mxu0 %v136
    %v341 = vpop.f32.mrf.mxu0
    %v342 = vadd.f32 0.0, %v341
    %v343 = vpop.f32.mrf.mxu0
    %v344 = vadd.f32 0.0, %v343
    %345 = vmatmul.bf16.gmra.mxu0 %v138
    %v346 = vpop.f32.mrf.mxu0
    %v347 = vadd.f32 0.0, %v346
    %v348 = vpop.f32.mrf.mxu0
    %v349 = vadd.f32 0.0, %v348
    %350 = vdwg.mxu0
    %351 = vmatpush.bf16.msra.mxu0 %v298
    %352 = vmatpush.bf16.msra.mxu0 %v296
    %353 = vmatpush.bf16.msra.mxu0 %v294
    %354 = vmatpush.bf16.msra.mxu0 %v292
    %355 = vmatpush.bf16.msra.mxu0 %v290
    %356 = vmatpush.bf16.msra.mxu0 %v288
    %357 = vmatpush.bf16.msra.mxu0 %v286
    %358 = vmatpush.bf16.msra.mxu0 %v284
    %359 = vmatmul.bf16.gmra.mxu0 %v137
    %v360 = vpop.f32.mrf.mxu0
    %v361 = vadd.f32 %v342, %v360
    %v362 = vpop.f32.mrf.mxu0
    %v363 = vadd.f32 %v344, %v362
    %364 = vmatmul.bf16.gmra.mxu0 %v139
    %v365 = vpop.f32.mrf.mxu0
    %v366 = vadd.f32 %v347, %v365
    %v367 = vpop.f32.mrf.mxu0
    %v368 = vadd.f32 %v349, %v367
    %369 = vdwg.mxu0
    %370 = vmatpush.bf16.msra.mxu0 %v283
    %371 = vmatpush.bf16.msra.mxu0 %v281
    %372 = vmatpush.bf16.msra.mxu0 %v279
    %373 = vmatpush.bf16.msra.mxu0 %v277
    %374 = vmatpush.bf16.msra.mxu0 %v275
    %375 = vmatpush.bf16.msra.mxu0 %v273
    %376 = vmatpush.bf16.msra.mxu0 %v271
    %377 = vmatpush.bf16.msra.mxu0 %v269
    %378 = vmatmul.bf16.gmra.mxu0 %v136
    %v379 = vpop.f32.mrf.mxu0
    %v380 = vadd.f32 0.0, %v379
    %v381 = vpop.f32.mrf.mxu0
    %v382 = vadd.f32 0.0, %v381
    %383 = vmatmul.bf16.gmra.mxu0 %v138
    %v384 = vpop.f32.mrf.mxu0
    %v385 = vadd.f32 0.0, %v384
    %v386 = vpop.f32.mrf.mxu0
    %v387 = vadd.f32 0.0, %v386
    %388 = vdwg.mxu0
    %389 = vmatpush.bf16.msra.mxu0 %v299
    %390 = vmatpush.bf16.msra.mxu0 %v297
    %391 = vmatpush.bf16.msra.mxu0 %v295
    %392 = vmatpush.bf16.msra.mxu0 %v293
    %393 = vmatpush.bf16.msra.mxu0 %v291
    %394 = vmatpush.bf16.msra.mxu0 %v289
    %395 = vmatpush.bf16.msra.mxu0 %v287
    %396 = vmatpush.bf16.msra.mxu0 %v285
    %397 = vmatmul.bf16.gmra.mxu0 %v137
    %v398 = vpop.f32.mrf.mxu0
    %v399 = vadd.f32 %v380, %v398
    %v400 = vpop.f32.mrf.mxu0
    %v401 = vadd.f32 %v382, %v400
    %402 = vmatmul.bf16.gmra.mxu0 %v139
    %v403 = vpop.f32.mrf.mxu0
    %v404 = vadd.f32 %v385, %v403
    %v405 = vpop.f32.mrf.mxu0
    %v406 = vadd.f32 %v387, %v405
    %407 = vdwg.mxu0
    %408 = vst [vmem:[#allocation5] sm:$0xff] %v361
    %409 = vst [vmem:[#allocation5 + $0x8] sm:$0xff] %v399
    %410 = vst [vmem:[#allocation5 + $0x10] sm:$0xff] %v363
    %411 = vst [vmem:[#allocation5 + $0x18] sm:$0xff] %v401
    %412 = vst [vmem:[#allocation5 + $0x20] sm:$0xff] %v366
    %413 = vst [vmem:[#allocation5 + $0x28] sm:$0xff] %v404
    %414 = vst [vmem:[#allocation5 + $0x30] sm:$0xff] %v368
    %415 = vst [vmem:[#allocation5 + $0x38] sm:$0xff] %v406
    // Predicated region
    $region18: #{decoder_forward.37} parent=1 // pred_check
      _
    $region19: #{decoder_forward.37} parent=1 // pred_check_branch
      %417 = sbr.rel (0) target = $region21
    $region20: #{decoder_forward.37} parent=1 // pred_region
      %419 = vsyncadd [#allocation4], 0
      %s420 = sshll.u32 [#allocation5], 4
      %s421 = int_to_ptr.vmem [resolvable:$true] %s420
      %s422 = sshll.u32 %s3, 4
      %s423 = int_to_ptr.hbm [resolvable:$true] %s422
      %428 = dma.vmem_to_hbm [thread:$0]  %s421, 1024, %s423, [#allocation4], 256, 256, 16
    $region21: #{decoder_forward.37} parent=1 // pred_fallthru
      _
    // Predicated region
    $region22: #{decoder_forward.37} parent=1 // pred_check
      _
    $region23: #{decoder_forward.37} parent=1 // pred_check_branch
      %430 = sbr.rel (0) target = $region25
    $region24: #{decoder_forward.37} parent=1 // pred_region
      %432 = dma.done [#allocation4], 1024
    $region25: #{decoder_forward.37} parent=1 // pred_fallthru
      _
    %433 = vsyncpa [#allocation3], 1
    %434 = vsyncpa [#allocation4], 1

</llo_original>
